<compile_context>
chip_gen: v6e
topology: v6e:2x2x1
jax: 0.10.0
libtpu: 0.0.40
codegen_flags: <defaults>
</compile_context>

<pallas_src>
import jax
import jax.numpy as jnp
from jax import lax
from jax.experimental import pallas as pl
from jax.experimental.pallas import tpu as pltpu

_F32 = jnp.float32
_VMEM = pl.BlockSpec(memory_space=pltpu.MemorySpace.VMEM)

_LA = 2     # layers in self.lstm
_LB = 3     # layers in self.lstm_res
_NPAT = 7   # pattern GRUs actually consumed by forward() (lstm_pattern7 unused)


# ----------------------------------------------------------------------------
# Fused kernel
# ----------------------------------------------------------------------------
def _make_fused_kernel(T, Bp, D, HA, HB, HP, P):
    TB = T * Bp

    def kernel(*refs):
        it = iter(refs)
        x_ref, res_ref, pat_ref = next(it), next(it), next(it)
        stackA = [tuple(next(it) for _ in range(4)) for _ in range(_LA)]
        stackB = [tuple(next(it) for _ in range(4)) for _ in range(_LB)]
        wpat_ref, bpat_ref, bhnp_ref = next(it), next(it), next(it)
        wol_ref, bol_ref = next(it), next(it)
        wor_ref, bor_ref = next(it), next(it)
        wos_ref, bos_ref = next(it), next(it)
        wfl_ref, wfr_ref, bof_ref = next(it), next(it), next(it)
        out_ref = next(it)
        gi_a, gi_b, act_a, act_b = next(it), next(it), next(it), next(it)

        # ----------------------- helpers ------------------------------------
        def rev_time(v):
            """Reverse the time-block order of a (T*Bp, C) value."""
            return jnp.concatenate(
                [v[(T - 1 - t) * Bp:(T - t) * Bp, :] for t in range(T)], axis=0)

        def hoist(src, w_cat_ref, bias_ref, gi_ref):
            # gi[row t] = [in(t) | in(T-1-t)] @ W_cat + bias, all timesteps at once
            gi_ref[...] = (jnp.dot(src, w_cat_ref[...],
                                   preferred_element_type=_F32) + bias_ref[...])

        def make_job(layer_refs, gi_ref, act_ref, H, need_rev):
            _, whh_ref, _, bhn_ref = layer_refs
            return dict(gi=gi_ref, act=act_ref, H=H, need_rev=need_rev,
                        whh=whh_ref[...],                               # (2H, 6H)
                        bhn=jnp.broadcast_to(bhn_ref[...], (Bp, 2 * H)))  # hoisted

        def step_jobs(t, hs, jobs, first):
            """One recurrence step for every layer-job of this level."""
            new_hs = []
            for job, h in zip(jobs, hs):
                H = job["H"]
                if isinstance(t, int):                      # peeled step 0
                    rf, rb = t * Bp, (T - 1 - t) * Bp
                else:
                    rf = pl.multiple_of(t * Bp, Bp)
                    rb = pl.multiple_of((T - 1 - t) * Bp, Bp)
                gi = job["gi"][pl.ds(rf, Bp), :]            # (Bp, 6H) single load
                if first:                                   # h == 0 -> no matmul
                    rz = jax.nn.sigmoid(gi[:, 0:4 * H])
                    r, z = rz[:, 0:2 * H], rz[:, 2 * H:4 * H]
                    n = jnp.tanh(gi[:, 4 * H:6 * H] + r * job["bhn"])
                    h_new = (1.0 - z) * n
                else:
                    gh = jnp.dot(h, job["whh"], preferred_element_type=_F32)
                    rz = jax.nn.sigmoid(gi[:, 0:4 * H] + gh[:, 0:4 * H])
                    r, z = rz[:, 0:2 * H], rz[:, 2 * H:4 * H]
                    n = jnp.tanh(gi[:, 4 * H:6 * H]
                                 + r * (gh[:, 4 * H:6 * H] + job["bhn"]))
                    h_new = (1.0 - z) * n + z * h
                h_f, h_b = h_new[:, 0:H], h_new[:, H:2 * H]
                act = job["act"]
                act[pl.ds(rf, Bp), pl.ds(0, H)] = h_f       # h_fwd(t)
                act[pl.ds(rb, Bp), pl.ds(H, H)] = h_b       # h_bwd(T-1-t)
                if job["need_rev"]:                         # reversed copy for next hoist
                    act[pl.ds(rb, Bp), pl.ds(2 * H, H)] = h_f
                    act[pl.ds(rf, Bp), pl.ds(3 * H, H)] = h_b
                new_hs.append(h_new)
            return tuple(new_hs)

        def run_level(jobs):
            hs = step_jobs(0, (None,) * len(jobs), jobs, first=True)   # peel t=0
            lax.fori_loop(1, T,
                          lambda t, c: step_jobs(t, c, jobs, first=False),
                          hs, unroll=True)

        # -------------- the two GRU stacks, layers interleaved --------------
        x_all = x_ref[...]
        res_all = res_ref[...]
        xcat_a = jnp.concatenate([x_all, rev_time(x_all)], axis=1)      # (TB, 2D)
        xcat_b = jnp.concatenate([res_all, rev_time(res_all)], axis=1)  # (TB, 2D)

        for lvl in range(max(_LA, _LB)):
            jobs = []
            if lvl < _LA:
                w_cat, _, bias, _ = stackA[lvl]
                src = xcat_a if lvl == 0 else act_a[...]
                hoist(src, w_cat, bias, gi_a)
                jobs.append(make_job(stackA[lvl], gi_a, act_a, HA,
                                     need_rev=lvl < _LA - 1))
            if lvl < _LB:
                w_cat, _, bias, _ = stackB[lvl]
                src = xcat_b if lvl == 0 else act_b[...]
                hoist(src, w_cat, bias, gi_b)
                jobs.append(make_job(stackB[lvl], gi_b, act_b, HB,
                                     need_rev=lvl < _LB - 1))
            run_level(jobs)

        # ----------------------------- epilogue ------------------------------
        state_a = act_a[...][:, 0:2 * HA]                               # (TB, 2HA)
        state_b = act_b[...][:, 0:2 * HB]
        outs_data = (jnp.dot(state_a, wol_ref[...], preferred_element_type=_F32)
                     + bol_ref[...])
        outs_r = (jnp.dot(state_b, wor_ref[...], preferred_element_type=_F32)
                  + bor_ref[...])

        # 7 single-step pattern GRUs in one block-diagonal matmul (T=1, h0=0).
        g = (jnp.dot(pat_ref[...], wpat_ref[...], preferred_element_type=_F32)
             + bpat_ref[...])                                           # (Bp, 21*HP)
        NH = _NPAT * HP
        rz = jax.nn.sigmoid(g[:, 0:2 * NH])
        r, z = rz[:, 0:NH], rz[:, NH:2 * NH]
        n = jnp.tanh(g[:, 2 * NH:3 * NH] + r * bhnp_ref[...])
        h7 = (1.0 - z) * n                                              # (Bp, 7*HP)
        # out_state applied once to the SUM of the 7 states (7x row-tiled weight)
        outs_pat = (jnp.dot(h7, wos_ref[...], preferred_element_type=_F32)
                    + bos_ref[...])                                     # (Bp, P)

        # final linear distributed over concat + time-broadcast (eval: drop = id)
        pat_term = (jnp.dot(outs_pat, wfr_ref[...], preferred_element_type=_F32)
                    + bof_ref[...])                                     # (Bp, P)
        out_ref[...] = (jnp.dot(outs_data, wfl_ref[...], preferred_element_type=_F32)
                        + jnp.dot(outs_r, wfr_ref[...], preferred_element_type=_F32)
                        + jnp.concatenate([pat_term] * T, axis=0))

    return kernel


# ----------------------------------------------------------------------------
# Wrapper
# ----------------------------------------------------------------------------
def fed_enhance_lstm_forward(params, x, patterns, res):
    """x: (B,T,seq_len)  patterns: (B,8,seq_len)  res: (B,T,seq_len) -> (B,T,pre_len)."""
    B, T, D = x.shape
    Bp = max(8, ((B + 7) // 8) * 8)                       # pad batch to sublanes
    TB = T * Bp

    HA = params["lstm"][0][1].shape[0] // 2
    HB = params["lstm_res"][0][1].shape[0] // 2
    HP = params["pat_bhn"].shape[1] // _NPAT
    P = params["out_final_b"].shape[1]

    def prep_seq(a):                                       # (B,T,D) -> (T*Bp, D)
        a = jnp.transpose(a, (1, 0, 2))
        a = jnp.pad(a, ((0, 0), (0, Bp - B), (0, 0)))
        return a.reshape(TB, D)

    x2, res2 = prep_seq(x), prep_seq(res)
    pat = patterns[:, :_NPAT, :].reshape(B, _NPAT * D)     # lane-pack the 7 patterns
    pat = jnp.pad(pat, ((0, Bp - B), (0, 0)))              # (Bp, 7D)

    flat = [x2, res2, pat]
    for layer in params["lstm"]:
        flat.extend(layer)
    for layer in params["lstm_res"]:
        flat.extend(layer)
    flat += [params["pat_w"], params["pat_b"], params["pat_bhn"],
             params["out_lstm_wT"], params["out_lstm_b"],
             params["out_res_wT"], params["out_res_b"],
             params["out_state_wT7"], params["out_state_b"],
             params["out_final_wT_l"], params["out_final_wT_r"], params["out_final_b"]]

    out2 = pl.pallas_call(
        _make_fused_kernel(T, Bp, D, HA, HB, HP, P),
        out_shape=jax.ShapeDtypeStruct((TB, P), _F32),
        in_specs=[_VMEM] * len(flat),
        out_specs=_VMEM,
        scratch_shapes=[pltpu.VMEM((TB, 6 * HA), _F32),    # gi_a
                        pltpu.VMEM((TB, 6 * HB), _F32),    # gi_b
                        pltpu.VMEM((TB, 4 * HA), _F32),    # act_a
                        pltpu.VMEM((TB, 4 * HB), _F32)],   # act_b
    )(*flat)

    out = out2.reshape(T, Bp, P)[:, :B]                    # drop batch padding
    return jnp.transpose(out, (1, 0, 2))                   # (B, T, P)


# ----------------------------------------------------------------------------
# Parameter init (PyTorch-style uniform(-1/sqrt(H))), raw + packed formats
# ----------------------------------------------------------------------------
def _uniform(key, shape, scale):
    return jax.random.uniform(key, shape, _F32, -scale, scale)


def _init_raw_gru_dir(key, d_in, H):
    s = 1.0 / float(H) ** 0.5
    k1, k2, k3, k4 = jax.random.split(key, 4)
    return (_uniform(k1, (3 * H, d_in), s), _uniform(k2, (3 * H, H), s),
            _uniform(k3, (3 * H,), s), _uniform(k4, (3 * H,), s))


def _init_raw_bistack(key, D, H, L):
    layers = []
    for l in range(L):
        d_in = D if l == 0 else 2 * H
        layers.append([_init_raw_gru_dir(jax.random.fold_in(key, 2 * l + d), d_in, H)
                       for d in range(2)])
    return layers


def _init_raw_linear(key, d_in, d_out):
    s = 1.0 / float(d_in) ** 0.5
    k1, k2 = jax.random.split(key)
    return _uniform(k1, (d_out, d_in), s), _uniform(k2, (d_out,), s)


def _pack_bistack(raw_layers, H):
    """Per layer: W_cat (2*d_in, 6H), Whh_bd (2H, 6H), bias (1, 6H), bhn (1, 2H).
    Column layout: [r_f r_b z_f z_b n_f n_b]."""
    packed = []
    for dirs in raw_layers:
        d_in = dirs[0][0].shape[1]
        w_cat = jnp.zeros((2 * d_in, 6 * H), _F32)
        whh = jnp.zeros((2 * H, 6 * H), _F32)
        bias = jnp.zeros((1, 6 * H), _F32)
        bhn = jnp.zeros((1, 2 * H), _F32)
        for d in range(2):
            w_ih, w_hh, b_ih, b_hh = dirs[d]
            for g in range(3):
                col = (2 * g + d) * H
                w_cat = w_cat.at[d * d_in:(d + 1) * d_in, col:col + H].set(
                    jnp.transpose(w_ih[g * H:(g + 1) * H]))
                whh = whh.at[d * H:(d + 1) * H, col:col + H].set(
                    jnp.transpose(w_hh[g * H:(g + 1) * H]))
                bb = b_ih[g * H:(g + 1) * H]
                if g < 2:                                  # fold b_hh into r, z
                    bb = bb + b_hh[g * H:(g + 1) * H]
                bias = bias.at[0, col:col + H].set(bb)
            bhn = bhn.at[0, d * H:(d + 1) * H].set(b_hh[2 * H:3 * H])
        packed.append((w_cat, whh, bias, bhn))
    return packed


def _pack_patterns(raw_pats, D, H):
    """Block-diagonal pattern weights: W (7D, 21H) gate-major [R|Z|N], biases packed."""
    n = len(raw_pats)
    W = jnp.zeros((n * D, 3 * n * H), _F32)
    b = jnp.zeros((1, 3 * n * H), _F32)
    bhn = jnp.zeros((1, n * H), _F32)
    for i, (w_ih, _w_hh, b_ih, b_hh) in enumerate(raw_pats):
        for g in range(3):
            col = g * n * H + i * H
            W = W.at[i * D:(i + 1) * D, col:col + H].set(
                jnp.transpose(w_ih[g * H:(g + 1) * H]))
            bb = b_ih[g * H:(g + 1) * H]
            if g < 2:
                bb = bb + b_hh[g * H:(g + 1) * H]
            b = b.at[0, col:col + H].set(bb)
        bhn = bhn.at[0, i * H:(i + 1) * H].set(b_hh[2 * H:3 * H])
    return W, b, bhn


def init_params(key, seq_len, data_hidden, res_hidden, hidden, pre_len):
    kA, kB, kP, k1, k2, k3, k4 = jax.random.split(key, 7)
    rawA = _init_raw_bistack(kA, seq_len, data_hidden, _LA)
    rawB = _init_raw_bistack(kB, seq_len, res_hidden, _LB)
    rawPat = [_init_raw_gru_dir(jax.random.fold_in(kP, i), seq_len, hidden)
              for i in range(_NPAT)]
    w_ol, b_ol = _init_raw_linear(k1, 2 * data_hidden, pre_len)
    w_or, b_or = _init_raw_linear(k2, 2 * res_hidden, pre_len)
    w_os, b_os = _init_raw_linear(k3, hidden, pre_len)
    w_of, b_of = _init_raw_linear(k4, 2 * pre_len, pre_len)

    raw = dict(lstm=rawA, lstm_res=rawB, patterns=rawPat,
               w_ol=w_ol, b_ol=b_ol, w_or=w_or, b_or=b_or,
               w_os=w_os, b_os=b_os, w_of=w_of, b_of=b_of)

    pat_w, pat_b, pat_bhn = _pack_patterns(rawPat, seq_len, hidden)
    packed = dict(
        lstm=_pack_bistack(rawA, data_hidden),
        lstm_res=_pack_bistack(rawB, res_hidden),
        pat_w=pat_w, pat_b=pat_b, pat_bhn=pat_bhn,
        out_lstm_wT=jnp.transpose(w_ol), out_lstm_b=b_ol[None, :],
        out_res_wT=jnp.transpose(w_or), out_res_b=b_or[None, :],
        out_state_wT7=jnp.tile(jnp.transpose(w_os), (_NPAT, 1)),
        out_state_b=b_os[None, :],
        out_final_wT_l=jnp.transpose(w_of[:, :pre_len]),
        out_final_wT_r=jnp.transpose(w_of[:, pre_len:]),
        out_final_b=b_of[None, :])
    return raw, packed


# ----------------------------------------------------------------------------
# Pure-JAX reference (mirrors the PyTorch module, eval mode)
# ----------------------------------------------------------------------------
def _ref_bigru_stack(x, layers):
    inp = x
    for dirs in layers:
        outs = []
        for d in range(2):
            w_ih, w_hh, b_ih, b_hh = dirs[d]
            H = w_hh.shape[1]
            seq = inp if d == 0 else inp[:, ::-1]

            def cell(h, xt, w_ih=w_ih, w_hh=w_hh, b_ih=b_ih, b_hh=b_hh, H=H):
                gi = xt @ w_ih.T + b_ih
                gh = h @ w_hh.T + b_hh
                r = jax.nn.sigmoid(gi[:, :H] + gh[:, :H])
                z = jax.nn.sigmoid(gi[:, H:2 * H] + gh[:, H:2 * H])
                n = jnp.tanh(gi[:, 2 * H:] + r * gh[:, 2 * H:])
                h_new = (1.0 - z) * n + z * h
                return h_new, h_new

            h0 = jnp.zeros((inp.shape[0], H), inp.dtype)
            _, hs = lax.scan(cell, h0, jnp.swapaxes(seq, 0, 1))
            hs = jnp.swapaxes(hs, 0, 1)
            if d == 1:
                hs = hs[:, ::-1]
            outs.append(hs)
        inp = jnp.concatenate(outs, axis=-1)
    return inp


def ref_forward(raw, x, patterns, res):
    state = _ref_bigru_stack(x, raw["lstm"])
    outs_data = state @ raw["w_ol"].T + raw["b_ol"]
    state0 = _ref_bigru_stack(res, raw["lstm_res"])
    outs_r = state0 @ raw["w_or"].T + raw["b_or"]
    hsum = 0.0
    for i, (w_ih, w_hh, b_ih, b_hh) in enumerate(raw["patterns"]):
        H = w_hh.shape[1]
        p = patterns[:, i, :]
        gi = p @ w_ih.T + b_ih
        r = jax.nn.sigmoid(gi[:, :H] + b_hh[:H])
        z = jax.nn.sigmoid(gi[:, H:2 * H] + b_hh[H:2 * H])
        n = jnp.tanh(gi[:, 2 * H:] + r * b_hh[2 * H:])
        hsum = hsum + (1.0 - z) * n
    outs_pat = hsum @ raw["w_os"].T + raw["b_os"]
    fusion = jnp.concatenate([outs_data, outs_r + outs_pat[:, None, :]], axis=-1)
    return fusion @ raw["w_of"].T + raw["b_of"]


# ----------------------------------------------------------------------------
if __name__ == "__main__":
    seq_len = 16
    pre_len = 16
    data_hidden_size = 32
    res_hidden_size = 32
    hidden_size = 32
    B, T = 2, 8

    root = jax.random.PRNGKey(0)
    kparam, kx, kp, kr = jax.random.split(root, 4)
    raw, packed = init_params(kparam, seq_len, data_hidden_size, res_hidden_size,
                              hidden_size, pre_len)

    x = jax.random.normal(kx, (B, T, seq_len), _F32)
    patterns = jax.random.normal(kp, (B, 8, seq_len), _F32)
    res = jax.random.normal(kr, (B, T, seq_len), _F32)

    fwd = jax.jit(fed_enhance_lstm_forward)
    out = fwd(packed, x, patterns, res)
    jax.block_until_ready(out)
    assert out.shape == (B, T, pre_len), out.shape
    assert bool(jnp.all(jnp.isfinite(out)))

    ref = ref_forward(raw, x, patterns, res)
    max_err = float(jnp.max(jnp.abs(out - ref)))
    assert max_err < 2e-2, f"max abs error vs reference = {max_err}"
    print("KERNEL_OK")
</pallas_src>

<mosaic_0001>
module attributes {stable_mosaic.version = 11 : i64} {
  func.func @kernel(%arg0: memref<64x16xf32, #tpu.memory_space<vmem>>, %arg1: memref<64x16xf32, #tpu.memory_space<vmem>>, %arg2: memref<8x112xf32, #tpu.memory_space<vmem>>, %arg3: memref<32x192xf32, #tpu.memory_space<vmem>>, %arg4: memref<64x192xf32, #tpu.memory_space<vmem>>, %arg5: memref<1x192xf32, #tpu.memory_space<vmem>>, %arg6: memref<1x64xf32, #tpu.memory_space<vmem>>, %arg7: memref<128x192xf32, #tpu.memory_space<vmem>>, %arg8: memref<64x192xf32, #tpu.memory_space<vmem>>, %arg9: memref<1x192xf32, #tpu.memory_space<vmem>>, %arg10: memref<1x64xf32, #tpu.memory_space<vmem>>, %arg11: memref<32x192xf32, #tpu.memory_space<vmem>>, %arg12: memref<64x192xf32, #tpu.memory_space<vmem>>, %arg13: memref<1x192xf32, #tpu.memory_space<vmem>>, %arg14: memref<1x64xf32, #tpu.memory_space<vmem>>, %arg15: memref<128x192xf32, #tpu.memory_space<vmem>>, %arg16: memref<64x192xf32, #tpu.memory_space<vmem>>, %arg17: memref<1x192xf32, #tpu.memory_space<vmem>>, %arg18: memref<1x64xf32, #tpu.memory_space<vmem>>, %arg19: memref<128x192xf32, #tpu.memory_space<vmem>>, %arg20: memref<64x192xf32, #tpu.memory_space<vmem>>, %arg21: memref<1x192xf32, #tpu.memory_space<vmem>>, %arg22: memref<1x64xf32, #tpu.memory_space<vmem>>, %arg23: memref<112x672xf32, #tpu.memory_space<vmem>>, %arg24: memref<1x672xf32, #tpu.memory_space<vmem>>, %arg25: memref<1x224xf32, #tpu.memory_space<vmem>>, %arg26: memref<64x16xf32, #tpu.memory_space<vmem>>, %arg27: memref<1x16xf32, #tpu.memory_space<vmem>>, %arg28: memref<64x16xf32, #tpu.memory_space<vmem>>, %arg29: memref<1x16xf32, #tpu.memory_space<vmem>>, %arg30: memref<224x16xf32, #tpu.memory_space<vmem>>, %arg31: memref<1x16xf32, #tpu.memory_space<vmem>>, %arg32: memref<16x16xf32, #tpu.memory_space<vmem>>, %arg33: memref<16x16xf32, #tpu.memory_space<vmem>>, %arg34: memref<1x16xf32, #tpu.memory_space<vmem>>, %arg35: memref<64x16xf32, #tpu.memory_space<vmem>>, %arg36: memref<64x192xf32, #tpu.memory_space<vmem>>, %arg37: memref<64x192xf32, #tpu.memory_space<vmem>>, %arg38: memref<64x128xf32, #tpu.memory_space<vmem>>, %arg39: memref<64x128xf32, #tpu.memory_space<vmem>>) attributes {dimension_semantics = [], scalar_prefetch = 0 : i64, scratch_operands = 4 : i64, tpu.core_type = #tpu.core_type<tc>} {
    %c0 = arith.constant 0 : index
    %c0_0 = arith.constant 0 : index
    %0 = vector.load %arg0[%c0, %c0_0] : memref<64x16xf32, #tpu.memory_space<vmem>>, vector<64x16xf32>
    %c0_1 = arith.constant 0 : index
    %c0_2 = arith.constant 0 : index
    %1 = vector.load %arg1[%c0_1, %c0_2] : memref<64x16xf32, #tpu.memory_space<vmem>>, vector<64x16xf32>
    %2 = vector.extract_strided_slice %0 {offsets = [56, 0], sizes = [8, 16], strides = [1, 1]} : vector<64x16xf32> to vector<8x16xf32>
    %3 = vector.extract_strided_slice %0 {offsets = [48, 0], sizes = [8, 16], strides = [1, 1]} : vector<64x16xf32> to vector<8x16xf32>
    %4 = vector.extract_strided_slice %0 {offsets = [40, 0], sizes = [8, 16], strides = [1, 1]} : vector<64x16xf32> to vector<8x16xf32>
    %5 = vector.extract_strided_slice %0 {offsets = [32, 0], sizes = [8, 16], strides = [1, 1]} : vector<64x16xf32> to vector<8x16xf32>
    %6 = vector.extract_strided_slice %0 {offsets = [24, 0], sizes = [8, 16], strides = [1, 1]} : vector<64x16xf32> to vector<8x16xf32>
    %7 = vector.extract_strided_slice %0 {offsets = [16, 0], sizes = [8, 16], strides = [1, 1]} : vector<64x16xf32> to vector<8x16xf32>
    %8 = vector.extract_strided_slice %0 {offsets = [8, 0], sizes = [8, 16], strides = [1, 1]} : vector<64x16xf32> to vector<8x16xf32>
    %9 = vector.extract_strided_slice %0 {offsets = [0, 0], sizes = [8, 16], strides = [1, 1]} : vector<64x16xf32> to vector<8x16xf32>
    %10 = tpu.concatenate %2, %3, %4, %5, %6, %7, %8, %9 in 0 : vector<8x16xf32>, vector<8x16xf32>, vector<8x16xf32>, vector<8x16xf32>, vector<8x16xf32>, vector<8x16xf32>, vector<8x16xf32>, vector<8x16xf32> -> vector<64x16xf32>
    %11 = tpu.concatenate %0, %10 in 1 : vector<64x16xf32>, vector<64x16xf32> -> vector<64x32xf32>
    %12 = vector.extract_strided_slice %1 {offsets = [56, 0], sizes = [8, 16], strides = [1, 1]} : vector<64x16xf32> to vector<8x16xf32>
    %13 = vector.extract_strided_slice %1 {offsets = [48, 0], sizes = [8, 16], strides = [1, 1]} : vector<64x16xf32> to vector<8x16xf32>
    %14 = vector.extract_strided_slice %1 {offsets = [40, 0], sizes = [8, 16], strides = [1, 1]} : vector<64x16xf32> to vector<8x16xf32>
    %15 = vector.extract_strided_slice %1 {offsets = [32, 0], sizes = [8, 16], strides = [1, 1]} : vector<64x16xf32> to vector<8x16xf32>
    %16 = vector.extract_strided_slice %1 {offsets = [24, 0], sizes = [8, 16], strides = [1, 1]} : vector<64x16xf32> to vector<8x16xf32>
    %17 = vector.extract_strided_slice %1 {offsets = [16, 0], sizes = [8, 16], strides = [1, 1]} : vector<64x16xf32> to vector<8x16xf32>
    %18 = vector.extract_strided_slice %1 {offsets = [8, 0], sizes = [8, 16], strides = [1, 1]} : vector<64x16xf32> to vector<8x16xf32>
    %19 = vector.extract_strided_slice %1 {offsets = [0, 0], sizes = [8, 16], strides = [1, 1]} : vector<64x16xf32> to vector<8x16xf32>
    %20 = tpu.concatenate %12, %13, %14, %15, %16, %17, %18, %19 in 0 : vector<8x16xf32>, vector<8x16xf32>, vector<8x16xf32>, vector<8x16xf32>, vector<8x16xf32>, vector<8x16xf32>, vector<8x16xf32>, vector<8x16xf32> -> vector<64x16xf32>
    %21 = tpu.concatenate %1, %20 in 1 : vector<64x16xf32>, vector<64x16xf32> -> vector<64x32xf32>
    %c0_3 = arith.constant 0 : index
    %c0_4 = arith.constant 0 : index
    %22 = vector.load %arg3[%c0_3, %c0_4] : memref<32x192xf32, #tpu.memory_space<vmem>>, vector<32x192xf32>
    %cst = arith.constant dense<0.000000e+00> : vector<64x192xf32>
    %23 = tpu.matmul %11, %22, %cst {dimension_numbers = #tpu.dot_dimension_numbers<[1], [0], [0], [1], [0, 0, 1, 1], [], []>} : vector<64x32xf32>, vector<32x192xf32>, vector<64x192xf32> -> vector<64x192xf32>
    %c0_5 = arith.constant 0 : index
    %c0_6 = arith.constant 0 : index
    %24 = vector.load %arg5[%c0_5, %c0_6] : memref<1x192xf32, #tpu.memory_space<vmem>>, vector<1x192xf32>
    %25 = vector.broadcast %24 : vector<1x192xf32> to vector<64x192xf32>
    %26 = arith.addf %23, %25 : vector<64x192xf32>
    %c0_7 = arith.constant 0 : index
    %c0_8 = arith.constant 0 : index
    %27 = vector.load %arg36[%c0_7, %c0_8] : memref<64x192xf32, #tpu.memory_space<vmem>>, vector<64x192xf32>
    tpu.vector_store %arg36[%c0_7, %c0_8], %26 {strides = array<i32>} : memref<64x192xf32, #tpu.memory_space<vmem>>, vector<64x192xf32>,
    %c0_9 = arith.constant 0 : index
    %c0_10 = arith.constant 0 : index
    %28 = vector.load %arg4[%c0_9, %c0_10] : memref<64x192xf32, #tpu.memory_space<vmem>>, vector<64x192xf32>
    %c0_11 = arith.constant 0 : index
    %c0_12 = arith.constant 0 : index
    %29 = vector.load %arg6[%c0_11, %c0_12] : memref<1x64xf32, #tpu.memory_space<vmem>>, vector<1x64xf32>
    %30 = vector.shape_cast %29 : vector<1x64xf32> to vector<1x64xf32>
    %31 = vector.broadcast %30 : vector<1x64xf32> to vector<8x64xf32>
    %c0_13 = arith.constant 0 : index
    %c0_14 = arith.constant 0 : index
    %32 = vector.load %arg11[%c0_13, %c0_14] : memref<32x192xf32, #tpu.memory_space<vmem>>, vector<32x192xf32>
    %cst_15 = arith.constant dense<0.000000e+00> : vector<64x192xf32>
    %33 = tpu.matmul %21, %32, %cst_15 {dimension_numbers = #tpu.dot_dimension_numbers<[1], [0], [0], [1], [0, 0, 1, 1], [], []>} : vector<64x32xf32>, vector<32x192xf32>, vector<64x192xf32> -> vector<64x192xf32>
    %c0_16 = arith.constant 0 : index
    %c0_17 = arith.constant 0 : index
    %34 = vector.load %arg13[%c0_16, %c0_17] : memref<1x192xf32, #tpu.memory_space<vmem>>, vector<1x192xf32>
    %35 = vector.broadcast %34 : vector<1x192xf32> to vector<64x192xf32>
    %36 = arith.addf %33, %35 : vector<64x192xf32>
    %c0_18 = arith.constant 0 : index
    %c0_19 = arith.constant 0 : index
    %37 = vector.load %arg37[%c0_18, %c0_19] : memref<64x192xf32, #tpu.memory_space<vmem>>, vector<64x192xf32>
    tpu.vector_store %arg37[%c0_18, %c0_19], %36 {strides = array<i32>} : memref<64x192xf32, #tpu.memory_space<vmem>>, vector<64x192xf32>,
    %c0_20 = arith.constant 0 : index
    %c0_21 = arith.constant 0 : index
    %38 = vector.load %arg12[%c0_20, %c0_21] : memref<64x192xf32, #tpu.memory_space<vmem>>, vector<64x192xf32>
    %c0_22 = arith.constant 0 : index
    %c0_23 = arith.constant 0 : index
    %39 = vector.load %arg14[%c0_22, %c0_23] : memref<1x64xf32, #tpu.memory_space<vmem>>, vector<1x64xf32>
    %40 = vector.shape_cast %39 : vector<1x64xf32> to vector<1x64xf32>
    %41 = vector.broadcast %40 : vector<1x64xf32> to vector<8x64xf32>
    %c0_24 = arith.constant 0 : index
    %c0_25 = arith.constant 0 : index
    %42 = vector.load %arg36[%c0_24, %c0_25] : memref<64x192xf32, #tpu.memory_space<vmem>>, vector<8x192xf32>
    %43 = vector.extract_strided_slice %42 {offsets = [0, 0], sizes = [8, 128], strides = [1, 1]} : vector<8x192xf32> to vector<8x128xf32>
    %44 = arith.negf %43 : vector<8x128xf32>
    %45 = math.exp %44 : vector<8x128xf32>
    %cst_26 = arith.constant 1.000000e+00 : f32
    %46 = vector.broadcast %cst_26 : f32 to vector<8x128xf32>
    %47 = arith.addf %46, %45 : vector<8x128xf32>
    %48 = arith.divf %46, %47 : vector<8x128xf32>
    %49 = vector.extract_strided_slice %48 {offsets = [0, 0], sizes = [8, 64], strides = [1, 1]} : vector<8x128xf32> to vector<8x64xf32>
    %50 = vector.extract_strided_slice %48 {offsets = [0, 64], sizes = [8, 64], strides = [1, 1]} : vector<8x128xf32> to vector<8x64xf32>
    %51 = vector.extract_strided_slice %42 {offsets = [0, 128], sizes = [8, 64], strides = [1, 1]} : vector<8x192xf32> to vector<8x64xf32>
    %52 = arith.mulf %49, %31 : vector<8x64xf32>
    %53 = arith.addf %51, %52 : vector<8x64xf32>
    %54 = math.tanh %53 : vector<8x64xf32>
    %cst_27 = arith.constant 1.000000e+00 : f32
    %55 = vector.broadcast %cst_27 : f32 to vector<8x64xf32>
    %56 = arith.subf %55, %50 : vector<8x64xf32>
    %57 = arith.mulf %56, %54 : vector<8x64xf32>
    %58 = vector.extract_strided_slice %57 {offsets = [0, 0], sizes = [8, 32], strides = [1, 1]} : vector<8x64xf32> to vector<8x32xf32>
    %59 = vector.extract_strided_slice %57 {offsets = [0, 32], sizes = [8, 32], strides = [1, 1]} : vector<8x64xf32> to vector<8x32xf32>
    %c0_28 = arith.constant 0 : index
    %c0_29 = arith.constant 0 : index
    %60 = vector.load %arg38[%c0_28, %c0_29] : memref<64x128xf32, #tpu.memory_space<vmem>>, vector<8x32xf32>
    tpu.vector_store %arg38[%c0_28, %c0_29], %58 {strides = array<i32>} : memref<64x128xf32, #tpu.memory_space<vmem>>, vector<8x32xf32>,
    %c56 = arith.constant 56 : index
    %c32 = arith.constant 32 : index
    %61 = vector.load %arg38[%c56, %c32] : memref<64x128xf32, #tpu.memory_space<vmem>>, vector<8x32xf32>
    tpu.vector_store %arg38[%c56, %c32], %59 {strides = array<i32>} : memref<64x128xf32, #tpu.memory_space<vmem>>, vector<8x32xf32>,
    %c56_30 = arith.constant 56 : index
    %c64 = arith.constant 64 : index
    %62 = vector.load %arg38[%c56_30, %c64] : memref<64x128xf32, #tpu.memory_space<vmem>>, vector<8x32xf32>
    tpu.vector_store %arg38[%c56_30, %c64], %58 {strides = array<i32>} : memref<64x128xf32, #tpu.memory_space<vmem>>, vector<8x32xf32>,
    %c0_31 = arith.constant 0 : index
    %c96 = arith.constant 96 : index
    %63 = vector.load %arg38[%c0_31, %c96] : memref<64x128xf32, #tpu.memory_space<vmem>>, vector<8x32xf32>
    tpu.vector_store %arg38[%c0_31, %c96], %59 {strides = array<i32>} : memref<64x128xf32, #tpu.memory_space<vmem>>, vector<8x32xf32>,
    %c0_32 = arith.constant 0 : index
    %c0_33 = arith.constant 0 : index
    %64 = vector.load %arg37[%c0_32, %c0_33] : memref<64x192xf32, #tpu.memory_space<vmem>>, vector<8x192xf32>
    %65 = vector.extract_strided_slice %64 {offsets = [0, 0], sizes = [8, 128], strides = [1, 1]} : vector<8x192xf32> to vector<8x128xf32>
    %66 = arith.negf %65 : vector<8x128xf32>
    %67 = math.exp %66 : vector<8x128xf32>
    %cst_34 = arith.constant 1.000000e+00 : f32
    %68 = vector.broadcast %cst_34 : f32 to vector<8x128xf32>
    %69 = arith.addf %68, %67 : vector<8x128xf32>
    %70 = arith.divf %68, %69 : vector<8x128xf32>
    %71 = vector.extract_strided_slice %70 {offsets = [0, 0], sizes = [8, 64], strides = [1, 1]} : vector<8x128xf32> to vector<8x64xf32>
    %72 = vector.extract_strided_slice %70 {offsets = [0, 64], sizes = [8, 64], strides = [1, 1]} : vector<8x128xf32> to vector<8x64xf32>
    %73 = vector.extract_strided_slice %64 {offsets = [0, 128], sizes = [8, 64], strides = [1, 1]} : vector<8x192xf32> to vector<8x64xf32>
    %74 = arith.mulf %71, %41 : vector<8x64xf32>
    %75 = arith.addf %73, %74 : vector<8x64xf32>
    %76 = math.tanh %75 : vector<8x64xf32>
    %cst_35 = arith.constant 1.000000e+00 : f32
    %77 = vector.broadcast %cst_35 : f32 to vector<8x64xf32>
    %78 = arith.subf %77, %72 : vector<8x64xf32>
    %79 = arith.mulf %78, %76 : vector<8x64xf32>
    %80 = vector.extract_strided_slice %79 {offsets = [0, 0], sizes = [8, 32], strides = [1, 1]} : vector<8x64xf32> to vector<8x32xf32>
    %81 = vector.extract_strided_slice %79 {offsets = [0, 32], sizes = [8, 32], strides = [1, 1]} : vector<8x64xf32> to vector<8x32xf32>
    %c0_36 = arith.constant 0 : index
    %c0_37 = arith.constant 0 : index
    %82 = vector.load %arg39[%c0_36, %c0_37] : memref<64x128xf32, #tpu.memory_space<vmem>>, vector<8x32xf32>
    tpu.vector_store %arg39[%c0_36, %c0_37], %80 {strides = array<i32>} : memref<64x128xf32, #tpu.memory_space<vmem>>, vector<8x32xf32>,
    %c56_38 = arith.constant 56 : index
    %c32_39 = arith.constant 32 : index
    %83 = vector.load %arg39[%c56_38, %c32_39] : memref<64x128xf32, #tpu.memory_space<vmem>>, vector<8x32xf32>
    tpu.vector_store %arg39[%c56_38, %c32_39], %81 {strides = array<i32>} : memref<64x128xf32, #tpu.memory_space<vmem>>, vector<8x32xf32>,
    %c56_40 = arith.constant 56 : index
    %c64_41 = arith.constant 64 : index
    %84 = vector.load %arg39[%c56_40, %c64_41] : memref<64x128xf32, #tpu.memory_space<vmem>>, vector<8x32xf32>
    tpu.vector_store %arg39[%c56_40, %c64_41], %80 {strides = array<i32>} : memref<64x128xf32, #tpu.memory_space<vmem>>, vector<8x32xf32>,
    %c0_42 = arith.constant 0 : index
    %c96_43 = arith.constant 96 : index
    %85 = vector.load %arg39[%c0_42, %c96_43] : memref<64x128xf32, #tpu.memory_space<vmem>>, vector<8x32xf32>
    tpu.vector_store %arg39[%c0_42, %c96_43], %81 {strides = array<i32>} : memref<64x128xf32, #tpu.memory_space<vmem>>, vector<8x32xf32>,
    %c1_i32 = arith.constant 1 : i32
    %c8_i32 = arith.constant 8 : i32
    %86 = arith.muli %c1_i32, %c8_i32 : i32
    %87 = tpu.assume_multiple %86, 8 : i32
    %c7_i32 = arith.constant 7 : i32
    %88 = arith.subi %c7_i32, %c1_i32 : i32
    %c8_i32_44 = arith.constant 8 : i32
    %89 = arith.muli %88, %c8_i32_44 : i32
    %90 = tpu.assume_multiple %89, 8 : i32
    %91 = arith.index_cast %87 : i32 to index
    %c0_45 = arith.constant 0 : index
    %92 = vector.load %arg36[%91, %c0_45] : memref<64x192xf32, #tpu.memory_space<vmem>>, vector<8x192xf32>
    %cst_46 = arith.constant dense<0.000000e+00> : vector<8x192xf32>
    %93 = tpu.matmul %57, %28, %cst_46 {dimension_numbers = #tpu.dot_dimension_numbers<[1], [0], [0], [1], [0, 0, 1, 1], [], []>} : vector<8x64xf32>, vector<64x192xf32>, vector<8x192xf32> -> vector<8x192xf32>
    %94 = vector.extract_strided_slice %92 {offsets = [0, 0], sizes = [8, 128], strides = [1, 1]} : vector<8x192xf32> to vector<8x128xf32>
    %95 = vector.extract_strided_slice %93 {offsets = [0, 0], sizes = [8, 128], strides = [1, 1]} : vector<8x192xf32> to vector<8x128xf32>
    %96 = arith.addf %94, %95 : vector<8x128xf32>
    %97 = arith.negf %96 : vector<8x128xf32>
    %98 = math.exp %97 : vector<8x128xf32>
    %cst_47 = arith.constant 1.000000e+00 : f32
    %99 = vector.broadcast %cst_47 : f32 to vector<8x128xf32>
    %100 = arith.addf %99, %98 : vector<8x128xf32>
    %101 = arith.divf %99, %100 : vector<8x128xf32>
    %102 = vector.extract_strided_slice %101 {offsets = [0, 0], sizes = [8, 64], strides = [1, 1]} : vector<8x128xf32> to vector<8x64xf32>
    %103 = vector.extract_strided_slice %101 {offsets = [0, 64], sizes = [8, 64], strides = [1, 1]} : vector<8x128xf32> to vector<8x64xf32>
    %104 = vector.extract_strided_slice %92 {offsets = [0, 128], sizes = [8, 64], strides = [1, 1]} : vector<8x192xf32> to vector<8x64xf32>
    %105 = vector.extract_strided_slice %93 {offsets = [0, 128], sizes = [8, 64], strides = [1, 1]} : vector<8x192xf32> to vector<8x64xf32>
    %106 = arith.addf %105, %31 : vector<8x64xf32>
    %107 = arith.mulf %102, %106 : vector<8x64xf32>
    %108 = arith.addf %104, %107 : vector<8x64xf32>
    %109 = math.tanh %108 : vector<8x64xf32>
    %cst_48 = arith.constant 1.000000e+00 : f32
    %110 = vector.broadcast %cst_48 : f32 to vector<8x64xf32>
    %111 = arith.subf %110, %103 : vector<8x64xf32>
    %112 = arith.mulf %111, %109 : vector<8x64xf32>
    %113 = arith.mulf %103, %57 : vector<8x64xf32>
    %114 = arith.addf %112, %113 : vector<8x64xf32>
    %115 = vector.extract_strided_slice %114 {offsets = [0, 0], sizes = [8, 32], strides = [1, 1]} : vector<8x64xf32> to vector<8x32xf32>
    %116 = vector.extract_strided_slice %114 {offsets = [0, 32], sizes = [8, 32], strides = [1, 1]} : vector<8x64xf32> to vector<8x32xf32>
    %117 = arith.index_cast %87 : i32 to index
    %c0_49 = arith.constant 0 : index
    %118 = vector.load %arg38[%117, %c0_49] : memref<64x128xf32, #tpu.memory_space<vmem>>, vector<8x32xf32>
    tpu.vector_store %arg38[%117, %c0_49], %115 {strides = array<i32>} : memref<64x128xf32, #tpu.memory_space<vmem>>, vector<8x32xf32>,
    %119 = arith.index_cast %90 : i32 to index
    %c32_50 = arith.constant 32 : index
    %120 = vector.load %arg38[%119, %c32_50] : memref<64x128xf32, #tpu.memory_space<vmem>>, vector<8x32xf32>
    tpu.vector_store %arg38[%119, %c32_50], %116 {strides = array<i32>} : memref<64x128xf32, #tpu.memory_space<vmem>>, vector<8x32xf32>,
    %121 = arith.index_cast %90 : i32 to index
    %c64_51 = arith.constant 64 : index
    %122 = vector.load %arg38[%121, %c64_51] : memref<64x128xf32, #tpu.memory_space<vmem>>, vector<8x32xf32>
    tpu.vector_store %arg38[%121, %c64_51], %115 {strides = array<i32>} : memref<64x128xf32, #tpu.memory_space<vmem>>, vector<8x32xf32>,
    %123 = arith.index_cast %87 : i32 to index
    %c96_52 = arith.constant 96 : index
    %124 = vector.load %arg38[%123, %c96_52] : memref<64x128xf32, #tpu.memory_space<vmem>>, vector<8x32xf32>
    tpu.vector_store %arg38[%123, %c96_52], %116 {strides = array<i32>} : memref<64x128xf32, #tpu.memory_space<vmem>>, vector<8x32xf32>,
    %c8_i32_53 = arith.constant 8 : i32
    %125 = arith.muli %c1_i32, %c8_i32_53 : i32
    %126 = tpu.assume_multiple %125, 8 : i32
    %c7_i32_54 = arith.constant 7 : i32
    %127 = arith.subi %c7_i32_54, %c1_i32 : i32
    %c8_i32_55 = arith.constant 8 : i32
    %128 = arith.muli %127, %c8_i32_55 : i32
    %129 = tpu.assume_multiple %128, 8 : i32
    %130 = arith.index_cast %126 : i32 to index
    %c0_56 = arith.constant 0 : index
    %131 = vector.load %arg37[%130, %c0_56] : memref<64x192xf32, #tpu.memory_space<vmem>>, vector<8x192xf32>
    %cst_57 = arith.constant dense<0.000000e+00> : vector<8x192xf32>
    %132 = tpu.matmul %79, %38, %cst_57 {dimension_numbers = #tpu.dot_dimension_numbers<[1], [0], [0], [1], [0, 0, 1, 1], [], []>} : vector<8x64xf32>, vector<64x192xf32>, vector<8x192xf32> -> vector<8x192xf32>
    %133 = vector.extract_strided_slice %131 {offsets = [0, 0], sizes = [8, 128], strides = [1, 1]} : vector<8x192xf32> to vector<8x128xf32>
    %134 = vector.extract_strided_slice %132 {offsets = [0, 0], sizes = [8, 128], strides = [1, 1]} : vector<8x192xf32> to vector<8x128xf32>
    %135 = arith.addf %133, %134 : vector<8x128xf32>
    %136 = arith.negf %135 : vector<8x128xf32>
    %137 = math.exp %136 : vector<8x128xf32>
    %cst_58 = arith.constant 1.000000e+00 : f32
    %138 = vector.broadcast %cst_58 : f32 to vector<8x128xf32>
    %139 = arith.addf %138, %137 : vector<8x128xf32>
    %140 = arith.divf %138, %139 : vector<8x128xf32>
    %141 = vector.extract_strided_slice %140 {offsets = [0, 0], sizes = [8, 64], strides = [1, 1]} : vector<8x128xf32> to vector<8x64xf32>
    %142 = vector.extract_strided_slice %140 {offsets = [0, 64], sizes = [8, 64], strides = [1, 1]} : vector<8x128xf32> to vector<8x64xf32>
    %143 = vector.extract_strided_slice %131 {offsets = [0, 128], sizes = [8, 64], strides = [1, 1]} : vector<8x192xf32> to vector<8x64xf32>
    %144 = vector.extract_strided_slice %132 {offsets = [0, 128], sizes = [8, 64], strides = [1, 1]} : vector<8x192xf32> to vector<8x64xf32>
    %145 = arith.addf %144, %41 : vector<8x64xf32>
    %146 = arith.mulf %141, %145 : vector<8x64xf32>
    %147 = arith.addf %143, %146 : vector<8x64xf32>
    %148 = math.tanh %147 : vector<8x64xf32>
    %cst_59 = arith.constant 1.000000e+00 : f32
    %149 = vector.broadcast %cst_59 : f32 to vector<8x64xf32>
    %150 = arith.subf %149, %142 : vector<8x64xf32>
    %151 = arith.mulf %150, %148 : vector<8x64xf32>
    %152 = arith.mulf %142, %79 : vector<8x64xf32>
    %153 = arith.addf %151, %152 : vector<8x64xf32>
    %154 = vector.extract_strided_slice %153 {offsets = [0, 0], sizes = [8, 32], strides = [1, 1]} : vector<8x64xf32> to vector<8x32xf32>
    %155 = vector.extract_strided_slice %153 {offsets = [0, 32], sizes = [8, 32], strides = [1, 1]} : vector<8x64xf32> to vector<8x32xf32>
    %156 = arith.index_cast %126 : i32 to index
    %c0_60 = arith.constant 0 : index
    %157 = vector.load %arg39[%156, %c0_60] : memref<64x128xf32, #tpu.memory_space<vmem>>, vector<8x32xf32>
    tpu.vector_store %arg39[%156, %c0_60], %154 {strides = array<i32>} : memref<64x128xf32, #tpu.memory_space<vmem>>, vector<8x32xf32>,
    %158 = arith.index_cast %129 : i32 to index
    %c32_61 = arith.constant 32 : index
    %159 = vector.load %arg39[%158, %c32_61] : memref<64x128xf32, #tpu.memory_space<vmem>>, vector<8x32xf32>
    tpu.vector_store %arg39[%158, %c32_61], %155 {strides = array<i32>} : memref<64x128xf32, #tpu.memory_space<vmem>>, vector<8x32xf32>,
    %160 = arith.index_cast %129 : i32 to index
    %c64_62 = arith.constant 64 : index
    %161 = vector.load %arg39[%160, %c64_62] : memref<64x128xf32, #tpu.memory_space<vmem>>, vector<8x32xf32>
    tpu.vector_store %arg39[%160, %c64_62], %154 {strides = array<i32>} : memref<64x128xf32, #tpu.memory_space<vmem>>, vector<8x32xf32>,
    %162 = arith.index_cast %126 : i32 to index
    %c96_63 = arith.constant 96 : index
    %163 = vector.load %arg39[%162, %c96_63] : memref<64x128xf32, #tpu.memory_space<vmem>>, vector<8x32xf32>
    tpu.vector_store %arg39[%162, %c96_63], %155 {strides = array<i32>} : memref<64x128xf32, #tpu.memory_space<vmem>>, vector<8x32xf32>,
    %c2_i32 = arith.constant 2 : i32
    %c8_i32_64 = arith.constant 8 : i32
    %164 = arith.muli %c2_i32, %c8_i32_64 : i32
    %165 = tpu.assume_multiple %164, 8 : i32
    %c7_i32_65 = arith.constant 7 : i32
    %166 = arith.subi %c7_i32_65, %c2_i32 : i32
    %c8_i32_66 = arith.constant 8 : i32
    %167 = arith.muli %166, %c8_i32_66 : i32
    %168 = tpu.assume_multiple %167, 8 : i32
    %169 = arith.index_cast %165 : i32 to index
    %c0_67 = arith.constant 0 : index
    %170 = vector.load %arg36[%169, %c0_67] : memref<64x192xf32, #tpu.memory_space<vmem>>, vector<8x192xf32>
    %cst_68 = arith.constant dense<0.000000e+00> : vector<8x192xf32>
    %171 = tpu.matmul %114, %28, %cst_68 {dimension_numbers = #tpu.dot_dimension_numbers<[1], [0], [0], [1], [0, 0, 1, 1], [], []>} : vector<8x64xf32>, vector<64x192xf32>, vector<8x192xf32> -> vector<8x192xf32>
    %172 = vector.extract_strided_slice %170 {offsets = [0, 0], sizes = [8, 128], strides = [1, 1]} : vector<8x192xf32> to vector<8x128xf32>
    %173 = vector.extract_strided_slice %171 {offsets = [0, 0], sizes = [8, 128], strides = [1, 1]} : vector<8x192xf32> to vector<8x128xf32>
    %174 = arith.addf %172, %173 : vector<8x128xf32>
    %175 = arith.negf %174 : vector<8x128xf32>
    %176 = math.exp %175 : vector<8x128xf32>
    %cst_69 = arith.constant 1.000000e+00 : f32
    %177 = vector.broadcast %cst_69 : f32 to vector<8x128xf32>
    %178 = arith.addf %177, %176 : vector<8x128xf32>
    %179 = arith.divf %177, %178 : vector<8x128xf32>
    %180 = vector.extract_strided_slice %179 {offsets = [0, 0], sizes = [8, 64], strides = [1, 1]} : vector<8x128xf32> to vector<8x64xf32>
    %181 = vector.extract_strided_slice %179 {offsets = [0, 64], sizes = [8, 64], strides = [1, 1]} : vector<8x128xf32> to vector<8x64xf32>
    %182 = vector.extract_strided_slice %170 {offsets = [0, 128], sizes = [8, 64], strides = [1, 1]} : vector<8x192xf32> to vector<8x64xf32>
    %183 = vector.extract_strided_slice %171 {offsets = [0, 128], sizes = [8, 64], strides = [1, 1]} : vector<8x192xf32> to vector<8x64xf32>
    %184 = arith.addf %183, %31 : vector<8x64xf32>
    %185 = arith.mulf %180, %184 : vector<8x64xf32>
    %186 = arith.addf %182, %185 : vector<8x64xf32>
    %187 = math.tanh %186 : vector<8x64xf32>
    %cst_70 = arith.constant 1.000000e+00 : f32
    %188 = vector.broadcast %cst_70 : f32 to vector<8x64xf32>
    %189 = arith.subf %188, %181 : vector<8x64xf32>
    %190 = arith.mulf %189, %187 : vector<8x64xf32>
    %191 = arith.mulf %181, %114 : vector<8x64xf32>
    %192 = arith.addf %190, %191 : vector<8x64xf32>
    %193 = vector.extract_strided_slice %192 {offsets = [0, 0], sizes = [8, 32], strides = [1, 1]} : vector<8x64xf32> to vector<8x32xf32>
    %194 = vector.extract_strided_slice %192 {offsets = [0, 32], sizes = [8, 32], strides = [1, 1]} : vector<8x64xf32> to vector<8x32xf32>
    %195 = arith.index_cast %165 : i32 to index
    %c0_71 = arith.constant 0 : index
    %196 = vector.load %arg38[%195, %c0_71] : memref<64x128xf32, #tpu.memory_space<vmem>>, vector<8x32xf32>
    tpu.vector_store %arg38[%195, %c0_71], %193 {strides = array<i32>} : memref<64x128xf32, #tpu.memory_space<vmem>>, vector<8x32xf32>,
    %197 = arith.index_cast %168 : i32 to index
    %c32_72 = arith.constant 32 : index
    %198 = vector.load %arg38[%197, %c32_72] : memref<64x128xf32, #tpu.memory_space<vmem>>, vector<8x32xf32>
    tpu.vector_store %arg38[%197, %c32_72], %194 {strides = array<i32>} : memref<64x128xf32, #tpu.memory_space<vmem>>, vector<8x32xf32>,
    %199 = arith.index_cast %168 : i32 to index
    %c64_73 = arith.constant 64 : index
    %200 = vector.load %arg38[%199, %c64_73] : memref<64x128xf32, #tpu.memory_space<vmem>>, vector<8x32xf32>
    tpu.vector_store %arg38[%199, %c64_73], %193 {strides = array<i32>} : memref<64x128xf32, #tpu.memory_space<vmem>>, vector<8x32xf32>,
    %201 = arith.index_cast %165 : i32 to index
    %c96_74 = arith.constant 96 : index
    %202 = vector.load %arg38[%201, %c96_74] : memref<64x128xf32, #tpu.memory_space<vmem>>, vector<8x32xf32>
    tpu.vector_store %arg38[%201, %c96_74], %194 {strides = array<i32>} : memref<64x128xf32, #tpu.memory_space<vmem>>, vector<8x32xf32>,
    %c8_i32_75 = arith.constant 8 : i32
    %203 = arith.muli %c2_i32, %c8_i32_75 : i32
    %204 = tpu.assume_multiple %203, 8 : i32
    %c7_i32_76 = arith.constant 7 : i32
    %205 = arith.subi %c7_i32_76, %c2_i32 : i32
    %c8_i32_77 = arith.constant 8 : i32
    %206 = arith.muli %205, %c8_i32_77 : i32
    %207 = tpu.assume_multiple %206, 8 : i32
    %208 = arith.index_cast %204 : i32 to index
    %c0_78 = arith.constant 0 : index
    %209 = vector.load %arg37[%208, %c0_78] : memref<64x192xf32, #tpu.memory_space<vmem>>, vector<8x192xf32>
    %cst_79 = arith.constant dense<0.000000e+00> : vector<8x192xf32>
    %210 = tpu.matmul %153, %38, %cst_79 {dimension_numbers = #tpu.dot_dimension_numbers<[1], [0], [0], [1], [0, 0, 1, 1], [], []>} : vector<8x64xf32>, vector<64x192xf32>, vector<8x192xf32> -> vector<8x192xf32>
    %211 = vector.extract_strided_slice %209 {offsets = [0, 0], sizes = [8, 128], strides = [1, 1]} : vector<8x192xf32> to vector<8x128xf32>
    %212 = vector.extract_strided_slice %210 {offsets = [0, 0], sizes = [8, 128], strides = [1, 1]} : vector<8x192xf32> to vector<8x128xf32>
    %213 = arith.addf %211, %212 : vector<8x128xf32>
    %214 = arith.negf %213 : vector<8x128xf32>
    %215 = math.exp %214 : vector<8x128xf32>
    %cst_80 = arith.constant 1.000000e+00 : f32
    %216 = vector.broadcast %cst_80 : f32 to vector<8x128xf32>
    %217 = arith.addf %216, %215 : vector<8x128xf32>
    %218 = arith.divf %216, %217 : vector<8x128xf32>
    %219 = vector.extract_strided_slice %218 {offsets = [0, 0], sizes = [8, 64], strides = [1, 1]} : vector<8x128xf32> to vector<8x64xf32>
    %220 = vector.extract_strided_slice %218 {offsets = [0, 64], sizes = [8, 64], strides = [1, 1]} : vector<8x128xf32> to vector<8x64xf32>
    %221 = vector.extract_strided_slice %209 {offsets = [0, 128], sizes = [8, 64], strides = [1, 1]} : vector<8x192xf32> to vector<8x64xf32>
    %222 = vector.extract_strided_slice %210 {offsets = [0, 128], sizes = [8, 64], strides = [1, 1]} : vector<8x192xf32> to vector<8x64xf32>
    %223 = arith.addf %222, %41 : vector<8x64xf32>
    %224 = arith.mulf %219, %223 : vector<8x64xf32>
    %225 = arith.addf %221, %224 : vector<8x64xf32>
    %226 = math.tanh %225 : vector<8x64xf32>
    %cst_81 = arith.constant 1.000000e+00 : f32
    %227 = vector.broadcast %cst_81 : f32 to vector<8x64xf32>
    %228 = arith.subf %227, %220 : vector<8x64xf32>
    %229 = arith.mulf %228, %226 : vector<8x64xf32>
    %230 = arith.mulf %220, %153 : vector<8x64xf32>
    %231 = arith.addf %229, %230 : vector<8x64xf32>
    %232 = vector.extract_strided_slice %231 {offsets = [0, 0], sizes = [8, 32], strides = [1, 1]} : vector<8x64xf32> to vector<8x32xf32>
    %233 = vector.extract_strided_slice %231 {offsets = [0, 32], sizes = [8, 32], strides = [1, 1]} : vector<8x64xf32> to vector<8x32xf32>
    %234 = arith.index_cast %204 : i32 to index
    %c0_82 = arith.constant 0 : index
    %235 = vector.load %arg39[%234, %c0_82] : memref<64x128xf32, #tpu.memory_space<vmem>>, vector<8x32xf32>
    tpu.vector_store %arg39[%234, %c0_82], %232 {strides = array<i32>} : memref<64x128xf32, #tpu.memory_space<vmem>>, vector<8x32xf32>,
    %236 = arith.index_cast %207 : i32 to index
    %c32_83 = arith.constant 32 : index
    %237 = vector.load %arg39[%236, %c32_83] : memref<64x128xf32, #tpu.memory_space<vmem>>, vector<8x32xf32>
    tpu.vector_store %arg39[%236, %c32_83], %233 {strides = array<i32>} : memref<64x128xf32, #tpu.memory_space<vmem>>, vector<8x32xf32>,
    %238 = arith.index_cast %207 : i32 to index
    %c64_84 = arith.constant 64 : index
    %239 = vector.load %arg39[%238, %c64_84] : memref<64x128xf32, #tpu.memory_space<vmem>>, vector<8x32xf32>
    tpu.vector_store %arg39[%238, %c64_84], %232 {strides = array<i32>} : memref<64x128xf32, #tpu.memory_space<vmem>>, vector<8x32xf32>,
    %240 = arith.index_cast %204 : i32 to index
    %c96_85 = arith.constant 96 : index
    %241 = vector.load %arg39[%240, %c96_85] : memref<64x128xf32, #tpu.memory_space<vmem>>, vector<8x32xf32>
    tpu.vector_store %arg39[%240, %c96_85], %233 {strides = array<i32>} : memref<64x128xf32, #tpu.memory_space<vmem>>, vector<8x32xf32>,
    %c3_i32 = arith.constant 3 : i32
    %c8_i32_86 = arith.constant 8 : i32
    %242 = arith.muli %c3_i32, %c8_i32_86 : i32
    %243 = tpu.assume_multiple %242, 8 : i32
    %c7_i32_87 = arith.constant 7 : i32
    %244 = arith.subi %c7_i32_87, %c3_i32 : i32
    %c8_i32_88 = arith.constant 8 : i32
    %245 = arith.muli %244, %c8_i32_88 : i32
    %246 = tpu.assume_multiple %245, 8 : i32
    %247 = arith.index_cast %243 : i32 to index
    %c0_89 = arith.constant 0 : index
    %248 = vector.load %arg36[%247, %c0_89] : memref<64x192xf32, #tpu.memory_space<vmem>>, vector<8x192xf32>
    %cst_90 = arith.constant dense<0.000000e+00> : vector<8x192xf32>
    %249 = tpu.matmul %192, %28, %cst_90 {dimension_numbers = #tpu.dot_dimension_numbers<[1], [0], [0], [1], [0, 0, 1, 1], [], []>} : vector<8x64xf32>, vector<64x192xf32>, vector<8x192xf32> -> vector<8x192xf32>
    %250 = vector.extract_strided_slice %248 {offsets = [0, 0], sizes = [8, 128], strides = [1, 1]} : vector<8x192xf32> to vector<8x128xf32>
    %251 = vector.extract_strided_slice %249 {offsets = [0, 0], sizes = [8, 128], strides = [1, 1]} : vector<8x192xf32> to vector<8x128xf32>
    %252 = arith.addf %250, %251 : vector<8x128xf32>
    %253 = arith.negf %252 : vector<8x128xf32>
    %254 = math.exp %253 : vector<8x128xf32>
    %cst_91 = arith.constant 1.000000e+00 : f32
    %255 = vector.broadcast %cst_91 : f32 to vector<8x128xf32>
    %256 = arith.addf %255, %254 : vector<8x128xf32>
    %257 = arith.divf %255, %256 : vector<8x128xf32>
    %258 = vector.extract_strided_slice %257 {offsets = [0, 0], sizes = [8, 64], strides = [1, 1]} : vector<8x128xf32> to vector<8x64xf32>
    %259 = vector.extract_strided_slice %257 {offsets = [0, 64], sizes = [8, 64], strides = [1, 1]} : vector<8x128xf32> to vector<8x64xf32>
    %260 = vector.extract_strided_slice %248 {offsets = [0, 128], sizes = [8, 64], strides = [1, 1]} : vector<8x192xf32> to vector<8x64xf32>
    %261 = vector.extract_strided_slice %249 {offsets = [0, 128], sizes = [8, 64], strides = [1, 1]} : vector<8x192xf32> to vector<8x64xf32>
    %262 = arith.addf %261, %31 : vector<8x64xf32>
    %263 = arith.mulf %258, %262 : vector<8x64xf32>
    %264 = arith.addf %260, %263 : vector<8x64xf32>
    %265 = math.tanh %264 : vector<8x64xf32>
    %cst_92 = arith.constant 1.000000e+00 : f32
    %266 = vector.broadcast %cst_92 : f32 to vector<8x64xf32>
    %267 = arith.subf %266, %259 : vector<8x64xf32>
    %268 = arith.mulf %267, %265 : vector<8x64xf32>
    %269 = arith.mulf %259, %192 : vector<8x64xf32>
    %270 = arith.addf %268, %269 : vector<8x64xf32>
    %271 = vector.extract_strided_slice %270 {offsets = [0, 0], sizes = [8, 32], strides = [1, 1]} : vector<8x64xf32> to vector<8x32xf32>
    %272 = vector.extract_strided_slice %270 {offsets = [0, 32], sizes = [8, 32], strides = [1, 1]} : vector<8x64xf32> to vector<8x32xf32>
    %273 = arith.index_cast %243 : i32 to index
    %c0_93 = arith.constant 0 : index
    %274 = vector.load %arg38[%273, %c0_93] : memref<64x128xf32, #tpu.memory_space<vmem>>, vector<8x32xf32>
    tpu.vector_store %arg38[%273, %c0_93], %271 {strides = array<i32>} : memref<64x128xf32, #tpu.memory_space<vmem>>, vector<8x32xf32>,
    %275 = arith.index_cast %246 : i32 to index
    %c32_94 = arith.constant 32 : index
    %276 = vector.load %arg38[%275, %c32_94] : memref<64x128xf32, #tpu.memory_space<vmem>>, vector<8x32xf32>
    tpu.vector_store %arg38[%275, %c32_94], %272 {strides = array<i32>} : memref<64x128xf32, #tpu.memory_space<vmem>>, vector<8x32xf32>,
    %277 = arith.index_cast %246 : i32 to index
    %c64_95 = arith.constant 64 : index
    %278 = vector.load %arg38[%277, %c64_95] : memref<64x128xf32, #tpu.memory_space<vmem>>, vector<8x32xf32>
    tpu.vector_store %arg38[%277, %c64_95], %271 {strides = array<i32>} : memref<64x128xf32, #tpu.memory_space<vmem>>, vector<8x32xf32>,
    %279 = arith.index_cast %243 : i32 to index
    %c96_96 = arith.constant 96 : index
    %280 = vector.load %arg38[%279, %c96_96] : memref<64x128xf32, #tpu.memory_space<vmem>>, vector<8x32xf32>
    tpu.vector_store %arg38[%279, %c96_96], %272 {strides = array<i32>} : memref<64x128xf32, #tpu.memory_space<vmem>>, vector<8x32xf32>,
    %c8_i32_97 = arith.constant 8 : i32
    %281 = arith.muli %c3_i32, %c8_i32_97 : i32
    %282 = tpu.assume_multiple %281, 8 : i32
    %c7_i32_98 = arith.constant 7 : i32
    %283 = arith.subi %c7_i32_98, %c3_i32 : i32
    %c8_i32_99 = arith.constant 8 : i32
    %284 = arith.muli %283, %c8_i32_99 : i32
    %285 = tpu.assume_multiple %284, 8 : i32
    %286 = arith.index_cast %282 : i32 to index
    %c0_100 = arith.constant 0 : index
    %287 = vector.load %arg37[%286, %c0_100] : memref<64x192xf32, #tpu.memory_space<vmem>>, vector<8x192xf32>
    %cst_101 = arith.constant dense<0.000000e+00> : vector<8x192xf32>
    %288 = tpu.matmul %231, %38, %cst_101 {dimension_numbers = #tpu.dot_dimension_numbers<[1], [0], [0], [1], [0, 0, 1, 1], [], []>} : vector<8x64xf32>, vector<64x192xf32>, vector<8x192xf32> -> vector<8x192xf32>
    %289 = vector.extract_strided_slice %287 {offsets = [0, 0], sizes = [8, 128], strides = [1, 1]} : vector<8x192xf32> to vector<8x128xf32>
    %290 = vector.extract_strided_slice %288 {offsets = [0, 0], sizes = [8, 128], strides = [1, 1]} : vector<8x192xf32> to vector<8x128xf32>
    %291 = arith.addf %289, %290 : vector<8x128xf32>
    %292 = arith.negf %291 : vector<8x128xf32>
    %293 = math.exp %292 : vector<8x128xf32>
    %cst_102 = arith.constant 1.000000e+00 : f32
    %294 = vector.broadcast %cst_102 : f32 to vector<8x128xf32>
    %295 = arith.addf %294, %293 : vector<8x128xf32>
    %296 = arith.divf %294, %295 : vector<8x128xf32>
    %297 = vector.extract_strided_slice %296 {offsets = [0, 0], sizes = [8, 64], strides = [1, 1]} : vector<8x128xf32> to vector<8x64xf32>
    %298 = vector.extract_strided_slice %296 {offsets = [0, 64], sizes = [8, 64], strides = [1, 1]} : vector<8x128xf32> to vector<8x64xf32>
    %299 = vector.extract_strided_slice %287 {offsets = [0, 128], sizes = [8, 64], strides = [1, 1]} : vector<8x192xf32> to vector<8x64xf32>
    %300 = vector.extract_strided_slice %288 {offsets = [0, 128], sizes = [8, 64], strides = [1, 1]} : vector<8x192xf32> to vector<8x64xf32>
    %301 = arith.addf %300, %41 : vector<8x64xf32>
    %302 = arith.mulf %297, %301 : vector<8x64xf32>
    %303 = arith.addf %299, %302 : vector<8x64xf32>
    %304 = math.tanh %303 : vector<8x64xf32>
    %cst_103 = arith.constant 1.000000e+00 : f32
    %305 = vector.broadcast %cst_103 : f32 to vector<8x64xf32>
    %306 = arith.subf %305, %298 : vector<8x64xf32>
    %307 = arith.mulf %306, %304 : vector<8x64xf32>
    %308 = arith.mulf %298, %231 : vector<8x64xf32>
    %309 = arith.addf %307, %308 : vector<8x64xf32>
    %310 = vector.extract_strided_slice %309 {offsets = [0, 0], sizes = [8, 32], strides = [1, 1]} : vector<8x64xf32> to vector<8x32xf32>
    %311 = vector.extract_strided_slice %309 {offsets = [0, 32], sizes = [8, 32], strides = [1, 1]} : vector<8x64xf32> to vector<8x32xf32>
    %312 = arith.index_cast %282 : i32 to index
    %c0_104 = arith.constant 0 : index
    %313 = vector.load %arg39[%312, %c0_104] : memref<64x128xf32, #tpu.memory_space<vmem>>, vector<8x32xf32>
    tpu.vector_store %arg39[%312, %c0_104], %310 {strides = array<i32>} : memref<64x128xf32, #tpu.memory_space<vmem>>, vector<8x32xf32>,
    %314 = arith.index_cast %285 : i32 to index
    %c32_105 = arith.constant 32 : index
    %315 = vector.load %arg39[%314, %c32_105] : memref<64x128xf32, #tpu.memory_space<vmem>>, vector<8x32xf32>
    tpu.vector_store %arg39[%314, %c32_105], %311 {strides = array<i32>} : memref<64x128xf32, #tpu.memory_space<vmem>>, vector<8x32xf32>,
    %316 = arith.index_cast %285 : i32 to index
    %c64_106 = arith.constant 64 : index
    %317 = vector.load %arg39[%316, %c64_106] : memref<64x128xf32, #tpu.memory_space<vmem>>, vector<8x32xf32>
    tpu.vector_store %arg39[%316, %c64_106], %310 {strides = array<i32>} : memref<64x128xf32, #tpu.memory_space<vmem>>, vector<8x32xf32>,
    %318 = arith.index_cast %282 : i32 to index
    %c96_107 = arith.constant 96 : index
    %319 = vector.load %arg39[%318, %c96_107] : memref<64x128xf32, #tpu.memory_space<vmem>>, vector<8x32xf32>
    tpu.vector_store %arg39[%318, %c96_107], %311 {strides = array<i32>} : memref<64x128xf32, #tpu.memory_space<vmem>>, vector<8x32xf32>,
    %c4_i32 = arith.constant 4 : i32
    %c8_i32_108 = arith.constant 8 : i32
    %320 = arith.muli %c4_i32, %c8_i32_108 : i32
    %321 = tpu.assume_multiple %320, 8 : i32
    %c7_i32_109 = arith.constant 7 : i32
    %322 = arith.subi %c7_i32_109, %c4_i32 : i32
    %c8_i32_110 = arith.constant 8 : i32
    %323 = arith.muli %322, %c8_i32_110 : i32
    %324 = tpu.assume_multiple %323, 8 : i32
    %325 = arith.index_cast %321 : i32 to index
    %c0_111 = arith.constant 0 : index
    %326 = vector.load %arg36[%325, %c0_111] : memref<64x192xf32, #tpu.memory_space<vmem>>, vector<8x192xf32>
    %cst_112 = arith.constant dense<0.000000e+00> : vector<8x192xf32>
    %327 = tpu.matmul %270, %28, %cst_112 {dimension_numbers = #tpu.dot_dimension_numbers<[1], [0], [0], [1], [0, 0, 1, 1], [], []>} : vector<8x64xf32>, vector<64x192xf32>, vector<8x192xf32> -> vector<8x192xf32>
    %328 = vector.extract_strided_slice %326 {offsets = [0, 0], sizes = [8, 128], strides = [1, 1]} : vector<8x192xf32> to vector<8x128xf32>
    %329 = vector.extract_strided_slice %327 {offsets = [0, 0], sizes = [8, 128], strides = [1, 1]} : vector<8x192xf32> to vector<8x128xf32>
    %330 = arith.addf %328, %329 : vector<8x128xf32>
    %331 = arith.negf %330 : vector<8x128xf32>
    %332 = math.exp %331 : vector<8x128xf32>
    %cst_113 = arith.constant 1.000000e+00 : f32
    %333 = vector.broadcast %cst_113 : f32 to vector<8x128xf32>
    %334 = arith.addf %333, %332 : vector<8x128xf32>
    %335 = arith.divf %333, %334 : vector<8x128xf32>
    %336 = vector.extract_strided_slice %335 {offsets = [0, 0], sizes = [8, 64], strides = [1, 1]} : vector<8x128xf32> to vector<8x64xf32>
    %337 = vector.extract_strided_slice %335 {offsets = [0, 64], sizes = [8, 64], strides = [1, 1]} : vector<8x128xf32> to vector<8x64xf32>
    %338 = vector.extract_strided_slice %326 {offsets = [0, 128], sizes = [8, 64], strides = [1, 1]} : vector<8x192xf32> to vector<8x64xf32>
    %339 = vector.extract_strided_slice %327 {offsets = [0, 128], sizes = [8, 64], strides = [1, 1]} : vector<8x192xf32> to vector<8x64xf32>
    %340 = arith.addf %339, %31 : vector<8x64xf32>
    %341 = arith.mulf %336, %340 : vector<8x64xf32>
    %342 = arith.addf %338, %341 : vector<8x64xf32>
    %343 = math.tanh %342 : vector<8x64xf32>
    %cst_114 = arith.constant 1.000000e+00 : f32
    %344 = vector.broadcast %cst_114 : f32 to vector<8x64xf32>
    %345 = arith.subf %344, %337 : vector<8x64xf32>
    %346 = arith.mulf %345, %343 : vector<8x64xf32>
    %347 = arith.mulf %337, %270 : vector<8x64xf32>
    %348 = arith.addf %346, %347 : vector<8x64xf32>
    %349 = vector.extract_strided_slice %348 {offsets = [0, 0], sizes = [8, 32], strides = [1, 1]} : vector<8x64xf32> to vector<8x32xf32>
    %350 = vector.extract_strided_slice %348 {offsets = [0, 32], sizes = [8, 32], strides = [1, 1]} : vector<8x64xf32> to vector<8x32xf32>
    %351 = arith.index_cast %321 : i32 to index
    %c0_115 = arith.constant 0 : index
    %352 = vector.load %arg38[%351, %c0_115] : memref<64x128xf32, #tpu.memory_space<vmem>>, vector<8x32xf32>
    tpu.vector_store %arg38[%351, %c0_115], %349 {strides = array<i32>} : memref<64x128xf32, #tpu.memory_space<vmem>>, vector<8x32xf32>,
    %353 = arith.index_cast %324 : i32 to index
    %c32_116 = arith.constant 32 : index
    %354 = vector.load %arg38[%353, %c32_116] : memref<64x128xf32, #tpu.memory_space<vmem>>, vector<8x32xf32>
    tpu.vector_store %arg38[%353, %c32_116], %350 {strides = array<i32>} : memref<64x128xf32, #tpu.memory_space<vmem>>, vector<8x32xf32>,
    %355 = arith.index_cast %324 : i32 to index
    %c64_117 = arith.constant 64 : index
    %356 = vector.load %arg38[%355, %c64_117] : memref<64x128xf32, #tpu.memory_space<vmem>>, vector<8x32xf32>
    tpu.vector_store %arg38[%355, %c64_117], %349 {strides = array<i32>} : memref<64x128xf32, #tpu.memory_space<vmem>>, vector<8x32xf32>,
    %357 = arith.index_cast %321 : i32 to index
    %c96_118 = arith.constant 96 : index
    %358 = vector.load %arg38[%357, %c96_118] : memref<64x128xf32, #tpu.memory_space<vmem>>, vector<8x32xf32>
    tpu.vector_store %arg38[%357, %c96_118], %350 {strides = array<i32>} : memref<64x128xf32, #tpu.memory_space<vmem>>, vector<8x32xf32>,
    %c8_i32_119 = arith.constant 8 : i32
    %359 = arith.muli %c4_i32, %c8_i32_119 : i32
    %360 = tpu.assume_multiple %359, 8 : i32
    %c7_i32_120 = arith.constant 7 : i32
    %361 = arith.subi %c7_i32_120, %c4_i32 : i32
    %c8_i32_121 = arith.constant 8 : i32
    %362 = arith.muli %361, %c8_i32_121 : i32
    %363 = tpu.assume_multiple %362, 8 : i32
    %364 = arith.index_cast %360 : i32 to index
    %c0_122 = arith.constant 0 : index
    %365 = vector.load %arg37[%364, %c0_122] : memref<64x192xf32, #tpu.memory_space<vmem>>, vector<8x192xf32>
    %cst_123 = arith.constant dense<0.000000e+00> : vector<8x192xf32>
    %366 = tpu.matmul %309, %38, %cst_123 {dimension_numbers = #tpu.dot_dimension_numbers<[1], [0], [0], [1], [0, 0, 1, 1], [], []>} : vector<8x64xf32>, vector<64x192xf32>, vector<8x192xf32> -> vector<8x192xf32>
    %367 = vector.extract_strided_slice %365 {offsets = [0, 0], sizes = [8, 128], strides = [1, 1]} : vector<8x192xf32> to vector<8x128xf32>
    %368 = vector.extract_strided_slice %366 {offsets = [0, 0], sizes = [8, 128], strides = [1, 1]} : vector<8x192xf32> to vector<8x128xf32>
    %369 = arith.addf %367, %368 : vector<8x128xf32>
    %370 = arith.negf %369 : vector<8x128xf32>
    %371 = math.exp %370 : vector<8x128xf32>
    %cst_124 = arith.constant 1.000000e+00 : f32
    %372 = vector.broadcast %cst_124 : f32 to vector<8x128xf32>
    %373 = arith.addf %372, %371 : vector<8x128xf32>
    %374 = arith.divf %372, %373 : vector<8x128xf32>
    %375 = vector.extract_strided_slice %374 {offsets = [0, 0], sizes = [8, 64], strides = [1, 1]} : vector<8x128xf32> to vector<8x64xf32>
    %376 = vector.extract_strided_slice %374 {offsets = [0, 64], sizes = [8, 64], strides = [1, 1]} : vector<8x128xf32> to vector<8x64xf32>
    %377 = vector.extract_strided_slice %365 {offsets = [0, 128], sizes = [8, 64], strides = [1, 1]} : vector<8x192xf32> to vector<8x64xf32>
    %378 = vector.extract_strided_slice %366 {offsets = [0, 128], sizes = [8, 64], strides = [1, 1]} : vector<8x192xf32> to vector<8x64xf32>
    %379 = arith.addf %378, %41 : vector<8x64xf32>
    %380 = arith.mulf %375, %379 : vector<8x64xf32>
    %381 = arith.addf %377, %380 : vector<8x64xf32>
    %382 = math.tanh %381 : vector<8x64xf32>
    %cst_125 = arith.constant 1.000000e+00 : f32
    %383 = vector.broadcast %cst_125 : f32 to vector<8x64xf32>
    %384 = arith.subf %383, %376 : vector<8x64xf32>
    %385 = arith.mulf %384, %382 : vector<8x64xf32>
    %386 = arith.mulf %376, %309 : vector<8x64xf32>
    %387 = arith.addf %385, %386 : vector<8x64xf32>
    %388 = vector.extract_strided_slice %387 {offsets = [0, 0], sizes = [8, 32], strides = [1, 1]} : vector<8x64xf32> to vector<8x32xf32>
    %389 = vector.extract_strided_slice %387 {offsets = [0, 32], sizes = [8, 32], strides = [1, 1]} : vector<8x64xf32> to vector<8x32xf32>
    %390 = arith.index_cast %360 : i32 to index
    %c0_126 = arith.constant 0 : index
    %391 = vector.load %arg39[%390, %c0_126] : memref<64x128xf32, #tpu.memory_space<vmem>>, vector<8x32xf32>
    tpu.vector_store %arg39[%390, %c0_126], %388 {strides = array<i32>} : memref<64x128xf32, #tpu.memory_space<vmem>>, vector<8x32xf32>,
    %392 = arith.index_cast %363 : i32 to index
    %c32_127 = arith.constant 32 : index
    %393 = vector.load %arg39[%392, %c32_127] : memref<64x128xf32, #tpu.memory_space<vmem>>, vector<8x32xf32>
    tpu.vector_store %arg39[%392, %c32_127], %389 {strides = array<i32>} : memref<64x128xf32, #tpu.memory_space<vmem>>, vector<8x32xf32>,
    %394 = arith.index_cast %363 : i32 to index
    %c64_128 = arith.constant 64 : index
    %395 = vector.load %arg39[%394, %c64_128] : memref<64x128xf32, #tpu.memory_space<vmem>>, vector<8x32xf32>
    tpu.vector_store %arg39[%394, %c64_128], %388 {strides = array<i32>} : memref<64x128xf32, #tpu.memory_space<vmem>>, vector<8x32xf32>,
    %396 = arith.index_cast %360 : i32 to index
    %c96_129 = arith.constant 96 : index
    %397 = vector.load %arg39[%396, %c96_129] : memref<64x128xf32, #tpu.memory_space<vmem>>, vector<8x32xf32>
    tpu.vector_store %arg39[%396, %c96_129], %389 {strides = array<i32>} : memref<64x128xf32, #tpu.memory_space<vmem>>, vector<8x32xf32>,
    %c5_i32 = arith.constant 5 : i32
    %c8_i32_130 = arith.constant 8 : i32
    %398 = arith.muli %c5_i32, %c8_i32_130 : i32
    %399 = tpu.assume_multiple %398, 8 : i32
    %c7_i32_131 = arith.constant 7 : i32
    %400 = arith.subi %c7_i32_131, %c5_i32 : i32
    %c8_i32_132 = arith.constant 8 : i32
    %401 = arith.muli %400, %c8_i32_132 : i32
    %402 = tpu.assume_multiple %401, 8 : i32
    %403 = arith.index_cast %399 : i32 to index
    %c0_133 = arith.constant 0 : index
    %404 = vector.load %arg36[%403, %c0_133] : memref<64x192xf32, #tpu.memory_space<vmem>>, vector<8x192xf32>
    %cst_134 = arith.constant dense<0.000000e+00> : vector<8x192xf32>
    %405 = tpu.matmul %348, %28, %cst_134 {dimension_numbers = #tpu.dot_dimension_numbers<[1], [0], [0], [1], [0, 0, 1, 1], [], []>} : vector<8x64xf32>, vector<64x192xf32>, vector<8x192xf32> -> vector<8x192xf32>
    %406 = vector.extract_strided_slice %404 {offsets = [0, 0], sizes = [8, 128], strides = [1, 1]} : vector<8x192xf32> to vector<8x128xf32>
    %407 = vector.extract_strided_slice %405 {offsets = [0, 0], sizes = [8, 128], strides = [1, 1]} : vector<8x192xf32> to vector<8x128xf32>
    %408 = arith.addf %406, %407 : vector<8x128xf32>
    %409 = arith.negf %408 : vector<8x128xf32>
    %410 = math.exp %409 : vector<8x128xf32>
    %cst_135 = arith.constant 1.000000e+00 : f32
    %411 = vector.broadcast %cst_135 : f32 to vector<8x128xf32>
    %412 = arith.addf %411, %410 : vector<8x128xf32>
    %413 = arith.divf %411, %412 : vector<8x128xf32>
    %414 = vector.extract_strided_slice %413 {offsets = [0, 0], sizes = [8, 64], strides = [1, 1]} : vector<8x128xf32> to vector<8x64xf32>
    %415 = vector.extract_strided_slice %413 {offsets = [0, 64], sizes = [8, 64], strides = [1, 1]} : vector<8x128xf32> to vector<8x64xf32>
    %416 = vector.extract_strided_slice %404 {offsets = [0, 128], sizes = [8, 64], strides = [1, 1]} : vector<8x192xf32> to vector<8x64xf32>
    %417 = vector.extract_strided_slice %405 {offsets = [0, 128], sizes = [8, 64], strides = [1, 1]} : vector<8x192xf32> to vector<8x64xf32>
    %418 = arith.addf %417, %31 : vector<8x64xf32>
    %419 = arith.mulf %414, %418 : vector<8x64xf32>
    %420 = arith.addf %416, %419 : vector<8x64xf32>
    %421 = math.tanh %420 : vector<8x64xf32>
    %cst_136 = arith.constant 1.000000e+00 : f32
    %422 = vector.broadcast %cst_136 : f32 to vector<8x64xf32>
    %423 = arith.subf %422, %415 : vector<8x64xf32>
    %424 = arith.mulf %423, %421 : vector<8x64xf32>
    %425 = arith.mulf %415, %348 : vector<8x64xf32>
    %426 = arith.addf %424, %425 : vector<8x64xf32>
    %427 = vector.extract_strided_slice %426 {offsets = [0, 0], sizes = [8, 32], strides = [1, 1]} : vector<8x64xf32> to vector<8x32xf32>
    %428 = vector.extract_strided_slice %426 {offsets = [0, 32], sizes = [8, 32], strides = [1, 1]} : vector<8x64xf32> to vector<8x32xf32>
    %429 = arith.index_cast %399 : i32 to index
    %c0_137 = arith.constant 0 : index
    %430 = vector.load %arg38[%429, %c0_137] : memref<64x128xf32, #tpu.memory_space<vmem>>, vector<8x32xf32>
    tpu.vector_store %arg38[%429, %c0_137], %427 {strides = array<i32>} : memref<64x128xf32, #tpu.memory_space<vmem>>, vector<8x32xf32>,
    %431 = arith.index_cast %402 : i32 to index
    %c32_138 = arith.constant 32 : index
    %432 = vector.load %arg38[%431, %c32_138] : memref<64x128xf32, #tpu.memory_space<vmem>>, vector<8x32xf32>
    tpu.vector_store %arg38[%431, %c32_138], %428 {strides = array<i32>} : memref<64x128xf32, #tpu.memory_space<vmem>>, vector<8x32xf32>,
    %433 = arith.index_cast %402 : i32 to index
    %c64_139 = arith.constant 64 : index
    %434 = vector.load %arg38[%433, %c64_139] : memref<64x128xf32, #tpu.memory_space<vmem>>, vector<8x32xf32>
    tpu.vector_store %arg38[%433, %c64_139], %427 {strides = array<i32>} : memref<64x128xf32, #tpu.memory_space<vmem>>, vector<8x32xf32>,
    %435 = arith.index_cast %399 : i32 to index
    %c96_140 = arith.constant 96 : index
    %436 = vector.load %arg38[%435, %c96_140] : memref<64x128xf32, #tpu.memory_space<vmem>>, vector<8x32xf32>
    tpu.vector_store %arg38[%435, %c96_140], %428 {strides = array<i32>} : memref<64x128xf32, #tpu.memory_space<vmem>>, vector<8x32xf32>,
    %c8_i32_141 = arith.constant 8 : i32
    %437 = arith.muli %c5_i32, %c8_i32_141 : i32
    %438 = tpu.assume_multiple %437, 8 : i32
    %c7_i32_142 = arith.constant 7 : i32
    %439 = arith.subi %c7_i32_142, %c5_i32 : i32
    %c8_i32_143 = arith.constant 8 : i32
    %440 = arith.muli %439, %c8_i32_143 : i32
    %441 = tpu.assume_multiple %440, 8 : i32
    %442 = arith.index_cast %438 : i32 to index
    %c0_144 = arith.constant 0 : index
    %443 = vector.load %arg37[%442, %c0_144] : memref<64x192xf32, #tpu.memory_space<vmem>>, vector<8x192xf32>
    %cst_145 = arith.constant dense<0.000000e+00> : vector<8x192xf32>
    %444 = tpu.matmul %387, %38, %cst_145 {dimension_numbers = #tpu.dot_dimension_numbers<[1], [0], [0], [1], [0, 0, 1, 1], [], []>} : vector<8x64xf32>, vector<64x192xf32>, vector<8x192xf32> -> vector<8x192xf32>
    %445 = vector.extract_strided_slice %443 {offsets = [0, 0], sizes = [8, 128], strides = [1, 1]} : vector<8x192xf32> to vector<8x128xf32>
    %446 = vector.extract_strided_slice %444 {offsets = [0, 0], sizes = [8, 128], strides = [1, 1]} : vector<8x192xf32> to vector<8x128xf32>
    %447 = arith.addf %445, %446 : vector<8x128xf32>
    %448 = arith.negf %447 : vector<8x128xf32>
    %449 = math.exp %448 : vector<8x128xf32>
    %cst_146 = arith.constant 1.000000e+00 : f32
    %450 = vector.broadcast %cst_146 : f32 to vector<8x128xf32>
    %451 = arith.addf %450, %449 : vector<8x128xf32>
    %452 = arith.divf %450, %451 : vector<8x128xf32>
    %453 = vector.extract_strided_slice %452 {offsets = [0, 0], sizes = [8, 64], strides = [1, 1]} : vector<8x128xf32> to vector<8x64xf32>
    %454 = vector.extract_strided_slice %452 {offsets = [0, 64], sizes = [8, 64], strides = [1, 1]} : vector<8x128xf32> to vector<8x64xf32>
    %455 = vector.extract_strided_slice %443 {offsets = [0, 128], sizes = [8, 64], strides = [1, 1]} : vector<8x192xf32> to vector<8x64xf32>
    %456 = vector.extract_strided_slice %444 {offsets = [0, 128], sizes = [8, 64], strides = [1, 1]} : vector<8x192xf32> to vector<8x64xf32>
    %457 = arith.addf %456, %41 : vector<8x64xf32>
    %458 = arith.mulf %453, %457 : vector<8x64xf32>
    %459 = arith.addf %455, %458 : vector<8x64xf32>
    %460 = math.tanh %459 : vector<8x64xf32>
    %cst_147 = arith.constant 1.000000e+00 : f32
    %461 = vector.broadcast %cst_147 : f32 to vector<8x64xf32>
    %462 = arith.subf %461, %454 : vector<8x64xf32>
    %463 = arith.mulf %462, %460 : vector<8x64xf32>
    %464 = arith.mulf %454, %387 : vector<8x64xf32>
    %465 = arith.addf %463, %464 : vector<8x64xf32>
    %466 = vector.extract_strided_slice %465 {offsets = [0, 0], sizes = [8, 32], strides = [1, 1]} : vector<8x64xf32> to vector<8x32xf32>
    %467 = vector.extract_strided_slice %465 {offsets = [0, 32], sizes = [8, 32], strides = [1, 1]} : vector<8x64xf32> to vector<8x32xf32>
    %468 = arith.index_cast %438 : i32 to index
    %c0_148 = arith.constant 0 : index
    %469 = vector.load %arg39[%468, %c0_148] : memref<64x128xf32, #tpu.memory_space<vmem>>, vector<8x32xf32>
    tpu.vector_store %arg39[%468, %c0_148], %466 {strides = array<i32>} : memref<64x128xf32, #tpu.memory_space<vmem>>, vector<8x32xf32>,
    %470 = arith.index_cast %441 : i32 to index
    %c32_149 = arith.constant 32 : index
    %471 = vector.load %arg39[%470, %c32_149] : memref<64x128xf32, #tpu.memory_space<vmem>>, vector<8x32xf32>
    tpu.vector_store %arg39[%470, %c32_149], %467 {strides = array<i32>} : memref<64x128xf32, #tpu.memory_space<vmem>>, vector<8x32xf32>,
    %472 = arith.index_cast %441 : i32 to index
    %c64_150 = arith.constant 64 : index
    %473 = vector.load %arg39[%472, %c64_150] : memref<64x128xf32, #tpu.memory_space<vmem>>, vector<8x32xf32>
    tpu.vector_store %arg39[%472, %c64_150], %466 {strides = array<i32>} : memref<64x128xf32, #tpu.memory_space<vmem>>, vector<8x32xf32>,
    %474 = arith.index_cast %438 : i32 to index
    %c96_151 = arith.constant 96 : index
    %475 = vector.load %arg39[%474, %c96_151] : memref<64x128xf32, #tpu.memory_space<vmem>>, vector<8x32xf32>
    tpu.vector_store %arg39[%474, %c96_151], %467 {strides = array<i32>} : memref<64x128xf32, #tpu.memory_space<vmem>>, vector<8x32xf32>,
    %c6_i32 = arith.constant 6 : i32
    %c8_i32_152 = arith.constant 8 : i32
    %476 = arith.muli %c6_i32, %c8_i32_152 : i32
    %477 = tpu.assume_multiple %476, 8 : i32
    %c7_i32_153 = arith.constant 7 : i32
    %478 = arith.subi %c7_i32_153, %c6_i32 : i32
    %c8_i32_154 = arith.constant 8 : i32
    %479 = arith.muli %478, %c8_i32_154 : i32
    %480 = tpu.assume_multiple %479, 8 : i32
    %481 = arith.index_cast %477 : i32 to index
    %c0_155 = arith.constant 0 : index
    %482 = vector.load %arg36[%481, %c0_155] : memref<64x192xf32, #tpu.memory_space<vmem>>, vector<8x192xf32>
    %cst_156 = arith.constant dense<0.000000e+00> : vector<8x192xf32>
    %483 = tpu.matmul %426, %28, %cst_156 {dimension_numbers = #tpu.dot_dimension_numbers<[1], [0], [0], [1], [0, 0, 1, 1], [], []>} : vector<8x64xf32>, vector<64x192xf32>, vector<8x192xf32> -> vector<8x192xf32>
    %484 = vector.extract_strided_slice %482 {offsets = [0, 0], sizes = [8, 128], strides = [1, 1]} : vector<8x192xf32> to vector<8x128xf32>
    %485 = vector.extract_strided_slice %483 {offsets = [0, 0], sizes = [8, 128], strides = [1, 1]} : vector<8x192xf32> to vector<8x128xf32>
    %486 = arith.addf %484, %485 : vector<8x128xf32>
    %487 = arith.negf %486 : vector<8x128xf32>
    %488 = math.exp %487 : vector<8x128xf32>
    %cst_157 = arith.constant 1.000000e+00 : f32
    %489 = vector.broadcast %cst_157 : f32 to vector<8x128xf32>
    %490 = arith.addf %489, %488 : vector<8x128xf32>
    %491 = arith.divf %489, %490 : vector<8x128xf32>
    %492 = vector.extract_strided_slice %491 {offsets = [0, 0], sizes = [8, 64], strides = [1, 1]} : vector<8x128xf32> to vector<8x64xf32>
    %493 = vector.extract_strided_slice %491 {offsets = [0, 64], sizes = [8, 64], strides = [1, 1]} : vector<8x128xf32> to vector<8x64xf32>
    %494 = vector.extract_strided_slice %482 {offsets = [0, 128], sizes = [8, 64], strides = [1, 1]} : vector<8x192xf32> to vector<8x64xf32>
    %495 = vector.extract_strided_slice %483 {offsets = [0, 128], sizes = [8, 64], strides = [1, 1]} : vector<8x192xf32> to vector<8x64xf32>
    %496 = arith.addf %495, %31 : vector<8x64xf32>
    %497 = arith.mulf %492, %496 : vector<8x64xf32>
    %498 = arith.addf %494, %497 : vector<8x64xf32>
    %499 = math.tanh %498 : vector<8x64xf32>
    %cst_158 = arith.constant 1.000000e+00 : f32
    %500 = vector.broadcast %cst_158 : f32 to vector<8x64xf32>
    %501 = arith.subf %500, %493 : vector<8x64xf32>
    %502 = arith.mulf %501, %499 : vector<8x64xf32>
    %503 = arith.mulf %493, %426 : vector<8x64xf32>
    %504 = arith.addf %502, %503 : vector<8x64xf32>
    %505 = vector.extract_strided_slice %504 {offsets = [0, 0], sizes = [8, 32], strides = [1, 1]} : vector<8x64xf32> to vector<8x32xf32>
    %506 = vector.extract_strided_slice %504 {offsets = [0, 32], sizes = [8, 32], strides = [1, 1]} : vector<8x64xf32> to vector<8x32xf32>
    %507 = arith.index_cast %477 : i32 to index
    %c0_159 = arith.constant 0 : index
    %508 = vector.load %arg38[%507, %c0_159] : memref<64x128xf32, #tpu.memory_space<vmem>>, vector<8x32xf32>
    tpu.vector_store %arg38[%507, %c0_159], %505 {strides = array<i32>} : memref<64x128xf32, #tpu.memory_space<vmem>>, vector<8x32xf32>,
    %509 = arith.index_cast %480 : i32 to index
    %c32_160 = arith.constant 32 : index
    %510 = vector.load %arg38[%509, %c32_160] : memref<64x128xf32, #tpu.memory_space<vmem>>, vector<8x32xf32>
    tpu.vector_store %arg38[%509, %c32_160], %506 {strides = array<i32>} : memref<64x128xf32, #tpu.memory_space<vmem>>, vector<8x32xf32>,
    %511 = arith.index_cast %480 : i32 to index
    %c64_161 = arith.constant 64 : index
    %512 = vector.load %arg38[%511, %c64_161] : memref<64x128xf32, #tpu.memory_space<vmem>>, vector<8x32xf32>
    tpu.vector_store %arg38[%511, %c64_161], %505 {strides = array<i32>} : memref<64x128xf32, #tpu.memory_space<vmem>>, vector<8x32xf32>,
    %513 = arith.index_cast %477 : i32 to index
    %c96_162 = arith.constant 96 : index
    %514 = vector.load %arg38[%513, %c96_162] : memref<64x128xf32, #tpu.memory_space<vmem>>, vector<8x32xf32>
    tpu.vector_store %arg38[%513, %c96_162], %506 {strides = array<i32>} : memref<64x128xf32, #tpu.memory_space<vmem>>, vector<8x32xf32>,
    %c8_i32_163 = arith.constant 8 : i32
    %515 = arith.muli %c6_i32, %c8_i32_163 : i32
    %516 = tpu.assume_multiple %515, 8 : i32
    %c7_i32_164 = arith.constant 7 : i32
    %517 = arith.subi %c7_i32_164, %c6_i32 : i32
    %c8_i32_165 = arith.constant 8 : i32
    %518 = arith.muli %517, %c8_i32_165 : i32
    %519 = tpu.assume_multiple %518, 8 : i32
    %520 = arith.index_cast %516 : i32 to index
    %c0_166 = arith.constant 0 : index
    %521 = vector.load %arg37[%520, %c0_166] : memref<64x192xf32, #tpu.memory_space<vmem>>, vector<8x192xf32>
    %cst_167 = arith.constant dense<0.000000e+00> : vector<8x192xf32>
    %522 = tpu.matmul %465, %38, %cst_167 {dimension_numbers = #tpu.dot_dimension_numbers<[1], [0], [0], [1], [0, 0, 1, 1], [], []>} : vector<8x64xf32>, vector<64x192xf32>, vector<8x192xf32> -> vector<8x192xf32>
    %523 = vector.extract_strided_slice %521 {offsets = [0, 0], sizes = [8, 128], strides = [1, 1]} : vector<8x192xf32> to vector<8x128xf32>
    %524 = vector.extract_strided_slice %522 {offsets = [0, 0], sizes = [8, 128], strides = [1, 1]} : vector<8x192xf32> to vector<8x128xf32>
    %525 = arith.addf %523, %524 : vector<8x128xf32>
    %526 = arith.negf %525 : vector<8x128xf32>
    %527 = math.exp %526 : vector<8x128xf32>
    %cst_168 = arith.constant 1.000000e+00 : f32
    %528 = vector.broadcast %cst_168 : f32 to vector<8x128xf32>
    %529 = arith.addf %528, %527 : vector<8x128xf32>
    %530 = arith.divf %528, %529 : vector<8x128xf32>
    %531 = vector.extract_strided_slice %530 {offsets = [0, 0], sizes = [8, 64], strides = [1, 1]} : vector<8x128xf32> to vector<8x64xf32>
    %532 = vector.extract_strided_slice %530 {offsets = [0, 64], sizes = [8, 64], strides = [1, 1]} : vector<8x128xf32> to vector<8x64xf32>
    %533 = vector.extract_strided_slice %521 {offsets = [0, 128], sizes = [8, 64], strides = [1, 1]} : vector<8x192xf32> to vector<8x64xf32>
    %534 = vector.extract_strided_slice %522 {offsets = [0, 128], sizes = [8, 64], strides = [1, 1]} : vector<8x192xf32> to vector<8x64xf32>
    %535 = arith.addf %534, %41 : vector<8x64xf32>
    %536 = arith.mulf %531, %535 : vector<8x64xf32>
    %537 = arith.addf %533, %536 : vector<8x64xf32>
    %538 = math.tanh %537 : vector<8x64xf32>
    %cst_169 = arith.constant 1.000000e+00 : f32
    %539 = vector.broadcast %cst_169 : f32 to vector<8x64xf32>
    %540 = arith.subf %539, %532 : vector<8x64xf32>
    %541 = arith.mulf %540, %538 : vector<8x64xf32>
    %542 = arith.mulf %532, %465 : vector<8x64xf32>
    %543 = arith.addf %541, %542 : vector<8x64xf32>
    %544 = vector.extract_strided_slice %543 {offsets = [0, 0], sizes = [8, 32], strides = [1, 1]} : vector<8x64xf32> to vector<8x32xf32>
    %545 = vector.extract_strided_slice %543 {offsets = [0, 32], sizes = [8, 32], strides = [1, 1]} : vector<8x64xf32> to vector<8x32xf32>
    %546 = arith.index_cast %516 : i32 to index
    %c0_170 = arith.constant 0 : index
    %547 = vector.load %arg39[%546, %c0_170] : memref<64x128xf32, #tpu.memory_space<vmem>>, vector<8x32xf32>
    tpu.vector_store %arg39[%546, %c0_170], %544 {strides = array<i32>} : memref<64x128xf32, #tpu.memory_space<vmem>>, vector<8x32xf32>,
    %548 = arith.index_cast %519 : i32 to index
    %c32_171 = arith.constant 32 : index
    %549 = vector.load %arg39[%548, %c32_171] : memref<64x128xf32, #tpu.memory_space<vmem>>, vector<8x32xf32>
    tpu.vector_store %arg39[%548, %c32_171], %545 {strides = array<i32>} : memref<64x128xf32, #tpu.memory_space<vmem>>, vector<8x32xf32>,
    %550 = arith.index_cast %519 : i32 to index
    %c64_172 = arith.constant 64 : index
    %551 = vector.load %arg39[%550, %c64_172] : memref<64x128xf32, #tpu.memory_space<vmem>>, vector<8x32xf32>
    tpu.vector_store %arg39[%550, %c64_172], %544 {strides = array<i32>} : memref<64x128xf32, #tpu.memory_space<vmem>>, vector<8x32xf32>,
    %552 = arith.index_cast %516 : i32 to index
    %c96_173 = arith.constant 96 : index
    %553 = vector.load %arg39[%552, %c96_173] : memref<64x128xf32, #tpu.memory_space<vmem>>, vector<8x32xf32>
    tpu.vector_store %arg39[%552, %c96_173], %545 {strides = array<i32>} : memref<64x128xf32, #tpu.memory_space<vmem>>, vector<8x32xf32>,
    %c7_i32_174 = arith.constant 7 : i32
    %c8_i32_175 = arith.constant 8 : i32
    %554 = arith.muli %c7_i32_174, %c8_i32_175 : i32
    %555 = tpu.assume_multiple %554, 8 : i32
    %c7_i32_176 = arith.constant 7 : i32
    %556 = arith.subi %c7_i32_176, %c7_i32_174 : i32
    %c8_i32_177 = arith.constant 8 : i32
    %557 = arith.muli %556, %c8_i32_177 : i32
    %558 = tpu.assume_multiple %557, 8 : i32
    %559 = arith.index_cast %555 : i32 to index
    %c0_178 = arith.constant 0 : index
    %560 = vector.load %arg36[%559, %c0_178] : memref<64x192xf32, #tpu.memory_space<vmem>>, vector<8x192xf32>
    %cst_179 = arith.constant dense<0.000000e+00> : vector<8x192xf32>
    %561 = tpu.matmul %504, %28, %cst_179 {dimension_numbers = #tpu.dot_dimension_numbers<[1], [0], [0], [1], [0, 0, 1, 1], [], []>} : vector<8x64xf32>, vector<64x192xf32>, vector<8x192xf32> -> vector<8x192xf32>
    %562 = vector.extract_strided_slice %560 {offsets = [0, 0], sizes = [8, 128], strides = [1, 1]} : vector<8x192xf32> to vector<8x128xf32>
    %563 = vector.extract_strided_slice %561 {offsets = [0, 0], sizes = [8, 128], strides = [1, 1]} : vector<8x192xf32> to vector<8x128xf32>
    %564 = arith.addf %562, %563 : vector<8x128xf32>
    %565 = arith.negf %564 : vector<8x128xf32>
    %566 = math.exp %565 : vector<8x128xf32>
    %cst_180 = arith.constant 1.000000e+00 : f32
    %567 = vector.broadcast %cst_180 : f32 to vector<8x128xf32>
    %568 = arith.addf %567, %566 : vector<8x128xf32>
    %569 = arith.divf %567, %568 : vector<8x128xf32>
    %570 = vector.extract_strided_slice %569 {offsets = [0, 0], sizes = [8, 64], strides = [1, 1]} : vector<8x128xf32> to vector<8x64xf32>
    %571 = vector.extract_strided_slice %569 {offsets = [0, 64], sizes = [8, 64], strides = [1, 1]} : vector<8x128xf32> to vector<8x64xf32>
    %572 = vector.extract_strided_slice %560 {offsets = [0, 128], sizes = [8, 64], strides = [1, 1]} : vector<8x192xf32> to vector<8x64xf32>
    %573 = vector.extract_strided_slice %561 {offsets = [0, 128], sizes = [8, 64], strides = [1, 1]} : vector<8x192xf32> to vector<8x64xf32>
    %574 = arith.addf %573, %31 : vector<8x64xf32>
    %575 = arith.mulf %570, %574 : vector<8x64xf32>
    %576 = arith.addf %572, %575 : vector<8x64xf32>
    %577 = math.tanh %576 : vector<8x64xf32>
    %cst_181 = arith.constant 1.000000e+00 : f32
    %578 = vector.broadcast %cst_181 : f32 to vector<8x64xf32>
    %579 = arith.subf %578, %571 : vector<8x64xf32>
    %580 = arith.mulf %579, %577 : vector<8x64xf32>
    %581 = arith.mulf %571, %504 : vector<8x64xf32>
    %582 = arith.addf %580, %581 : vector<8x64xf32>
    %583 = vector.extract_strided_slice %582 {offsets = [0, 0], sizes = [8, 32], strides = [1, 1]} : vector<8x64xf32> to vector<8x32xf32>
    %584 = vector.extract_strided_slice %582 {offsets = [0, 32], sizes = [8, 32], strides = [1, 1]} : vector<8x64xf32> to vector<8x32xf32>
    %585 = arith.index_cast %555 : i32 to index
    %c0_182 = arith.constant 0 : index
    %586 = vector.load %arg38[%585, %c0_182] : memref<64x128xf32, #tpu.memory_space<vmem>>, vector<8x32xf32>
    tpu.vector_store %arg38[%585, %c0_182], %583 {strides = array<i32>} : memref<64x128xf32, #tpu.memory_space<vmem>>, vector<8x32xf32>,
    %587 = arith.index_cast %558 : i32 to index
    %c32_183 = arith.constant 32 : index
    %588 = vector.load %arg38[%587, %c32_183] : memref<64x128xf32, #tpu.memory_space<vmem>>, vector<8x32xf32>
    tpu.vector_store %arg38[%587, %c32_183], %584 {strides = array<i32>} : memref<64x128xf32, #tpu.memory_space<vmem>>, vector<8x32xf32>,
    %589 = arith.index_cast %558 : i32 to index
    %c64_184 = arith.constant 64 : index
    %590 = vector.load %arg38[%589, %c64_184] : memref<64x128xf32, #tpu.memory_space<vmem>>, vector<8x32xf32>
    tpu.vector_store %arg38[%589, %c64_184], %583 {strides = array<i32>} : memref<64x128xf32, #tpu.memory_space<vmem>>, vector<8x32xf32>,
    %591 = arith.index_cast %555 : i32 to index
    %c96_185 = arith.constant 96 : index
    %592 = vector.load %arg38[%591, %c96_185] : memref<64x128xf32, #tpu.memory_space<vmem>>, vector<8x32xf32>
    tpu.vector_store %arg38[%591, %c96_185], %584 {strides = array<i32>} : memref<64x128xf32, #tpu.memory_space<vmem>>, vector<8x32xf32>,
    %c8_i32_186 = arith.constant 8 : i32
    %593 = arith.muli %c7_i32_174, %c8_i32_186 : i32
    %594 = tpu.assume_multiple %593, 8 : i32
    %c7_i32_187 = arith.constant 7 : i32
    %595 = arith.subi %c7_i32_187, %c7_i32_174 : i32
    %c8_i32_188 = arith.constant 8 : i32
    %596 = arith.muli %595, %c8_i32_188 : i32
    %597 = tpu.assume_multiple %596, 8 : i32
    %598 = arith.index_cast %594 : i32 to index
    %c0_189 = arith.constant 0 : index
    %599 = vector.load %arg37[%598, %c0_189] : memref<64x192xf32, #tpu.memory_space<vmem>>, vector<8x192xf32>
    %cst_190 = arith.constant dense<0.000000e+00> : vector<8x192xf32>
    %600 = tpu.matmul %543, %38, %cst_190 {dimension_numbers = #tpu.dot_dimension_numbers<[1], [0], [0], [1], [0, 0, 1, 1], [], []>} : vector<8x64xf32>, vector<64x192xf32>, vector<8x192xf32> -> vector<8x192xf32>
    %601 = vector.extract_strided_slice %599 {offsets = [0, 0], sizes = [8, 128], strides = [1, 1]} : vector<8x192xf32> to vector<8x128xf32>
    %602 = vector.extract_strided_slice %600 {offsets = [0, 0], sizes = [8, 128], strides = [1, 1]} : vector<8x192xf32> to vector<8x128xf32>
    %603 = arith.addf %601, %602 : vector<8x128xf32>
    %604 = arith.negf %603 : vector<8x128xf32>
    %605 = math.exp %604 : vector<8x128xf32>
    %cst_191 = arith.constant 1.000000e+00 : f32
    %606 = vector.broadcast %cst_191 : f32 to vector<8x128xf32>
    %607 = arith.addf %606, %605 : vector<8x128xf32>
    %608 = arith.divf %606, %607 : vector<8x128xf32>
    %609 = vector.extract_strided_slice %608 {offsets = [0, 0], sizes = [8, 64], strides = [1, 1]} : vector<8x128xf32> to vector<8x64xf32>
    %610 = vector.extract_strided_slice %608 {offsets = [0, 64], sizes = [8, 64], strides = [1, 1]} : vector<8x128xf32> to vector<8x64xf32>
    %611 = vector.extract_strided_slice %599 {offsets = [0, 128], sizes = [8, 64], strides = [1, 1]} : vector<8x192xf32> to vector<8x64xf32>
    %612 = vector.extract_strided_slice %600 {offsets = [0, 128], sizes = [8, 64], strides = [1, 1]} : vector<8x192xf32> to vector<8x64xf32>
    %613 = arith.addf %612, %41 : vector<8x64xf32>
    %614 = arith.mulf %609, %613 : vector<8x64xf32>
    %615 = arith.addf %611, %614 : vector<8x64xf32>
    %616 = math.tanh %615 : vector<8x64xf32>
    %cst_192 = arith.constant 1.000000e+00 : f32
    %617 = vector.broadcast %cst_192 : f32 to vector<8x64xf32>
    %618 = arith.subf %617, %610 : vector<8x64xf32>
    %619 = arith.mulf %618, %616 : vector<8x64xf32>
    %620 = arith.mulf %610, %543 : vector<8x64xf32>
    %621 = arith.addf %619, %620 : vector<8x64xf32>
    %622 = vector.extract_strided_slice %621 {offsets = [0, 0], sizes = [8, 32], strides = [1, 1]} : vector<8x64xf32> to vector<8x32xf32>
    %623 = vector.extract_strided_slice %621 {offsets = [0, 32], sizes = [8, 32], strides = [1, 1]} : vector<8x64xf32> to vector<8x32xf32>
    %624 = arith.index_cast %594 : i32 to index
    %c0_193 = arith.constant 0 : index
    %625 = vector.load %arg39[%624, %c0_193] : memref<64x128xf32, #tpu.memory_space<vmem>>, vector<8x32xf32>
    tpu.vector_store %arg39[%624, %c0_193], %622 {strides = array<i32>} : memref<64x128xf32, #tpu.memory_space<vmem>>, vector<8x32xf32>,
    %626 = arith.index_cast %597 : i32 to index
    %c32_194 = arith.constant 32 : index
    %627 = vector.load %arg39[%626, %c32_194] : memref<64x128xf32, #tpu.memory_space<vmem>>, vector<8x32xf32>
    tpu.vector_store %arg39[%626, %c32_194], %623 {strides = array<i32>} : memref<64x128xf32, #tpu.memory_space<vmem>>, vector<8x32xf32>,
    %628 = arith.index_cast %597 : i32 to index
    %c64_195 = arith.constant 64 : index
    %629 = vector.load %arg39[%628, %c64_195] : memref<64x128xf32, #tpu.memory_space<vmem>>, vector<8x32xf32>
    tpu.vector_store %arg39[%628, %c64_195], %622 {strides = array<i32>} : memref<64x128xf32, #tpu.memory_space<vmem>>, vector<8x32xf32>,
    %630 = arith.index_cast %594 : i32 to index
    %c96_196 = arith.constant 96 : index
    %631 = vector.load %arg39[%630, %c96_196] : memref<64x128xf32, #tpu.memory_space<vmem>>, vector<8x32xf32>
    tpu.vector_store %arg39[%630, %c96_196], %623 {strides = array<i32>} : memref<64x128xf32, #tpu.memory_space<vmem>>, vector<8x32xf32>,
    %c7_i32_197 = arith.constant 7 : i32
    %c0_198 = arith.constant 0 : index
    %c0_199 = arith.constant 0 : index
    %632 = vector.load %arg38[%c0_198, %c0_199] : memref<64x128xf32, #tpu.memory_space<vmem>>, vector<64x128xf32>
    %c0_200 = arith.constant 0 : index
    %c0_201 = arith.constant 0 : index
    %633 = vector.load %arg7[%c0_200, %c0_201] : memref<128x192xf32, #tpu.memory_space<vmem>>, vector<128x192xf32>
    %cst_202 = arith.constant dense<0.000000e+00> : vector<64x192xf32>
    %634 = tpu.matmul %632, %633, %cst_202 {dimension_numbers = #tpu.dot_dimension_numbers<[1], [0], [0], [1], [0, 0, 1, 1], [], []>} : vector<64x128xf32>, vector<128x192xf32>, vector<64x192xf32> -> vector<64x192xf32>
    %c0_203 = arith.constant 0 : index
    %c0_204 = arith.constant 0 : index
    %635 = vector.load %arg9[%c0_203, %c0_204] : memref<1x192xf32, #tpu.memory_space<vmem>>, vector<1x192xf32>
    %636 = vector.broadcast %635 : vector<1x192xf32> to vector<64x192xf32>
    %637 = arith.addf %634, %636 : vector<64x192xf32>
    %c0_205 = arith.constant 0 : index
    %c0_206 = arith.constant 0 : index
    %638 = vector.load %arg36[%c0_205, %c0_206] : memref<64x192xf32, #tpu.memory_space<vmem>>, vector<64x192xf32>
    tpu.vector_store %arg36[%c0_205, %c0_206], %637 {strides = array<i32>} : memref<64x192xf32, #tpu.memory_space<vmem>>, vector<64x192xf32>,
    %c0_207 = arith.constant 0 : index
    %c0_208 = arith.constant 0 : index
    %639 = vector.load %arg8[%c0_207, %c0_208] : memref<64x192xf32, #tpu.memory_space<vmem>>, vector<64x192xf32>
    %c0_209 = arith.constant 0 : index
    %c0_210 = arith.constant 0 : index
    %640 = vector.load %arg10[%c0_209, %c0_210] : memref<1x64xf32, #tpu.memory_space<vmem>>, vector<1x64xf32>
    %641 = vector.shape_cast %640 : vector<1x64xf32> to vector<1x64xf32>
    %642 = vector.broadcast %641 : vector<1x64xf32> to vector<8x64xf32>
    %c0_211 = arith.constant 0 : index
    %c0_212 = arith.constant 0 : index
    %643 = vector.load %arg39[%c0_211, %c0_212] : memref<64x128xf32, #tpu.memory_space<vmem>>, vector<64x128xf32>
    %c0_213 = arith.constant 0 : index
    %c0_214 = arith.constant 0 : index
    %644 = vector.load %arg15[%c0_213, %c0_214] : memref<128x192xf32, #tpu.memory_space<vmem>>, vector<128x192xf32>
    %cst_215 = arith.constant dense<0.000000e+00> : vector<64x192xf32>
    %645 = tpu.matmul %643, %644, %cst_215 {dimension_numbers = #tpu.dot_dimension_numbers<[1], [0], [0], [1], [0, 0, 1, 1], [], []>} : vector<64x128xf32>, vector<128x192xf32>, vector<64x192xf32> -> vector<64x192xf32>
    %c0_216 = arith.constant 0 : index
    %c0_217 = arith.constant 0 : index
    %646 = vector.load %arg17[%c0_216, %c0_217] : memref<1x192xf32, #tpu.memory_space<vmem>>, vector<1x192xf32>
    %647 = vector.broadcast %646 : vector<1x192xf32> to vector<64x192xf32>
    %648 = arith.addf %645, %647 : vector<64x192xf32>
    %c0_218 = arith.constant 0 : index
    %c0_219 = arith.constant 0 : index
    %649 = vector.load %arg37[%c0_218, %c0_219] : memref<64x192xf32, #tpu.memory_space<vmem>>, vector<64x192xf32>
    tpu.vector_store %arg37[%c0_218, %c0_219], %648 {strides = array<i32>} : memref<64x192xf32, #tpu.memory_space<vmem>>, vector<64x192xf32>,
    %c0_220 = arith.constant 0 : index
    %c0_221 = arith.constant 0 : index
    %650 = vector.load %arg16[%c0_220, %c0_221] : memref<64x192xf32, #tpu.memory_space<vmem>>, vector<64x192xf32>
    %c0_222 = arith.constant 0 : index
    %c0_223 = arith.constant 0 : index
    %651 = vector.load %arg18[%c0_222, %c0_223] : memref<1x64xf32, #tpu.memory_space<vmem>>, vector<1x64xf32>
    %652 = vector.shape_cast %651 : vector<1x64xf32> to vector<1x64xf32>
    %653 = vector.broadcast %652 : vector<1x64xf32> to vector<8x64xf32>
    %c0_224 = arith.constant 0 : index
    %c0_225 = arith.constant 0 : index
    %654 = vector.load %arg36[%c0_224, %c0_225] : memref<64x192xf32, #tpu.memory_space<vmem>>, vector<8x192xf32>
    %655 = vector.extract_strided_slice %654 {offsets = [0, 0], sizes = [8, 128], strides = [1, 1]} : vector<8x192xf32> to vector<8x128xf32>
    %656 = arith.negf %655 : vector<8x128xf32>
    %657 = math.exp %656 : vector<8x128xf32>
    %cst_226 = arith.constant 1.000000e+00 : f32
    %658 = vector.broadcast %cst_226 : f32 to vector<8x128xf32>
    %659 = arith.addf %658, %657 : vector<8x128xf32>
    %660 = arith.divf %658, %659 : vector<8x128xf32>
    %661 = vector.extract_strided_slice %660 {offsets = [0, 0], sizes = [8, 64], strides = [1, 1]} : vector<8x128xf32> to vector<8x64xf32>
    %662 = vector.extract_strided_slice %660 {offsets = [0, 64], sizes = [8, 64], strides = [1, 1]} : vector<8x128xf32> to vector<8x64xf32>
    %663 = vector.extract_strided_slice %654 {offsets = [0, 128], sizes = [8, 64], strides = [1, 1]} : vector<8x192xf32> to vector<8x64xf32>
    %664 = arith.mulf %661, %642 : vector<8x64xf32>
    %665 = arith.addf %663, %664 : vector<8x64xf32>
    %666 = math.tanh %665 : vector<8x64xf32>
    %cst_227 = arith.constant 1.000000e+00 : f32
    %667 = vector.broadcast %cst_227 : f32 to vector<8x64xf32>
    %668 = arith.subf %667, %662 : vector<8x64xf32>
    %669 = arith.mulf %668, %666 : vector<8x64xf32>
    %670 = vector.extract_strided_slice %669 {offsets = [0, 0], sizes = [8, 32], strides = [1, 1]} : vector<8x64xf32> to vector<8x32xf32>
    %671 = vector.extract_strided_slice %669 {offsets = [0, 32], sizes = [8, 32], strides = [1, 1]} : vector<8x64xf32> to vector<8x32xf32>
    %c0_228 = arith.constant 0 : index
    %c0_229 = arith.constant 0 : index
    %672 = vector.load %arg38[%c0_228, %c0_229] : memref<64x128xf32, #tpu.memory_space<vmem>>, vector<8x32xf32>
    tpu.vector_store %arg38[%c0_228, %c0_229], %670 {strides = array<i32>} : memref<64x128xf32, #tpu.memory_space<vmem>>, vector<8x32xf32>,
    %c56_230 = arith.constant 56 : index
    %c32_231 = arith.constant 32 : index
    %673 = vector.load %arg38[%c56_230, %c32_231] : memref<64x128xf32, #tpu.memory_space<vmem>>, vector<8x32xf32>
    tpu.vector_store %arg38[%c56_230, %c32_231], %671 {strides = array<i32>} : memref<64x128xf32, #tpu.memory_space<vmem>>, vector<8x32xf32>,
    %c0_232 = arith.constant 0 : index
    %c0_233 = arith.constant 0 : index
    %674 = vector.load %arg37[%c0_232, %c0_233] : memref<64x192xf32, #tpu.memory_space<vmem>>, vector<8x192xf32>
    %675 = vector.extract_strided_slice %674 {offsets = [0, 0], sizes = [8, 128], strides = [1, 1]} : vector<8x192xf32> to vector<8x128xf32>
    %676 = arith.negf %675 : vector<8x128xf32>
    %677 = math.exp %676 : vector<8x128xf32>
    %cst_234 = arith.constant 1.000000e+00 : f32
    %678 = vector.broadcast %cst_234 : f32 to vector<8x128xf32>
    %679 = arith.addf %678, %677 : vector<8x128xf32>
    %680 = arith.divf %678, %679 : vector<8x128xf32>
    %681 = vector.extract_strided_slice %680 {offsets = [0, 0], sizes = [8, 64], strides = [1, 1]} : vector<8x128xf32> to vector<8x64xf32>
    %682 = vector.extract_strided_slice %680 {offsets = [0, 64], sizes = [8, 64], strides = [1, 1]} : vector<8x128xf32> to vector<8x64xf32>
    %683 = vector.extract_strided_slice %674 {offsets = [0, 128], sizes = [8, 64], strides = [1, 1]} : vector<8x192xf32> to vector<8x64xf32>
    %684 = arith.mulf %681, %653 : vector<8x64xf32>
    %685 = arith.addf %683, %684 : vector<8x64xf32>
    %686 = math.tanh %685 : vector<8x64xf32>
    %cst_235 = arith.constant 1.000000e+00 : f32
    %687 = vector.broadcast %cst_235 : f32 to vector<8x64xf32>
    %688 = arith.subf %687, %682 : vector<8x64xf32>
    %689 = arith.mulf %688, %686 : vector<8x64xf32>
    %690 = vector.extract_strided_slice %689 {offsets = [0, 0], sizes = [8, 32], strides = [1, 1]} : vector<8x64xf32> to vector<8x32xf32>
    %691 = vector.extract_strided_slice %689 {offsets = [0, 32], sizes = [8, 32], strides = [1, 1]} : vector<8x64xf32> to vector<8x32xf32>
    %c0_236 = arith.constant 0 : index
    %c0_237 = arith.constant 0 : index
    %692 = vector.load %arg39[%c0_236, %c0_237] : memref<64x128xf32, #tpu.memory_space<vmem>>, vector<8x32xf32>
    tpu.vector_store %arg39[%c0_236, %c0_237], %690 {strides = array<i32>} : memref<64x128xf32, #tpu.memory_space<vmem>>, vector<8x32xf32>,
    %c56_238 = arith.constant 56 : index
    %c32_239 = arith.constant 32 : index
    %693 = vector.load %arg39[%c56_238, %c32_239] : memref<64x128xf32, #tpu.memory_space<vmem>>, vector<8x32xf32>
    tpu.vector_store %arg39[%c56_238, %c32_239], %691 {strides = array<i32>} : memref<64x128xf32, #tpu.memory_space<vmem>>, vector<8x32xf32>,
    %c56_240 = arith.constant 56 : index
    %c64_241 = arith.constant 64 : index
    %694 = vector.load %arg39[%c56_240, %c64_241] : memref<64x128xf32, #tpu.memory_space<vmem>>, vector<8x32xf32>
    tpu.vector_store %arg39[%c56_240, %c64_241], %690 {strides = array<i32>} : memref<64x128xf32, #tpu.memory_space<vmem>>, vector<8x32xf32>,
    %c0_242 = arith.constant 0 : index
    %c96_243 = arith.constant 96 : index
    %695 = vector.load %arg39[%c0_242, %c96_243] : memref<64x128xf32, #tpu.memory_space<vmem>>, vector<8x32xf32>
    tpu.vector_store %arg39[%c0_242, %c96_243], %691 {strides = array<i32>} : memref<64x128xf32, #tpu.memory_space<vmem>>, vector<8x32xf32>,
    %c1_i32_244 = arith.constant 1 : i32
    %c8_i32_245 = arith.constant 8 : i32
    %696 = arith.muli %c1_i32_244, %c8_i32_245 : i32
    %697 = tpu.assume_multiple %696, 8 : i32
    %c7_i32_246 = arith.constant 7 : i32
    %698 = arith.subi %c7_i32_246, %c1_i32_244 : i32
    %c8_i32_247 = arith.constant 8 : i32
    %699 = arith.muli %698, %c8_i32_247 : i32
    %700 = tpu.assume_multiple %699, 8 : i32
    %701 = arith.index_cast %697 : i32 to index
    %c0_248 = arith.constant 0 : index
    %702 = vector.load %arg36[%701, %c0_248] : memref<64x192xf32, #tpu.memory_space<vmem>>, vector<8x192xf32>
    %cst_249 = arith.constant dense<0.000000e+00> : vector<8x192xf32>
    %703 = tpu.matmul %669, %639, %cst_249 {dimension_numbers = #tpu.dot_dimension_numbers<[1], [0], [0], [1], [0, 0, 1, 1], [], []>} : vector<8x64xf32>, vector<64x192xf32>, vector<8x192xf32> -> vector<8x192xf32>
    %704 = vector.extract_strided_slice %702 {offsets = [0, 0], sizes = [8, 128], strides = [1, 1]} : vector<8x192xf32> to vector<8x128xf32>
    %705 = vector.extract_strided_slice %703 {offsets = [0, 0], sizes = [8, 128], strides = [1, 1]} : vector<8x192xf32> to vector<8x128xf32>
    %706 = arith.addf %704, %705 : vector<8x128xf32>
    %707 = arith.negf %706 : vector<8x128xf32>
    %708 = math.exp %707 : vector<8x128xf32>
    %cst_250 = arith.constant 1.000000e+00 : f32
    %709 = vector.broadcast %cst_250 : f32 to vector<8x128xf32>
    %710 = arith.addf %709, %708 : vector<8x128xf32>
    %711 = arith.divf %709, %710 : vector<8x128xf32>
    %712 = vector.extract_strided_slice %711 {offsets = [0, 0], sizes = [8, 64], strides = [1, 1]} : vector<8x128xf32> to vector<8x64xf32>
    %713 = vector.extract_strided_slice %711 {offsets = [0, 64], sizes = [8, 64], strides = [1, 1]} : vector<8x128xf32> to vector<8x64xf32>
    %714 = vector.extract_strided_slice %702 {offsets = [0, 128], sizes = [8, 64], strides = [1, 1]} : vector<8x192xf32> to vector<8x64xf32>
    %715 = vector.extract_strided_slice %703 {offsets = [0, 128], sizes = [8, 64], strides = [1, 1]} : vector<8x192xf32> to vector<8x64xf32>
    %716 = arith.addf %715, %642 : vector<8x64xf32>
    %717 = arith.mulf %712, %716 : vector<8x64xf32>
    %718 = arith.addf %714, %717 : vector<8x64xf32>
    %719 = math.tanh %718 : vector<8x64xf32>
    %cst_251 = arith.constant 1.000000e+00 : f32
    %720 = vector.broadcast %cst_251 : f32 to vector<8x64xf32>
    %721 = arith.subf %720, %713 : vector<8x64xf32>
    %722 = arith.mulf %721, %719 : vector<8x64xf32>
    %723 = arith.mulf %713, %669 : vector<8x64xf32>
    %724 = arith.addf %722, %723 : vector<8x64xf32>
    %725 = vector.extract_strided_slice %724 {offsets = [0, 0], sizes = [8, 32], strides = [1, 1]} : vector<8x64xf32> to vector<8x32xf32>
    %726 = vector.extract_strided_slice %724 {offsets = [0, 32], sizes = [8, 32], strides = [1, 1]} : vector<8x64xf32> to vector<8x32xf32>
    %727 = arith.index_cast %697 : i32 to index
    %c0_252 = arith.constant 0 : index
    %728 = vector.load %arg38[%727, %c0_252] : memref<64x128xf32, #tpu.memory_space<vmem>>, vector<8x32xf32>
    tpu.vector_store %arg38[%727, %c0_252], %725 {strides = array<i32>} : memref<64x128xf32, #tpu.memory_space<vmem>>, vector<8x32xf32>,
    %729 = arith.index_cast %700 : i32 to index
    %c32_253 = arith.constant 32 : index
    %730 = vector.load %arg38[%729, %c32_253] : memref<64x128xf32, #tpu.memory_space<vmem>>, vector<8x32xf32>
    tpu.vector_store %arg38[%729, %c32_253], %726 {strides = array<i32>} : memref<64x128xf32, #tpu.memory_space<vmem>>, vector<8x32xf32>,
    %c8_i32_254 = arith.constant 8 : i32
    %731 = arith.muli %c1_i32_244, %c8_i32_254 : i32
    %732 = tpu.assume_multiple %731, 8 : i32
    %c7_i32_255 = arith.constant 7 : i32
    %733 = arith.subi %c7_i32_255, %c1_i32_244 : i32
    %c8_i32_256 = arith.constant 8 : i32
    %734 = arith.muli %733, %c8_i32_256 : i32
    %735 = tpu.assume_multiple %734, 8 : i32
    %736 = arith.index_cast %732 : i32 to index
    %c0_257 = arith.constant 0 : index
    %737 = vector.load %arg37[%736, %c0_257] : memref<64x192xf32, #tpu.memory_space<vmem>>, vector<8x192xf32>
    %cst_258 = arith.constant dense<0.000000e+00> : vector<8x192xf32>
    %738 = tpu.matmul %689, %650, %cst_258 {dimension_numbers = #tpu.dot_dimension_numbers<[1], [0], [0], [1], [0, 0, 1, 1], [], []>} : vector<8x64xf32>, vector<64x192xf32>, vector<8x192xf32> -> vector<8x192xf32>
    %739 = vector.extract_strided_slice %737 {offsets = [0, 0], sizes = [8, 128], strides = [1, 1]} : vector<8x192xf32> to vector<8x128xf32>
    %740 = vector.extract_strided_slice %738 {offsets = [0, 0], sizes = [8, 128], strides = [1, 1]} : vector<8x192xf32> to vector<8x128xf32>
    %741 = arith.addf %739, %740 : vector<8x128xf32>
    %742 = arith.negf %741 : vector<8x128xf32>
    %743 = math.exp %742 : vector<8x128xf32>
    %cst_259 = arith.constant 1.000000e+00 : f32
    %744 = vector.broadcast %cst_259 : f32 to vector<8x128xf32>
    %745 = arith.addf %744, %743 : vector<8x128xf32>
    %746 = arith.divf %744, %745 : vector<8x128xf32>
    %747 = vector.extract_strided_slice %746 {offsets = [0, 0], sizes = [8, 64], strides = [1, 1]} : vector<8x128xf32> to vector<8x64xf32>
    %748 = vector.extract_strided_slice %746 {offsets = [0, 64], sizes = [8, 64], strides = [1, 1]} : vector<8x128xf32> to vector<8x64xf32>
    %749 = vector.extract_strided_slice %737 {offsets = [0, 128], sizes = [8, 64], strides = [1, 1]} : vector<8x192xf32> to vector<8x64xf32>
    %750 = vector.extract_strided_slice %738 {offsets = [0, 128], sizes = [8, 64], strides = [1, 1]} : vector<8x192xf32> to vector<8x64xf32>
    %751 = arith.addf %750, %653 : vector<8x64xf32>
    %752 = arith.mulf %747, %751 : vector<8x64xf32>
    %753 = arith.addf %749, %752 : vector<8x64xf32>
    %754 = math.tanh %753 : vector<8x64xf32>
    %cst_260 = arith.constant 1.000000e+00 : f32
    %755 = vector.broadcast %cst_260 : f32 to vector<8x64xf32>
    %756 = arith.subf %755, %748 : vector<8x64xf32>
    %757 = arith.mulf %756, %754 : vector<8x64xf32>
    %758 = arith.mulf %748, %689 : vector<8x64xf32>
    %759 = arith.addf %757, %758 : vector<8x64xf32>
    %760 = vector.extract_strided_slice %759 {offsets = [0, 0], sizes = [8, 32], strides = [1, 1]} : vector<8x64xf32> to vector<8x32xf32>
    %761 = vector.extract_strided_slice %759 {offsets = [0, 32], sizes = [8, 32], strides = [1, 1]} : vector<8x64xf32> to vector<8x32xf32>
    %762 = arith.index_cast %732 : i32 to index
    %c0_261 = arith.constant 0 : index
    %763 = vector.load %arg39[%762, %c0_261] : memref<64x128xf32, #tpu.memory_space<vmem>>, vector<8x32xf32>
    tpu.vector_store %arg39[%762, %c0_261], %760 {strides = array<i32>} : memref<64x128xf32, #tpu.memory_space<vmem>>, vector<8x32xf32>,
    %764 = arith.index_cast %735 : i32 to index
    %c32_262 = arith.constant 32 : index
    %765 = vector.load %arg39[%764, %c32_262] : memref<64x128xf32, #tpu.memory_space<vmem>>, vector<8x32xf32>
    tpu.vector_store %arg39[%764, %c32_262], %761 {strides = array<i32>} : memref<64x128xf32, #tpu.memory_space<vmem>>, vector<8x32xf32>,
    %766 = arith.index_cast %735 : i32 to index
    %c64_263 = arith.constant 64 : index
    %767 = vector.load %arg39[%766, %c64_263] : memref<64x128xf32, #tpu.memory_space<vmem>>, vector<8x32xf32>
    tpu.vector_store %arg39[%766, %c64_263], %760 {strides = array<i32>} : memref<64x128xf32, #tpu.memory_space<vmem>>, vector<8x32xf32>,
    %768 = arith.index_cast %732 : i32 to index
    %c96_264 = arith.constant 96 : index
    %769 = vector.load %arg39[%768, %c96_264] : memref<64x128xf32, #tpu.memory_space<vmem>>, vector<8x32xf32>
    tpu.vector_store %arg39[%768, %c96_264], %761 {strides = array<i32>} : memref<64x128xf32, #tpu.memory_space<vmem>>, vector<8x32xf32>,
    %c2_i32_265 = arith.constant 2 : i32
    %c8_i32_266 = arith.constant 8 : i32
    %770 = arith.muli %c2_i32_265, %c8_i32_266 : i32
    %771 = tpu.assume_multiple %770, 8 : i32
    %c7_i32_267 = arith.constant 7 : i32
    %772 = arith.subi %c7_i32_267, %c2_i32_265 : i32
    %c8_i32_268 = arith.constant 8 : i32
    %773 = arith.muli %772, %c8_i32_268 : i32
    %774 = tpu.assume_multiple %773, 8 : i32
    %775 = arith.index_cast %771 : i32 to index
    %c0_269 = arith.constant 0 : index
    %776 = vector.load %arg36[%775, %c0_269] : memref<64x192xf32, #tpu.memory_space<vmem>>, vector<8x192xf32>
    %cst_270 = arith.constant dense<0.000000e+00> : vector<8x192xf32>
    %777 = tpu.matmul %724, %639, %cst_270 {dimension_numbers = #tpu.dot_dimension_numbers<[1], [0], [0], [1], [0, 0, 1, 1], [], []>} : vector<8x64xf32>, vector<64x192xf32>, vector<8x192xf32> -> vector<8x192xf32>
    %778 = vector.extract_strided_slice %776 {offsets = [0, 0], sizes = [8, 128], strides = [1, 1]} : vector<8x192xf32> to vector<8x128xf32>
    %779 = vector.extract_strided_slice %777 {offsets = [0, 0], sizes = [8, 128], strides = [1, 1]} : vector<8x192xf32> to vector<8x128xf32>
    %780 = arith.addf %778, %779 : vector<8x128xf32>
    %781 = arith.negf %780 : vector<8x128xf32>
    %782 = math.exp %781 : vector<8x128xf32>
    %cst_271 = arith.constant 1.000000e+00 : f32
    %783 = vector.broadcast %cst_271 : f32 to vector<8x128xf32>
    %784 = arith.addf %783, %782 : vector<8x128xf32>
    %785 = arith.divf %783, %784 : vector<8x128xf32>
    %786 = vector.extract_strided_slice %785 {offsets = [0, 0], sizes = [8, 64], strides = [1, 1]} : vector<8x128xf32> to vector<8x64xf32>
    %787 = vector.extract_strided_slice %785 {offsets = [0, 64], sizes = [8, 64], strides = [1, 1]} : vector<8x128xf32> to vector<8x64xf32>
    %788 = vector.extract_strided_slice %776 {offsets = [0, 128], sizes = [8, 64], strides = [1, 1]} : vector<8x192xf32> to vector<8x64xf32>
    %789 = vector.extract_strided_slice %777 {offsets = [0, 128], sizes = [8, 64], strides = [1, 1]} : vector<8x192xf32> to vector<8x64xf32>
    %790 = arith.addf %789, %642 : vector<8x64xf32>
    %791 = arith.mulf %786, %790 : vector<8x64xf32>
    %792 = arith.addf %788, %791 : vector<8x64xf32>
    %793 = math.tanh %792 : vector<8x64xf32>
    %cst_272 = arith.constant 1.000000e+00 : f32
    %794 = vector.broadcast %cst_272 : f32 to vector<8x64xf32>
    %795 = arith.subf %794, %787 : vector<8x64xf32>
    %796 = arith.mulf %795, %793 : vector<8x64xf32>
    %797 = arith.mulf %787, %724 : vector<8x64xf32>
    %798 = arith.addf %796, %797 : vector<8x64xf32>
    %799 = vector.extract_strided_slice %798 {offsets = [0, 0], sizes = [8, 32], strides = [1, 1]} : vector<8x64xf32> to vector<8x32xf32>
    %800 = vector.extract_strided_slice %798 {offsets = [0, 32], sizes = [8, 32], strides = [1, 1]} : vector<8x64xf32> to vector<8x32xf32>
    %801 = arith.index_cast %771 : i32 to index
    %c0_273 = arith.constant 0 : index
    %802 = vector.load %arg38[%801, %c0_273] : memref<64x128xf32, #tpu.memory_space<vmem>>, vector<8x32xf32>
    tpu.vector_store %arg38[%801, %c0_273], %799 {strides = array<i32>} : memref<64x128xf32, #tpu.memory_space<vmem>>, vector<8x32xf32>,
    %803 = arith.index_cast %774 : i32 to index
    %c32_274 = arith.constant 32 : index
    %804 = vector.load %arg38[%803, %c32_274] : memref<64x128xf32, #tpu.memory_space<vmem>>, vector<8x32xf32>
    tpu.vector_store %arg38[%803, %c32_274], %800 {strides = array<i32>} : memref<64x128xf32, #tpu.memory_space<vmem>>, vector<8x32xf32>,
    %c8_i32_275 = arith.constant 8 : i32
    %805 = arith.muli %c2_i32_265, %c8_i32_275 : i32
    %806 = tpu.assume_multiple %805, 8 : i32
    %c7_i32_276 = arith.constant 7 : i32
    %807 = arith.subi %c7_i32_276, %c2_i32_265 : i32
    %c8_i32_277 = arith.constant 8 : i32
    %808 = arith.muli %807, %c8_i32_277 : i32
    %809 = tpu.assume_multiple %808, 8 : i32
    %810 = arith.index_cast %806 : i32 to index
    %c0_278 = arith.constant 0 : index
    %811 = vector.load %arg37[%810, %c0_278] : memref<64x192xf32, #tpu.memory_space<vmem>>, vector<8x192xf32>
    %cst_279 = arith.constant dense<0.000000e+00> : vector<8x192xf32>
    %812 = tpu.matmul %759, %650, %cst_279 {dimension_numbers = #tpu.dot_dimension_numbers<[1], [0], [0], [1], [0, 0, 1, 1], [], []>} : vector<8x64xf32>, vector<64x192xf32>, vector<8x192xf32> -> vector<8x192xf32>
    %813 = vector.extract_strided_slice %811 {offsets = [0, 0], sizes = [8, 128], strides = [1, 1]} : vector<8x192xf32> to vector<8x128xf32>
    %814 = vector.extract_strided_slice %812 {offsets = [0, 0], sizes = [8, 128], strides = [1, 1]} : vector<8x192xf32> to vector<8x128xf32>
    %815 = arith.addf %813, %814 : vector<8x128xf32>
    %816 = arith.negf %815 : vector<8x128xf32>
    %817 = math.exp %816 : vector<8x128xf32>
    %cst_280 = arith.constant 1.000000e+00 : f32
    %818 = vector.broadcast %cst_280 : f32 to vector<8x128xf32>
    %819 = arith.addf %818, %817 : vector<8x128xf32>
    %820 = arith.divf %818, %819 : vector<8x128xf32>
    %821 = vector.extract_strided_slice %820 {offsets = [0, 0], sizes = [8, 64], strides = [1, 1]} : vector<8x128xf32> to vector<8x64xf32>
    %822 = vector.extract_strided_slice %820 {offsets = [0, 64], sizes = [8, 64], strides = [1, 1]} : vector<8x128xf32> to vector<8x64xf32>
    %823 = vector.extract_strided_slice %811 {offsets = [0, 128], sizes = [8, 64], strides = [1, 1]} : vector<8x192xf32> to vector<8x64xf32>
    %824 = vector.extract_strided_slice %812 {offsets = [0, 128], sizes = [8, 64], strides = [1, 1]} : vector<8x192xf32> to vector<8x64xf32>
    %825 = arith.addf %824, %653 : vector<8x64xf32>
    %826 = arith.mulf %821, %825 : vector<8x64xf32>
    %827 = arith.addf %823, %826 : vector<8x64xf32>
    %828 = math.tanh %827 : vector<8x64xf32>
    %cst_281 = arith.constant 1.000000e+00 : f32
    %829 = vector.broadcast %cst_281 : f32 to vector<8x64xf32>
    %830 = arith.subf %829, %822 : vector<8x64xf32>
    %831 = arith.mulf %830, %828 : vector<8x64xf32>
    %832 = arith.mulf %822, %759 : vector<8x64xf32>
    %833 = arith.addf %831, %832 : vector<8x64xf32>
    %834 = vector.extract_strided_slice %833 {offsets = [0, 0], sizes = [8, 32], strides = [1, 1]} : vector<8x64xf32> to vector<8x32xf32>
    %835 = vector.extract_strided_slice %833 {offsets = [0, 32], sizes = [8, 32], strides = [1, 1]} : vector<8x64xf32> to vector<8x32xf32>
    %836 = arith.index_cast %806 : i32 to index
    %c0_282 = arith.constant 0 : index
    %837 = vector.load %arg39[%836, %c0_282] : memref<64x128xf32, #tpu.memory_space<vmem>>, vector<8x32xf32>
    tpu.vector_store %arg39[%836, %c0_282], %834 {strides = array<i32>} : memref<64x128xf32, #tpu.memory_space<vmem>>, vector<8x32xf32>,
    %838 = arith.index_cast %809 : i32 to index
    %c32_283 = arith.constant 32 : index
    %839 = vector.load %arg39[%838, %c32_283] : memref<64x128xf32, #tpu.memory_space<vmem>>, vector<8x32xf32>
    tpu.vector_store %arg39[%838, %c32_283], %835 {strides = array<i32>} : memref<64x128xf32, #tpu.memory_space<vmem>>, vector<8x32xf32>,
    %840 = arith.index_cast %809 : i32 to index
    %c64_284 = arith.constant 64 : index
    %841 = vector.load %arg39[%840, %c64_284] : memref<64x128xf32, #tpu.memory_space<vmem>>, vector<8x32xf32>
    tpu.vector_store %arg39[%840, %c64_284], %834 {strides = array<i32>} : memref<64x128xf32, #tpu.memory_space<vmem>>, vector<8x32xf32>,
    %842 = arith.index_cast %806 : i32 to index
    %c96_285 = arith.constant 96 : index
    %843 = vector.load %arg39[%842, %c96_285] : memref<64x128xf32, #tpu.memory_space<vmem>>, vector<8x32xf32>
    tpu.vector_store %arg39[%842, %c96_285], %835 {strides = array<i32>} : memref<64x128xf32, #tpu.memory_space<vmem>>, vector<8x32xf32>,
    %c3_i32_286 = arith.constant 3 : i32
    %c8_i32_287 = arith.constant 8 : i32
    %844 = arith.muli %c3_i32_286, %c8_i32_287 : i32
    %845 = tpu.assume_multiple %844, 8 : i32
    %c7_i32_288 = arith.constant 7 : i32
    %846 = arith.subi %c7_i32_288, %c3_i32_286 : i32
    %c8_i32_289 = arith.constant 8 : i32
    %847 = arith.muli %846, %c8_i32_289 : i32
    %848 = tpu.assume_multiple %847, 8 : i32
    %849 = arith.index_cast %845 : i32 to index
    %c0_290 = arith.constant 0 : index
    %850 = vector.load %arg36[%849, %c0_290] : memref<64x192xf32, #tpu.memory_space<vmem>>, vector<8x192xf32>
    %cst_291 = arith.constant dense<0.000000e+00> : vector<8x192xf32>
    %851 = tpu.matmul %798, %639, %cst_291 {dimension_numbers = #tpu.dot_dimension_numbers<[1], [0], [0], [1], [0, 0, 1, 1], [], []>} : vector<8x64xf32>, vector<64x192xf32>, vector<8x192xf32> -> vector<8x192xf32>
    %852 = vector.extract_strided_slice %850 {offsets = [0, 0], sizes = [8, 128], strides = [1, 1]} : vector<8x192xf32> to vector<8x128xf32>
    %853 = vector.extract_strided_slice %851 {offsets = [0, 0], sizes = [8, 128], strides = [1, 1]} : vector<8x192xf32> to vector<8x128xf32>
    %854 = arith.addf %852, %853 : vector<8x128xf32>
    %855 = arith.negf %854 : vector<8x128xf32>
    %856 = math.exp %855 : vector<8x128xf32>
    %cst_292 = arith.constant 1.000000e+00 : f32
    %857 = vector.broadcast %cst_292 : f32 to vector<8x128xf32>
    %858 = arith.addf %857, %856 : vector<8x128xf32>
    %859 = arith.divf %857, %858 : vector<8x128xf32>
    %860 = vector.extract_strided_slice %859 {offsets = [0, 0], sizes = [8, 64], strides = [1, 1]} : vector<8x128xf32> to vector<8x64xf32>
    %861 = vector.extract_strided_slice %859 {offsets = [0, 64], sizes = [8, 64], strides = [1, 1]} : vector<8x128xf32> to vector<8x64xf32>
    %862 = vector.extract_strided_slice %850 {offsets = [0, 128], sizes = [8, 64], strides = [1, 1]} : vector<8x192xf32> to vector<8x64xf32>
    %863 = vector.extract_strided_slice %851 {offsets = [0, 128], sizes = [8, 64], strides = [1, 1]} : vector<8x192xf32> to vector<8x64xf32>
    %864 = arith.addf %863, %642 : vector<8x64xf32>
    %865 = arith.mulf %860, %864 : vector<8x64xf32>
    %866 = arith.addf %862, %865 : vector<8x64xf32>
    %867 = math.tanh %866 : vector<8x64xf32>
    %cst_293 = arith.constant 1.000000e+00 : f32
    %868 = vector.broadcast %cst_293 : f32 to vector<8x64xf32>
    %869 = arith.subf %868, %861 : vector<8x64xf32>
    %870 = arith.mulf %869, %867 : vector<8x64xf32>
    %871 = arith.mulf %861, %798 : vector<8x64xf32>
    %872 = arith.addf %870, %871 : vector<8x64xf32>
    %873 = vector.extract_strided_slice %872 {offsets = [0, 0], sizes = [8, 32], strides = [1, 1]} : vector<8x64xf32> to vector<8x32xf32>
    %874 = vector.extract_strided_slice %872 {offsets = [0, 32], sizes = [8, 32], strides = [1, 1]} : vector<8x64xf32> to vector<8x32xf32>
    %875 = arith.index_cast %845 : i32 to index
    %c0_294 = arith.constant 0 : index
    %876 = vector.load %arg38[%875, %c0_294] : memref<64x128xf32, #tpu.memory_space<vmem>>, vector<8x32xf32>
    tpu.vector_store %arg38[%875, %c0_294], %873 {strides = array<i32>} : memref<64x128xf32, #tpu.memory_space<vmem>>, vector<8x32xf32>,
    %877 = arith.index_cast %848 : i32 to index
    %c32_295 = arith.constant 32 : index
    %878 = vector.load %arg38[%877, %c32_295] : memref<64x128xf32, #tpu.memory_space<vmem>>, vector<8x32xf32>
    tpu.vector_store %arg38[%877, %c32_295], %874 {strides = array<i32>} : memref<64x128xf32, #tpu.memory_space<vmem>>, vector<8x32xf32>,
    %c8_i32_296 = arith.constant 8 : i32
    %879 = arith.muli %c3_i32_286, %c8_i32_296 : i32
    %880 = tpu.assume_multiple %879, 8 : i32
    %c7_i32_297 = arith.constant 7 : i32
    %881 = arith.subi %c7_i32_297, %c3_i32_286 : i32
    %c8_i32_298 = arith.constant 8 : i32
    %882 = arith.muli %881, %c8_i32_298 : i32
    %883 = tpu.assume_multiple %882, 8 : i32
    %884 = arith.index_cast %880 : i32 to index
    %c0_299 = arith.constant 0 : index
    %885 = vector.load %arg37[%884, %c0_299] : memref<64x192xf32, #tpu.memory_space<vmem>>, vector<8x192xf32>
    %cst_300 = arith.constant dense<0.000000e+00> : vector<8x192xf32>
    %886 = tpu.matmul %833, %650, %cst_300 {dimension_numbers = #tpu.dot_dimension_numbers<[1], [0], [0], [1], [0, 0, 1, 1], [], []>} : vector<8x64xf32>, vector<64x192xf32>, vector<8x192xf32> -> vector<8x192xf32>
    %887 = vector.extract_strided_slice %885 {offsets = [0, 0], sizes = [8, 128], strides = [1, 1]} : vector<8x192xf32> to vector<8x128xf32>
    %888 = vector.extract_strided_slice %886 {offsets = [0, 0], sizes = [8, 128], strides = [1, 1]} : vector<8x192xf32> to vector<8x128xf32>
    %889 = arith.addf %887, %888 : vector<8x128xf32>
    %890 = arith.negf %889 : vector<8x128xf32>
    %891 = math.exp %890 : vector<8x128xf32>
    %cst_301 = arith.constant 1.000000e+00 : f32
    %892 = vector.broadcast %cst_301 : f32 to vector<8x128xf32>
    %893 = arith.addf %892, %891 : vector<8x128xf32>
    %894 = arith.divf %892, %893 : vector<8x128xf32>
    %895 = vector.extract_strided_slice %894 {offsets = [0, 0], sizes = [8, 64], strides = [1, 1]} : vector<8x128xf32> to vector<8x64xf32>
    %896 = vector.extract_strided_slice %894 {offsets = [0, 64], sizes = [8, 64], strides = [1, 1]} : vector<8x128xf32> to vector<8x64xf32>
    %897 = vector.extract_strided_slice %885 {offsets = [0, 128], sizes = [8, 64], strides = [1, 1]} : vector<8x192xf32> to vector<8x64xf32>
    %898 = vector.extract_strided_slice %886 {offsets = [0, 128], sizes = [8, 64], strides = [1, 1]} : vector<8x192xf32> to vector<8x64xf32>
    %899 = arith.addf %898, %653 : vector<8x64xf32>
    %900 = arith.mulf %895, %899 : vector<8x64xf32>
    %901 = arith.addf %897, %900 : vector<8x64xf32>
    %902 = math.tanh %901 : vector<8x64xf32>
    %cst_302 = arith.constant 1.000000e+00 : f32
    %903 = vector.broadcast %cst_302 : f32 to vector<8x64xf32>
    %904 = arith.subf %903, %896 : vector<8x64xf32>
    %905 = arith.mulf %904, %902 : vector<8x64xf32>
    %906 = arith.mulf %896, %833 : vector<8x64xf32>
    %907 = arith.addf %905, %906 : vector<8x64xf32>
    %908 = vector.extract_strided_slice %907 {offsets = [0, 0], sizes = [8, 32], strides = [1, 1]} : vector<8x64xf32> to vector<8x32xf32>
    %909 = vector.extract_strided_slice %907 {offsets = [0, 32], sizes = [8, 32], strides = [1, 1]} : vector<8x64xf32> to vector<8x32xf32>
    %910 = arith.index_cast %880 : i32 to index
    %c0_303 = arith.constant 0 : index
    %911 = vector.load %arg39[%910, %c0_303] : memref<64x128xf32, #tpu.memory_space<vmem>>, vector<8x32xf32>
    tpu.vector_store %arg39[%910, %c0_303], %908 {strides = array<i32>} : memref<64x128xf32, #tpu.memory_space<vmem>>, vector<8x32xf32>,
    %912 = arith.index_cast %883 : i32 to index
    %c32_304 = arith.constant 32 : index
    %913 = vector.load %arg39[%912, %c32_304] : memref<64x128xf32, #tpu.memory_space<vmem>>, vector<8x32xf32>
    tpu.vector_store %arg39[%912, %c32_304], %909 {strides = array<i32>} : memref<64x128xf32, #tpu.memory_space<vmem>>, vector<8x32xf32>,
    %914 = arith.index_cast %883 : i32 to index
    %c64_305 = arith.constant 64 : index
    %915 = vector.load %arg39[%914, %c64_305] : memref<64x128xf32, #tpu.memory_space<vmem>>, vector<8x32xf32>
    tpu.vector_store %arg39[%914, %c64_305], %908 {strides = array<i32>} : memref<64x128xf32, #tpu.memory_space<vmem>>, vector<8x32xf32>,
    %916 = arith.index_cast %880 : i32 to index
    %c96_306 = arith.constant 96 : index
    %917 = vector.load %arg39[%916, %c96_306] : memref<64x128xf32, #tpu.memory_space<vmem>>, vector<8x32xf32>
    tpu.vector_store %arg39[%916, %c96_306], %909 {strides = array<i32>} : memref<64x128xf32, #tpu.memory_space<vmem>>, vector<8x32xf32>,
    %c4_i32_307 = arith.constant 4 : i32
    %c8_i32_308 = arith.constant 8 : i32
    %918 = arith.muli %c4_i32_307, %c8_i32_308 : i32
    %919 = tpu.assume_multiple %918, 8 : i32
    %c7_i32_309 = arith.constant 7 : i32
    %920 = arith.subi %c7_i32_309, %c4_i32_307 : i32
    %c8_i32_310 = arith.constant 8 : i32
    %921 = arith.muli %920, %c8_i32_310 : i32
    %922 = tpu.assume_multiple %921, 8 : i32
    %923 = arith.index_cast %919 : i32 to index
    %c0_311 = arith.constant 0 : index
    %924 = vector.load %arg36[%923, %c0_311] : memref<64x192xf32, #tpu.memory_space<vmem>>, vector<8x192xf32>
    %cst_312 = arith.constant dense<0.000000e+00> : vector<8x192xf32>
    %925 = tpu.matmul %872, %639, %cst_312 {dimension_numbers = #tpu.dot_dimension_numbers<[1], [0], [0], [1], [0, 0, 1, 1], [], []>} : vector<8x64xf32>, vector<64x192xf32>, vector<8x192xf32> -> vector<8x192xf32>
    %926 = vector.extract_strided_slice %924 {offsets = [0, 0], sizes = [8, 128], strides = [1, 1]} : vector<8x192xf32> to vector<8x128xf32>
    %927 = vector.extract_strided_slice %925 {offsets = [0, 0], sizes = [8, 128], strides = [1, 1]} : vector<8x192xf32> to vector<8x128xf32>
    %928 = arith.addf %926, %927 : vector<8x128xf32>
    %929 = arith.negf %928 : vector<8x128xf32>
    %930 = math.exp %929 : vector<8x128xf32>
    %cst_313 = arith.constant 1.000000e+00 : f32
    %931 = vector.broadcast %cst_313 : f32 to vector<8x128xf32>
    %932 = arith.addf %931, %930 : vector<8x128xf32>
    %933 = arith.divf %931, %932 : vector<8x128xf32>
    %934 = vector.extract_strided_slice %933 {offsets = [0, 0], sizes = [8, 64], strides = [1, 1]} : vector<8x128xf32> to vector<8x64xf32>
    %935 = vector.extract_strided_slice %933 {offsets = [0, 64], sizes = [8, 64], strides = [1, 1]} : vector<8x128xf32> to vector<8x64xf32>
    %936 = vector.extract_strided_slice %924 {offsets = [0, 128], sizes = [8, 64], strides = [1, 1]} : vector<8x192xf32> to vector<8x64xf32>
    %937 = vector.extract_strided_slice %925 {offsets = [0, 128], sizes = [8, 64], strides = [1, 1]} : vector<8x192xf32> to vector<8x64xf32>
    %938 = arith.addf %937, %642 : vector<8x64xf32>
    %939 = arith.mulf %934, %938 : vector<8x64xf32>
    %940 = arith.addf %936, %939 : vector<8x64xf32>
    %941 = math.tanh %940 : vector<8x64xf32>
    %cst_314 = arith.constant 1.000000e+00 : f32
    %942 = vector.broadcast %cst_314 : f32 to vector<8x64xf32>
    %943 = arith.subf %942, %935 : vector<8x64xf32>
    %944 = arith.mulf %943, %941 : vector<8x64xf32>
    %945 = arith.mulf %935, %872 : vector<8x64xf32>
    %946 = arith.addf %944, %945 : vector<8x64xf32>
    %947 = vector.extract_strided_slice %946 {offsets = [0, 0], sizes = [8, 32], strides = [1, 1]} : vector<8x64xf32> to vector<8x32xf32>
    %948 = vector.extract_strided_slice %946 {offsets = [0, 32], sizes = [8, 32], strides = [1, 1]} : vector<8x64xf32> to vector<8x32xf32>
    %949 = arith.index_cast %919 : i32 to index
    %c0_315 = arith.constant 0 : index
    %950 = vector.load %arg38[%949, %c0_315] : memref<64x128xf32, #tpu.memory_space<vmem>>, vector<8x32xf32>
    tpu.vector_store %arg38[%949, %c0_315], %947 {strides = array<i32>} : memref<64x128xf32, #tpu.memory_space<vmem>>, vector<8x32xf32>,
    %951 = arith.index_cast %922 : i32 to index
    %c32_316 = arith.constant 32 : index
    %952 = vector.load %arg38[%951, %c32_316] : memref<64x128xf32, #tpu.memory_space<vmem>>, vector<8x32xf32>
    tpu.vector_store %arg38[%951, %c32_316], %948 {strides = array<i32>} : memref<64x128xf32, #tpu.memory_space<vmem>>, vector<8x32xf32>,
    %c8_i32_317 = arith.constant 8 : i32
    %953 = arith.muli %c4_i32_307, %c8_i32_317 : i32
    %954 = tpu.assume_multiple %953, 8 : i32
    %c7_i32_318 = arith.constant 7 : i32
    %955 = arith.subi %c7_i32_318, %c4_i32_307 : i32
    %c8_i32_319 = arith.constant 8 : i32
    %956 = arith.muli %955, %c8_i32_319 : i32
    %957 = tpu.assume_multiple %956, 8 : i32
    %958 = arith.index_cast %954 : i32 to index
    %c0_320 = arith.constant 0 : index
    %959 = vector.load %arg37[%958, %c0_320] : memref<64x192xf32, #tpu.memory_space<vmem>>, vector<8x192xf32>
    %cst_321 = arith.constant dense<0.000000e+00> : vector<8x192xf32>
    %960 = tpu.matmul %907, %650, %cst_321 {dimension_numbers = #tpu.dot_dimension_numbers<[1], [0], [0], [1], [0, 0, 1, 1], [], []>} : vector<8x64xf32>, vector<64x192xf32>, vector<8x192xf32> -> vector<8x192xf32>
    %961 = vector.extract_strided_slice %959 {offsets = [0, 0], sizes = [8, 128], strides = [1, 1]} : vector<8x192xf32> to vector<8x128xf32>
    %962 = vector.extract_strided_slice %960 {offsets = [0, 0], sizes = [8, 128], strides = [1, 1]} : vector<8x192xf32> to vector<8x128xf32>
    %963 = arith.addf %961, %962 : vector<8x128xf32>
    %964 = arith.negf %963 : vector<8x128xf32>
    %965 = math.exp %964 : vector<8x128xf32>
    %cst_322 = arith.constant 1.000000e+00 : f32
    %966 = vector.broadcast %cst_322 : f32 to vector<8x128xf32>
    %967 = arith.addf %966, %965 : vector<8x128xf32>
    %968 = arith.divf %966, %967 : vector<8x128xf32>
    %969 = vector.extract_strided_slice %968 {offsets = [0, 0], sizes = [8, 64], strides = [1, 1]} : vector<8x128xf32> to vector<8x64xf32>
    %970 = vector.extract_strided_slice %968 {offsets = [0, 64], sizes = [8, 64], strides = [1, 1]} : vector<8x128xf32> to vector<8x64xf32>
    %971 = vector.extract_strided_slice %959 {offsets = [0, 128], sizes = [8, 64], strides = [1, 1]} : vector<8x192xf32> to vector<8x64xf32>
    %972 = vector.extract_strided_slice %960 {offsets = [0, 128], sizes = [8, 64], strides = [1, 1]} : vector<8x192xf32> to vector<8x64xf32>
    %973 = arith.addf %972, %653 : vector<8x64xf32>
    %974 = arith.mulf %969, %973 : vector<8x64xf32>
    %975 = arith.addf %971, %974 : vector<8x64xf32>
    %976 = math.tanh %975 : vector<8x64xf32>
    %cst_323 = arith.constant 1.000000e+00 : f32
    %977 = vector.broadcast %cst_323 : f32 to vector<8x64xf32>
    %978 = arith.subf %977, %970 : vector<8x64xf32>
    %979 = arith.mulf %978, %976 : vector<8x64xf32>
    %980 = arith.mulf %970, %907 : vector<8x64xf32>
    %981 = arith.addf %979, %980 : vector<8x64xf32>
    %982 = vector.extract_strided_slice %981 {offsets = [0, 0], sizes = [8, 32], strides = [1, 1]} : vector<8x64xf32> to vector<8x32xf32>
    %983 = vector.extract_strided_slice %981 {offsets = [0, 32], sizes = [8, 32], strides = [1, 1]} : vector<8x64xf32> to vector<8x32xf32>
    %984 = arith.index_cast %954 : i32 to index
    %c0_324 = arith.constant 0 : index
    %985 = vector.load %arg39[%984, %c0_324] : memref<64x128xf32, #tpu.memory_space<vmem>>, vector<8x32xf32>
    tpu.vector_store %arg39[%984, %c0_324], %982 {strides = array<i32>} : memref<64x128xf32, #tpu.memory_space<vmem>>, vector<8x32xf32>,
    %986 = arith.index_cast %957 : i32 to index
    %c32_325 = arith.constant 32 : index
    %987 = vector.load %arg39[%986, %c32_325] : memref<64x128xf32, #tpu.memory_space<vmem>>, vector<8x32xf32>
    tpu.vector_store %arg39[%986, %c32_325], %983 {strides = array<i32>} : memref<64x128xf32, #tpu.memory_space<vmem>>, vector<8x32xf32>,
    %988 = arith.index_cast %957 : i32 to index
    %c64_326 = arith.constant 64 : index
    %989 = vector.load %arg39[%988, %c64_326] : memref<64x128xf32, #tpu.memory_space<vmem>>, vector<8x32xf32>
    tpu.vector_store %arg39[%988, %c64_326], %982 {strides = array<i32>} : memref<64x128xf32, #tpu.memory_space<vmem>>, vector<8x32xf32>,
    %990 = arith.index_cast %954 : i32 to index
    %c96_327 = arith.constant 96 : index
    %991 = vector.load %arg39[%990, %c96_327] : memref<64x128xf32, #tpu.memory_space<vmem>>, vector<8x32xf32>
    tpu.vector_store %arg39[%990, %c96_327], %983 {strides = array<i32>} : memref<64x128xf32, #tpu.memory_space<vmem>>, vector<8x32xf32>,
    %c5_i32_328 = arith.constant 5 : i32
    %c8_i32_329 = arith.constant 8 : i32
    %992 = arith.muli %c5_i32_328, %c8_i32_329 : i32
    %993 = tpu.assume_multiple %992, 8 : i32
    %c7_i32_330 = arith.constant 7 : i32
    %994 = arith.subi %c7_i32_330, %c5_i32_328 : i32
    %c8_i32_331 = arith.constant 8 : i32
    %995 = arith.muli %994, %c8_i32_331 : i32
    %996 = tpu.assume_multiple %995, 8 : i32
    %997 = arith.index_cast %993 : i32 to index
    %c0_332 = arith.constant 0 : index
    %998 = vector.load %arg36[%997, %c0_332] : memref<64x192xf32, #tpu.memory_space<vmem>>, vector<8x192xf32>
    %cst_333 = arith.constant dense<0.000000e+00> : vector<8x192xf32>
    %999 = tpu.matmul %946, %639, %cst_333 {dimension_numbers = #tpu.dot_dimension_numbers<[1], [0], [0], [1], [0, 0, 1, 1], [], []>} : vector<8x64xf32>, vector<64x192xf32>, vector<8x192xf32> -> vector<8x192xf32>
    %1000 = vector.extract_strided_slice %998 {offsets = [0, 0], sizes = [8, 128], strides = [1, 1]} : vector<8x192xf32> to vector<8x128xf32>
    %1001 = vector.extract_strided_slice %999 {offsets = [0, 0], sizes = [8, 128], strides = [1, 1]} : vector<8x192xf32> to vector<8x128xf32>
    %1002 = arith.addf %1000, %1001 : vector<8x128xf32>
    %1003 = arith.negf %1002 : vector<8x128xf32>
    %1004 = math.exp %1003 : vector<8x128xf32>
    %cst_334 = arith.constant 1.000000e+00 : f32
    %1005 = vector.broadcast %cst_334 : f32 to vector<8x128xf32>
    %1006 = arith.addf %1005, %1004 : vector<8x128xf32>
    %1007 = arith.divf %1005, %1006 : vector<8x128xf32>
    %1008 = vector.extract_strided_slice %1007 {offsets = [0, 0], sizes = [8, 64], strides = [1, 1]} : vector<8x128xf32> to vector<8x64xf32>
    %1009 = vector.extract_strided_slice %1007 {offsets = [0, 64], sizes = [8, 64], strides = [1, 1]} : vector<8x128xf32> to vector<8x64xf32>
    %1010 = vector.extract_strided_slice %998 {offsets = [0, 128], sizes = [8, 64], strides = [1, 1]} : vector<8x192xf32> to vector<8x64xf32>
    %1011 = vector.extract_strided_slice %999 {offsets = [0, 128], sizes = [8, 64], strides = [1, 1]} : vector<8x192xf32> to vector<8x64xf32>
    %1012 = arith.addf %1011, %642 : vector<8x64xf32>
    %1013 = arith.mulf %1008, %1012 : vector<8x64xf32>
    %1014 = arith.addf %1010, %1013 : vector<8x64xf32>
    %1015 = math.tanh %1014 : vector<8x64xf32>
    %cst_335 = arith.constant 1.000000e+00 : f32
    %1016 = vector.broadcast %cst_335 : f32 to vector<8x64xf32>
    %1017 = arith.subf %1016, %1009 : vector<8x64xf32>
    %1018 = arith.mulf %1017, %1015 : vector<8x64xf32>
    %1019 = arith.mulf %1009, %946 : vector<8x64xf32>
    %1020 = arith.addf %1018, %1019 : vector<8x64xf32>
    %1021 = vector.extract_strided_slice %1020 {offsets = [0, 0], sizes = [8, 32], strides = [1, 1]} : vector<8x64xf32> to vector<8x32xf32>
    %1022 = vector.extract_strided_slice %1020 {offsets = [0, 32], sizes = [8, 32], strides = [1, 1]} : vector<8x64xf32> to vector<8x32xf32>
    %1023 = arith.index_cast %993 : i32 to index
    %c0_336 = arith.constant 0 : index
    %1024 = vector.load %arg38[%1023, %c0_336] : memref<64x128xf32, #tpu.memory_space<vmem>>, vector<8x32xf32>
    tpu.vector_store %arg38[%1023, %c0_336], %1021 {strides = array<i32>} : memref<64x128xf32, #tpu.memory_space<vmem>>, vector<8x32xf32>,
    %1025 = arith.index_cast %996 : i32 to index
    %c32_337 = arith.constant 32 : index
    %1026 = vector.load %arg38[%1025, %c32_337] : memref<64x128xf32, #tpu.memory_space<vmem>>, vector<8x32xf32>
    tpu.vector_store %arg38[%1025, %c32_337], %1022 {strides = array<i32>} : memref<64x128xf32, #tpu.memory_space<vmem>>, vector<8x32xf32>,
    %c8_i32_338 = arith.constant 8 : i32
    %1027 = arith.muli %c5_i32_328, %c8_i32_338 : i32
    %1028 = tpu.assume_multiple %1027, 8 : i32
    %c7_i32_339 = arith.constant 7 : i32
    %1029 = arith.subi %c7_i32_339, %c5_i32_328 : i32
    %c8_i32_340 = arith.constant 8 : i32
    %1030 = arith.muli %1029, %c8_i32_340 : i32
    %1031 = tpu.assume_multiple %1030, 8 : i32
    %1032 = arith.index_cast %1028 : i32 to index
    %c0_341 = arith.constant 0 : index
    %1033 = vector.load %arg37[%1032, %c0_341] : memref<64x192xf32, #tpu.memory_space<vmem>>, vector<8x192xf32>
    %cst_342 = arith.constant dense<0.000000e+00> : vector<8x192xf32>
    %1034 = tpu.matmul %981, %650, %cst_342 {dimension_numbers = #tpu.dot_dimension_numbers<[1], [0], [0], [1], [0, 0, 1, 1], [], []>} : vector<8x64xf32>, vector<64x192xf32>, vector<8x192xf32> -> vector<8x192xf32>
    %1035 = vector.extract_strided_slice %1033 {offsets = [0, 0], sizes = [8, 128], strides = [1, 1]} : vector<8x192xf32> to vector<8x128xf32>
    %1036 = vector.extract_strided_slice %1034 {offsets = [0, 0], sizes = [8, 128], strides = [1, 1]} : vector<8x192xf32> to vector<8x128xf32>
    %1037 = arith.addf %1035, %1036 : vector<8x128xf32>
    %1038 = arith.negf %1037 : vector<8x128xf32>
    %1039 = math.exp %1038 : vector<8x128xf32>
    %cst_343 = arith.constant 1.000000e+00 : f32
    %1040 = vector.broadcast %cst_343 : f32 to vector<8x128xf32>
    %1041 = arith.addf %1040, %1039 : vector<8x128xf32>
    %1042 = arith.divf %1040, %1041 : vector<8x128xf32>
    %1043 = vector.extract_strided_slice %1042 {offsets = [0, 0], sizes = [8, 64], strides = [1, 1]} : vector<8x128xf32> to vector<8x64xf32>
    %1044 = vector.extract_strided_slice %1042 {offsets = [0, 64], sizes = [8, 64], strides = [1, 1]} : vector<8x128xf32> to vector<8x64xf32>
    %1045 = vector.extract_strided_slice %1033 {offsets = [0, 128], sizes = [8, 64], strides = [1, 1]} : vector<8x192xf32> to vector<8x64xf32>
    %1046 = vector.extract_strided_slice %1034 {offsets = [0, 128], sizes = [8, 64], strides = [1, 1]} : vector<8x192xf32> to vector<8x64xf32>
    %1047 = arith.addf %1046, %653 : vector<8x64xf32>
    %1048 = arith.mulf %1043, %1047 : vector<8x64xf32>
    %1049 = arith.addf %1045, %1048 : vector<8x64xf32>
    %1050 = math.tanh %1049 : vector<8x64xf32>
    %cst_344 = arith.constant 1.000000e+00 : f32
    %1051 = vector.broadcast %cst_344 : f32 to vector<8x64xf32>
    %1052 = arith.subf %1051, %1044 : vector<8x64xf32>
    %1053 = arith.mulf %1052, %1050 : vector<8x64xf32>
    %1054 = arith.mulf %1044, %981 : vector<8x64xf32>
    %1055 = arith.addf %1053, %1054 : vector<8x64xf32>
    %1056 = vector.extract_strided_slice %1055 {offsets = [0, 0], sizes = [8, 32], strides = [1, 1]} : vector<8x64xf32> to vector<8x32xf32>
    %1057 = vector.extract_strided_slice %1055 {offsets = [0, 32], sizes = [8, 32], strides = [1, 1]} : vector<8x64xf32> to vector<8x32xf32>
    %1058 = arith.index_cast %1028 : i32 to index
    %c0_345 = arith.constant 0 : index
    %1059 = vector.load %arg39[%1058, %c0_345] : memref<64x128xf32, #tpu.memory_space<vmem>>, vector<8x32xf32>
    tpu.vector_store %arg39[%1058, %c0_345], %1056 {strides = array<i32>} : memref<64x128xf32, #tpu.memory_space<vmem>>, vector<8x32xf32>,
    %1060 = arith.index_cast %1031 : i32 to index
    %c32_346 = arith.constant 32 : index
    %1061 = vector.load %arg39[%1060, %c32_346] : memref<64x128xf32, #tpu.memory_space<vmem>>, vector<8x32xf32>
    tpu.vector_store %arg39[%1060, %c32_346], %1057 {strides = array<i32>} : memref<64x128xf32, #tpu.memory_space<vmem>>, vector<8x32xf32>,
    %1062 = arith.index_cast %1031 : i32 to index
    %c64_347 = arith.constant 64 : index
    %1063 = vector.load %arg39[%1062, %c64_347] : memref<64x128xf32, #tpu.memory_space<vmem>>, vector<8x32xf32>
    tpu.vector_store %arg39[%1062, %c64_347], %1056 {strides = array<i32>} : memref<64x128xf32, #tpu.memory_space<vmem>>, vector<8x32xf32>,
    %1064 = arith.index_cast %1028 : i32 to index
    %c96_348 = arith.constant 96 : index
    %1065 = vector.load %arg39[%1064, %c96_348] : memref<64x128xf32, #tpu.memory_space<vmem>>, vector<8x32xf32>
    tpu.vector_store %arg39[%1064, %c96_348], %1057 {strides = array<i32>} : memref<64x128xf32, #tpu.memory_space<vmem>>, vector<8x32xf32>,
    %c6_i32_349 = arith.constant 6 : i32
    %c8_i32_350 = arith.constant 8 : i32
    %1066 = arith.muli %c6_i32_349, %c8_i32_350 : i32
    %1067 = tpu.assume_multiple %1066, 8 : i32
    %c7_i32_351 = arith.constant 7 : i32
    %1068 = arith.subi %c7_i32_351, %c6_i32_349 : i32
    %c8_i32_352 = arith.constant 8 : i32
    %1069 = arith.muli %1068, %c8_i32_352 : i32
    %1070 = tpu.assume_multiple %1069, 8 : i32
    %1071 = arith.index_cast %1067 : i32 to index
    %c0_353 = arith.constant 0 : index
    %1072 = vector.load %arg36[%1071, %c0_353] : memref<64x192xf32, #tpu.memory_space<vmem>>, vector<8x192xf32>
    %cst_354 = arith.constant dense<0.000000e+00> : vector<8x192xf32>
    %1073 = tpu.matmul %1020, %639, %cst_354 {dimension_numbers = #tpu.dot_dimension_numbers<[1], [0], [0], [1], [0, 0, 1, 1], [], []>} : vector<8x64xf32>, vector<64x192xf32>, vector<8x192xf32> -> vector<8x192xf32>
    %1074 = vector.extract_strided_slice %1072 {offsets = [0, 0], sizes = [8, 128], strides = [1, 1]} : vector<8x192xf32> to vector<8x128xf32>
    %1075 = vector.extract_strided_slice %1073 {offsets = [0, 0], sizes = [8, 128], strides = [1, 1]} : vector<8x192xf32> to vector<8x128xf32>
    %1076 = arith.addf %1074, %1075 : vector<8x128xf32>
    %1077 = arith.negf %1076 : vector<8x128xf32>
    %1078 = math.exp %1077 : vector<8x128xf32>
    %cst_355 = arith.constant 1.000000e+00 : f32
    %1079 = vector.broadcast %cst_355 : f32 to vector<8x128xf32>
    %1080 = arith.addf %1079, %1078 : vector<8x128xf32>
    %1081 = arith.divf %1079, %1080 : vector<8x128xf32>
    %1082 = vector.extract_strided_slice %1081 {offsets = [0, 0], sizes = [8, 64], strides = [1, 1]} : vector<8x128xf32> to vector<8x64xf32>
    %1083 = vector.extract_strided_slice %1081 {offsets = [0, 64], sizes = [8, 64], strides = [1, 1]} : vector<8x128xf32> to vector<8x64xf32>
    %1084 = vector.extract_strided_slice %1072 {offsets = [0, 128], sizes = [8, 64], strides = [1, 1]} : vector<8x192xf32> to vector<8x64xf32>
    %1085 = vector.extract_strided_slice %1073 {offsets = [0, 128], sizes = [8, 64], strides = [1, 1]} : vector<8x192xf32> to vector<8x64xf32>
    %1086 = arith.addf %1085, %642 : vector<8x64xf32>
    %1087 = arith.mulf %1082, %1086 : vector<8x64xf32>
    %1088 = arith.addf %1084, %1087 : vector<8x64xf32>
    %1089 = math.tanh %1088 : vector<8x64xf32>
    %cst_356 = arith.constant 1.000000e+00 : f32
    %1090 = vector.broadcast %cst_356 : f32 to vector<8x64xf32>
    %1091 = arith.subf %1090, %1083 : vector<8x64xf32>
    %1092 = arith.mulf %1091, %1089 : vector<8x64xf32>
    %1093 = arith.mulf %1083, %1020 : vector<8x64xf32>
    %1094 = arith.addf %1092, %1093 : vector<8x64xf32>
    %1095 = vector.extract_strided_slice %1094 {offsets = [0, 0], sizes = [8, 32], strides = [1, 1]} : vector<8x64xf32> to vector<8x32xf32>
    %1096 = vector.extract_strided_slice %1094 {offsets = [0, 32], sizes = [8, 32], strides = [1, 1]} : vector<8x64xf32> to vector<8x32xf32>
    %1097 = arith.index_cast %1067 : i32 to index
    %c0_357 = arith.constant 0 : index
    %1098 = vector.load %arg38[%1097, %c0_357] : memref<64x128xf32, #tpu.memory_space<vmem>>, vector<8x32xf32>
    tpu.vector_store %arg38[%1097, %c0_357], %1095 {strides = array<i32>} : memref<64x128xf32, #tpu.memory_space<vmem>>, vector<8x32xf32>,
    %1099 = arith.index_cast %1070 : i32 to index
    %c32_358 = arith.constant 32 : index
    %1100 = vector.load %arg38[%1099, %c32_358] : memref<64x128xf32, #tpu.memory_space<vmem>>, vector<8x32xf32>
    tpu.vector_store %arg38[%1099, %c32_358], %1096 {strides = array<i32>} : memref<64x128xf32, #tpu.memory_space<vmem>>, vector<8x32xf32>,
    %c8_i32_359 = arith.constant 8 : i32
    %1101 = arith.muli %c6_i32_349, %c8_i32_359 : i32
    %1102 = tpu.assume_multiple %1101, 8 : i32
    %c7_i32_360 = arith.constant 7 : i32
    %1103 = arith.subi %c7_i32_360, %c6_i32_349 : i32
    %c8_i32_361 = arith.constant 8 : i32
    %1104 = arith.muli %1103, %c8_i32_361 : i32
    %1105 = tpu.assume_multiple %1104, 8 : i32
    %1106 = arith.index_cast %1102 : i32 to index
    %c0_362 = arith.constant 0 : index
    %1107 = vector.load %arg37[%1106, %c0_362] : memref<64x192xf32, #tpu.memory_space<vmem>>, vector<8x192xf32>
    %cst_363 = arith.constant dense<0.000000e+00> : vector<8x192xf32>
    %1108 = tpu.matmul %1055, %650, %cst_363 {dimension_numbers = #tpu.dot_dimension_numbers<[1], [0], [0], [1], [0, 0, 1, 1], [], []>} : vector<8x64xf32>, vector<64x192xf32>, vector<8x192xf32> -> vector<8x192xf32>
    %1109 = vector.extract_strided_slice %1107 {offsets = [0, 0], sizes = [8, 128], strides = [1, 1]} : vector<8x192xf32> to vector<8x128xf32>
    %1110 = vector.extract_strided_slice %1108 {offsets = [0, 0], sizes = [8, 128], strides = [1, 1]} : vector<8x192xf32> to vector<8x128xf32>
    %1111 = arith.addf %1109, %1110 : vector<8x128xf32>
    %1112 = arith.negf %1111 : vector<8x128xf32>
    %1113 = math.exp %1112 : vector<8x128xf32>
    %cst_364 = arith.constant 1.000000e+00 : f32
    %1114 = vector.broadcast %cst_364 : f32 to vector<8x128xf32>
    %1115 = arith.addf %1114, %1113 : vector<8x128xf32>
    %1116 = arith.divf %1114, %1115 : vector<8x128xf32>
    %1117 = vector.extract_strided_slice %1116 {offsets = [0, 0], sizes = [8, 64], strides = [1, 1]} : vector<8x128xf32> to vector<8x64xf32>
    %1118 = vector.extract_strided_slice %1116 {offsets = [0, 64], sizes = [8, 64], strides = [1, 1]} : vector<8x128xf32> to vector<8x64xf32>
    %1119 = vector.extract_strided_slice %1107 {offsets = [0, 128], sizes = [8, 64], strides = [1, 1]} : vector<8x192xf32> to vector<8x64xf32>
    %1120 = vector.extract_strided_slice %1108 {offsets = [0, 128], sizes = [8, 64], strides = [1, 1]} : vector<8x192xf32> to vector<8x64xf32>
    %1121 = arith.addf %1120, %653 : vector<8x64xf32>
    %1122 = arith.mulf %1117, %1121 : vector<8x64xf32>
    %1123 = arith.addf %1119, %1122 : vector<8x64xf32>
    %1124 = math.tanh %1123 : vector<8x64xf32>
    %cst_365 = arith.constant 1.000000e+00 : f32
    %1125 = vector.broadcast %cst_365 : f32 to vector<8x64xf32>
    %1126 = arith.subf %1125, %1118 : vector<8x64xf32>
    %1127 = arith.mulf %1126, %1124 : vector<8x64xf32>
    %1128 = arith.mulf %1118, %1055 : vector<8x64xf32>
    %1129 = arith.addf %1127, %1128 : vector<8x64xf32>
    %1130 = vector.extract_strided_slice %1129 {offsets = [0, 0], sizes = [8, 32], strides = [1, 1]} : vector<8x64xf32> to vector<8x32xf32>
    %1131 = vector.extract_strided_slice %1129 {offsets = [0, 32], sizes = [8, 32], strides = [1, 1]} : vector<8x64xf32> to vector<8x32xf32>
    %1132 = arith.index_cast %1102 : i32 to index
    %c0_366 = arith.constant 0 : index
    %1133 = vector.load %arg39[%1132, %c0_366] : memref<64x128xf32, #tpu.memory_space<vmem>>, vector<8x32xf32>
    tpu.vector_store %arg39[%1132, %c0_366], %1130 {strides = array<i32>} : memref<64x128xf32, #tpu.memory_space<vmem>>, vector<8x32xf32>,
    %1134 = arith.index_cast %1105 : i32 to index
    %c32_367 = arith.constant 32 : index
    %1135 = vector.load %arg39[%1134, %c32_367] : memref<64x128xf32, #tpu.memory_space<vmem>>, vector<8x32xf32>
    tpu.vector_store %arg39[%1134, %c32_367], %1131 {strides = array<i32>} : memref<64x128xf32, #tpu.memory_space<vmem>>, vector<8x32xf32>,
    %1136 = arith.index_cast %1105 : i32 to index
    %c64_368 = arith.constant 64 : index
    %1137 = vector.load %arg39[%1136, %c64_368] : memref<64x128xf32, #tpu.memory_space<vmem>>, vector<8x32xf32>
    tpu.vector_store %arg39[%1136, %c64_368], %1130 {strides = array<i32>} : memref<64x128xf32, #tpu.memory_space<vmem>>, vector<8x32xf32>,
    %1138 = arith.index_cast %1102 : i32 to index
    %c96_369 = arith.constant 96 : index
    %1139 = vector.load %arg39[%1138, %c96_369] : memref<64x128xf32, #tpu.memory_space<vmem>>, vector<8x32xf32>
    tpu.vector_store %arg39[%1138, %c96_369], %1131 {strides = array<i32>} : memref<64x128xf32, #tpu.memory_space<vmem>>, vector<8x32xf32>,
    %c7_i32_370 = arith.constant 7 : i32
    %c8_i32_371 = arith.constant 8 : i32
    %1140 = arith.muli %c7_i32_370, %c8_i32_371 : i32
    %1141 = tpu.assume_multiple %1140, 8 : i32
    %c7_i32_372 = arith.constant 7 : i32
    %1142 = arith.subi %c7_i32_372, %c7_i32_370 : i32
    %c8_i32_373 = arith.constant 8 : i32
    %1143 = arith.muli %1142, %c8_i32_373 : i32
    %1144 = tpu.assume_multiple %1143, 8 : i32
    %1145 = arith.index_cast %1141 : i32 to index
    %c0_374 = arith.constant 0 : index
    %1146 = vector.load %arg36[%1145, %c0_374] : memref<64x192xf32, #tpu.memory_space<vmem>>, vector<8x192xf32>
    %cst_375 = arith.constant dense<0.000000e+00> : vector<8x192xf32>
    %1147 = tpu.matmul %1094, %639, %cst_375 {dimension_numbers = #tpu.dot_dimension_numbers<[1], [0], [0], [1], [0, 0, 1, 1], [], []>} : vector<8x64xf32>, vector<64x192xf32>, vector<8x192xf32> -> vector<8x192xf32>
    %1148 = vector.extract_strided_slice %1146 {offsets = [0, 0], sizes = [8, 128], strides = [1, 1]} : vector<8x192xf32> to vector<8x128xf32>
    %1149 = vector.extract_strided_slice %1147 {offsets = [0, 0], sizes = [8, 128], strides = [1, 1]} : vector<8x192xf32> to vector<8x128xf32>
    %1150 = arith.addf %1148, %1149 : vector<8x128xf32>
    %1151 = arith.negf %1150 : vector<8x128xf32>
    %1152 = math.exp %1151 : vector<8x128xf32>
    %cst_376 = arith.constant 1.000000e+00 : f32
    %1153 = vector.broadcast %cst_376 : f32 to vector<8x128xf32>
    %1154 = arith.addf %1153, %1152 : vector<8x128xf32>
    %1155 = arith.divf %1153, %1154 : vector<8x128xf32>
    %1156 = vector.extract_strided_slice %1155 {offsets = [0, 0], sizes = [8, 64], strides = [1, 1]} : vector<8x128xf32> to vector<8x64xf32>
    %1157 = vector.extract_strided_slice %1155 {offsets = [0, 64], sizes = [8, 64], strides = [1, 1]} : vector<8x128xf32> to vector<8x64xf32>
    %1158 = vector.extract_strided_slice %1146 {offsets = [0, 128], sizes = [8, 64], strides = [1, 1]} : vector<8x192xf32> to vector<8x64xf32>
    %1159 = vector.extract_strided_slice %1147 {offsets = [0, 128], sizes = [8, 64], strides = [1, 1]} : vector<8x192xf32> to vector<8x64xf32>
    %1160 = arith.addf %1159, %642 : vector<8x64xf32>
    %1161 = arith.mulf %1156, %1160 : vector<8x64xf32>
    %1162 = arith.addf %1158, %1161 : vector<8x64xf32>
    %1163 = math.tanh %1162 : vector<8x64xf32>
    %cst_377 = arith.constant 1.000000e+00 : f32
    %1164 = vector.broadcast %cst_377 : f32 to vector<8x64xf32>
    %1165 = arith.subf %1164, %1157 : vector<8x64xf32>
    %1166 = arith.mulf %1165, %1163 : vector<8x64xf32>
    %1167 = arith.mulf %1157, %1094 : vector<8x64xf32>
    %1168 = arith.addf %1166, %1167 : vector<8x64xf32>
    %1169 = vector.extract_strided_slice %1168 {offsets = [0, 0], sizes = [8, 32], strides = [1, 1]} : vector<8x64xf32> to vector<8x32xf32>
    %1170 = vector.extract_strided_slice %1168 {offsets = [0, 32], sizes = [8, 32], strides = [1, 1]} : vector<8x64xf32> to vector<8x32xf32>
    %1171 = arith.index_cast %1141 : i32 to index
    %c0_378 = arith.constant 0 : index
    %1172 = vector.load %arg38[%1171, %c0_378] : memref<64x128xf32, #tpu.memory_space<vmem>>, vector<8x32xf32>
    tpu.vector_store %arg38[%1171, %c0_378], %1169 {strides = array<i32>} : memref<64x128xf32, #tpu.memory_space<vmem>>, vector<8x32xf32>,
    %1173 = arith.index_cast %1144 : i32 to index
    %c32_379 = arith.constant 32 : index
    %1174 = vector.load %arg38[%1173, %c32_379] : memref<64x128xf32, #tpu.memory_space<vmem>>, vector<8x32xf32>
    tpu.vector_store %arg38[%1173, %c32_379], %1170 {strides = array<i32>} : memref<64x128xf32, #tpu.memory_space<vmem>>, vector<8x32xf32>,
    %c8_i32_380 = arith.constant 8 : i32
    %1175 = arith.muli %c7_i32_370, %c8_i32_380 : i32
    %1176 = tpu.assume_multiple %1175, 8 : i32
    %c7_i32_381 = arith.constant 7 : i32
    %1177 = arith.subi %c7_i32_381, %c7_i32_370 : i32
    %c8_i32_382 = arith.constant 8 : i32
    %1178 = arith.muli %1177, %c8_i32_382 : i32
    %1179 = tpu.assume_multiple %1178, 8 : i32
    %1180 = arith.index_cast %1176 : i32 to index
    %c0_383 = arith.constant 0 : index
    %1181 = vector.load %arg37[%1180, %c0_383] : memref<64x192xf32, #tpu.memory_space<vmem>>, vector<8x192xf32>
    %cst_384 = arith.constant dense<0.000000e+00> : vector<8x192xf32>
    %1182 = tpu.matmul %1129, %650, %cst_384 {dimension_numbers = #tpu.dot_dimension_numbers<[1], [0], [0], [1], [0, 0, 1, 1], [], []>} : vector<8x64xf32>, vector<64x192xf32>, vector<8x192xf32> -> vector<8x192xf32>
    %1183 = vector.extract_strided_slice %1181 {offsets = [0, 0], sizes = [8, 128], strides = [1, 1]} : vector<8x192xf32> to vector<8x128xf32>
    %1184 = vector.extract_strided_slice %1182 {offsets = [0, 0], sizes = [8, 128], strides = [1, 1]} : vector<8x192xf32> to vector<8x128xf32>
    %1185 = arith.addf %1183, %1184 : vector<8x128xf32>
    %1186 = arith.negf %1185 : vector<8x128xf32>
    %1187 = math.exp %1186 : vector<8x128xf32>
    %cst_385 = arith.constant 1.000000e+00 : f32
    %1188 = vector.broadcast %cst_385 : f32 to vector<8x128xf32>
    %1189 = arith.addf %1188, %1187 : vector<8x128xf32>
    %1190 = arith.divf %1188, %1189 : vector<8x128xf32>
    %1191 = vector.extract_strided_slice %1190 {offsets = [0, 0], sizes = [8, 64], strides = [1, 1]} : vector<8x128xf32> to vector<8x64xf32>
    %1192 = vector.extract_strided_slice %1190 {offsets = [0, 64], sizes = [8, 64], strides = [1, 1]} : vector<8x128xf32> to vector<8x64xf32>
    %1193 = vector.extract_strided_slice %1181 {offsets = [0, 128], sizes = [8, 64], strides = [1, 1]} : vector<8x192xf32> to vector<8x64xf32>
    %1194 = vector.extract_strided_slice %1182 {offsets = [0, 128], sizes = [8, 64], strides = [1, 1]} : vector<8x192xf32> to vector<8x64xf32>
    %1195 = arith.addf %1194, %653 : vector<8x64xf32>
    %1196 = arith.mulf %1191, %1195 : vector<8x64xf32>
    %1197 = arith.addf %1193, %1196 : vector<8x64xf32>
    %1198 = math.tanh %1197 : vector<8x64xf32>
    %cst_386 = arith.constant 1.000000e+00 : f32
    %1199 = vector.broadcast %cst_386 : f32 to vector<8x64xf32>
    %1200 = arith.subf %1199, %1192 : vector<8x64xf32>
    %1201 = arith.mulf %1200, %1198 : vector<8x64xf32>
    %1202 = arith.mulf %1192, %1129 : vector<8x64xf32>
    %1203 = arith.addf %1201, %1202 : vector<8x64xf32>
    %1204 = vector.extract_strided_slice %1203 {offsets = [0, 0], sizes = [8, 32], strides = [1, 1]} : vector<8x64xf32> to vector<8x32xf32>
    %1205 = vector.extract_strided_slice %1203 {offsets = [0, 32], sizes = [8, 32], strides = [1, 1]} : vector<8x64xf32> to vector<8x32xf32>
    %1206 = arith.index_cast %1176 : i32 to index
    %c0_387 = arith.constant 0 : index
    %1207 = vector.load %arg39[%1206, %c0_387] : memref<64x128xf32, #tpu.memory_space<vmem>>, vector<8x32xf32>
    tpu.vector_store %arg39[%1206, %c0_387], %1204 {strides = array<i32>} : memref<64x128xf32, #tpu.memory_space<vmem>>, vector<8x32xf32>,
    %1208 = arith.index_cast %1179 : i32 to index
    %c32_388 = arith.constant 32 : index
    %1209 = vector.load %arg39[%1208, %c32_388] : memref<64x128xf32, #tpu.memory_space<vmem>>, vector<8x32xf32>
    tpu.vector_store %arg39[%1208, %c32_388], %1205 {strides = array<i32>} : memref<64x128xf32, #tpu.memory_space<vmem>>, vector<8x32xf32>,
    %1210 = arith.index_cast %1179 : i32 to index
    %c64_389 = arith.constant 64 : index
    %1211 = vector.load %arg39[%1210, %c64_389] : memref<64x128xf32, #tpu.memory_space<vmem>>, vector<8x32xf32>
    tpu.vector_store %arg39[%1210, %c64_389], %1204 {strides = array<i32>} : memref<64x128xf32, #tpu.memory_space<vmem>>, vector<8x32xf32>,
    %1212 = arith.index_cast %1176 : i32 to index
    %c96_390 = arith.constant 96 : index
    %1213 = vector.load %arg39[%1212, %c96_390] : memref<64x128xf32, #tpu.memory_space<vmem>>, vector<8x32xf32>
    tpu.vector_store %arg39[%1212, %c96_390], %1205 {strides = array<i32>} : memref<64x128xf32, #tpu.memory_space<vmem>>, vector<8x32xf32>,
    %c7_i32_391 = arith.constant 7 : i32
    %c0_392 = arith.constant 0 : index
    %c0_393 = arith.constant 0 : index
    %1214 = vector.load %arg39[%c0_392, %c0_393] : memref<64x128xf32, #tpu.memory_space<vmem>>, vector<64x128xf32>
    %c0_394 = arith.constant 0 : index
    %c0_395 = arith.constant 0 : index
    %1215 = vector.load %arg19[%c0_394, %c0_395] : memref<128x192xf32, #tpu.memory_space<vmem>>, vector<128x192xf32>
    %cst_396 = arith.constant dense<0.000000e+00> : vector<64x192xf32>
    %1216 = tpu.matmul %1214, %1215, %cst_396 {dimension_numbers = #tpu.dot_dimension_numbers<[1], [0], [0], [1], [0, 0, 1, 1], [], []>} : vector<64x128xf32>, vector<128x192xf32>, vector<64x192xf32> -> vector<64x192xf32>
    %c0_397 = arith.constant 0 : index
    %c0_398 = arith.constant 0 : index
    %1217 = vector.load %arg21[%c0_397, %c0_398] : memref<1x192xf32, #tpu.memory_space<vmem>>, vector<1x192xf32>
    %1218 = vector.broadcast %1217 : vector<1x192xf32> to vector<64x192xf32>
    %1219 = arith.addf %1216, %1218 : vector<64x192xf32>
    %c0_399 = arith.constant 0 : index
    %c0_400 = arith.constant 0 : index
    %1220 = vector.load %arg37[%c0_399, %c0_400] : memref<64x192xf32, #tpu.memory_space<vmem>>, vector<64x192xf32>
    tpu.vector_store %arg37[%c0_399, %c0_400], %1219 {strides = array<i32>} : memref<64x192xf32, #tpu.memory_space<vmem>>, vector<64x192xf32>,
    %c0_401 = arith.constant 0 : index
    %c0_402 = arith.constant 0 : index
    %1221 = vector.load %arg20[%c0_401, %c0_402] : memref<64x192xf32, #tpu.memory_space<vmem>>, vector<64x192xf32>
    %c0_403 = arith.constant 0 : index
    %c0_404 = arith.constant 0 : index
    %1222 = vector.load %arg22[%c0_403, %c0_404] : memref<1x64xf32, #tpu.memory_space<vmem>>, vector<1x64xf32>
    %1223 = vector.shape_cast %1222 : vector<1x64xf32> to vector<1x64xf32>
    %1224 = vector.broadcast %1223 : vector<1x64xf32> to vector<8x64xf32>
    %c0_405 = arith.constant 0 : index
    %c0_406 = arith.constant 0 : index
    %1225 = vector.load %arg37[%c0_405, %c0_406] : memref<64x192xf32, #tpu.memory_space<vmem>>, vector<8x192xf32>
    %1226 = vector.extract_strided_slice %1225 {offsets = [0, 0], sizes = [8, 128], strides = [1, 1]} : vector<8x192xf32> to vector<8x128xf32>
    %1227 = arith.negf %1226 : vector<8x128xf32>
    %1228 = math.exp %1227 : vector<8x128xf32>
    %cst_407 = arith.constant 1.000000e+00 : f32
    %1229 = vector.broadcast %cst_407 : f32 to vector<8x128xf32>
    %1230 = arith.addf %1229, %1228 : vector<8x128xf32>
    %1231 = arith.divf %1229, %1230 : vector<8x128xf32>
    %1232 = vector.extract_strided_slice %1231 {offsets = [0, 0], sizes = [8, 64], strides = [1, 1]} : vector<8x128xf32> to vector<8x64xf32>
    %1233 = vector.extract_strided_slice %1231 {offsets = [0, 64], sizes = [8, 64], strides = [1, 1]} : vector<8x128xf32> to vector<8x64xf32>
    %1234 = vector.extract_strided_slice %1225 {offsets = [0, 128], sizes = [8, 64], strides = [1, 1]} : vector<8x192xf32> to vector<8x64xf32>
    %1235 = arith.mulf %1232, %1224 : vector<8x64xf32>
    %1236 = arith.addf %1234, %1235 : vector<8x64xf32>
    %1237 = math.tanh %1236 : vector<8x64xf32>
    %cst_408 = arith.constant 1.000000e+00 : f32
    %1238 = vector.broadcast %cst_408 : f32 to vector<8x64xf32>
    %1239 = arith.subf %1238, %1233 : vector<8x64xf32>
    %1240 = arith.mulf %1239, %1237 : vector<8x64xf32>
    %1241 = vector.extract_strided_slice %1240 {offsets = [0, 0], sizes = [8, 32], strides = [1, 1]} : vector<8x64xf32> to vector<8x32xf32>
    %1242 = vector.extract_strided_slice %1240 {offsets = [0, 32], sizes = [8, 32], strides = [1, 1]} : vector<8x64xf32> to vector<8x32xf32>
    %c0_409 = arith.constant 0 : index
    %c0_410 = arith.constant 0 : index
    %1243 = vector.load %arg39[%c0_409, %c0_410] : memref<64x128xf32, #tpu.memory_space<vmem>>, vector<8x32xf32>
    tpu.vector_store %arg39[%c0_409, %c0_410], %1241 {strides = array<i32>} : memref<64x128xf32, #tpu.memory_space<vmem>>, vector<8x32xf32>,
    %c56_411 = arith.constant 56 : index
    %c32_412 = arith.constant 32 : index
    %1244 = vector.load %arg39[%c56_411, %c32_412] : memref<64x128xf32, #tpu.memory_space<vmem>>, vector<8x32xf32>
    tpu.vector_store %arg39[%c56_411, %c32_412], %1242 {strides = array<i32>} : memref<64x128xf32, #tpu.memory_space<vmem>>, vector<8x32xf32>,
    %c1_i32_413 = arith.constant 1 : i32
    %c8_i32_414 = arith.constant 8 : i32
    %1245 = arith.muli %c1_i32_413, %c8_i32_414 : i32
    %1246 = tpu.assume_multiple %1245, 8 : i32
    %c7_i32_415 = arith.constant 7 : i32
    %1247 = arith.subi %c7_i32_415, %c1_i32_413 : i32
    %c8_i32_416 = arith.constant 8 : i32
    %1248 = arith.muli %1247, %c8_i32_416 : i32
    %1249 = tpu.assume_multiple %1248, 8 : i32
    %1250 = arith.index_cast %1246 : i32 to index
    %c0_417 = arith.constant 0 : index
    %1251 = vector.load %arg37[%1250, %c0_417] : memref<64x192xf32, #tpu.memory_space<vmem>>, vector<8x192xf32>
    %cst_418 = arith.constant dense<0.000000e+00> : vector<8x192xf32>
    %1252 = tpu.matmul %1240, %1221, %cst_418 {dimension_numbers = #tpu.dot_dimension_numbers<[1], [0], [0], [1], [0, 0, 1, 1], [], []>} : vector<8x64xf32>, vector<64x192xf32>, vector<8x192xf32> -> vector<8x192xf32>
    %1253 = vector.extract_strided_slice %1251 {offsets = [0, 0], sizes = [8, 128], strides = [1, 1]} : vector<8x192xf32> to vector<8x128xf32>
    %1254 = vector.extract_strided_slice %1252 {offsets = [0, 0], sizes = [8, 128], strides = [1, 1]} : vector<8x192xf32> to vector<8x128xf32>
    %1255 = arith.addf %1253, %1254 : vector<8x128xf32>
    %1256 = arith.negf %1255 : vector<8x128xf32>
    %1257 = math.exp %1256 : vector<8x128xf32>
    %cst_419 = arith.constant 1.000000e+00 : f32
    %1258 = vector.broadcast %cst_419 : f32 to vector<8x128xf32>
    %1259 = arith.addf %1258, %1257 : vector<8x128xf32>
    %1260 = arith.divf %1258, %1259 : vector<8x128xf32>
    %1261 = vector.extract_strided_slice %1260 {offsets = [0, 0], sizes = [8, 64], strides = [1, 1]} : vector<8x128xf32> to vector<8x64xf32>
    %1262 = vector.extract_strided_slice %1260 {offsets = [0, 64], sizes = [8, 64], strides = [1, 1]} : vector<8x128xf32> to vector<8x64xf32>
    %1263 = vector.extract_strided_slice %1251 {offsets = [0, 128], sizes = [8, 64], strides = [1, 1]} : vector<8x192xf32> to vector<8x64xf32>
    %1264 = vector.extract_strided_slice %1252 {offsets = [0, 128], sizes = [8, 64], strides = [1, 1]} : vector<8x192xf32> to vector<8x64xf32>
    %1265 = arith.addf %1264, %1224 : vector<8x64xf32>
    %1266 = arith.mulf %1261, %1265 : vector<8x64xf32>
    %1267 = arith.addf %1263, %1266 : vector<8x64xf32>
    %1268 = math.tanh %1267 : vector<8x64xf32>
    %cst_420 = arith.constant 1.000000e+00 : f32
    %1269 = vector.broadcast %cst_420 : f32 to vector<8x64xf32>
    %1270 = arith.subf %1269, %1262 : vector<8x64xf32>
    %1271 = arith.mulf %1270, %1268 : vector<8x64xf32>
    %1272 = arith.mulf %1262, %1240 : vector<8x64xf32>
    %1273 = arith.addf %1271, %1272 : vector<8x64xf32>
    %1274 = vector.extract_strided_slice %1273 {offsets = [0, 0], sizes = [8, 32], strides = [1, 1]} : vector<8x64xf32> to vector<8x32xf32>
    %1275 = vector.extract_strided_slice %1273 {offsets = [0, 32], sizes = [8, 32], strides = [1, 1]} : vector<8x64xf32> to vector<8x32xf32>
    %1276 = arith.index_cast %1246 : i32 to index
    %c0_421 = arith.constant 0 : index
    %1277 = vector.load %arg39[%1276, %c0_421] : memref<64x128xf32, #tpu.memory_space<vmem>>, vector<8x32xf32>
    tpu.vector_store %arg39[%1276, %c0_421], %1274 {strides = array<i32>} : memref<64x128xf32, #tpu.memory_space<vmem>>, vector<8x32xf32>,
    %1278 = arith.index_cast %1249 : i32 to index
    %c32_422 = arith.constant 32 : index
    %1279 = vector.load %arg39[%1278, %c32_422] : memref<64x128xf32, #tpu.memory_space<vmem>>, vector<8x32xf32>
    tpu.vector_store %arg39[%1278, %c32_422], %1275 {strides = array<i32>} : memref<64x128xf32, #tpu.memory_space<vmem>>, vector<8x32xf32>,
    %c2_i32_423 = arith.constant 2 : i32
    %c8_i32_424 = arith.constant 8 : i32
    %1280 = arith.muli %c2_i32_423, %c8_i32_424 : i32
    %1281 = tpu.assume_multiple %1280, 8 : i32
    %c7_i32_425 = arith.constant 7 : i32
    %1282 = arith.subi %c7_i32_425, %c2_i32_423 : i32
    %c8_i32_426 = arith.constant 8 : i32
    %1283 = arith.muli %1282, %c8_i32_426 : i32
    %1284 = tpu.assume_multiple %1283, 8 : i32
    %1285 = arith.index_cast %1281 : i32 to index
    %c0_427 = arith.constant 0 : index
    %1286 = vector.load %arg37[%1285, %c0_427] : memref<64x192xf32, #tpu.memory_space<vmem>>, vector<8x192xf32>
    %cst_428 = arith.constant dense<0.000000e+00> : vector<8x192xf32>
    %1287 = tpu.matmul %1273, %1221, %cst_428 {dimension_numbers = #tpu.dot_dimension_numbers<[1], [0], [0], [1], [0, 0, 1, 1], [], []>} : vector<8x64xf32>, vector<64x192xf32>, vector<8x192xf32> -> vector<8x192xf32>
    %1288 = vector.extract_strided_slice %1286 {offsets = [0, 0], sizes = [8, 128], strides = [1, 1]} : vector<8x192xf32> to vector<8x128xf32>
    %1289 = vector.extract_strided_slice %1287 {offsets = [0, 0], sizes = [8, 128], strides = [1, 1]} : vector<8x192xf32> to vector<8x128xf32>
    %1290 = arith.addf %1288, %1289 : vector<8x128xf32>
    %1291 = arith.negf %1290 : vector<8x128xf32>
    %1292 = math.exp %1291 : vector<8x128xf32>
    %cst_429 = arith.constant 1.000000e+00 : f32
    %1293 = vector.broadcast %cst_429 : f32 to vector<8x128xf32>
    %1294 = arith.addf %1293, %1292 : vector<8x128xf32>
    %1295 = arith.divf %1293, %1294 : vector<8x128xf32>
    %1296 = vector.extract_strided_slice %1295 {offsets = [0, 0], sizes = [8, 64], strides = [1, 1]} : vector<8x128xf32> to vector<8x64xf32>
    %1297 = vector.extract_strided_slice %1295 {offsets = [0, 64], sizes = [8, 64], strides = [1, 1]} : vector<8x128xf32> to vector<8x64xf32>
    %1298 = vector.extract_strided_slice %1286 {offsets = [0, 128], sizes = [8, 64], strides = [1, 1]} : vector<8x192xf32> to vector<8x64xf32>
    %1299 = vector.extract_strided_slice %1287 {offsets = [0, 128], sizes = [8, 64], strides = [1, 1]} : vector<8x192xf32> to vector<8x64xf32>
    %1300 = arith.addf %1299, %1224 : vector<8x64xf32>
    %1301 = arith.mulf %1296, %1300 : vector<8x64xf32>
    %1302 = arith.addf %1298, %1301 : vector<8x64xf32>
    %1303 = math.tanh %1302 : vector<8x64xf32>
    %cst_430 = arith.constant 1.000000e+00 : f32
    %1304 = vector.broadcast %cst_430 : f32 to vector<8x64xf32>
    %1305 = arith.subf %1304, %1297 : vector<8x64xf32>
    %1306 = arith.mulf %1305, %1303 : vector<8x64xf32>
    %1307 = arith.mulf %1297, %1273 : vector<8x64xf32>
    %1308 = arith.addf %1306, %1307 : vector<8x64xf32>
    %1309 = vector.extract_strided_slice %1308 {offsets = [0, 0], sizes = [8, 32], strides = [1, 1]} : vector<8x64xf32> to vector<8x32xf32>
    %1310 = vector.extract_strided_slice %1308 {offsets = [0, 32], sizes = [8, 32], strides = [1, 1]} : vector<8x64xf32> to vector<8x32xf32>
    %1311 = arith.index_cast %1281 : i32 to index
    %c0_431 = arith.constant 0 : index
    %1312 = vector.load %arg39[%1311, %c0_431] : memref<64x128xf32, #tpu.memory_space<vmem>>, vector<8x32xf32>
    tpu.vector_store %arg39[%1311, %c0_431], %1309 {strides = array<i32>} : memref<64x128xf32, #tpu.memory_space<vmem>>, vector<8x32xf32>,
    %1313 = arith.index_cast %1284 : i32 to index
    %c32_432 = arith.constant 32 : index
    %1314 = vector.load %arg39[%1313, %c32_432] : memref<64x128xf32, #tpu.memory_space<vmem>>, vector<8x32xf32>
    tpu.vector_store %arg39[%1313, %c32_432], %1310 {strides = array<i32>} : memref<64x128xf32, #tpu.memory_space<vmem>>, vector<8x32xf32>,
    %c3_i32_433 = arith.constant 3 : i32
    %c8_i32_434 = arith.constant 8 : i32
    %1315 = arith.muli %c3_i32_433, %c8_i32_434 : i32
    %1316 = tpu.assume_multiple %1315, 8 : i32
    %c7_i32_435 = arith.constant 7 : i32
    %1317 = arith.subi %c7_i32_435, %c3_i32_433 : i32
    %c8_i32_436 = arith.constant 8 : i32
    %1318 = arith.muli %1317, %c8_i32_436 : i32
    %1319 = tpu.assume_multiple %1318, 8 : i32
    %1320 = arith.index_cast %1316 : i32 to index
    %c0_437 = arith.constant 0 : index
    %1321 = vector.load %arg37[%1320, %c0_437] : memref<64x192xf32, #tpu.memory_space<vmem>>, vector<8x192xf32>
    %cst_438 = arith.constant dense<0.000000e+00> : vector<8x192xf32>
    %1322 = tpu.matmul %1308, %1221, %cst_438 {dimension_numbers = #tpu.dot_dimension_numbers<[1], [0], [0], [1], [0, 0, 1, 1], [], []>} : vector<8x64xf32>, vector<64x192xf32>, vector<8x192xf32> -> vector<8x192xf32>
    %1323 = vector.extract_strided_slice %1321 {offsets = [0, 0], sizes = [8, 128], strides = [1, 1]} : vector<8x192xf32> to vector<8x128xf32>
    %1324 = vector.extract_strided_slice %1322 {offsets = [0, 0], sizes = [8, 128], strides = [1, 1]} : vector<8x192xf32> to vector<8x128xf32>
    %1325 = arith.addf %1323, %1324 : vector<8x128xf32>
    %1326 = arith.negf %1325 : vector<8x128xf32>
    %1327 = math.exp %1326 : vector<8x128xf32>
    %cst_439 = arith.constant 1.000000e+00 : f32
    %1328 = vector.broadcast %cst_439 : f32 to vector<8x128xf32>
    %1329 = arith.addf %1328, %1327 : vector<8x128xf32>
    %1330 = arith.divf %1328, %1329 : vector<8x128xf32>
    %1331 = vector.extract_strided_slice %1330 {offsets = [0, 0], sizes = [8, 64], strides = [1, 1]} : vector<8x128xf32> to vector<8x64xf32>
    %1332 = vector.extract_strided_slice %1330 {offsets = [0, 64], sizes = [8, 64], strides = [1, 1]} : vector<8x128xf32> to vector<8x64xf32>
    %1333 = vector.extract_strided_slice %1321 {offsets = [0, 128], sizes = [8, 64], strides = [1, 1]} : vector<8x192xf32> to vector<8x64xf32>
    %1334 = vector.extract_strided_slice %1322 {offsets = [0, 128], sizes = [8, 64], strides = [1, 1]} : vector<8x192xf32> to vector<8x64xf32>
    %1335 = arith.addf %1334, %1224 : vector<8x64xf32>
    %1336 = arith.mulf %1331, %1335 : vector<8x64xf32>
    %1337 = arith.addf %1333, %1336 : vector<8x64xf32>
    %1338 = math.tanh %1337 : vector<8x64xf32>
    %cst_440 = arith.constant 1.000000e+00 : f32
    %1339 = vector.broadcast %cst_440 : f32 to vector<8x64xf32>
    %1340 = arith.subf %1339, %1332 : vector<8x64xf32>
    %1341 = arith.mulf %1340, %1338 : vector<8x64xf32>
    %1342 = arith.mulf %1332, %1308 : vector<8x64xf32>
    %1343 = arith.addf %1341, %1342 : vector<8x64xf32>
    %1344 = vector.extract_strided_slice %1343 {offsets = [0, 0], sizes = [8, 32], strides = [1, 1]} : vector<8x64xf32> to vector<8x32xf32>
    %1345 = vector.extract_strided_slice %1343 {offsets = [0, 32], sizes = [8, 32], strides = [1, 1]} : vector<8x64xf32> to vector<8x32xf32>
    %1346 = arith.index_cast %1316 : i32 to index
    %c0_441 = arith.constant 0 : index
    %1347 = vector.load %arg39[%1346, %c0_441] : memref<64x128xf32, #tpu.memory_space<vmem>>, vector<8x32xf32>
    tpu.vector_store %arg39[%1346, %c0_441], %1344 {strides = array<i32>} : memref<64x128xf32, #tpu.memory_space<vmem>>, vector<8x32xf32>,
    %1348 = arith.index_cast %1319 : i32 to index
    %c32_442 = arith.constant 32 : index
    %1349 = vector.load %arg39[%1348, %c32_442] : memref<64x128xf32, #tpu.memory_space<vmem>>, vector<8x32xf32>
    tpu.vector_store %arg39[%1348, %c32_442], %1345 {strides = array<i32>} : memref<64x128xf32, #tpu.memory_space<vmem>>, vector<8x32xf32>,
    %c4_i32_443 = arith.constant 4 : i32
    %c8_i32_444 = arith.constant 8 : i32
    %1350 = arith.muli %c4_i32_443, %c8_i32_444 : i32
    %1351 = tpu.assume_multiple %1350, 8 : i32
    %c7_i32_445 = arith.constant 7 : i32
    %1352 = arith.subi %c7_i32_445, %c4_i32_443 : i32
    %c8_i32_446 = arith.constant 8 : i32
    %1353 = arith.muli %1352, %c8_i32_446 : i32
    %1354 = tpu.assume_multiple %1353, 8 : i32
    %1355 = arith.index_cast %1351 : i32 to index
    %c0_447 = arith.constant 0 : index
    %1356 = vector.load %arg37[%1355, %c0_447] : memref<64x192xf32, #tpu.memory_space<vmem>>, vector<8x192xf32>
    %cst_448 = arith.constant dense<0.000000e+00> : vector<8x192xf32>
    %1357 = tpu.matmul %1343, %1221, %cst_448 {dimension_numbers = #tpu.dot_dimension_numbers<[1], [0], [0], [1], [0, 0, 1, 1], [], []>} : vector<8x64xf32>, vector<64x192xf32>, vector<8x192xf32> -> vector<8x192xf32>
    %1358 = vector.extract_strided_slice %1356 {offsets = [0, 0], sizes = [8, 128], strides = [1, 1]} : vector<8x192xf32> to vector<8x128xf32>
    %1359 = vector.extract_strided_slice %1357 {offsets = [0, 0], sizes = [8, 128], strides = [1, 1]} : vector<8x192xf32> to vector<8x128xf32>
    %1360 = arith.addf %1358, %1359 : vector<8x128xf32>
    %1361 = arith.negf %1360 : vector<8x128xf32>
    %1362 = math.exp %1361 : vector<8x128xf32>
    %cst_449 = arith.constant 1.000000e+00 : f32
    %1363 = vector.broadcast %cst_449 : f32 to vector<8x128xf32>
    %1364 = arith.addf %1363, %1362 : vector<8x128xf32>
    %1365 = arith.divf %1363, %1364 : vector<8x128xf32>
    %1366 = vector.extract_strided_slice %1365 {offsets = [0, 0], sizes = [8, 64], strides = [1, 1]} : vector<8x128xf32> to vector<8x64xf32>
    %1367 = vector.extract_strided_slice %1365 {offsets = [0, 64], sizes = [8, 64], strides = [1, 1]} : vector<8x128xf32> to vector<8x64xf32>
    %1368 = vector.extract_strided_slice %1356 {offsets = [0, 128], sizes = [8, 64], strides = [1, 1]} : vector<8x192xf32> to vector<8x64xf32>
    %1369 = vector.extract_strided_slice %1357 {offsets = [0, 128], sizes = [8, 64], strides = [1, 1]} : vector<8x192xf32> to vector<8x64xf32>
    %1370 = arith.addf %1369, %1224 : vector<8x64xf32>
    %1371 = arith.mulf %1366, %1370 : vector<8x64xf32>
    %1372 = arith.addf %1368, %1371 : vector<8x64xf32>
    %1373 = math.tanh %1372 : vector<8x64xf32>
    %cst_450 = arith.constant 1.000000e+00 : f32
    %1374 = vector.broadcast %cst_450 : f32 to vector<8x64xf32>
    %1375 = arith.subf %1374, %1367 : vector<8x64xf32>
    %1376 = arith.mulf %1375, %1373 : vector<8x64xf32>
    %1377 = arith.mulf %1367, %1343 : vector<8x64xf32>
    %1378 = arith.addf %1376, %1377 : vector<8x64xf32>
    %1379 = vector.extract_strided_slice %1378 {offsets = [0, 0], sizes = [8, 32], strides = [1, 1]} : vector<8x64xf32> to vector<8x32xf32>
    %1380 = vector.extract_strided_slice %1378 {offsets = [0, 32], sizes = [8, 32], strides = [1, 1]} : vector<8x64xf32> to vector<8x32xf32>
    %1381 = arith.index_cast %1351 : i32 to index
    %c0_451 = arith.constant 0 : index
    %1382 = vector.load %arg39[%1381, %c0_451] : memref<64x128xf32, #tpu.memory_space<vmem>>, vector<8x32xf32>
    tpu.vector_store %arg39[%1381, %c0_451], %1379 {strides = array<i32>} : memref<64x128xf32, #tpu.memory_space<vmem>>, vector<8x32xf32>,
    %1383 = arith.index_cast %1354 : i32 to index
    %c32_452 = arith.constant 32 : index
    %1384 = vector.load %arg39[%1383, %c32_452] : memref<64x128xf32, #tpu.memory_space<vmem>>, vector<8x32xf32>
    tpu.vector_store %arg39[%1383, %c32_452], %1380 {strides = array<i32>} : memref<64x128xf32, #tpu.memory_space<vmem>>, vector<8x32xf32>,
    %c5_i32_453 = arith.constant 5 : i32
    %c8_i32_454 = arith.constant 8 : i32
    %1385 = arith.muli %c5_i32_453, %c8_i32_454 : i32
    %1386 = tpu.assume_multiple %1385, 8 : i32
    %c7_i32_455 = arith.constant 7 : i32
    %1387 = arith.subi %c7_i32_455, %c5_i32_453 : i32
    %c8_i32_456 = arith.constant 8 : i32
    %1388 = arith.muli %1387, %c8_i32_456 : i32
    %1389 = tpu.assume_multiple %1388, 8 : i32
    %1390 = arith.index_cast %1386 : i32 to index
    %c0_457 = arith.constant 0 : index
    %1391 = vector.load %arg37[%1390, %c0_457] : memref<64x192xf32, #tpu.memory_space<vmem>>, vector<8x192xf32>
    %cst_458 = arith.constant dense<0.000000e+00> : vector<8x192xf32>
    %1392 = tpu.matmul %1378, %1221, %cst_458 {dimension_numbers = #tpu.dot_dimension_numbers<[1], [0], [0], [1], [0, 0, 1, 1], [], []>} : vector<8x64xf32>, vector<64x192xf32>, vector<8x192xf32> -> vector<8x192xf32>
    %1393 = vector.extract_strided_slice %1391 {offsets = [0, 0], sizes = [8, 128], strides = [1, 1]} : vector<8x192xf32> to vector<8x128xf32>
    %1394 = vector.extract_strided_slice %1392 {offsets = [0, 0], sizes = [8, 128], strides = [1, 1]} : vector<8x192xf32> to vector<8x128xf32>
    %1395 = arith.addf %1393, %1394 : vector<8x128xf32>
    %1396 = arith.negf %1395 : vector<8x128xf32>
    %1397 = math.exp %1396 : vector<8x128xf32>
    %cst_459 = arith.constant 1.000000e+00 : f32
    %1398 = vector.broadcast %cst_459 : f32 to vector<8x128xf32>
    %1399 = arith.addf %1398, %1397 : vector<8x128xf32>
    %1400 = arith.divf %1398, %1399 : vector<8x128xf32>
    %1401 = vector.extract_strided_slice %1400 {offsets = [0, 0], sizes = [8, 64], strides = [1, 1]} : vector<8x128xf32> to vector<8x64xf32>
    %1402 = vector.extract_strided_slice %1400 {offsets = [0, 64], sizes = [8, 64], strides = [1, 1]} : vector<8x128xf32> to vector<8x64xf32>
    %1403 = vector.extract_strided_slice %1391 {offsets = [0, 128], sizes = [8, 64], strides = [1, 1]} : vector<8x192xf32> to vector<8x64xf32>
    %1404 = vector.extract_strided_slice %1392 {offsets = [0, 128], sizes = [8, 64], strides = [1, 1]} : vector<8x192xf32> to vector<8x64xf32>
    %1405 = arith.addf %1404, %1224 : vector<8x64xf32>
    %1406 = arith.mulf %1401, %1405 : vector<8x64xf32>
    %1407 = arith.addf %1403, %1406 : vector<8x64xf32>
    %1408 = math.tanh %1407 : vector<8x64xf32>
    %cst_460 = arith.constant 1.000000e+00 : f32
    %1409 = vector.broadcast %cst_460 : f32 to vector<8x64xf32>
    %1410 = arith.subf %1409, %1402 : vector<8x64xf32>
    %1411 = arith.mulf %1410, %1408 : vector<8x64xf32>
    %1412 = arith.mulf %1402, %1378 : vector<8x64xf32>
    %1413 = arith.addf %1411, %1412 : vector<8x64xf32>
    %1414 = vector.extract_strided_slice %1413 {offsets = [0, 0], sizes = [8, 32], strides = [1, 1]} : vector<8x64xf32> to vector<8x32xf32>
    %1415 = vector.extract_strided_slice %1413 {offsets = [0, 32], sizes = [8, 32], strides = [1, 1]} : vector<8x64xf32> to vector<8x32xf32>
    %1416 = arith.index_cast %1386 : i32 to index
    %c0_461 = arith.constant 0 : index
    %1417 = vector.load %arg39[%1416, %c0_461] : memref<64x128xf32, #tpu.memory_space<vmem>>, vector<8x32xf32>
    tpu.vector_store %arg39[%1416, %c0_461], %1414 {strides = array<i32>} : memref<64x128xf32, #tpu.memory_space<vmem>>, vector<8x32xf32>,
    %1418 = arith.index_cast %1389 : i32 to index
    %c32_462 = arith.constant 32 : index
    %1419 = vector.load %arg39[%1418, %c32_462] : memref<64x128xf32, #tpu.memory_space<vmem>>, vector<8x32xf32>
    tpu.vector_store %arg39[%1418, %c32_462], %1415 {strides = array<i32>} : memref<64x128xf32, #tpu.memory_space<vmem>>, vector<8x32xf32>,
    %c6_i32_463 = arith.constant 6 : i32
    %c8_i32_464 = arith.constant 8 : i32
    %1420 = arith.muli %c6_i32_463, %c8_i32_464 : i32
    %1421 = tpu.assume_multiple %1420, 8 : i32
    %c7_i32_465 = arith.constant 7 : i32
    %1422 = arith.subi %c7_i32_465, %c6_i32_463 : i32
    %c8_i32_466 = arith.constant 8 : i32
    %1423 = arith.muli %1422, %c8_i32_466 : i32
    %1424 = tpu.assume_multiple %1423, 8 : i32
    %1425 = arith.index_cast %1421 : i32 to index
    %c0_467 = arith.constant 0 : index
    %1426 = vector.load %arg37[%1425, %c0_467] : memref<64x192xf32, #tpu.memory_space<vmem>>, vector<8x192xf32>
    %cst_468 = arith.constant dense<0.000000e+00> : vector<8x192xf32>
    %1427 = tpu.matmul %1413, %1221, %cst_468 {dimension_numbers = #tpu.dot_dimension_numbers<[1], [0], [0], [1], [0, 0, 1, 1], [], []>} : vector<8x64xf32>, vector<64x192xf32>, vector<8x192xf32> -> vector<8x192xf32>
    %1428 = vector.extract_strided_slice %1426 {offsets = [0, 0], sizes = [8, 128], strides = [1, 1]} : vector<8x192xf32> to vector<8x128xf32>
    %1429 = vector.extract_strided_slice %1427 {offsets = [0, 0], sizes = [8, 128], strides = [1, 1]} : vector<8x192xf32> to vector<8x128xf32>
    %1430 = arith.addf %1428, %1429 : vector<8x128xf32>
    %1431 = arith.negf %1430 : vector<8x128xf32>
    %1432 = math.exp %1431 : vector<8x128xf32>
    %cst_469 = arith.constant 1.000000e+00 : f32
    %1433 = vector.broadcast %cst_469 : f32 to vector<8x128xf32>
    %1434 = arith.addf %1433, %1432 : vector<8x128xf32>
    %1435 = arith.divf %1433, %1434 : vector<8x128xf32>
    %1436 = vector.extract_strided_slice %1435 {offsets = [0, 0], sizes = [8, 64], strides = [1, 1]} : vector<8x128xf32> to vector<8x64xf32>
    %1437 = vector.extract_strided_slice %1435 {offsets = [0, 64], sizes = [8, 64], strides = [1, 1]} : vector<8x128xf32> to vector<8x64xf32>
    %1438 = vector.extract_strided_slice %1426 {offsets = [0, 128], sizes = [8, 64], strides = [1, 1]} : vector<8x192xf32> to vector<8x64xf32>
    %1439 = vector.extract_strided_slice %1427 {offsets = [0, 128], sizes = [8, 64], strides = [1, 1]} : vector<8x192xf32> to vector<8x64xf32>
    %1440 = arith.addf %1439, %1224 : vector<8x64xf32>
    %1441 = arith.mulf %1436, %1440 : vector<8x64xf32>
    %1442 = arith.addf %1438, %1441 : vector<8x64xf32>
    %1443 = math.tanh %1442 : vector<8x64xf32>
    %cst_470 = arith.constant 1.000000e+00 : f32
    %1444 = vector.broadcast %cst_470 : f32 to vector<8x64xf32>
    %1445 = arith.subf %1444, %1437 : vector<8x64xf32>
    %1446 = arith.mulf %1445, %1443 : vector<8x64xf32>
    %1447 = arith.mulf %1437, %1413 : vector<8x64xf32>
    %1448 = arith.addf %1446, %1447 : vector<8x64xf32>
    %1449 = vector.extract_strided_slice %1448 {offsets = [0, 0], sizes = [8, 32], strides = [1, 1]} : vector<8x64xf32> to vector<8x32xf32>
    %1450 = vector.extract_strided_slice %1448 {offsets = [0, 32], sizes = [8, 32], strides = [1, 1]} : vector<8x64xf32> to vector<8x32xf32>
    %1451 = arith.index_cast %1421 : i32 to index
    %c0_471 = arith.constant 0 : index
    %1452 = vector.load %arg39[%1451, %c0_471] : memref<64x128xf32, #tpu.memory_space<vmem>>, vector<8x32xf32>
    tpu.vector_store %arg39[%1451, %c0_471], %1449 {strides = array<i32>} : memref<64x128xf32, #tpu.memory_space<vmem>>, vector<8x32xf32>,
    %1453 = arith.index_cast %1424 : i32 to index
    %c32_472 = arith.constant 32 : index
    %1454 = vector.load %arg39[%1453, %c32_472] : memref<64x128xf32, #tpu.memory_space<vmem>>, vector<8x32xf32>
    tpu.vector_store %arg39[%1453, %c32_472], %1450 {strides = array<i32>} : memref<64x128xf32, #tpu.memory_space<vmem>>, vector<8x32xf32>,
    %c7_i32_473 = arith.constant 7 : i32
    %c8_i32_474 = arith.constant 8 : i32
    %1455 = arith.muli %c7_i32_473, %c8_i32_474 : i32
    %1456 = tpu.assume_multiple %1455, 8 : i32
    %c7_i32_475 = arith.constant 7 : i32
    %1457 = arith.subi %c7_i32_475, %c7_i32_473 : i32
    %c8_i32_476 = arith.constant 8 : i32
    %1458 = arith.muli %1457, %c8_i32_476 : i32
    %1459 = tpu.assume_multiple %1458, 8 : i32
    %1460 = arith.index_cast %1456 : i32 to index
    %c0_477 = arith.constant 0 : index
    %1461 = vector.load %arg37[%1460, %c0_477] : memref<64x192xf32, #tpu.memory_space<vmem>>, vector<8x192xf32>
    %cst_478 = arith.constant dense<0.000000e+00> : vector<8x192xf32>
    %1462 = tpu.matmul %1448, %1221, %cst_478 {dimension_numbers = #tpu.dot_dimension_numbers<[1], [0], [0], [1], [0, 0, 1, 1], [], []>} : vector<8x64xf32>, vector<64x192xf32>, vector<8x192xf32> -> vector<8x192xf32>
    %1463 = vector.extract_strided_slice %1461 {offsets = [0, 0], sizes = [8, 128], strides = [1, 1]} : vector<8x192xf32> to vector<8x128xf32>
    %1464 = vector.extract_strided_slice %1462 {offsets = [0, 0], sizes = [8, 128], strides = [1, 1]} : vector<8x192xf32> to vector<8x128xf32>
    %1465 = arith.addf %1463, %1464 : vector<8x128xf32>
    %1466 = arith.negf %1465 : vector<8x128xf32>
    %1467 = math.exp %1466 : vector<8x128xf32>
    %cst_479 = arith.constant 1.000000e+00 : f32
    %1468 = vector.broadcast %cst_479 : f32 to vector<8x128xf32>
    %1469 = arith.addf %1468, %1467 : vector<8x128xf32>
    %1470 = arith.divf %1468, %1469 : vector<8x128xf32>
    %1471 = vector.extract_strided_slice %1470 {offsets = [0, 0], sizes = [8, 64], strides = [1, 1]} : vector<8x128xf32> to vector<8x64xf32>
    %1472 = vector.extract_strided_slice %1470 {offsets = [0, 64], sizes = [8, 64], strides = [1, 1]} : vector<8x128xf32> to vector<8x64xf32>
    %1473 = vector.extract_strided_slice %1461 {offsets = [0, 128], sizes = [8, 64], strides = [1, 1]} : vector<8x192xf32> to vector<8x64xf32>
    %1474 = vector.extract_strided_slice %1462 {offsets = [0, 128], sizes = [8, 64], strides = [1, 1]} : vector<8x192xf32> to vector<8x64xf32>
    %1475 = arith.addf %1474, %1224 : vector<8x64xf32>
    %1476 = arith.mulf %1471, %1475 : vector<8x64xf32>
    %1477 = arith.addf %1473, %1476 : vector<8x64xf32>
    %1478 = math.tanh %1477 : vector<8x64xf32>
    %cst_480 = arith.constant 1.000000e+00 : f32
    %1479 = vector.broadcast %cst_480 : f32 to vector<8x64xf32>
    %1480 = arith.subf %1479, %1472 : vector<8x64xf32>
    %1481 = arith.mulf %1480, %1478 : vector<8x64xf32>
    %1482 = arith.mulf %1472, %1448 : vector<8x64xf32>
    %1483 = arith.addf %1481, %1482 : vector<8x64xf32>
    %1484 = vector.extract_strided_slice %1483 {offsets = [0, 0], sizes = [8, 32], strides = [1, 1]} : vector<8x64xf32> to vector<8x32xf32>
    %1485 = vector.extract_strided_slice %1483 {offsets = [0, 32], sizes = [8, 32], strides = [1, 1]} : vector<8x64xf32> to vector<8x32xf32>
    %1486 = arith.index_cast %1456 : i32 to index
    %c0_481 = arith.constant 0 : index
    %1487 = vector.load %arg39[%1486, %c0_481] : memref<64x128xf32, #tpu.memory_space<vmem>>, vector<8x32xf32>
    tpu.vector_store %arg39[%1486, %c0_481], %1484 {strides = array<i32>} : memref<64x128xf32, #tpu.memory_space<vmem>>, vector<8x32xf32>,
    %1488 = arith.index_cast %1459 : i32 to index
    %c32_482 = arith.constant 32 : index
    %1489 = vector.load %arg39[%1488, %c32_482] : memref<64x128xf32, #tpu.memory_space<vmem>>, vector<8x32xf32>
    tpu.vector_store %arg39[%1488, %c32_482], %1485 {strides = array<i32>} : memref<64x128xf32, #tpu.memory_space<vmem>>, vector<8x32xf32>,
    %c7_i32_483 = arith.constant 7 : i32
    %c0_484 = arith.constant 0 : index
    %c0_485 = arith.constant 0 : index
    %1490 = vector.load %arg38[%c0_484, %c0_485] : memref<64x128xf32, #tpu.memory_space<vmem>>, vector<64x128xf32>
    %1491 = vector.extract_strided_slice %1490 {offsets = [0, 0], sizes = [64, 64], strides = [1, 1]} : vector<64x128xf32> to vector<64x64xf32>
    %c0_486 = arith.constant 0 : index
    %c0_487 = arith.constant 0 : index
    %1492 = vector.load %arg39[%c0_486, %c0_487] : memref<64x128xf32, #tpu.memory_space<vmem>>, vector<64x128xf32>
    %1493 = vector.extract_strided_slice %1492 {offsets = [0, 0], sizes = [64, 64], strides = [1, 1]} : vector<64x128xf32> to vector<64x64xf32>
    %c0_488 = arith.constant 0 : index
    %c0_489 = arith.constant 0 : index
    %1494 = vector.load %arg26[%c0_488, %c0_489] : memref<64x16xf32, #tpu.memory_space<vmem>>, vector<64x16xf32>
    %cst_490 = arith.constant dense<0.000000e+00> : vector<64x16xf32>
    %1495 = tpu.matmul %1491, %1494, %cst_490 {dimension_numbers = #tpu.dot_dimension_numbers<[1], [0], [0], [1], [0, 0, 1, 1], [], []>} : vector<64x64xf32>, vector<64x16xf32>, vector<64x16xf32> -> vector<64x16xf32>
    %c0_491 = arith.constant 0 : index
    %c0_492 = arith.constant 0 : index
    %1496 = vector.load %arg27[%c0_491, %c0_492] : memref<1x16xf32, #tpu.memory_space<vmem>>, vector<1x16xf32>
    %1497 = vector.broadcast %1496 : vector<1x16xf32> to vector<64x16xf32>
    %1498 = arith.addf %1495, %1497 : vector<64x16xf32>
    %c0_493 = arith.constant 0 : index
    %c0_494 = arith.constant 0 : index
    %1499 = vector.load %arg28[%c0_493, %c0_494] : memref<64x16xf32, #tpu.memory_space<vmem>>, vector<64x16xf32>
    %cst_495 = arith.constant dense<0.000000e+00> : vector<64x16xf32>
    %1500 = tpu.matmul %1493, %1499, %cst_495 {dimension_numbers = #tpu.dot_dimension_numbers<[1], [0], [0], [1], [0, 0, 1, 1], [], []>} : vector<64x64xf32>, vector<64x16xf32>, vector<64x16xf32> -> vector<64x16xf32>
    %c0_496 = arith.constant 0 : index
    %c0_497 = arith.constant 0 : index
    %1501 = vector.load %arg29[%c0_496, %c0_497] : memref<1x16xf32, #tpu.memory_space<vmem>>, vector<1x16xf32>
    %1502 = vector.broadcast %1501 : vector<1x16xf32> to vector<64x16xf32>
    %1503 = arith.addf %1500, %1502 : vector<64x16xf32>
    %c0_498 = arith.constant 0 : index
    %c0_499 = arith.constant 0 : index
    %1504 = vector.load %arg2[%c0_498, %c0_499] : memref<8x112xf32, #tpu.memory_space<vmem>>, vector<8x112xf32>
    %c0_500 = arith.constant 0 : index
    %c0_501 = arith.constant 0 : index
    %1505 = vector.load %arg23[%c0_500, %c0_501] : memref<112x672xf32, #tpu.memory_space<vmem>>, vector<112x672xf32>
    %cst_502 = arith.constant dense<0.000000e+00> : vector<8x672xf32>
    %1506 = tpu.matmul %1504, %1505, %cst_502 {dimension_numbers = #tpu.dot_dimension_numbers<[1], [0], [0], [1], [0, 0, 1, 1], [], []>} : vector<8x112xf32>, vector<112x672xf32>, vector<8x672xf32> -> vector<8x672xf32>
    %c0_503 = arith.constant 0 : index
    %c0_504 = arith.constant 0 : index
    %1507 = vector.load %arg24[%c0_503, %c0_504] : memref<1x672xf32, #tpu.memory_space<vmem>>, vector<1x672xf32>
    %1508 = vector.broadcast %1507 : vector<1x672xf32> to vector<8x672xf32>
    %1509 = arith.addf %1506, %1508 : vector<8x672xf32>
    %1510 = vector.extract_strided_slice %1509 {offsets = [0, 0], sizes = [8, 448], strides = [1, 1]} : vector<8x672xf32> to vector<8x448xf32>
    %1511 = arith.negf %1510 : vector<8x448xf32>
    %1512 = math.exp %1511 : vector<8x448xf32>
    %cst_505 = arith.constant 1.000000e+00 : f32
    %1513 = vector.broadcast %cst_505 : f32 to vector<8x448xf32>
    %1514 = arith.addf %1513, %1512 : vector<8x448xf32>
    %1515 = arith.divf %1513, %1514 : vector<8x448xf32>
    %1516 = vector.extract_strided_slice %1515 {offsets = [0, 0], sizes = [8, 224], strides = [1, 1]} : vector<8x448xf32> to vector<8x224xf32>
    %1517 = vector.extract_strided_slice %1515 {offsets = [0, 224], sizes = [8, 224], strides = [1, 1]} : vector<8x448xf32> to vector<8x224xf32>
    %1518 = vector.extract_strided_slice %1509 {offsets = [0, 448], sizes = [8, 224], strides = [1, 1]} : vector<8x672xf32> to vector<8x224xf32>
    %c0_506 = arith.constant 0 : index
    %c0_507 = arith.constant 0 : index
    %1519 = vector.load %arg25[%c0_506, %c0_507] : memref<1x224xf32, #tpu.memory_space<vmem>>, vector<1x224xf32>
    %1520 = vector.broadcast %1519 : vector<1x224xf32> to vector<8x224xf32>
    %1521 = arith.mulf %1516, %1520 : vector<8x224xf32>
    %1522 = arith.addf %1518, %1521 : vector<8x224xf32>
    %1523 = math.tanh %1522 : vector<8x224xf32>
    %cst_508 = arith.constant 1.000000e+00 : f32
    %1524 = vector.broadcast %cst_508 : f32 to vector<8x224xf32>
    %1525 = arith.subf %1524, %1517 : vector<8x224xf32>
    %1526 = arith.mulf %1525, %1523 : vector<8x224xf32>
    %c0_509 = arith.constant 0 : index
    %c0_510 = arith.constant 0 : index
    %1527 = vector.load %arg30[%c0_509, %c0_510] : memref<224x16xf32, #tpu.memory_space<vmem>>, vector<224x16xf32>
    %cst_511 = arith.constant dense<0.000000e+00> : vector<8x16xf32>
    %1528 = tpu.matmul %1526, %1527, %cst_511 {dimension_numbers = #tpu.dot_dimension_numbers<[1], [0], [0], [1], [0, 0, 1, 1], [], []>} : vector<8x224xf32>, vector<224x16xf32>, vector<8x16xf32> -> vector<8x16xf32>
    %c0_512 = arith.constant 0 : index
    %c0_513 = arith.constant 0 : index
    %1529 = vector.load %arg31[%c0_512, %c0_513] : memref<1x16xf32, #tpu.memory_space<vmem>>, vector<1x16xf32>
    %1530 = vector.broadcast %1529 : vector<1x16xf32> to vector<8x16xf32>
    %1531 = arith.addf %1528, %1530 : vector<8x16xf32>
    %c0_514 = arith.constant 0 : index
    %c0_515 = arith.constant 0 : index
    %1532 = vector.load %arg33[%c0_514, %c0_515] : memref<16x16xf32, #tpu.memory_space<vmem>>, vector<16x16xf32>
    %cst_516 = arith.constant dense<0.000000e+00> : vector<8x16xf32>
    %1533 = tpu.matmul %1531, %1532, %cst_516 {dimension_numbers = #tpu.dot_dimension_numbers<[1], [0], [0], [1], [0, 0, 1, 1], [], []>} : vector<8x16xf32>, vector<16x16xf32>, vector<8x16xf32> -> vector<8x16xf32>
    %c0_517 = arith.constant 0 : index
    %c0_518 = arith.constant 0 : index
    %1534 = vector.load %arg34[%c0_517, %c0_518] : memref<1x16xf32, #tpu.memory_space<vmem>>, vector<1x16xf32>
    %1535 = vector.broadcast %1534 : vector<1x16xf32> to vector<8x16xf32>
    %1536 = arith.addf %1533, %1535 : vector<8x16xf32>
    %c0_519 = arith.constant 0 : index
    %c0_520 = arith.constant 0 : index
    %1537 = vector.load %arg32[%c0_519, %c0_520] : memref<16x16xf32, #tpu.memory_space<vmem>>, vector<16x16xf32>
    %cst_521 = arith.constant dense<0.000000e+00> : vector<64x16xf32>
    %1538 = tpu.matmul %1498, %1537, %cst_521 {dimension_numbers = #tpu.dot_dimension_numbers<[1], [0], [0], [1], [0, 0, 1, 1], [], []>} : vector<64x16xf32>, vector<16x16xf32>, vector<64x16xf32> -> vector<64x16xf32>
    %c0_522 = arith.constant 0 : index
    %c0_523 = arith.constant 0 : index
    %1539 = vector.load %arg33[%c0_522, %c0_523] : memref<16x16xf32, #tpu.memory_space<vmem>>, vector<16x16xf32>
    %cst_524 = arith.constant dense<0.000000e+00> : vector<64x16xf32>
    %1540 = tpu.matmul %1503, %1539, %cst_524 {dimension_numbers = #tpu.dot_dimension_numbers<[1], [0], [0], [1], [0, 0, 1, 1], [], []>} : vector<64x16xf32>, vector<16x16xf32>, vector<64x16xf32> -> vector<64x16xf32>
    %1541 = arith.addf %1538, %1540 : vector<64x16xf32>
    %1542 = tpu.concatenate %1536, %1536, %1536, %1536, %1536, %1536, %1536, %1536 in 0 : vector<8x16xf32>, vector<8x16xf32>, vector<8x16xf32>, vector<8x16xf32>, vector<8x16xf32>, vector<8x16xf32>, vector<8x16xf32>, vector<8x16xf32> -> vector<64x16xf32>
    %1543 = arith.addf %1541, %1542 : vector<64x16xf32>
    %c0_525 = arith.constant 0 : index
    %c0_526 = arith.constant 0 : index
    %1544 = vector.load %arg35[%c0_525, %c0_526] : memref<64x16xf32, #tpu.memory_space<vmem>>, vector<64x16xf32>
    tpu.vector_store %arg35[%c0_525, %c0_526], %1543 {strides = array<i32>} : memref<64x16xf32, #tpu.memory_space<vmem>>, vector<64x16xf32>,
    return
  }
}

</mosaic_0001>

<llo_original>
// kernel: fed_enhance_lstm_forward.1
$region0: #{fed_enhance_lstm_forward.1}
  #allocation0 [shape = 'u32[]', space=smem, size = 0x4, offset = 0x4, fixed_abs, tag = 'smem constant byte address 0x4 - core index']
  #allocation1 [shape = 'u32[144,128]{1,0:T(1,128)}', space=vmem, size = 0x12000, scoped, tag = 'internal scratch']
  #allocation2 [shape = 'f32[64,192]{1,0:T(8,128)}', space=vmem, size = 0x10000, scoped, tag = 'scratch operand']
  #allocation3 [shape = 'f32[64,192]{1,0:T(8,128)}', space=vmem, size = 0x10000, scoped, tag = 'scratch operand']
  #allocation4 [shape = 'f32[64,128]{1,0:T(8,128)}', space=vmem, size = 0x8000, scoped, tag = 'scratch operand']
  #allocation5 [shape = 'f32[64,128]{1,0:T(8,128)}', space=vmem, size = 0x8000, scoped, tag = 'scratch operand']
  %s0 = inlined_call_operand.smem [shape: u32[36], index: -1, kind: input, shape index: {}]
  %s1 = sld [smem:[%s0]]
  %s2 = scalar_lea.smem %s0, 1
  %s3 = sld [smem:[%s2]]
  %s4 = scalar_lea.smem %s0, 2
  %s5 = sld [smem:[%s4]]
  %s6 = scalar_lea.smem %s0, 3
  %s7 = sld [smem:[%s6]]
  %s8 = scalar_lea.smem %s0, 4
  %s9 = sld [smem:[%s8]]
  %s10 = scalar_lea.smem %s0, 5
  %s11 = sld [smem:[%s10]]
  %s12 = scalar_lea.smem %s0, 6
  %s13 = sld [smem:[%s12]]
  %s14 = scalar_lea.smem %s0, 7
  %s15 = sld [smem:[%s14]]
  %s16 = scalar_lea.smem %s0, 8
  %s17 = sld [smem:[%s16]]
  %s18 = scalar_lea.smem %s0, 9
  %s19 = sld [smem:[%s18]]
  %s20 = scalar_lea.smem %s0, 10
  %s21 = sld [smem:[%s20]]
  %s22 = scalar_lea.smem %s0, 11
  %s23 = sld [smem:[%s22]]
  %s24 = scalar_lea.smem %s0, 12
  %s25 = sld [smem:[%s24]]
  %s26 = scalar_lea.smem %s0, 13
  %s27 = sld [smem:[%s26]]
  %s28 = scalar_lea.smem %s0, 14
  %s29 = sld [smem:[%s28]]
  %s30 = scalar_lea.smem %s0, 15
  %s31 = sld [smem:[%s30]]
  %s32 = scalar_lea.smem %s0, 16
  %s33 = sld [smem:[%s32]]
  %s34 = scalar_lea.smem %s0, 17
  %s35 = sld [smem:[%s34]]
  %s36 = scalar_lea.smem %s0, 18
  %s37 = sld [smem:[%s36]]
  %s38 = scalar_lea.smem %s0, 19
  %s39 = sld [smem:[%s38]]
  %s40 = scalar_lea.smem %s0, 20
  %s41 = sld [smem:[%s40]]
  %s42 = scalar_lea.smem %s0, 21
  %s43 = sld [smem:[%s42]]
  %s44 = scalar_lea.smem %s0, 22
  %s45 = sld [smem:[%s44]]
  %s46 = scalar_lea.smem %s0, 23
  %s47 = sld [smem:[%s46]]
  %s48 = scalar_lea.smem %s0, 24
  %s49 = sld [smem:[%s48]]
  %s50 = scalar_lea.smem %s0, 25
  %s51 = sld [smem:[%s50]]
  %s52 = scalar_lea.smem %s0, 26
  %s53 = sld [smem:[%s52]]
  %s54 = scalar_lea.smem %s0, 27
  %s55 = sld [smem:[%s54]]
  %s56 = scalar_lea.smem %s0, 28
  %s57 = sld [smem:[%s56]]
  %s58 = scalar_lea.smem %s0, 29
  %s59 = sld [smem:[%s58]]
  %s60 = scalar_lea.smem %s0, 30
  %s61 = sld [smem:[%s60]]
  %s62 = scalar_lea.smem %s0, 31
  %s63 = sld [smem:[%s62]]
  %s64 = scalar_lea.smem %s0, 32
  %s65 = sld [smem:[%s64]]
  %s66 = scalar_lea.smem %s0, 33
  %s67 = sld [smem:[%s66]]
  %s68 = scalar_lea.smem %s0, 34
  %s69 = sld [smem:[%s68]]
  %s70 = scalar_lea.smem %s0, 35
  %s71 = sld [smem:[%s70]]
  %s72 = sld [smem:[#allocation0]]
  $region222: #{fed_enhance_lstm_forward.1} parent=0
    _
  %s74 = ssub.s32 1, %s72
  %s75 = scalar_select 0, %s74, %s72
  $region1: #{fed_enhance_lstm_forward.1} parent=0
    #allocation6 [shape = 'u8[1024]{0}', space=vmem, size = 0x400, scoped, tag = 'input window, operand 5, single buffered']
    #allocation7 [shape = 's32[1]{0}', space=sflag, size = 0x4, scoped, tag = 'scoped memory for fed_enhance_lstm_forward.1']
    #allocation8 [shape = 'u8[512]{0}', space=vmem, size = 0x400, scoped, tag = 'input window, operand 6, single buffered']
    #allocation9 [shape = 's32[1]{0}', space=sflag, size = 0x4, scoped, tag = 'scoped memory for fed_enhance_lstm_forward.1']
    #allocation10 [shape = 'u8[1024]{0}', space=vmem, size = 0x400, scoped, tag = 'input window, operand 9, single buffered']
    #allocation11 [shape = 'u8[512]{0}', space=vmem, size = 0x400, scoped, tag = 'input window, operand 10, single buffered']
    #allocation12 [shape = 's32[1]{0}', space=sflag, size = 0x4, scoped, tag = 'scoped memory for fed_enhance_lstm_forward.1']
    #allocation13 [shape = 'u8[1024]{0}', space=vmem, size = 0x400, scoped, tag = 'input window, operand 13, single buffered']
    #allocation14 [shape = 'u8[512]{0}', space=vmem, size = 0x400, scoped, tag = 'input window, operand 14, single buffered']
    #allocation15 [shape = 's32[1]{0}', space=sflag, size = 0x4, scoped, tag = 'scoped memory for fed_enhance_lstm_forward.1']
    #allocation16 [shape = 'u8[1024]{0}', space=vmem, size = 0x400, scoped, tag = 'input window, operand 17, single buffered']
    #allocation17 [shape = 'u8[512]{0}', space=vmem, size = 0x400, scoped, tag = 'input window, operand 18, single buffered']
    #allocation18 [shape = 's32[1]{0}', space=sflag, size = 0x4, scoped, tag = 'scoped memory for fed_enhance_lstm_forward.1']
    #allocation19 [shape = 'u8[1024]{0}', space=vmem, size = 0x400, scoped, tag = 'input window, operand 21, single buffered']
    #allocation20 [shape = 'u8[512]{0}', space=vmem, size = 0x400, scoped, tag = 'input window, operand 22, single buffered']
    #allocation21 [shape = 's32[1]{0}', space=sflag, size = 0x4, scoped, tag = 'scoped memory for fed_enhance_lstm_forward.1']
    #allocation22 [shape = 'u8[3072]{0}', space=vmem, size = 0xc00, scoped, tag = 'input window, operand 24, single buffered']
    #allocation23 [shape = 'u8[1024]{0}', space=vmem, size = 0x400, scoped, tag = 'input window, operand 25, single buffered']
    #allocation24 [shape = 's32[1]{0}', space=sflag, size = 0x4, scoped, tag = 'scoped memory for fed_enhance_lstm_forward.1']
    #allocation25 [shape = 'u8[512]{0}', space=vmem, size = 0x400, scoped, tag = 'input window, operand 27, single buffered']
    #allocation26 [shape = 'u8[512]{0}', space=vmem, size = 0x400, scoped, tag = 'input window, operand 29, single buffered']
    #allocation27 [shape = 's32[1]{0}', space=sflag, size = 0x4, scoped, tag = 'scoped memory for fed_enhance_lstm_forward.1']
    #allocation28 [shape = 'u8[512]{0}', space=vmem, size = 0x400, scoped, tag = 'input window, operand 31, single buffered']
    #allocation29 [shape = 'u8[8192]{0}', space=vmem, size = 0x2000, scoped, tag = 'input window, operand 32, single buffered']
    #allocation30 [shape = 's32[1]{0}', space=sflag, size = 0x4, scoped, tag = 'scoped memory for fed_enhance_lstm_forward.1']
    #allocation31 [shape = 'u8[8192]{0}', space=vmem, size = 0x2000, scoped, tag = 'input window, operand 33, single buffered']
    #allocation32 [shape = 'u8[512]{0}', space=vmem, size = 0x400, scoped, tag = 'input window, operand 34, single buffered']
    #allocation33 [shape = 's32[1]{0}', space=sflag, size = 0x4, scoped, tag = 'scoped memory for fed_enhance_lstm_forward.1']
    %76 = vsyncpa [#allocation7], 0
    %77 = vsyncpa [#allocation9], 0
    %78 = vsyncpa [#allocation12], 0
    %79 = vsyncpa [#allocation15], 0
    %80 = vsyncpa [#allocation18], 0
    %81 = vsyncpa [#allocation21], 0
    %82 = vsyncpa [#allocation24], 0
    %83 = vsyncpa [#allocation27], 0
    %84 = vsyncpa [#allocation30], 0
    %85 = vsyncpa [#allocation33], 0
    // Predicated region
    $region2: #{fed_enhance_lstm_forward.1} parent=1 // pred_check
      _
    $region3: #{fed_enhance_lstm_forward.1} parent=1 // pred_check_branch
      %87 = sbr.rel (0) target = $region5
    $region4: #{fed_enhance_lstm_forward.1} parent=1 // pred_region
      _
    $region5: #{fed_enhance_lstm_forward.1} parent=1 // pred_fallthru
      _
    // Predicated region
    $region6: #{fed_enhance_lstm_forward.1} parent=1 // pred_check
      _
    $region7: #{fed_enhance_lstm_forward.1} parent=1 // pred_check_branch
      %89 = sbr.rel (0) target = $region9
    $region8: #{fed_enhance_lstm_forward.1} parent=1 // pred_region
      _
    $region9: #{fed_enhance_lstm_forward.1} parent=1 // pred_fallthru
      _
    // Predicated region
    $region10: #{fed_enhance_lstm_forward.1} parent=1 // pred_check
      _
    $region11: #{fed_enhance_lstm_forward.1} parent=1 // pred_check_branch
      %91 = sbr.rel (0) target = $region13
    $region12: #{fed_enhance_lstm_forward.1} parent=1 // pred_region
      _
    $region13: #{fed_enhance_lstm_forward.1} parent=1 // pred_fallthru
      _
    // Predicated region
    $region14: #{fed_enhance_lstm_forward.1} parent=1 // pred_check
      _
    $region15: #{fed_enhance_lstm_forward.1} parent=1 // pred_check_branch
      %93 = sbr.rel (0) target = $region17
    $region16: #{fed_enhance_lstm_forward.1} parent=1 // pred_region
      _
    $region17: #{fed_enhance_lstm_forward.1} parent=1 // pred_fallthru
      _
    // Predicated region
    $region18: #{fed_enhance_lstm_forward.1} parent=1 // pred_check
      _
    $region19: #{fed_enhance_lstm_forward.1} parent=1 // pred_check_branch
      %95 = sbr.rel (0) target = $region21
    $region20: #{fed_enhance_lstm_forward.1} parent=1 // pred_region
      _
    $region21: #{fed_enhance_lstm_forward.1} parent=1 // pred_fallthru
      _
    // Predicated region
    $region22: #{fed_enhance_lstm_forward.1} parent=1 // pred_check
      _
    $region23: #{fed_enhance_lstm_forward.1} parent=1 // pred_check_branch
      %97 = sbr.rel (0) target = $region25
    $region24: #{fed_enhance_lstm_forward.1} parent=1 // pred_region
      %s99 = ssub.s32 32, 32
      %100 = vsyncadd [#allocation7], %s99
      %s102 = sshll.u32 [#allocation6], 4
      %s103 = int_to_ptr.vmem [resolvable:$true] %s102
      %105 = dma.hbm_to_vmem [thread:$0]  %s11, 32, %s103, [#allocation7]
    $region25: #{fed_enhance_lstm_forward.1} parent=1 // pred_fallthru
      _
    // Predicated region
    $region26: #{fed_enhance_lstm_forward.1} parent=1 // pred_check
      _
    $region27: #{fed_enhance_lstm_forward.1} parent=1 // pred_check_branch
      %107 = sbr.rel (0) target = $region29
    $region28: #{fed_enhance_lstm_forward.1} parent=1 // pred_region
      %s109 = ssub.s32 16, 16
      %110 = vsyncadd [#allocation9], %s109
      %s112 = sshll.u32 [#allocation8], 4
      %s113 = int_to_ptr.vmem [resolvable:$true] %s112
      %115 = dma.hbm_to_vmem [thread:$0]  %s13, 16, %s113, [#allocation9]
    $region29: #{fed_enhance_lstm_forward.1} parent=1 // pred_fallthru
      _
    // Predicated region
    $region30: #{fed_enhance_lstm_forward.1} parent=1 // pred_check
      _
    $region31: #{fed_enhance_lstm_forward.1} parent=1 // pred_check_branch
      %117 = sbr.rel (0) target = $region33
    $region32: #{fed_enhance_lstm_forward.1} parent=1 // pred_region
      _
    $region33: #{fed_enhance_lstm_forward.1} parent=1 // pred_fallthru
      _
    // Predicated region
    $region34: #{fed_enhance_lstm_forward.1} parent=1 // pred_check
      _
    $region35: #{fed_enhance_lstm_forward.1} parent=1 // pred_check_branch
      %119 = sbr.rel (0) target = $region37
    $region36: #{fed_enhance_lstm_forward.1} parent=1 // pred_region
      _
    $region37: #{fed_enhance_lstm_forward.1} parent=1 // pred_fallthru
      _
    // Predicated region
    $region38: #{fed_enhance_lstm_forward.1} parent=1 // pred_check
      _
    $region39: #{fed_enhance_lstm_forward.1} parent=1 // pred_check_branch
      %121 = sbr.rel (0) target = $region41
    $region40: #{fed_enhance_lstm_forward.1} parent=1 // pred_region
      %s123 = ssub.s32 32, 32
      %124 = vsyncadd [#allocation9], %s123
      %s126 = sshll.u32 [#allocation10], 4
      %s127 = int_to_ptr.vmem [resolvable:$true] %s126
      %129 = dma.hbm_to_vmem [thread:$0]  %s19, 32, %s127, [#allocation9]
    $region41: #{fed_enhance_lstm_forward.1} parent=1 // pred_fallthru
      _
    // Predicated region
    $region42: #{fed_enhance_lstm_forward.1} parent=1 // pred_check
      _
    $region43: #{fed_enhance_lstm_forward.1} parent=1 // pred_check_branch
      %131 = sbr.rel (0) target = $region45
    $region44: #{fed_enhance_lstm_forward.1} parent=1 // pred_region
      %s133 = ssub.s32 16, 16
      %134 = vsyncadd [#allocation12], %s133
      %s136 = sshll.u32 [#allocation11], 4
      %s137 = int_to_ptr.vmem [resolvable:$true] %s136
      %139 = dma.hbm_to_vmem [thread:$0]  %s21, 16, %s137, [#allocation12]
    $region45: #{fed_enhance_lstm_forward.1} parent=1 // pred_fallthru
      _
    // Predicated region
    $region46: #{fed_enhance_lstm_forward.1} parent=1 // pred_check
      _
    $region47: #{fed_enhance_lstm_forward.1} parent=1 // pred_check_branch
      %141 = sbr.rel (0) target = $region49
    $region48: #{fed_enhance_lstm_forward.1} parent=1 // pred_region
      _
    $region49: #{fed_enhance_lstm_forward.1} parent=1 // pred_fallthru
      _
    // Predicated region
    $region50: #{fed_enhance_lstm_forward.1} parent=1 // pred_check
      _
    $region51: #{fed_enhance_lstm_forward.1} parent=1 // pred_check_branch
      %143 = sbr.rel (0) target = $region53
    $region52: #{fed_enhance_lstm_forward.1} parent=1 // pred_region
      _
    $region53: #{fed_enhance_lstm_forward.1} parent=1 // pred_fallthru
      _
    // Predicated region
    $region54: #{fed_enhance_lstm_forward.1} parent=1 // pred_check
      _
    $region55: #{fed_enhance_lstm_forward.1} parent=1 // pred_check_branch
      %145 = sbr.rel (0) target = $region57
    $region56: #{fed_enhance_lstm_forward.1} parent=1 // pred_region
      %s147 = ssub.s32 32, 32
      %148 = vsyncadd [#allocation12], %s147
      %s150 = sshll.u32 [#allocation13], 4
      %s151 = int_to_ptr.vmem [resolvable:$true] %s150
      %153 = dma.hbm_to_vmem [thread:$0]  %s27, 32, %s151, [#allocation12]
    $region57: #{fed_enhance_lstm_forward.1} parent=1 // pred_fallthru
      _
    // Predicated region
    $region58: #{fed_enhance_lstm_forward.1} parent=1 // pred_check
      _
    $region59: #{fed_enhance_lstm_forward.1} parent=1 // pred_check_branch
      %155 = sbr.rel (0) target = $region61
    $region60: #{fed_enhance_lstm_forward.1} parent=1 // pred_region
      %s157 = ssub.s32 16, 16
      %158 = vsyncadd [#allocation15], %s157
      %s160 = sshll.u32 [#allocation14], 4
      %s161 = int_to_ptr.vmem [resolvable:$true] %s160
      %163 = dma.hbm_to_vmem [thread:$0]  %s29, 16, %s161, [#allocation15]
    $region61: #{fed_enhance_lstm_forward.1} parent=1 // pred_fallthru
      _
    // Predicated region
    $region62: #{fed_enhance_lstm_forward.1} parent=1 // pred_check
      _
    $region63: #{fed_enhance_lstm_forward.1} parent=1 // pred_check_branch
      %165 = sbr.rel (0) target = $region65
    $region64: #{fed_enhance_lstm_forward.1} parent=1 // pred_region
      _
    $region65: #{fed_enhance_lstm_forward.1} parent=1 // pred_fallthru
      _
    // Predicated region
    $region66: #{fed_enhance_lstm_forward.1} parent=1 // pred_check
      _
    $region67: #{fed_enhance_lstm_forward.1} parent=1 // pred_check_branch
      %167 = sbr.rel (0) target = $region69
    $region68: #{fed_enhance_lstm_forward.1} parent=1 // pred_region
      _
    $region69: #{fed_enhance_lstm_forward.1} parent=1 // pred_fallthru
      _
    // Predicated region
    $region70: #{fed_enhance_lstm_forward.1} parent=1 // pred_check
      _
    $region71: #{fed_enhance_lstm_forward.1} parent=1 // pred_check_branch
      %169 = sbr.rel (0) target = $region73
    $region72: #{fed_enhance_lstm_forward.1} parent=1 // pred_region
      %s171 = ssub.s32 32, 32
      %172 = vsyncadd [#allocation15], %s171
      %s174 = sshll.u32 [#allocation16], 4
      %s175 = int_to_ptr.vmem [resolvable:$true] %s174
      %177 = dma.hbm_to_vmem [thread:$0]  %s35, 32, %s175, [#allocation15]
    $region73: #{fed_enhance_lstm_forward.1} parent=1 // pred_fallthru
      _
    // Predicated region
    $region74: #{fed_enhance_lstm_forward.1} parent=1 // pred_check
      _
    $region75: #{fed_enhance_lstm_forward.1} parent=1 // pred_check_branch
      %179 = sbr.rel (0) target = $region77
    $region76: #{fed_enhance_lstm_forward.1} parent=1 // pred_region
      %s181 = ssub.s32 16, 16
      %182 = vsyncadd [#allocation18], %s181
      %s184 = sshll.u32 [#allocation17], 4
      %s185 = int_to_ptr.vmem [resolvable:$true] %s184
      %187 = dma.hbm_to_vmem [thread:$0]  %s37, 16, %s185, [#allocation18]
    $region77: #{fed_enhance_lstm_forward.1} parent=1 // pred_fallthru
      _
    // Predicated region
    $region78: #{fed_enhance_lstm_forward.1} parent=1 // pred_check
      _
    $region79: #{fed_enhance_lstm_forward.1} parent=1 // pred_check_branch
      %189 = sbr.rel (0) target = $region81
    $region80: #{fed_enhance_lstm_forward.1} parent=1 // pred_region
      _
    $region81: #{fed_enhance_lstm_forward.1} parent=1 // pred_fallthru
      _
    // Predicated region
    $region82: #{fed_enhance_lstm_forward.1} parent=1 // pred_check
      _
    $region83: #{fed_enhance_lstm_forward.1} parent=1 // pred_check_branch
      %191 = sbr.rel (0) target = $region85
    $region84: #{fed_enhance_lstm_forward.1} parent=1 // pred_region
      _
    $region85: #{fed_enhance_lstm_forward.1} parent=1 // pred_fallthru
      _
    // Predicated region
    $region86: #{fed_enhance_lstm_forward.1} parent=1 // pred_check
      _
    $region87: #{fed_enhance_lstm_forward.1} parent=1 // pred_check_branch
      %193 = sbr.rel (0) target = $region89
    $region88: #{fed_enhance_lstm_forward.1} parent=1 // pred_region
      %s195 = ssub.s32 32, 32
      %196 = vsyncadd [#allocation18], %s195
      %s198 = sshll.u32 [#allocation19], 4
      %s199 = int_to_ptr.vmem [resolvable:$true] %s198
      %201 = dma.hbm_to_vmem [thread:$0]  %s43, 32, %s199, [#allocation18]
    $region89: #{fed_enhance_lstm_forward.1} parent=1 // pred_fallthru
      _
    // Predicated region
    $region90: #{fed_enhance_lstm_forward.1} parent=1 // pred_check
      _
    $region91: #{fed_enhance_lstm_forward.1} parent=1 // pred_check_branch
      %203 = sbr.rel (0) target = $region93
    $region92: #{fed_enhance_lstm_forward.1} parent=1 // pred_region
      %s205 = ssub.s32 16, 16
      %206 = vsyncadd [#allocation21], %s205
      %s208 = sshll.u32 [#allocation20], 4
      %s209 = int_to_ptr.vmem [resolvable:$true] %s208
      %211 = dma.hbm_to_vmem [thread:$0]  %s45, 16, %s209, [#allocation21]
    $region93: #{fed_enhance_lstm_forward.1} parent=1 // pred_fallthru
      _
    // Predicated region
    $region94: #{fed_enhance_lstm_forward.1} parent=1 // pred_check
      _
    $region95: #{fed_enhance_lstm_forward.1} parent=1 // pred_check_branch
      %213 = sbr.rel (0) target = $region97
    $region96: #{fed_enhance_lstm_forward.1} parent=1 // pred_region
      _
    $region97: #{fed_enhance_lstm_forward.1} parent=1 // pred_fallthru
      _
    // Predicated region
    $region98: #{fed_enhance_lstm_forward.1} parent=1 // pred_check
      _
    $region99: #{fed_enhance_lstm_forward.1} parent=1 // pred_check_branch
      %215 = sbr.rel (0) target = $region101
    $region100: #{fed_enhance_lstm_forward.1} parent=1 // pred_region
      %s217 = ssub.s32 96, 96
      %218 = vsyncadd [#allocation21], %s217
      %s220 = sshll.u32 [#allocation22], 4
      %s221 = int_to_ptr.vmem [resolvable:$true] %s220
      %223 = dma.hbm_to_vmem [thread:$0]  %s49, 96, %s221, [#allocation21]
    $region101: #{fed_enhance_lstm_forward.1} parent=1 // pred_fallthru
      _
    // Predicated region
    $region102: #{fed_enhance_lstm_forward.1} parent=1 // pred_check
      _
    $region103: #{fed_enhance_lstm_forward.1} parent=1 // pred_check_branch
      %225 = sbr.rel (0) target = $region105
    $region104: #{fed_enhance_lstm_forward.1} parent=1 // pred_region
      %s227 = ssub.s32 32, 32
      %228 = vsyncadd [#allocation24], %s227
      %s230 = sshll.u32 [#allocation23], 4
      %s231 = int_to_ptr.vmem [resolvable:$true] %s230
      %233 = dma.hbm_to_vmem [thread:$0]  %s51, 32, %s231, [#allocation24]
    $region105: #{fed_enhance_lstm_forward.1} parent=1 // pred_fallthru
      _
    // Predicated region
    $region106: #{fed_enhance_lstm_forward.1} parent=1 // pred_check
      _
    $region107: #{fed_enhance_lstm_forward.1} parent=1 // pred_check_branch
      %235 = sbr.rel (0) target = $region109
    $region108: #{fed_enhance_lstm_forward.1} parent=1 // pred_region
      _
    $region109: #{fed_enhance_lstm_forward.1} parent=1 // pred_fallthru
      _
    // Predicated region
    $region110: #{fed_enhance_lstm_forward.1} parent=1 // pred_check
      _
    $region111: #{fed_enhance_lstm_forward.1} parent=1 // pred_check_branch
      %237 = sbr.rel (0) target = $region113
    $region112: #{fed_enhance_lstm_forward.1} parent=1 // pred_region
      %s239 = ssub.s32 16, 16
      %240 = vsyncadd [#allocation24], %s239
      %s242 = sshll.u32 [#allocation25], 4
      %s243 = int_to_ptr.vmem [resolvable:$true] %s242
      %245 = dma.hbm_to_vmem [thread:$0]  %s55, 16, %s243, [#allocation24]
    $region113: #{fed_enhance_lstm_forward.1} parent=1 // pred_fallthru
      _
    // Predicated region
    $region114: #{fed_enhance_lstm_forward.1} parent=1 // pred_check
      _
    $region115: #{fed_enhance_lstm_forward.1} parent=1 // pred_check_branch
      %247 = sbr.rel (0) target = $region117
    $region116: #{fed_enhance_lstm_forward.1} parent=1 // pred_region
      _
    $region117: #{fed_enhance_lstm_forward.1} parent=1 // pred_fallthru
      _
    // Predicated region
    $region118: #{fed_enhance_lstm_forward.1} parent=1 // pred_check
      _
    $region119: #{fed_enhance_lstm_forward.1} parent=1 // pred_check_branch
      %249 = sbr.rel (0) target = $region121
    $region120: #{fed_enhance_lstm_forward.1} parent=1 // pred_region
      %s251 = ssub.s32 16, 16
      %252 = vsyncadd [#allocation27], %s251
      %s254 = sshll.u32 [#allocation26], 4
      %s255 = int_to_ptr.vmem [resolvable:$true] %s254
      %257 = dma.hbm_to_vmem [thread:$0]  %s59, 16, %s255, [#allocation27]
    $region121: #{fed_enhance_lstm_forward.1} parent=1 // pred_fallthru
      _
    // Predicated region
    $region122: #{fed_enhance_lstm_forward.1} parent=1 // pred_check
      _
    $region123: #{fed_enhance_lstm_forward.1} parent=1 // pred_check_branch
      %259 = sbr.rel (0) target = $region125
    $region124: #{fed_enhance_lstm_forward.1} parent=1 // pred_region
      _
    $region125: #{fed_enhance_lstm_forward.1} parent=1 // pred_fallthru
      _
    // Predicated region
    $region126: #{fed_enhance_lstm_forward.1} parent=1 // pred_check
      _
    $region127: #{fed_enhance_lstm_forward.1} parent=1 // pred_check_branch
      %261 = sbr.rel (0) target = $region129
    $region128: #{fed_enhance_lstm_forward.1} parent=1 // pred_region
      %s263 = ssub.s32 16, 16
      %264 = vsyncadd [#allocation27], %s263
      %s266 = sshll.u32 [#allocation28], 4
      %s267 = int_to_ptr.vmem [resolvable:$true] %s266
      %269 = dma.hbm_to_vmem [thread:$0]  %s63, 16, %s267, [#allocation27]
    $region129: #{fed_enhance_lstm_forward.1} parent=1 // pred_fallthru
      _
    // Predicated region
    $region130: #{fed_enhance_lstm_forward.1} parent=1 // pred_check
      _
    $region131: #{fed_enhance_lstm_forward.1} parent=1 // pred_check_branch
      %271 = sbr.rel (0) target = $region133
    $region132: #{fed_enhance_lstm_forward.1} parent=1 // pred_region
      %s273 = ssub.s32 256, 256
      %274 = vsyncadd [#allocation30], %s273
      %s275 = sshll.u32 [#allocation29], 4
      %s276 = int_to_ptr.vmem [resolvable:$true] %s275
      %281 = dma.hbm_to_vmem [thread:$0]  %s65, 256, %s276, [#allocation30], 128, 128, 8
    $region133: #{fed_enhance_lstm_forward.1} parent=1 // pred_fallthru
      _
    // Predicated region
    $region134: #{fed_enhance_lstm_forward.1} parent=1 // pred_check
      _
    $region135: #{fed_enhance_lstm_forward.1} parent=1 // pred_check_branch
      %283 = sbr.rel (0) target = $region137
    $region136: #{fed_enhance_lstm_forward.1} parent=1 // pred_region
      %s285 = ssub.s32 256, 256
      %286 = vsyncadd [#allocation30], %s285
      %s287 = sshll.u32 [#allocation31], 4
      %s288 = int_to_ptr.vmem [resolvable:$true] %s287
      %293 = dma.hbm_to_vmem [thread:$0]  %s67, 256, %s288, [#allocation30], 128, 128, 8
    $region137: #{fed_enhance_lstm_forward.1} parent=1 // pred_fallthru
      _
    // Predicated region
    $region138: #{fed_enhance_lstm_forward.1} parent=1 // pred_check
      _
    $region139: #{fed_enhance_lstm_forward.1} parent=1 // pred_check_branch
      %295 = sbr.rel (0) target = $region141
    $region140: #{fed_enhance_lstm_forward.1} parent=1 // pred_region
      %s297 = ssub.s32 16, 16
      %298 = vsyncadd [#allocation33], %s297
      %s300 = sshll.u32 [#allocation32], 4
      %s301 = int_to_ptr.vmem [resolvable:$true] %s300
      %303 = dma.hbm_to_vmem [thread:$0]  %s69, 16, %s301, [#allocation33]
    $region141: #{fed_enhance_lstm_forward.1} parent=1 // pred_fallthru
      _
    // Predicated region
    $region142: #{fed_enhance_lstm_forward.1} parent=1 // pred_check
      _
    $region143: #{fed_enhance_lstm_forward.1} parent=1 // pred_check_branch
      %305 = sbr.rel (0) target = $region145
    $region144: #{fed_enhance_lstm_forward.1} parent=1 // pred_region
      %306 = dma.done [#allocation7], 32
    $region145: #{fed_enhance_lstm_forward.1} parent=1 // pred_fallthru
      _
    // Predicated region
    $region146: #{fed_enhance_lstm_forward.1} parent=1 // pred_check
      _
    $region147: #{fed_enhance_lstm_forward.1} parent=1 // pred_check_branch
      %308 = sbr.rel (0) target = $region149
    $region148: #{fed_enhance_lstm_forward.1} parent=1 // pred_region
      %309 = dma.done [#allocation9], 16
    $region149: #{fed_enhance_lstm_forward.1} parent=1 // pred_fallthru
      _
    // Predicated region
    $region150: #{fed_enhance_lstm_forward.1} parent=1 // pred_check
      _
    $region151: #{fed_enhance_lstm_forward.1} parent=1 // pred_check_branch
      %311 = sbr.rel (0) target = $region153
    $region152: #{fed_enhance_lstm_forward.1} parent=1 // pred_region
      %312 = dma.done [#allocation9], 32
    $region153: #{fed_enhance_lstm_forward.1} parent=1 // pred_fallthru
      _
    // Predicated region
    $region154: #{fed_enhance_lstm_forward.1} parent=1 // pred_check
      _
    $region155: #{fed_enhance_lstm_forward.1} parent=1 // pred_check_branch
      %314 = sbr.rel (0) target = $region157
    $region156: #{fed_enhance_lstm_forward.1} parent=1 // pred_region
      %315 = dma.done [#allocation12], 16
    $region157: #{fed_enhance_lstm_forward.1} parent=1 // pred_fallthru
      _
    // Predicated region
    $region158: #{fed_enhance_lstm_forward.1} parent=1 // pred_check
      _
    $region159: #{fed_enhance_lstm_forward.1} parent=1 // pred_check_branch
      %317 = sbr.rel (0) target = $region161
    $region160: #{fed_enhance_lstm_forward.1} parent=1 // pred_region
      %318 = dma.done [#allocation12], 32
    $region161: #{fed_enhance_lstm_forward.1} parent=1 // pred_fallthru
      _
    // Predicated region
    $region162: #{fed_enhance_lstm_forward.1} parent=1 // pred_check
      _
    $region163: #{fed_enhance_lstm_forward.1} parent=1 // pred_check_branch
      %320 = sbr.rel (0) target = $region165
    $region164: #{fed_enhance_lstm_forward.1} parent=1 // pred_region
      %321 = dma.done [#allocation15], 16
    $region165: #{fed_enhance_lstm_forward.1} parent=1 // pred_fallthru
      _
    // Predicated region
    $region166: #{fed_enhance_lstm_forward.1} parent=1 // pred_check
      _
    $region167: #{fed_enhance_lstm_forward.1} parent=1 // pred_check_branch
      %323 = sbr.rel (0) target = $region169
    $region168: #{fed_enhance_lstm_forward.1} parent=1 // pred_region
      %324 = dma.done [#allocation15], 32
    $region169: #{fed_enhance_lstm_forward.1} parent=1 // pred_fallthru
      _
    // Predicated region
    $region170: #{fed_enhance_lstm_forward.1} parent=1 // pred_check
      _
    $region171: #{fed_enhance_lstm_forward.1} parent=1 // pred_check_branch
      %326 = sbr.rel (0) target = $region173
    $region172: #{fed_enhance_lstm_forward.1} parent=1 // pred_region
      %327 = dma.done [#allocation18], 16
    $region173: #{fed_enhance_lstm_forward.1} parent=1 // pred_fallthru
      _
    // Predicated region
    $region174: #{fed_enhance_lstm_forward.1} parent=1 // pred_check
      _
    $region175: #{fed_enhance_lstm_forward.1} parent=1 // pred_check_branch
      %329 = sbr.rel (0) target = $region177
    $region176: #{fed_enhance_lstm_forward.1} parent=1 // pred_region
      %330 = dma.done [#allocation18], 32
    $region177: #{fed_enhance_lstm_forward.1} parent=1 // pred_fallthru
      _
    // Predicated region
    $region178: #{fed_enhance_lstm_forward.1} parent=1 // pred_check
      _
    $region179: #{fed_enhance_lstm_forward.1} parent=1 // pred_check_branch
      %332 = sbr.rel (0) target = $region181
    $region180: #{fed_enhance_lstm_forward.1} parent=1 // pred_region
      %333 = dma.done [#allocation21], 16
    $region181: #{fed_enhance_lstm_forward.1} parent=1 // pred_fallthru
      _
    // Predicated region
    $region182: #{fed_enhance_lstm_forward.1} parent=1 // pred_check
      _
    $region183: #{fed_enhance_lstm_forward.1} parent=1 // pred_check_branch
      %335 = sbr.rel (0) target = $region185
    $region184: #{fed_enhance_lstm_forward.1} parent=1 // pred_region
      %336 = dma.done [#allocation21], 96
    $region185: #{fed_enhance_lstm_forward.1} parent=1 // pred_fallthru
      _
    // Predicated region
    $region186: #{fed_enhance_lstm_forward.1} parent=1 // pred_check
      _
    $region187: #{fed_enhance_lstm_forward.1} parent=1 // pred_check_branch
      %338 = sbr.rel (0) target = $region189
    $region188: #{fed_enhance_lstm_forward.1} parent=1 // pred_region
      %339 = dma.done [#allocation24], 32
    $region189: #{fed_enhance_lstm_forward.1} parent=1 // pred_fallthru
      _
    // Predicated region
    $region190: #{fed_enhance_lstm_forward.1} parent=1 // pred_check
      _
    $region191: #{fed_enhance_lstm_forward.1} parent=1 // pred_check_branch
      %341 = sbr.rel (0) target = $region193
    $region192: #{fed_enhance_lstm_forward.1} parent=1 // pred_region
      %342 = dma.done [#allocation24], 16
    $region193: #{fed_enhance_lstm_forward.1} parent=1 // pred_fallthru
      _
    // Predicated region
    $region194: #{fed_enhance_lstm_forward.1} parent=1 // pred_check
      _
    $region195: #{fed_enhance_lstm_forward.1} parent=1 // pred_check_branch
      %344 = sbr.rel (0) target = $region197
    $region196: #{fed_enhance_lstm_forward.1} parent=1 // pred_region
      %345 = dma.done [#allocation27], 16
    $region197: #{fed_enhance_lstm_forward.1} parent=1 // pred_fallthru
      _
    // Predicated region
    $region198: #{fed_enhance_lstm_forward.1} parent=1 // pred_check
      _
    $region199: #{fed_enhance_lstm_forward.1} parent=1 // pred_check_branch
      %347 = sbr.rel (0) target = $region201
    $region200: #{fed_enhance_lstm_forward.1} parent=1 // pred_region
      %348 = dma.done [#allocation27], 16
    $region201: #{fed_enhance_lstm_forward.1} parent=1 // pred_fallthru
      _
    // Predicated region
    $region202: #{fed_enhance_lstm_forward.1} parent=1 // pred_check
      _
    $region203: #{fed_enhance_lstm_forward.1} parent=1 // pred_check_branch
      %350 = sbr.rel (0) target = $region205
    $region204: #{fed_enhance_lstm_forward.1} parent=1 // pred_region
      %351 = dma.done [#allocation30], 256
    $region205: #{fed_enhance_lstm_forward.1} parent=1 // pred_fallthru
      _
    // Predicated region
    $region206: #{fed_enhance_lstm_forward.1} parent=1 // pred_check
      _
    $region207: #{fed_enhance_lstm_forward.1} parent=1 // pred_check_branch
      %353 = sbr.rel (0) target = $region209
    $region208: #{fed_enhance_lstm_forward.1} parent=1 // pred_region
      %354 = dma.done [#allocation30], 256
    $region209: #{fed_enhance_lstm_forward.1} parent=1 // pred_fallthru
      _
    // Predicated region
    $region210: #{fed_enhance_lstm_forward.1} parent=1 // pred_check
      _
    $region211: #{fed_enhance_lstm_forward.1} parent=1 // pred_check_branch
      %356 = sbr.rel (0) target = $region213
    $region212: #{fed_enhance_lstm_forward.1} parent=1 // pred_region
      %357 = dma.done [#allocation33], 16
    $region213: #{fed_enhance_lstm_forward.1} parent=1 // pred_fallthru
      _
    %v358 = vld [vmem:[%s1] sm:$0xff]
    %v359 = vld [vmem:[%s1 + $0x8] sm:$0xff]
    %v360 = vld [vmem:[%s1 + $0x10] sm:$0xff]
    %v361 = vld [vmem:[%s1 + $0x18] sm:$0xff]
    %v362 = vld [vmem:[%s1 + $0x20] sm:$0xff]
    %v363 = vld [vmem:[%s1 + $0x28] sm:$0xff]
    %v364 = vld [vmem:[%s1 + $0x30] sm:$0xff]
    %v365 = vld [vmem:[%s1 + $0x38] sm:$0xff]
    %v366 = vld [vmem:[%s3] sm:$0xff]
    %v367 = vld [vmem:[%s3 + $0x8] sm:$0xff]
    %v368 = vld [vmem:[%s3 + $0x10] sm:$0xff]
    %v369 = vld [vmem:[%s3 + $0x18] sm:$0xff]
    %v370 = vld [vmem:[%s3 + $0x20] sm:$0xff]
    %v371 = vld [vmem:[%s3 + $0x28] sm:$0xff]
    %v372 = vld [vmem:[%s3 + $0x30] sm:$0xff]
    %v373 = vld [vmem:[%s3 + $0x38] sm:$0xff]
    %382 = vrot.lane.b32.xlu0 %v365, 16
    %v383 = vpop.permute.xlu0 %382
    %384 = vrot.lane.b32.xlu0 %v364, 16
    %v385 = vpop.permute.xlu0 %384
    %386 = vrot.lane.b32.xlu0 %v363, 16
    %v387 = vpop.permute.xlu0 %386
    %388 = vrot.lane.b32.xlu0 %v362, 16
    %v389 = vpop.permute.xlu0 %388
    %390 = vrot.lane.b32.xlu0 %v361, 16
    %v391 = vpop.permute.xlu0 %390
    %392 = vrot.lane.b32.xlu0 %v360, 16
    %v393 = vpop.permute.xlu0 %392
    %394 = vrot.lane.b32.xlu0 %v359, 16
    %v395 = vpop.permute.xlu0 %394
    %396 = vrot.lane.b32.xlu0 %v358, 16
    %v397 = vpop.permute.xlu0 %396
    %vm406 = vcmask 130048
    %v407 = vsel %vm406, %v358, %v383
    %v408 = vsel %vm406, %v359, %v385
    %v409 = vsel %vm406, %v360, %v387
    %v410 = vsel %vm406, %v361, %v389
    %v411 = vsel %vm406, %v362, %v391
    %v412 = vsel %vm406, %v363, %v393
    %v413 = vsel %vm406, %v364, %v395
    %v414 = vsel %vm406, %v365, %v397
    %423 = vrot.lane.b32.xlu0 %v373, 16
    %v424 = vpop.permute.xlu0 %423
    %425 = vrot.lane.b32.xlu0 %v372, 16
    %v426 = vpop.permute.xlu0 %425
    %427 = vrot.lane.b32.xlu0 %v371, 16
    %v428 = vpop.permute.xlu0 %427
    %429 = vrot.lane.b32.xlu0 %v370, 16
    %v430 = vpop.permute.xlu0 %429
    %431 = vrot.lane.b32.xlu0 %v369, 16
    %v432 = vpop.permute.xlu0 %431
    %433 = vrot.lane.b32.xlu0 %v368, 16
    %v434 = vpop.permute.xlu0 %433
    %435 = vrot.lane.b32.xlu0 %v367, 16
    %v436 = vpop.permute.xlu0 %435
    %437 = vrot.lane.b32.xlu0 %v366, 16
    %v438 = vpop.permute.xlu0 %437
    %v447 = vsel %vm406, %v366, %v424
    %v448 = vsel %vm406, %v367, %v426
    %v449 = vsel %vm406, %v368, %v428
    %v450 = vsel %vm406, %v369, %v430
    %v451 = vsel %vm406, %v370, %v432
    %v452 = vsel %vm406, %v371, %v434
    %v453 = vsel %vm406, %v372, %v436
    %v454 = vsel %vm406, %v373, %v438
    %v455 = vld [vmem:[%s7] sm:$0xff]
    %v456 = vld [vmem:[%s7 + $0x8] sm:$0xff]
    %v457 = vld [vmem:[%s7 + $0x10] sm:$0xff]
    %v458 = vld [vmem:[%s7 + $0x18] sm:$0xff]
    %v459 = vld [vmem:[%s7 + $0x20] sm:$0xff]
    %v460 = vld [vmem:[%s7 + $0x28] sm:$0xff]
    %v461 = vld [vmem:[%s7 + $0x30] sm:$0xff]
    %v462 = vld [vmem:[%s7 + $0x38] sm:$0xff]
    %v463 = vld [vmem:[#allocation6] sm:$0x3]
    %v465 = vlaneseq
    %v466 = vshrl.u32 %v465, 7
    %v467 = vsub.s32 0, %v466
    %v468 = vrot.slane %v463, %v467
    %v469 = vlaneseq
    %v470 = vshrl.u32 %v469, 7
    %v471 = vsub.s32 1, %v470
    %v472 = vrot.slane %v463, %v471
    %vm475 = vcmask 261120
    %v477 = vsel %vm475, %v407, 0
    %v480 = vsel %vm475, %v408, 0
    %v483 = vsel %vm475, %v409, 0
    %v486 = vsel %vm475, %v410, 0
    %v489 = vsel %vm475, %v411, 0
    %v492 = vsel %vm475, %v412, 0
    %v495 = vsel %vm475, %v413, 0
    %v498 = vsel %vm475, %v414, 0
    %500 = vmatprep.subr.mxu0 0.0
    %501 = vmatpush1.msra.mxu0 0.0
    %502 = vmatprep.subr.mxu0 0.0
    %503 = vmatpush1.msra.mxu0 0.0
    %504 = vmatprep.subr.mxu0 0.0
    %505 = vmatpush1.msra.mxu0 0.0
    %506 = vmatprep.subr.mxu0 0.0
    %507 = vmatpush1.msra.mxu0 0.0
    %508 = vmatprep.subr.mxu0 0.0
    %509 = vmatpush1.msra.mxu0 0.0
    %510 = vmatprep.subr.mxu0 0.0
    %511 = vmatpush1.msra.mxu0 0.0
    %512 = vmatprep.subr.mxu0 0.0
    %513 = vmatpush1.msra.mxu0 0.0
    %514 = vmatprep.subr.mxu0 0.0
    %515 = vmatpush1.msra.mxu0 0.0
    %516 = vmatprep.subr.mxu0 0.0
    %517 = vmatpush1.msra.mxu0 0.0
    %518 = vmatprep.subr.mxu0 0.0
    %519 = vmatpush1.msra.mxu0 0.0
    %520 = vmatprep.subr.mxu0 0.0
    %521 = vmatpush1.msra.mxu0 0.0
    %522 = vmatprep.subr.mxu0 0.0
    %523 = vmatpush1.msra.mxu0 0.0
    %524 = vmatprep.subr.mxu0 %v462
    %525 = vmatpush1.msra.mxu0 %v461
    %526 = vmatprep.subr.mxu0 %v460
    %527 = vmatpush1.msra.mxu0 %v459
    %528 = vmatprep.subr.mxu0 %v458
    %529 = vmatpush1.msra.mxu0 %v457
    %530 = vmatprep.subr.mxu0 %v456
    %531 = vmatpush1.msra.mxu0 %v455
    %532 = vmatprep.subr.mxu0 0.0
    %533 = vmatpush2.msra.mxu0 0.0
    %534 = vmatprep.subr.mxu0 0.0
    %535 = vmatpush2.msra.mxu0 0.0
    %536 = vmatprep.subr.mxu0 0.0
    %537 = vmatpush2.msra.mxu0 0.0
    %538 = vmatprep.subr.mxu0 0.0
    %539 = vmatpush2.msra.mxu0 0.0
    %540 = vmatprep.subr.mxu0 0.0
    %541 = vmatpush2.msra.mxu0 0.0
    %542 = vmatprep.subr.mxu0 0.0
    %543 = vmatpush2.msra.mxu0 0.0
    %544 = vmatprep.subr.mxu0 0.0
    %545 = vmatpush2.msra.mxu0 0.0
    %546 = vmatprep.subr.mxu0 0.0
    %547 = vmatpush2.msra.mxu0 0.0
    %548 = vmatprep.subr.mxu0 0.0
    %549 = vmatpush2.msra.mxu0 0.0
    %550 = vmatprep.subr.mxu0 0.0
    %551 = vmatpush2.msra.mxu0 0.0
    %552 = vmatprep.subr.mxu0 0.0
    %553 = vmatpush2.msra.mxu0 0.0
    %554 = vmatprep.subr.mxu0 0.0
    %555 = vmatpush2.msra.mxu0 0.0
    %556 = vmatprep.subr.mxu0 0.0
    %557 = vmatpush2.msra.mxu0 0.0
    %558 = vmatprep.subr.mxu0 0.0
    %559 = vmatpush2.msra.mxu0 0.0
    %560 = vmatprep.subr.mxu0 0.0
    %561 = vmatpush2.msra.mxu0 0.0
    %562 = vmatprep.subr.mxu0 0.0
    %563 = vmatpush2.msra.mxu0 0.0
    %564 = vmatprep.mubr.f32.mxu0 0.0
    %565 = vmatmul.mubr.f32.gmra.mxu0 %v477
    %v566 = vpop.f32.mrf.mxu0
    %v567 = vadd.f32 %v468, %v566
    %v568 = vpop.f32.mrf.mxu0
    %v569 = vadd.f32 %v472, %v568
    %570 = vmatprep.mubr.f32.mxu0 0.0
    %571 = vmatmul.mubr.f32.gmra.mxu0 %v480
    %v572 = vpop.f32.mrf.mxu0
    %v573 = vadd.f32 %v468, %v572
    %v574 = vpop.f32.mrf.mxu0
    %v575 = vadd.f32 %v472, %v574
    %576 = vmatprep.mubr.f32.mxu0 0.0
    %577 = vmatmul.mubr.f32.gmra.mxu0 %v483
    %v578 = vpop.f32.mrf.mxu0
    %v579 = vadd.f32 %v468, %v578
    %v580 = vpop.f32.mrf.mxu0
    %v581 = vadd.f32 %v472, %v580
    %582 = vmatprep.mubr.f32.mxu0 0.0
    %583 = vmatmul.mubr.f32.gmra.mxu0 %v486
    %v584 = vpop.f32.mrf.mxu0
    %v585 = vadd.f32 %v468, %v584
    %v586 = vpop.f32.mrf.mxu0
    %v587 = vadd.f32 %v472, %v586
    %588 = vmatprep.mubr.f32.mxu0 0.0
    %589 = vmatmul.mubr.f32.gmra.mxu0 %v489
    %v590 = vpop.f32.mrf.mxu0
    %v591 = vadd.f32 %v468, %v590
    %v592 = vpop.f32.mrf.mxu0
    %v593 = vadd.f32 %v472, %v592
    %594 = vmatprep.mubr.f32.mxu0 0.0
    %595 = vmatmul.mubr.f32.gmra.mxu0 %v492
    %v596 = vpop.f32.mrf.mxu0
    %v597 = vadd.f32 %v468, %v596
    %v598 = vpop.f32.mrf.mxu0
    %v599 = vadd.f32 %v472, %v598
    %600 = vmatprep.mubr.f32.mxu0 0.0
    %601 = vmatmul.mubr.f32.gmra.mxu0 %v495
    %v602 = vpop.f32.mrf.mxu0
    %v603 = vadd.f32 %v468, %v602
    %v604 = vpop.f32.mrf.mxu0
    %v605 = vadd.f32 %v472, %v604
    %606 = vmatprep.mubr.f32.mxu0 0.0
    %607 = vmatmul.mubr.f32.gmra.mxu0 %v498
    %v608 = vpop.f32.mrf.mxu0
    %v609 = vadd.f32 %v468, %v608
    %v610 = vpop.f32.mrf.mxu0
    %v611 = vadd.f32 %v472, %v610
    %612 = vdwg.mxu0
    %613 = vst [vmem:[#allocation2] sm:$0xff] %v567
    %vm614 = vcmask 523264
    %615 = vst.msk [vmem:[#allocation2 + $0x8] sm:$0xff] %vm614, %v569
    %616 = vst [vmem:[#allocation2 + $0x10] sm:$0xff] %v573
    %617 = vst.msk [vmem:[#allocation2 + $0x18] sm:$0xff] %vm614, %v575
    %618 = vst [vmem:[#allocation2 + $0x20] sm:$0xff] %v579
    %619 = vst.msk [vmem:[#allocation2 + $0x28] sm:$0xff] %vm614, %v581
    %620 = vst [vmem:[#allocation2 + $0x30] sm:$0xff] %v585
    %621 = vst.msk [vmem:[#allocation2 + $0x38] sm:$0xff] %vm614, %v587
    %622 = vst [vmem:[#allocation2 + $0x40] sm:$0xff] %v591
    %623 = vst.msk [vmem:[#allocation2 + $0x48] sm:$0xff] %vm614, %v593
    %624 = vst [vmem:[#allocation2 + $0x50] sm:$0xff] %v597
    %625 = vst.msk [vmem:[#allocation2 + $0x58] sm:$0xff] %vm614, %v599
    %626 = vst [vmem:[#allocation2 + $0x60] sm:$0xff] %v603
    %627 = vst.msk [vmem:[#allocation2 + $0x68] sm:$0xff] %vm614, %v605
    %628 = vst [vmem:[#allocation2 + $0x70] sm:$0xff] %v609
    %629 = vst.msk [vmem:[#allocation2 + $0x78] sm:$0xff] %vm614, %v611
    %v630 = vld [vmem:[%s9] sm:$0xff]
    %v631 = vld [vmem:[%s9 + $0x8] sm:$0xff]
    %v632 = vld [vmem:[%s9 + $0x10] sm:$0xff]
    %v633 = vld [vmem:[%s9 + $0x18] sm:$0xff]
    %v634 = vld [vmem:[%s9 + $0x20] sm:$0xff]
    %v635 = vld [vmem:[%s9 + $0x28] sm:$0xff]
    %v636 = vld [vmem:[%s9 + $0x30] sm:$0xff]
    %v637 = vld [vmem:[%s9 + $0x38] sm:$0xff]
    %v638 = vld [vmem:[%s9 + $0x40] sm:$0xff]
    %v639 = vld [vmem:[%s9 + $0x48] sm:$0xff]
    %v640 = vld [vmem:[%s9 + $0x50] sm:$0xff]
    %v641 = vld [vmem:[%s9 + $0x58] sm:$0xff]
    %v642 = vld [vmem:[%s9 + $0x60] sm:$0xff]
    %v643 = vld [vmem:[%s9 + $0x68] sm:$0xff]
    %v644 = vld [vmem:[%s9 + $0x70] sm:$0xff]
    %v645 = vld [vmem:[%s9 + $0x78] sm:$0xff]
    %v646 = vld [vmem:[#allocation8] sm:$0x1]
    %v648 = vlaneseq
    %v649 = vshrl.u32 %v648, 7
    %v650 = vsub.s32 0, %v649
    %v651 = vrot.slane %v646, %v650
    %v653 = vld [vmem:[%s23] sm:$0xff]
    %v654 = vld [vmem:[%s23 + $0x8] sm:$0xff]
    %v655 = vld [vmem:[%s23 + $0x10] sm:$0xff]
    %v656 = vld [vmem:[%s23 + $0x18] sm:$0xff]
    %v657 = vld [vmem:[%s23 + $0x20] sm:$0xff]
    %v658 = vld [vmem:[%s23 + $0x28] sm:$0xff]
    %v659 = vld [vmem:[%s23 + $0x30] sm:$0xff]
    %v660 = vld [vmem:[%s23 + $0x38] sm:$0xff]
    %v661 = vld [vmem:[#allocation13] sm:$0x3]
    %v663 = vlaneseq
    %v664 = vshrl.u32 %v663, 7
    %v665 = vsub.s32 0, %v664
    %v666 = vrot.slane %v661, %v665
    %v667 = vlaneseq
    %v668 = vshrl.u32 %v667, 7
    %v669 = vsub.s32 1, %v668
    %v670 = vrot.slane %v661, %v669
    %v674 = vsel %vm475, %v447, 0
    %v677 = vsel %vm475, %v448, 0
    %v680 = vsel %vm475, %v449, 0
    %v683 = vsel %vm475, %v450, 0
    %v686 = vsel %vm475, %v451, 0
    %v689 = vsel %vm475, %v452, 0
    %v692 = vsel %vm475, %v453, 0
    %v695 = vsel %vm475, %v454, 0
    %697 = vmatprep.subr.mxu0 0.0
    %698 = vmatpush1.msra.mxu0 0.0
    %699 = vmatprep.subr.mxu0 0.0
    %700 = vmatpush1.msra.mxu0 0.0
    %701 = vmatprep.subr.mxu0 0.0
    %702 = vmatpush1.msra.mxu0 0.0
    %703 = vmatprep.subr.mxu0 0.0
    %704 = vmatpush1.msra.mxu0 0.0
    %705 = vmatprep.subr.mxu0 0.0
    %706 = vmatpush1.msra.mxu0 0.0
    %707 = vmatprep.subr.mxu0 0.0
    %708 = vmatpush1.msra.mxu0 0.0
    %709 = vmatprep.subr.mxu0 0.0
    %710 = vmatpush1.msra.mxu0 0.0
    %711 = vmatprep.subr.mxu0 0.0
    %712 = vmatpush1.msra.mxu0 0.0
    %713 = vmatprep.subr.mxu0 0.0
    %714 = vmatpush1.msra.mxu0 0.0
    %715 = vmatprep.subr.mxu0 0.0
    %716 = vmatpush1.msra.mxu0 0.0
    %717 = vmatprep.subr.mxu0 0.0
    %718 = vmatpush1.msra.mxu0 0.0
    %719 = vmatprep.subr.mxu0 0.0
    %720 = vmatpush1.msra.mxu0 0.0
    %721 = vmatprep.subr.mxu0 %v660
    %722 = vmatpush1.msra.mxu0 %v659
    %723 = vmatprep.subr.mxu0 %v658
    %724 = vmatpush1.msra.mxu0 %v657
    %725 = vmatprep.subr.mxu0 %v656
    %726 = vmatpush1.msra.mxu0 %v655
    %727 = vmatprep.subr.mxu0 %v654
    %728 = vmatpush1.msra.mxu0 %v653
    %729 = vmatprep.subr.mxu0 0.0
    %730 = vmatpush2.msra.mxu0 0.0
    %731 = vmatprep.subr.mxu0 0.0
    %732 = vmatpush2.msra.mxu0 0.0
    %733 = vmatprep.subr.mxu0 0.0
    %734 = vmatpush2.msra.mxu0 0.0
    %735 = vmatprep.subr.mxu0 0.0
    %736 = vmatpush2.msra.mxu0 0.0
    %737 = vmatprep.subr.mxu0 0.0
    %738 = vmatpush2.msra.mxu0 0.0
    %739 = vmatprep.subr.mxu0 0.0
    %740 = vmatpush2.msra.mxu0 0.0
    %741 = vmatprep.subr.mxu0 0.0
    %742 = vmatpush2.msra.mxu0 0.0
    %743 = vmatprep.subr.mxu0 0.0
    %744 = vmatpush2.msra.mxu0 0.0
    %745 = vmatprep.subr.mxu0 0.0
    %746 = vmatpush2.msra.mxu0 0.0
    %747 = vmatprep.subr.mxu0 0.0
    %748 = vmatpush2.msra.mxu0 0.0
    %749 = vmatprep.subr.mxu0 0.0
    %750 = vmatpush2.msra.mxu0 0.0
    %751 = vmatprep.subr.mxu0 0.0
    %752 = vmatpush2.msra.mxu0 0.0
    %753 = vmatprep.subr.mxu0 0.0
    %754 = vmatpush2.msra.mxu0 0.0
    %755 = vmatprep.subr.mxu0 0.0
    %756 = vmatpush2.msra.mxu0 0.0
    %757 = vmatprep.subr.mxu0 0.0
    %758 = vmatpush2.msra.mxu0 0.0
    %759 = vmatprep.subr.mxu0 0.0
    %760 = vmatpush2.msra.mxu0 0.0
    %761 = vmatprep.mubr.f32.mxu0 0.0
    %762 = vmatmul.mubr.f32.gmra.mxu0 %v674
    %v763 = vpop.f32.mrf.mxu0
    %v764 = vadd.f32 %v666, %v763
    %v765 = vpop.f32.mrf.mxu0
    %v766 = vadd.f32 %v670, %v765
    %767 = vmatprep.mubr.f32.mxu0 0.0
    %768 = vmatmul.mubr.f32.gmra.mxu0 %v677
    %v769 = vpop.f32.mrf.mxu0
    %v770 = vadd.f32 %v666, %v769
    %v771 = vpop.f32.mrf.mxu0
    %v772 = vadd.f32 %v670, %v771
    %773 = vmatprep.mubr.f32.mxu0 0.0
    %774 = vmatmul.mubr.f32.gmra.mxu0 %v680
    %v775 = vpop.f32.mrf.mxu0
    %v776 = vadd.f32 %v666, %v775
    %v777 = vpop.f32.mrf.mxu0
    %v778 = vadd.f32 %v670, %v777
    %779 = vmatprep.mubr.f32.mxu0 0.0
    %780 = vmatmul.mubr.f32.gmra.mxu0 %v683
    %v781 = vpop.f32.mrf.mxu0
    %v782 = vadd.f32 %v666, %v781
    %v783 = vpop.f32.mrf.mxu0
    %v784 = vadd.f32 %v670, %v783
    %785 = vmatprep.mubr.f32.mxu0 0.0
    %786 = vmatmul.mubr.f32.gmra.mxu0 %v686
    %v787 = vpop.f32.mrf.mxu0
    %v788 = vadd.f32 %v666, %v787
    %v789 = vpop.f32.mrf.mxu0
    %v790 = vadd.f32 %v670, %v789
    %791 = vmatprep.mubr.f32.mxu0 0.0
    %792 = vmatmul.mubr.f32.gmra.mxu0 %v689
    %v793 = vpop.f32.mrf.mxu0
    %v794 = vadd.f32 %v666, %v793
    %v795 = vpop.f32.mrf.mxu0
    %v796 = vadd.f32 %v670, %v795
    %797 = vmatprep.mubr.f32.mxu0 0.0
    %798 = vmatmul.mubr.f32.gmra.mxu0 %v692
    %v799 = vpop.f32.mrf.mxu0
    %v800 = vadd.f32 %v666, %v799
    %v801 = vpop.f32.mrf.mxu0
    %v802 = vadd.f32 %v670, %v801
    %803 = vmatprep.mubr.f32.mxu0 0.0
    %804 = vmatmul.mubr.f32.gmra.mxu0 %v695
    %v805 = vpop.f32.mrf.mxu0
    %v806 = vadd.f32 %v666, %v805
    %v807 = vpop.f32.mrf.mxu0
    %v808 = vadd.f32 %v670, %v807
    %809 = vdwg.mxu0
    %810 = vst [vmem:[#allocation3] sm:$0xff] %v764
    %811 = vst.msk [vmem:[#allocation3 + $0x8] sm:$0xff] %vm614, %v766
    %812 = vst [vmem:[#allocation3 + $0x10] sm:$0xff] %v770
    %813 = vst.msk [vmem:[#allocation3 + $0x18] sm:$0xff] %vm614, %v772
    %814 = vst [vmem:[#allocation3 + $0x20] sm:$0xff] %v776
    %815 = vst.msk [vmem:[#allocation3 + $0x28] sm:$0xff] %vm614, %v778
    %816 = vst [vmem:[#allocation3 + $0x30] sm:$0xff] %v782
    %817 = vst.msk [vmem:[#allocation3 + $0x38] sm:$0xff] %vm614, %v784
    %818 = vst [vmem:[#allocation3 + $0x40] sm:$0xff] %v788
    %819 = vst.msk [vmem:[#allocation3 + $0x48] sm:$0xff] %vm614, %v790
    %820 = vst [vmem:[#allocation3 + $0x50] sm:$0xff] %v794
    %821 = vst.msk [vmem:[#allocation3 + $0x58] sm:$0xff] %vm614, %v796
    %822 = vst [vmem:[#allocation3 + $0x60] sm:$0xff] %v800
    %823 = vst.msk [vmem:[#allocation3 + $0x68] sm:$0xff] %vm614, %v802
    %824 = vst [vmem:[#allocation3 + $0x70] sm:$0xff] %v806
    %825 = vst.msk [vmem:[#allocation3 + $0x78] sm:$0xff] %vm614, %v808
    %v826 = vld [vmem:[%s25] sm:$0xff]
    %v827 = vld [vmem:[%s25 + $0x8] sm:$0xff]
    %v828 = vld [vmem:[%s25 + $0x10] sm:$0xff]
    %v829 = vld [vmem:[%s25 + $0x18] sm:$0xff]
    %v830 = vld [vmem:[%s25 + $0x20] sm:$0xff]
    %v831 = vld [vmem:[%s25 + $0x28] sm:$0xff]
    %v832 = vld [vmem:[%s25 + $0x30] sm:$0xff]
    %v833 = vld [vmem:[%s25 + $0x38] sm:$0xff]
    %v834 = vld [vmem:[%s25 + $0x40] sm:$0xff]
    %v835 = vld [vmem:[%s25 + $0x48] sm:$0xff]
    %v836 = vld [vmem:[%s25 + $0x50] sm:$0xff]
    %v837 = vld [vmem:[%s25 + $0x58] sm:$0xff]
    %v838 = vld [vmem:[%s25 + $0x60] sm:$0xff]
    %v839 = vld [vmem:[%s25 + $0x68] sm:$0xff]
    %v840 = vld [vmem:[%s25 + $0x70] sm:$0xff]
    %v841 = vld [vmem:[%s25 + $0x78] sm:$0xff]
    %v842 = vld [vmem:[#allocation14] sm:$0x1]
    %v844 = vlaneseq
    %v845 = vshrl.u32 %v844, 7
    %v846 = vsub.s32 0, %v845
    %v847 = vrot.slane %v842, %v846
    %v849 = vld [vmem:[#allocation2] sm:$0xff]
    %v850 = vld [vmem:[#allocation2 + $0x8] sm:$0xff]
    %v851 = vxor.u32 %v849, 2147483648
    %v852 = vmul.f32 %v851, 1.442695
    %v853 = vpow.pop %v852
    %v854 = vadd.f32 %v853, 1.0
    %v855 = vrcp.pop %v854
    %v856 = vmul.f32 1.0, %v855
    %v857 = vmul.f32 %v856, %v651
    %v858 = vadd.f32 %v850, %v857
    %v859 = vtanh.pop %v858
    %v860 = vsub.f32 1.0, %v856
    %862 = vrot.lane.b32.xlu0 %v859, 64
    %v863 = vpop.permute.xlu0 %862
    %v865 = vmul.f32 %v860, %v863
    %867 = vrot.lane.b32.xlu0 %v865, 64
    %v868 = vpop.permute.xlu0 %867
    %870 = vst.msk [vmem:[#allocation4] sm:$0xff] %vm475, %v868
    %vm871 = vcmask 523520
    %872 = vst.msk [vmem:[#allocation4 + $0x38] sm:$0xff] %vm871, %v868
    %vm873 = vcmask 785920
    %874 = vst.msk [vmem:[#allocation4 + $0x38] sm:$0xff] %vm873, %v865
    %vm875 = vcmask 1048320
    %876 = vst.msk [vmem:[#allocation4] sm:$0xff] %vm875, %v865
    %v877 = vld [vmem:[#allocation3] sm:$0xff]
    %v878 = vld [vmem:[#allocation3 + $0x8] sm:$0xff]
    %v879 = vxor.u32 %v877, 2147483648
    %v880 = vmul.f32 %v879, 1.442695
    %v881 = vpow.pop %v880
    %v882 = vadd.f32 %v881, 1.0
    %v883 = vrcp.pop %v882
    %v884 = vmul.f32 1.0, %v883
    %v885 = vmul.f32 %v884, %v847
    %v886 = vadd.f32 %v878, %v885
    %v887 = vtanh.pop %v886
    %v888 = vsub.f32 1.0, %v884
    %890 = vrot.lane.b32.xlu0 %v887, 64
    %v891 = vpop.permute.xlu0 %890
    %v893 = vmul.f32 %v888, %v891
    %895 = vrot.lane.b32.xlu0 %v893, 64
    %v896 = vpop.permute.xlu0 %895
    %898 = vst.msk [vmem:[#allocation5] sm:$0xff] %vm475, %v896
    %899 = vst.msk [vmem:[#allocation5 + $0x38] sm:$0xff] %vm871, %v896
    %900 = vst.msk [vmem:[#allocation5 + $0x38] sm:$0xff] %vm873, %v893
    %901 = vst.msk [vmem:[#allocation5] sm:$0xff] %vm875, %v893
    %s902 = smul.u32 1, 2
    %s903 = smul.addr %s902, 8
    %s904 = scalar_lea.vmem [#allocation2], %s903
    %v905 = vld [vmem:[%s904] sm:$0xff]
    %v906 = vld [vmem:[%s904 + $0x8] sm:$0xff]
    %v907 = vsel %vm614, %v868, 0
    %909 = vmatprep.subr.mxu0 0.0
    %910 = vmatpush1.msra.mxu0 0.0
    %911 = vmatprep.subr.mxu0 0.0
    %912 = vmatpush1.msra.mxu0 0.0
    %913 = vmatprep.subr.mxu0 0.0
    %914 = vmatpush1.msra.mxu0 0.0
    %915 = vmatprep.subr.mxu0 0.0
    %916 = vmatpush1.msra.mxu0 0.0
    %917 = vmatprep.subr.mxu0 0.0
    %918 = vmatpush1.msra.mxu0 0.0
    %919 = vmatprep.subr.mxu0 0.0
    %920 = vmatpush1.msra.mxu0 0.0
    %921 = vmatprep.subr.mxu0 0.0
    %922 = vmatpush1.msra.mxu0 0.0
    %923 = vmatprep.subr.mxu0 0.0
    %924 = vmatpush1.msra.mxu0 0.0
    %925 = vmatprep.subr.mxu0 %v645
    %926 = vmatpush1.msra.mxu0 %v644
    %927 = vmatprep.subr.mxu0 %v643
    %928 = vmatpush1.msra.mxu0 %v642
    %929 = vmatprep.subr.mxu0 %v641
    %930 = vmatpush1.msra.mxu0 %v640
    %931 = vmatprep.subr.mxu0 %v639
    %932 = vmatpush1.msra.mxu0 %v638
    %933 = vmatprep.subr.mxu0 %v637
    %934 = vmatpush1.msra.mxu0 %v636
    %935 = vmatprep.subr.mxu0 %v635
    %936 = vmatpush1.msra.mxu0 %v634
    %937 = vmatprep.subr.mxu0 %v633
    %938 = vmatpush1.msra.mxu0 %v632
    %939 = vmatprep.subr.mxu0 %v631
    %940 = vmatpush1.msra.mxu0 %v630
    %941 = vmatprep.subr.mxu0 0.0
    %942 = vmatpush2.msra.mxu0 0.0
    %943 = vmatprep.subr.mxu0 0.0
    %944 = vmatpush2.msra.mxu0 0.0
    %945 = vmatprep.subr.mxu0 0.0
    %946 = vmatpush2.msra.mxu0 0.0
    %947 = vmatprep.subr.mxu0 0.0
    %948 = vmatpush2.msra.mxu0 0.0
    %949 = vmatprep.subr.mxu0 0.0
    %950 = vmatpush2.msra.mxu0 0.0
    %951 = vmatprep.subr.mxu0 0.0
    %952 = vmatpush2.msra.mxu0 0.0
    %953 = vmatprep.subr.mxu0 0.0
    %954 = vmatpush2.msra.mxu0 0.0
    %955 = vmatprep.subr.mxu0 0.0
    %956 = vmatpush2.msra.mxu0 0.0
    %957 = vmatprep.subr.mxu0 0.0
    %958 = vmatpush2.msra.mxu0 0.0
    %959 = vmatprep.subr.mxu0 0.0
    %960 = vmatpush2.msra.mxu0 0.0
    %961 = vmatprep.subr.mxu0 0.0
    %962 = vmatpush2.msra.mxu0 0.0
    %963 = vmatprep.subr.mxu0 0.0
    %964 = vmatpush2.msra.mxu0 0.0
    %965 = vmatprep.subr.mxu0 0.0
    %966 = vmatpush2.msra.mxu0 0.0
    %967 = vmatprep.subr.mxu0 0.0
    %968 = vmatpush2.msra.mxu0 0.0
    %969 = vmatprep.subr.mxu0 0.0
    %970 = vmatpush2.msra.mxu0 0.0
    %971 = vmatprep.subr.mxu0 0.0
    %972 = vmatpush2.msra.mxu0 0.0
    %973 = vmatprep.mubr.f32.mxu0 0.0
    %974 = vmatmul.mubr.f32.gmra.mxu0 %v907
    %v975 = vpop.f32.mrf.mxu0
    %v976 = vadd.f32 0.0, %v975
    %v977 = vpop.f32.mrf.mxu0
    %v978 = vadd.f32 0.0, %v977
    %979 = vdwg.mxu0
    %v980 = vadd.f32 %v905, %v976
    %v981 = vxor.u32 %v980, 2147483648
    %v982 = vmul.f32 %v981, 1.442695
    %v983 = vpow.pop %v982
    %v984 = vadd.f32 %v983, 1.0
    %v985 = vrcp.pop %v984
    %v986 = vmul.f32 1.0, %v985
    %v987 = vadd.f32 %v978, %v651
    %v988 = vmul.f32 %v986, %v987
    %v989 = vadd.f32 %v906, %v988
    %v990 = vtanh.pop %v989
    %v991 = vsub.f32 1.0, %v986
    %993 = vrot.lane.b32.xlu0 %v990, 64
    %v994 = vpop.permute.xlu0 %993
    %v996 = vmul.f32 %v991, %v994
    %v997 = vmul.f32 %v986, %v865
    %v998 = vadd.f32 %v996, %v997
    %1000 = vrot.lane.b32.xlu0 %v998, 64
    %v1001 = vpop.permute.xlu0 %1000
    %s1003 = scalar_lea.vmem [#allocation4], 8
    %1004 = vst.msk [vmem:[%s1003] sm:$0xff] %vm475, %v1001
    %s1005 = scalar_lea.vmem [#allocation4], 48
    %1006 = vst.msk [vmem:[%s1005] sm:$0xff] %vm871, %v1001
    %1007 = vst.msk [vmem:[%s1005] sm:$0xff] %vm873, %v998
    %1008 = vst.msk [vmem:[%s1003] sm:$0xff] %vm875, %v998
    %s1009 = smul.addr %s902, 8
    %s1010 = scalar_lea.vmem [#allocation3], %s1009
    %v1011 = vld [vmem:[%s1010] sm:$0xff]
    %v1012 = vld [vmem:[%s1010 + $0x8] sm:$0xff]
    %v1013 = vsel %vm614, %v896, 0
    %1015 = vmatprep.subr.mxu0 0.0
    %1016 = vmatpush1.msra.mxu0 0.0
    %1017 = vmatprep.subr.mxu0 0.0
    %1018 = vmatpush1.msra.mxu0 0.0
    %1019 = vmatprep.subr.mxu0 0.0
    %1020 = vmatpush1.msra.mxu0 0.0
    %1021 = vmatprep.subr.mxu0 0.0
    %1022 = vmatpush1.msra.mxu0 0.0
    %1023 = vmatprep.subr.mxu0 0.0
    %1024 = vmatpush1.msra.mxu0 0.0
    %1025 = vmatprep.subr.mxu0 0.0
    %1026 = vmatpush1.msra.mxu0 0.0
    %1027 = vmatprep.subr.mxu0 0.0
    %1028 = vmatpush1.msra.mxu0 0.0
    %1029 = vmatprep.subr.mxu0 0.0
    %1030 = vmatpush1.msra.mxu0 0.0
    %1031 = vmatprep.subr.mxu0 %v841
    %1032 = vmatpush1.msra.mxu0 %v840
    %1033 = vmatprep.subr.mxu0 %v839
    %1034 = vmatpush1.msra.mxu0 %v838
    %1035 = vmatprep.subr.mxu0 %v837
    %1036 = vmatpush1.msra.mxu0 %v836
    %1037 = vmatprep.subr.mxu0 %v835
    %1038 = vmatpush1.msra.mxu0 %v834
    %1039 = vmatprep.subr.mxu0 %v833
    %1040 = vmatpush1.msra.mxu0 %v832
    %1041 = vmatprep.subr.mxu0 %v831
    %1042 = vmatpush1.msra.mxu0 %v830
    %1043 = vmatprep.subr.mxu0 %v829
    %1044 = vmatpush1.msra.mxu0 %v828
    %1045 = vmatprep.subr.mxu0 %v827
    %1046 = vmatpush1.msra.mxu0 %v826
    %1047 = vmatprep.subr.mxu0 0.0
    %1048 = vmatpush2.msra.mxu0 0.0
    %1049 = vmatprep.subr.mxu0 0.0
    %1050 = vmatpush2.msra.mxu0 0.0
    %1051 = vmatprep.subr.mxu0 0.0
    %1052 = vmatpush2.msra.mxu0 0.0
    %1053 = vmatprep.subr.mxu0 0.0
    %1054 = vmatpush2.msra.mxu0 0.0
    %1055 = vmatprep.subr.mxu0 0.0
    %1056 = vmatpush2.msra.mxu0 0.0
    %1057 = vmatprep.subr.mxu0 0.0
    %1058 = vmatpush2.msra.mxu0 0.0
    %1059 = vmatprep.subr.mxu0 0.0
    %1060 = vmatpush2.msra.mxu0 0.0
    %1061 = vmatprep.subr.mxu0 0.0
    %1062 = vmatpush2.msra.mxu0 0.0
    %1063 = vmatprep.subr.mxu0 0.0
    %1064 = vmatpush2.msra.mxu0 0.0
    %1065 = vmatprep.subr.mxu0 0.0
    %1066 = vmatpush2.msra.mxu0 0.0
    %1067 = vmatprep.subr.mxu0 0.0
    %1068 = vmatpush2.msra.mxu0 0.0
    %1069 = vmatprep.subr.mxu0 0.0
    %1070 = vmatpush2.msra.mxu0 0.0
    %1071 = vmatprep.subr.mxu0 0.0
    %1072 = vmatpush2.msra.mxu0 0.0
    %1073 = vmatprep.subr.mxu0 0.0
    %1074 = vmatpush2.msra.mxu0 0.0
    %1075 = vmatprep.subr.mxu0 0.0
    %1076 = vmatpush2.msra.mxu0 0.0
    %1077 = vmatprep.subr.mxu0 0.0
    %1078 = vmatpush2.msra.mxu0 0.0
    %1079 = vmatprep.mubr.f32.mxu0 0.0
    %1080 = vmatmul.mubr.f32.gmra.mxu0 %v1013
    %v1081 = vpop.f32.mrf.mxu0
    %v1082 = vadd.f32 0.0, %v1081
    %v1083 = vpop.f32.mrf.mxu0
    %v1084 = vadd.f32 0.0, %v1083
    %1085 = vdwg.mxu0
    %v1086 = vadd.f32 %v1011, %v1082
    %v1087 = vxor.u32 %v1086, 2147483648
    %v1088 = vmul.f32 %v1087, 1.442695
    %v1089 = vpow.pop %v1088
    %v1090 = vadd.f32 %v1089, 1.0
    %v1091 = vrcp.pop %v1090
    %v1092 = vmul.f32 1.0, %v1091
    %v1093 = vadd.f32 %v1084, %v847
    %v1094 = vmul.f32 %v1092, %v1093
    %v1095 = vadd.f32 %v1012, %v1094
    %v1096 = vtanh.pop %v1095
    %v1097 = vsub.f32 1.0, %v1092
    %1099 = vrot.lane.b32.xlu0 %v1096, 64
    %v1100 = vpop.permute.xlu0 %1099
    %v1102 = vmul.f32 %v1097, %v1100
    %v1103 = vmul.f32 %v1092, %v893
    %v1104 = vadd.f32 %v1102, %v1103
    %1106 = vrot.lane.b32.xlu0 %v1104, 64
    %v1107 = vpop.permute.xlu0 %1106
    %s1109 = scalar_lea.vmem [#allocation5], 8
    %1110 = vst.msk [vmem:[%s1109] sm:$0xff] %vm475, %v1107
    %s1111 = scalar_lea.vmem [#allocation5], 48
    %1112 = vst.msk [vmem:[%s1111] sm:$0xff] %vm871, %v1107
    %1113 = vst.msk [vmem:[%s1111] sm:$0xff] %vm873, %v1104
    %1114 = vst.msk [vmem:[%s1109] sm:$0xff] %vm875, %v1104
    %s1115 = smul.u32 2, 2
    %s1116 = smul.addr %s1115, 8
    %s1117 = scalar_lea.vmem [#allocation2], %s1116
    %v1118 = vld [vmem:[%s1117] sm:$0xff]
    %v1119 = vld [vmem:[%s1117 + $0x8] sm:$0xff]
    %v1120 = vsel %vm614, %v1001, 0
    %1122 = vmatprep.subr.mxu0 0.0
    %1123 = vmatpush1.msra.mxu0 0.0
    %1124 = vmatprep.subr.mxu0 0.0
    %1125 = vmatpush1.msra.mxu0 0.0
    %1126 = vmatprep.subr.mxu0 0.0
    %1127 = vmatpush1.msra.mxu0 0.0
    %1128 = vmatprep.subr.mxu0 0.0
    %1129 = vmatpush1.msra.mxu0 0.0
    %1130 = vmatprep.subr.mxu0 0.0
    %1131 = vmatpush1.msra.mxu0 0.0
    %1132 = vmatprep.subr.mxu0 0.0
    %1133 = vmatpush1.msra.mxu0 0.0
    %1134 = vmatprep.subr.mxu0 0.0
    %1135 = vmatpush1.msra.mxu0 0.0
    %1136 = vmatprep.subr.mxu0 0.0
    %1137 = vmatpush1.msra.mxu0 0.0
    %1138 = vmatprep.subr.mxu0 %v645
    %1139 = vmatpush1.msra.mxu0 %v644
    %1140 = vmatprep.subr.mxu0 %v643
    %1141 = vmatpush1.msra.mxu0 %v642
    %1142 = vmatprep.subr.mxu0 %v641
    %1143 = vmatpush1.msra.mxu0 %v640
    %1144 = vmatprep.subr.mxu0 %v639
    %1145 = vmatpush1.msra.mxu0 %v638
    %1146 = vmatprep.subr.mxu0 %v637
    %1147 = vmatpush1.msra.mxu0 %v636
    %1148 = vmatprep.subr.mxu0 %v635
    %1149 = vmatpush1.msra.mxu0 %v634
    %1150 = vmatprep.subr.mxu0 %v633
    %1151 = vmatpush1.msra.mxu0 %v632
    %1152 = vmatprep.subr.mxu0 %v631
    %1153 = vmatpush1.msra.mxu0 %v630
    %1154 = vmatprep.subr.mxu0 0.0
    %1155 = vmatpush2.msra.mxu0 0.0
    %1156 = vmatprep.subr.mxu0 0.0
    %1157 = vmatpush2.msra.mxu0 0.0
    %1158 = vmatprep.subr.mxu0 0.0
    %1159 = vmatpush2.msra.mxu0 0.0
    %1160 = vmatprep.subr.mxu0 0.0
    %1161 = vmatpush2.msra.mxu0 0.0
    %1162 = vmatprep.subr.mxu0 0.0
    %1163 = vmatpush2.msra.mxu0 0.0
    %1164 = vmatprep.subr.mxu0 0.0
    %1165 = vmatpush2.msra.mxu0 0.0
    %1166 = vmatprep.subr.mxu0 0.0
    %1167 = vmatpush2.msra.mxu0 0.0
    %1168 = vmatprep.subr.mxu0 0.0
    %1169 = vmatpush2.msra.mxu0 0.0
    %1170 = vmatprep.subr.mxu0 0.0
    %1171 = vmatpush2.msra.mxu0 0.0
    %1172 = vmatprep.subr.mxu0 0.0
    %1173 = vmatpush2.msra.mxu0 0.0
    %1174 = vmatprep.subr.mxu0 0.0
    %1175 = vmatpush2.msra.mxu0 0.0
    %1176 = vmatprep.subr.mxu0 0.0
    %1177 = vmatpush2.msra.mxu0 0.0
    %1178 = vmatprep.subr.mxu0 0.0
    %1179 = vmatpush2.msra.mxu0 0.0
    %1180 = vmatprep.subr.mxu0 0.0
    %1181 = vmatpush2.msra.mxu0 0.0
    %1182 = vmatprep.subr.mxu0 0.0
    %1183 = vmatpush2.msra.mxu0 0.0
    %1184 = vmatprep.subr.mxu0 0.0
    %1185 = vmatpush2.msra.mxu0 0.0
    %1186 = vmatprep.mubr.f32.mxu0 0.0
    %1187 = vmatmul.mubr.f32.gmra.mxu0 %v1120
    %v1188 = vpop.f32.mrf.mxu0
    %v1189 = vadd.f32 0.0, %v1188
    %v1190 = vpop.f32.mrf.mxu0
    %v1191 = vadd.f32 0.0, %v1190
    %1192 = vdwg.mxu0
    %v1193 = vadd.f32 %v1118, %v1189
    %v1194 = vxor.u32 %v1193, 2147483648
    %v1195 = vmul.f32 %v1194, 1.442695
    %v1196 = vpow.pop %v1195
    %v1197 = vadd.f32 %v1196, 1.0
    %v1198 = vrcp.pop %v1197
    %v1199 = vmul.f32 1.0, %v1198
    %v1200 = vadd.f32 %v1191, %v651
    %v1201 = vmul.f32 %v1199, %v1200
    %v1202 = vadd.f32 %v1119, %v1201
    %v1203 = vtanh.pop %v1202
    %v1204 = vsub.f32 1.0, %v1199
    %1206 = vrot.lane.b32.xlu0 %v1203, 64
    %v1207 = vpop.permute.xlu0 %1206
    %v1209 = vmul.f32 %v1204, %v1207
    %v1210 = vmul.f32 %v1199, %v998
    %v1211 = vadd.f32 %v1209, %v1210
    %1213 = vrot.lane.b32.xlu0 %v1211, 64
    %v1214 = vpop.permute.xlu0 %1213
    %s1216 = scalar_lea.vmem [#allocation4], 16
    %1217 = vst.msk [vmem:[%s1216] sm:$0xff] %vm475, %v1214
    %s1218 = scalar_lea.vmem [#allocation4], 40
    %1219 = vst.msk [vmem:[%s1218] sm:$0xff] %vm871, %v1214
    %1220 = vst.msk [vmem:[%s1218] sm:$0xff] %vm873, %v1211
    %1221 = vst.msk [vmem:[%s1216] sm:$0xff] %vm875, %v1211
    %s1222 = smul.addr %s1115, 8
    %s1223 = scalar_lea.vmem [#allocation3], %s1222
    %v1224 = vld [vmem:[%s1223] sm:$0xff]
    %v1225 = vld [vmem:[%s1223 + $0x8] sm:$0xff]
    %v1226 = vsel %vm614, %v1107, 0
    %1228 = vmatprep.subr.mxu0 0.0
    %1229 = vmatpush1.msra.mxu0 0.0
    %1230 = vmatprep.subr.mxu0 0.0
    %1231 = vmatpush1.msra.mxu0 0.0
    %1232 = vmatprep.subr.mxu0 0.0
    %1233 = vmatpush1.msra.mxu0 0.0
    %1234 = vmatprep.subr.mxu0 0.0
    %1235 = vmatpush1.msra.mxu0 0.0
    %1236 = vmatprep.subr.mxu0 0.0
    %1237 = vmatpush1.msra.mxu0 0.0
    %1238 = vmatprep.subr.mxu0 0.0
    %1239 = vmatpush1.msra.mxu0 0.0
    %1240 = vmatprep.subr.mxu0 0.0
    %1241 = vmatpush1.msra.mxu0 0.0
    %1242 = vmatprep.subr.mxu0 0.0
    %1243 = vmatpush1.msra.mxu0 0.0
    %1244 = vmatprep.subr.mxu0 %v841
    %1245 = vmatpush1.msra.mxu0 %v840
    %1246 = vmatprep.subr.mxu0 %v839
    %1247 = vmatpush1.msra.mxu0 %v838
    %1248 = vmatprep.subr.mxu0 %v837
    %1249 = vmatpush1.msra.mxu0 %v836
    %1250 = vmatprep.subr.mxu0 %v835
    %1251 = vmatpush1.msra.mxu0 %v834
    %1252 = vmatprep.subr.mxu0 %v833
    %1253 = vmatpush1.msra.mxu0 %v832
    %1254 = vmatprep.subr.mxu0 %v831
    %1255 = vmatpush1.msra.mxu0 %v830
    %1256 = vmatprep.subr.mxu0 %v829
    %1257 = vmatpush1.msra.mxu0 %v828
    %1258 = vmatprep.subr.mxu0 %v827
    %1259 = vmatpush1.msra.mxu0 %v826
    %1260 = vmatprep.subr.mxu0 0.0
    %1261 = vmatpush2.msra.mxu0 0.0
    %1262 = vmatprep.subr.mxu0 0.0
    %1263 = vmatpush2.msra.mxu0 0.0
    %1264 = vmatprep.subr.mxu0 0.0
    %1265 = vmatpush2.msra.mxu0 0.0
    %1266 = vmatprep.subr.mxu0 0.0
    %1267 = vmatpush2.msra.mxu0 0.0
    %1268 = vmatprep.subr.mxu0 0.0
    %1269 = vmatpush2.msra.mxu0 0.0
    %1270 = vmatprep.subr.mxu0 0.0
    %1271 = vmatpush2.msra.mxu0 0.0
    %1272 = vmatprep.subr.mxu0 0.0
    %1273 = vmatpush2.msra.mxu0 0.0
    %1274 = vmatprep.subr.mxu0 0.0
    %1275 = vmatpush2.msra.mxu0 0.0
    %1276 = vmatprep.subr.mxu0 0.0
    %1277 = vmatpush2.msra.mxu0 0.0
    %1278 = vmatprep.subr.mxu0 0.0
    %1279 = vmatpush2.msra.mxu0 0.0
    %1280 = vmatprep.subr.mxu0 0.0
    %1281 = vmatpush2.msra.mxu0 0.0
    %1282 = vmatprep.subr.mxu0 0.0
    %1283 = vmatpush2.msra.mxu0 0.0
    %1284 = vmatprep.subr.mxu0 0.0
    %1285 = vmatpush2.msra.mxu0 0.0
    %1286 = vmatprep.subr.mxu0 0.0
    %1287 = vmatpush2.msra.mxu0 0.0
    %1288 = vmatprep.subr.mxu0 0.0
    %1289 = vmatpush2.msra.mxu0 0.0
    %1290 = vmatprep.subr.mxu0 0.0
    %1291 = vmatpush2.msra.mxu0 0.0
    %1292 = vmatprep.mubr.f32.mxu0 0.0
    %1293 = vmatmul.mubr.f32.gmra.mxu0 %v1226
    %v1294 = vpop.f32.mrf.mxu0
    %v1295 = vadd.f32 0.0, %v1294
    %v1296 = vpop.f32.mrf.mxu0
    %v1297 = vadd.f32 0.0, %v1296
    %1298 = vdwg.mxu0
    %v1299 = vadd.f32 %v1224, %v1295
    %v1300 = vxor.u32 %v1299, 2147483648
    %v1301 = vmul.f32 %v1300, 1.442695
    %v1302 = vpow.pop %v1301
    %v1303 = vadd.f32 %v1302, 1.0
    %v1304 = vrcp.pop %v1303
    %v1305 = vmul.f32 1.0, %v1304
    %v1306 = vadd.f32 %v1297, %v847
    %v1307 = vmul.f32 %v1305, %v1306
    %v1308 = vadd.f32 %v1225, %v1307
    %v1309 = vtanh.pop %v1308
    %v1310 = vsub.f32 1.0, %v1305
    %1312 = vrot.lane.b32.xlu0 %v1309, 64
    %v1313 = vpop.permute.xlu0 %1312
    %v1315 = vmul.f32 %v1310, %v1313
    %v1316 = vmul.f32 %v1305, %v1104
    %v1317 = vadd.f32 %v1315, %v1316
    %1319 = vrot.lane.b32.xlu0 %v1317, 64
    %v1320 = vpop.permute.xlu0 %1319
    %s1322 = scalar_lea.vmem [#allocation5], 16
    %1323 = vst.msk [vmem:[%s1322] sm:$0xff] %vm475, %v1320
    %s1324 = scalar_lea.vmem [#allocation5], 40
    %1325 = vst.msk [vmem:[%s1324] sm:$0xff] %vm871, %v1320
    %1326 = vst.msk [vmem:[%s1324] sm:$0xff] %vm873, %v1317
    %1327 = vst.msk [vmem:[%s1322] sm:$0xff] %vm875, %v1317
    %s1328 = smul.u32 3, 2
    %s1329 = smul.addr %s1328, 8
    %s1330 = scalar_lea.vmem [#allocation2], %s1329
    %v1331 = vld [vmem:[%s1330] sm:$0xff]
    %v1332 = vld [vmem:[%s1330 + $0x8] sm:$0xff]
    %v1333 = vsel %vm614, %v1214, 0
    %1335 = vmatprep.subr.mxu0 0.0
    %1336 = vmatpush1.msra.mxu0 0.0
    %1337 = vmatprep.subr.mxu0 0.0
    %1338 = vmatpush1.msra.mxu0 0.0
    %1339 = vmatprep.subr.mxu0 0.0
    %1340 = vmatpush1.msra.mxu0 0.0
    %1341 = vmatprep.subr.mxu0 0.0
    %1342 = vmatpush1.msra.mxu0 0.0
    %1343 = vmatprep.subr.mxu0 0.0
    %1344 = vmatpush1.msra.mxu0 0.0
    %1345 = vmatprep.subr.mxu0 0.0
    %1346 = vmatpush1.msra.mxu0 0.0
    %1347 = vmatprep.subr.mxu0 0.0
    %1348 = vmatpush1.msra.mxu0 0.0
    %1349 = vmatprep.subr.mxu0 0.0
    %1350 = vmatpush1.msra.mxu0 0.0
    %1351 = vmatprep.subr.mxu0 %v645
    %1352 = vmatpush1.msra.mxu0 %v644
    %1353 = vmatprep.subr.mxu0 %v643
    %1354 = vmatpush1.msra.mxu0 %v642
    %1355 = vmatprep.subr.mxu0 %v641
    %1356 = vmatpush1.msra.mxu0 %v640
    %1357 = vmatprep.subr.mxu0 %v639
    %1358 = vmatpush1.msra.mxu0 %v638
    %1359 = vmatprep.subr.mxu0 %v637
    %1360 = vmatpush1.msra.mxu0 %v636
    %1361 = vmatprep.subr.mxu0 %v635
    %1362 = vmatpush1.msra.mxu0 %v634
    %1363 = vmatprep.subr.mxu0 %v633
    %1364 = vmatpush1.msra.mxu0 %v632
    %1365 = vmatprep.subr.mxu0 %v631
    %1366 = vmatpush1.msra.mxu0 %v630
    %1367 = vmatprep.subr.mxu0 0.0
    %1368 = vmatpush2.msra.mxu0 0.0
    %1369 = vmatprep.subr.mxu0 0.0
    %1370 = vmatpush2.msra.mxu0 0.0
    %1371 = vmatprep.subr.mxu0 0.0
    %1372 = vmatpush2.msra.mxu0 0.0
    %1373 = vmatprep.subr.mxu0 0.0
    %1374 = vmatpush2.msra.mxu0 0.0
    %1375 = vmatprep.subr.mxu0 0.0
    %1376 = vmatpush2.msra.mxu0 0.0
    %1377 = vmatprep.subr.mxu0 0.0
    %1378 = vmatpush2.msra.mxu0 0.0
    %1379 = vmatprep.subr.mxu0 0.0
    %1380 = vmatpush2.msra.mxu0 0.0
    %1381 = vmatprep.subr.mxu0 0.0
    %1382 = vmatpush2.msra.mxu0 0.0
    %1383 = vmatprep.subr.mxu0 0.0
    %1384 = vmatpush2.msra.mxu0 0.0
    %1385 = vmatprep.subr.mxu0 0.0
    %1386 = vmatpush2.msra.mxu0 0.0
    %1387 = vmatprep.subr.mxu0 0.0
    %1388 = vmatpush2.msra.mxu0 0.0
    %1389 = vmatprep.subr.mxu0 0.0
    %1390 = vmatpush2.msra.mxu0 0.0
    %1391 = vmatprep.subr.mxu0 0.0
    %1392 = vmatpush2.msra.mxu0 0.0
    %1393 = vmatprep.subr.mxu0 0.0
    %1394 = vmatpush2.msra.mxu0 0.0
    %1395 = vmatprep.subr.mxu0 0.0
    %1396 = vmatpush2.msra.mxu0 0.0
    %1397 = vmatprep.subr.mxu0 0.0
    %1398 = vmatpush2.msra.mxu0 0.0
    %1399 = vmatprep.mubr.f32.mxu0 0.0
    %1400 = vmatmul.mubr.f32.gmra.mxu0 %v1333
    %v1401 = vpop.f32.mrf.mxu0
    %v1402 = vadd.f32 0.0, %v1401
    %v1403 = vpop.f32.mrf.mxu0
    %v1404 = vadd.f32 0.0, %v1403
    %1405 = vdwg.mxu0
    %v1406 = vadd.f32 %v1331, %v1402
    %v1407 = vxor.u32 %v1406, 2147483648
    %v1408 = vmul.f32 %v1407, 1.442695
    %v1409 = vpow.pop %v1408
    %v1410 = vadd.f32 %v1409, 1.0
    %v1411 = vrcp.pop %v1410
    %v1412 = vmul.f32 1.0, %v1411
    %v1413 = vadd.f32 %v1404, %v651
    %v1414 = vmul.f32 %v1412, %v1413
    %v1415 = vadd.f32 %v1332, %v1414
    %v1416 = vtanh.pop %v1415
    %v1417 = vsub.f32 1.0, %v1412
    %1419 = vrot.lane.b32.xlu0 %v1416, 64
    %v1420 = vpop.permute.xlu0 %1419
    %v1422 = vmul.f32 %v1417, %v1420
    %v1423 = vmul.f32 %v1412, %v1211
    %v1424 = vadd.f32 %v1422, %v1423
    %1426 = vrot.lane.b32.xlu0 %v1424, 64
    %v1427 = vpop.permute.xlu0 %1426
    %s1429 = scalar_lea.vmem [#allocation4], 24
    %1430 = vst.msk [vmem:[%s1429] sm:$0xff] %vm475, %v1427
    %s1431 = scalar_lea.vmem [#allocation4], 32
    %1432 = vst.msk [vmem:[%s1431] sm:$0xff] %vm871, %v1427
    %1433 = vst.msk [vmem:[%s1431] sm:$0xff] %vm873, %v1424
    %1434 = vst.msk [vmem:[%s1429] sm:$0xff] %vm875, %v1424
    %s1435 = smul.addr %s1328, 8
    %s1436 = scalar_lea.vmem [#allocation3], %s1435
    %v1437 = vld [vmem:[%s1436] sm:$0xff]
    %v1438 = vld [vmem:[%s1436 + $0x8] sm:$0xff]
    %v1439 = vsel %vm614, %v1320, 0
    %1441 = vmatprep.subr.mxu0 0.0
    %1442 = vmatpush1.msra.mxu0 0.0
    %1443 = vmatprep.subr.mxu0 0.0
    %1444 = vmatpush1.msra.mxu0 0.0
    %1445 = vmatprep.subr.mxu0 0.0
    %1446 = vmatpush1.msra.mxu0 0.0
    %1447 = vmatprep.subr.mxu0 0.0
    %1448 = vmatpush1.msra.mxu0 0.0
    %1449 = vmatprep.subr.mxu0 0.0
    %1450 = vmatpush1.msra.mxu0 0.0
    %1451 = vmatprep.subr.mxu0 0.0
    %1452 = vmatpush1.msra.mxu0 0.0
    %1453 = vmatprep.subr.mxu0 0.0
    %1454 = vmatpush1.msra.mxu0 0.0
    %1455 = vmatprep.subr.mxu0 0.0
    %1456 = vmatpush1.msra.mxu0 0.0
    %1457 = vmatprep.subr.mxu0 %v841
    %1458 = vmatpush1.msra.mxu0 %v840
    %1459 = vmatprep.subr.mxu0 %v839
    %1460 = vmatpush1.msra.mxu0 %v838
    %1461 = vmatprep.subr.mxu0 %v837
    %1462 = vmatpush1.msra.mxu0 %v836
    %1463 = vmatprep.subr.mxu0 %v835
    %1464 = vmatpush1.msra.mxu0 %v834
    %1465 = vmatprep.subr.mxu0 %v833
    %1466 = vmatpush1.msra.mxu0 %v832
    %1467 = vmatprep.subr.mxu0 %v831
    %1468 = vmatpush1.msra.mxu0 %v830
    %1469 = vmatprep.subr.mxu0 %v829
    %1470 = vmatpush1.msra.mxu0 %v828
    %1471 = vmatprep.subr.mxu0 %v827
    %1472 = vmatpush1.msra.mxu0 %v826
    %1473 = vmatprep.subr.mxu0 0.0
    %1474 = vmatpush2.msra.mxu0 0.0
    %1475 = vmatprep.subr.mxu0 0.0
    %1476 = vmatpush2.msra.mxu0 0.0
    %1477 = vmatprep.subr.mxu0 0.0
    %1478 = vmatpush2.msra.mxu0 0.0
    %1479 = vmatprep.subr.mxu0 0.0
    %1480 = vmatpush2.msra.mxu0 0.0
    %1481 = vmatprep.subr.mxu0 0.0
    %1482 = vmatpush2.msra.mxu0 0.0
    %1483 = vmatprep.subr.mxu0 0.0
    %1484 = vmatpush2.msra.mxu0 0.0
    %1485 = vmatprep.subr.mxu0 0.0
    %1486 = vmatpush2.msra.mxu0 0.0
    %1487 = vmatprep.subr.mxu0 0.0
    %1488 = vmatpush2.msra.mxu0 0.0
    %1489 = vmatprep.subr.mxu0 0.0
    %1490 = vmatpush2.msra.mxu0 0.0
    %1491 = vmatprep.subr.mxu0 0.0
    %1492 = vmatpush2.msra.mxu0 0.0
    %1493 = vmatprep.subr.mxu0 0.0
    %1494 = vmatpush2.msra.mxu0 0.0
    %1495 = vmatprep.subr.mxu0 0.0
    %1496 = vmatpush2.msra.mxu0 0.0
    %1497 = vmatprep.subr.mxu0 0.0
    %1498 = vmatpush2.msra.mxu0 0.0
    %1499 = vmatprep.subr.mxu0 0.0
    %1500 = vmatpush2.msra.mxu0 0.0
    %1501 = vmatprep.subr.mxu0 0.0
    %1502 = vmatpush2.msra.mxu0 0.0
    %1503 = vmatprep.subr.mxu0 0.0
    %1504 = vmatpush2.msra.mxu0 0.0
    %1505 = vmatprep.mubr.f32.mxu0 0.0
    %1506 = vmatmul.mubr.f32.gmra.mxu0 %v1439
    %v1507 = vpop.f32.mrf.mxu0
    %v1508 = vadd.f32 0.0, %v1507
    %v1509 = vpop.f32.mrf.mxu0
    %v1510 = vadd.f32 0.0, %v1509
    %1511 = vdwg.mxu0
    %v1512 = vadd.f32 %v1437, %v1508
    %v1513 = vxor.u32 %v1512, 2147483648
    %v1514 = vmul.f32 %v1513, 1.442695
    %v1515 = vpow.pop %v1514
    %v1516 = vadd.f32 %v1515, 1.0
    %v1517 = vrcp.pop %v1516
    %v1518 = vmul.f32 1.0, %v1517
    %v1519 = vadd.f32 %v1510, %v847
    %v1520 = vmul.f32 %v1518, %v1519
    %v1521 = vadd.f32 %v1438, %v1520
    %v1522 = vtanh.pop %v1521
    %v1523 = vsub.f32 1.0, %v1518
    %1525 = vrot.lane.b32.xlu0 %v1522, 64
    %v1526 = vpop.permute.xlu0 %1525
    %v1528 = vmul.f32 %v1523, %v1526
    %v1529 = vmul.f32 %v1518, %v1317
    %v1530 = vadd.f32 %v1528, %v1529
    %1532 = vrot.lane.b32.xlu0 %v1530, 64
    %v1533 = vpop.permute.xlu0 %1532
    %s1535 = scalar_lea.vmem [#allocation5], 24
    %1536 = vst.msk [vmem:[%s1535] sm:$0xff] %vm475, %v1533
    %s1537 = scalar_lea.vmem [#allocation5], 32
    %1538 = vst.msk [vmem:[%s1537] sm:$0xff] %vm871, %v1533
    %1539 = vst.msk [vmem:[%s1537] sm:$0xff] %vm873, %v1530
    %1540 = vst.msk [vmem:[%s1535] sm:$0xff] %vm875, %v1530
    %s1541 = smul.u32 4, 2
    %s1542 = smul.addr %s1541, 8
    %s1543 = scalar_lea.vmem [#allocation2], %s1542
    %v1544 = vld [vmem:[%s1543] sm:$0xff]
    %v1545 = vld [vmem:[%s1543 + $0x8] sm:$0xff]
    %v1546 = vsel %vm614, %v1427, 0
    %1548 = vmatprep.subr.mxu0 0.0
    %1549 = vmatpush1.msra.mxu0 0.0
    %1550 = vmatprep.subr.mxu0 0.0
    %1551 = vmatpush1.msra.mxu0 0.0
    %1552 = vmatprep.subr.mxu0 0.0
    %1553 = vmatpush1.msra.mxu0 0.0
    %1554 = vmatprep.subr.mxu0 0.0
    %1555 = vmatpush1.msra.mxu0 0.0
    %1556 = vmatprep.subr.mxu0 0.0
    %1557 = vmatpush1.msra.mxu0 0.0
    %1558 = vmatprep.subr.mxu0 0.0
    %1559 = vmatpush1.msra.mxu0 0.0
    %1560 = vmatprep.subr.mxu0 0.0
    %1561 = vmatpush1.msra.mxu0 0.0
    %1562 = vmatprep.subr.mxu0 0.0
    %1563 = vmatpush1.msra.mxu0 0.0
    %1564 = vmatprep.subr.mxu0 %v645
    %1565 = vmatpush1.msra.mxu0 %v644
    %1566 = vmatprep.subr.mxu0 %v643
    %1567 = vmatpush1.msra.mxu0 %v642
    %1568 = vmatprep.subr.mxu0 %v641
    %1569 = vmatpush1.msra.mxu0 %v640
    %1570 = vmatprep.subr.mxu0 %v639
    %1571 = vmatpush1.msra.mxu0 %v638
    %1572 = vmatprep.subr.mxu0 %v637
    %1573 = vmatpush1.msra.mxu0 %v636
    %1574 = vmatprep.subr.mxu0 %v635
    %1575 = vmatpush1.msra.mxu0 %v634
    %1576 = vmatprep.subr.mxu0 %v633
    %1577 = vmatpush1.msra.mxu0 %v632
    %1578 = vmatprep.subr.mxu0 %v631
    %1579 = vmatpush1.msra.mxu0 %v630
    %1580 = vmatprep.subr.mxu0 0.0
    %1581 = vmatpush2.msra.mxu0 0.0
    %1582 = vmatprep.subr.mxu0 0.0
    %1583 = vmatpush2.msra.mxu0 0.0
    %1584 = vmatprep.subr.mxu0 0.0
    %1585 = vmatpush2.msra.mxu0 0.0
    %1586 = vmatprep.subr.mxu0 0.0
    %1587 = vmatpush2.msra.mxu0 0.0
    %1588 = vmatprep.subr.mxu0 0.0
    %1589 = vmatpush2.msra.mxu0 0.0
    %1590 = vmatprep.subr.mxu0 0.0
    %1591 = vmatpush2.msra.mxu0 0.0
    %1592 = vmatprep.subr.mxu0 0.0
    %1593 = vmatpush2.msra.mxu0 0.0
    %1594 = vmatprep.subr.mxu0 0.0
    %1595 = vmatpush2.msra.mxu0 0.0
    %1596 = vmatprep.subr.mxu0 0.0
    %1597 = vmatpush2.msra.mxu0 0.0
    %1598 = vmatprep.subr.mxu0 0.0
    %1599 = vmatpush2.msra.mxu0 0.0
    %1600 = vmatprep.subr.mxu0 0.0
    %1601 = vmatpush2.msra.mxu0 0.0
    %1602 = vmatprep.subr.mxu0 0.0
    %1603 = vmatpush2.msra.mxu0 0.0
    %1604 = vmatprep.subr.mxu0 0.0
    %1605 = vmatpush2.msra.mxu0 0.0
    %1606 = vmatprep.subr.mxu0 0.0
    %1607 = vmatpush2.msra.mxu0 0.0
    %1608 = vmatprep.subr.mxu0 0.0
    %1609 = vmatpush2.msra.mxu0 0.0
    %1610 = vmatprep.subr.mxu0 0.0
    %1611 = vmatpush2.msra.mxu0 0.0
    %1612 = vmatprep.mubr.f32.mxu0 0.0
    %1613 = vmatmul.mubr.f32.gmra.mxu0 %v1546
    %v1614 = vpop.f32.mrf.mxu0
    %v1615 = vadd.f32 0.0, %v1614
    %v1616 = vpop.f32.mrf.mxu0
    %v1617 = vadd.f32 0.0, %v1616
    %1618 = vdwg.mxu0
    %v1619 = vadd.f32 %v1544, %v1615
    %v1620 = vxor.u32 %v1619, 2147483648
    %v1621 = vmul.f32 %v1620, 1.442695
    %v1622 = vpow.pop %v1621
    %v1623 = vadd.f32 %v1622, 1.0
    %v1624 = vrcp.pop %v1623
    %v1625 = vmul.f32 1.0, %v1624
    %v1626 = vadd.f32 %v1617, %v651
    %v1627 = vmul.f32 %v1625, %v1626
    %v1628 = vadd.f32 %v1545, %v1627
    %v1629 = vtanh.pop %v1628
    %v1630 = vsub.f32 1.0, %v1625
    %1632 = vrot.lane.b32.xlu0 %v1629, 64
    %v1633 = vpop.permute.xlu0 %1632
    %v1635 = vmul.f32 %v1630, %v1633
    %v1636 = vmul.f32 %v1625, %v1424
    %v1637 = vadd.f32 %v1635, %v1636
    %1639 = vrot.lane.b32.xlu0 %v1637, 64
    %v1640 = vpop.permute.xlu0 %1639
    %1642 = vst.msk [vmem:[%s1431] sm:$0xff] %vm475, %v1640
    %1643 = vst.msk [vmem:[%s1429] sm:$0xff] %vm871, %v1640
    %1644 = vst.msk [vmem:[%s1429] sm:$0xff] %vm873, %v1637
    %1645 = vst.msk [vmem:[%s1431] sm:$0xff] %vm875, %v1637
    %s1646 = smul.addr %s1541, 8
    %s1647 = scalar_lea.vmem [#allocation3], %s1646
    %v1648 = vld [vmem:[%s1647] sm:$0xff]
    %v1649 = vld [vmem:[%s1647 + $0x8] sm:$0xff]
    %v1650 = vsel %vm614, %v1533, 0
    %1652 = vmatprep.subr.mxu0 0.0
    %1653 = vmatpush1.msra.mxu0 0.0
    %1654 = vmatprep.subr.mxu0 0.0
    %1655 = vmatpush1.msra.mxu0 0.0
    %1656 = vmatprep.subr.mxu0 0.0
    %1657 = vmatpush1.msra.mxu0 0.0
    %1658 = vmatprep.subr.mxu0 0.0
    %1659 = vmatpush1.msra.mxu0 0.0
    %1660 = vmatprep.subr.mxu0 0.0
    %1661 = vmatpush1.msra.mxu0 0.0
    %1662 = vmatprep.subr.mxu0 0.0
    %1663 = vmatpush1.msra.mxu0 0.0
    %1664 = vmatprep.subr.mxu0 0.0
    %1665 = vmatpush1.msra.mxu0 0.0
    %1666 = vmatprep.subr.mxu0 0.0
    %1667 = vmatpush1.msra.mxu0 0.0
    %1668 = vmatprep.subr.mxu0 %v841
    %1669 = vmatpush1.msra.mxu0 %v840
    %1670 = vmatprep.subr.mxu0 %v839
    %1671 = vmatpush1.msra.mxu0 %v838
    %1672 = vmatprep.subr.mxu0 %v837
    %1673 = vmatpush1.msra.mxu0 %v836
    %1674 = vmatprep.subr.mxu0 %v835
    %1675 = vmatpush1.msra.mxu0 %v834
    %1676 = vmatprep.subr.mxu0 %v833
    %1677 = vmatpush1.msra.mxu0 %v832
    %1678 = vmatprep.subr.mxu0 %v831
    %1679 = vmatpush1.msra.mxu0 %v830
    %1680 = vmatprep.subr.mxu0 %v829
    %1681 = vmatpush1.msra.mxu0 %v828
    %1682 = vmatprep.subr.mxu0 %v827
    %1683 = vmatpush1.msra.mxu0 %v826
    %1684 = vmatprep.subr.mxu0 0.0
    %1685 = vmatpush2.msra.mxu0 0.0
    %1686 = vmatprep.subr.mxu0 0.0
    %1687 = vmatpush2.msra.mxu0 0.0
    %1688 = vmatprep.subr.mxu0 0.0
    %1689 = vmatpush2.msra.mxu0 0.0
    %1690 = vmatprep.subr.mxu0 0.0
    %1691 = vmatpush2.msra.mxu0 0.0
    %1692 = vmatprep.subr.mxu0 0.0
    %1693 = vmatpush2.msra.mxu0 0.0
    %1694 = vmatprep.subr.mxu0 0.0
    %1695 = vmatpush2.msra.mxu0 0.0
    %1696 = vmatprep.subr.mxu0 0.0
    %1697 = vmatpush2.msra.mxu0 0.0
    %1698 = vmatprep.subr.mxu0 0.0
    %1699 = vmatpush2.msra.mxu0 0.0
    %1700 = vmatprep.subr.mxu0 0.0
    %1701 = vmatpush2.msra.mxu0 0.0
    %1702 = vmatprep.subr.mxu0 0.0
    %1703 = vmatpush2.msra.mxu0 0.0
    %1704 = vmatprep.subr.mxu0 0.0
    %1705 = vmatpush2.msra.mxu0 0.0
    %1706 = vmatprep.subr.mxu0 0.0
    %1707 = vmatpush2.msra.mxu0 0.0
    %1708 = vmatprep.subr.mxu0 0.0
    %1709 = vmatpush2.msra.mxu0 0.0
    %1710 = vmatprep.subr.mxu0 0.0
    %1711 = vmatpush2.msra.mxu0 0.0
    %1712 = vmatprep.subr.mxu0 0.0
    %1713 = vmatpush2.msra.mxu0 0.0
    %1714 = vmatprep.subr.mxu0 0.0
    %1715 = vmatpush2.msra.mxu0 0.0
    %1716 = vmatprep.mubr.f32.mxu0 0.0
    %1717 = vmatmul.mubr.f32.gmra.mxu0 %v1650
    %v1718 = vpop.f32.mrf.mxu0
    %v1719 = vadd.f32 0.0, %v1718
    %v1720 = vpop.f32.mrf.mxu0
    %v1721 = vadd.f32 0.0, %v1720
    %1722 = vdwg.mxu0
    %v1723 = vadd.f32 %v1648, %v1719
    %v1724 = vxor.u32 %v1723, 2147483648
    %v1725 = vmul.f32 %v1724, 1.442695
    %v1726 = vpow.pop %v1725
    %v1727 = vadd.f32 %v1726, 1.0
    %v1728 = vrcp.pop %v1727
    %v1729 = vmul.f32 1.0, %v1728
    %v1730 = vadd.f32 %v1721, %v847
    %v1731 = vmul.f32 %v1729, %v1730
    %v1732 = vadd.f32 %v1649, %v1731
    %v1733 = vtanh.pop %v1732
    %v1734 = vsub.f32 1.0, %v1729
    %1736 = vrot.lane.b32.xlu0 %v1733, 64
    %v1737 = vpop.permute.xlu0 %1736
    %v1739 = vmul.f32 %v1734, %v1737
    %v1740 = vmul.f32 %v1729, %v1530
    %v1741 = vadd.f32 %v1739, %v1740
    %1743 = vrot.lane.b32.xlu0 %v1741, 64
    %v1744 = vpop.permute.xlu0 %1743
    %1746 = vst.msk [vmem:[%s1537] sm:$0xff] %vm475, %v1744
    %1747 = vst.msk [vmem:[%s1535] sm:$0xff] %vm871, %v1744
    %1748 = vst.msk [vmem:[%s1535] sm:$0xff] %vm873, %v1741
    %1749 = vst.msk [vmem:[%s1537] sm:$0xff] %vm875, %v1741
    %s1750 = smul.u32 5, 2
    %s1751 = smul.addr %s1750, 8
    %s1752 = scalar_lea.vmem [#allocation2], %s1751
    %v1753 = vld [vmem:[%s1752] sm:$0xff]
    %v1754 = vld [vmem:[%s1752 + $0x8] sm:$0xff]
    %v1755 = vsel %vm614, %v1640, 0
    %1757 = vmatprep.subr.mxu0 0.0
    %1758 = vmatpush1.msra.mxu0 0.0
    %1759 = vmatprep.subr.mxu0 0.0
    %1760 = vmatpush1.msra.mxu0 0.0
    %1761 = vmatprep.subr.mxu0 0.0
    %1762 = vmatpush1.msra.mxu0 0.0
    %1763 = vmatprep.subr.mxu0 0.0
    %1764 = vmatpush1.msra.mxu0 0.0
    %1765 = vmatprep.subr.mxu0 0.0
    %1766 = vmatpush1.msra.mxu0 0.0
    %1767 = vmatprep.subr.mxu0 0.0
    %1768 = vmatpush1.msra.mxu0 0.0
    %1769 = vmatprep.subr.mxu0 0.0
    %1770 = vmatpush1.msra.mxu0 0.0
    %1771 = vmatprep.subr.mxu0 0.0
    %1772 = vmatpush1.msra.mxu0 0.0
    %1773 = vmatprep.subr.mxu0 %v645
    %1774 = vmatpush1.msra.mxu0 %v644
    %1775 = vmatprep.subr.mxu0 %v643
    %1776 = vmatpush1.msra.mxu0 %v642
    %1777 = vmatprep.subr.mxu0 %v641
    %1778 = vmatpush1.msra.mxu0 %v640
    %1779 = vmatprep.subr.mxu0 %v639
    %1780 = vmatpush1.msra.mxu0 %v638
    %1781 = vmatprep.subr.mxu0 %v637
    %1782 = vmatpush1.msra.mxu0 %v636
    %1783 = vmatprep.subr.mxu0 %v635
    %1784 = vmatpush1.msra.mxu0 %v634
    %1785 = vmatprep.subr.mxu0 %v633
    %1786 = vmatpush1.msra.mxu0 %v632
    %1787 = vmatprep.subr.mxu0 %v631
    %1788 = vmatpush1.msra.mxu0 %v630
    %1789 = vmatprep.subr.mxu0 0.0
    %1790 = vmatpush2.msra.mxu0 0.0
    %1791 = vmatprep.subr.mxu0 0.0
    %1792 = vmatpush2.msra.mxu0 0.0
    %1793 = vmatprep.subr.mxu0 0.0
    %1794 = vmatpush2.msra.mxu0 0.0
    %1795 = vmatprep.subr.mxu0 0.0
    %1796 = vmatpush2.msra.mxu0 0.0
    %1797 = vmatprep.subr.mxu0 0.0
    %1798 = vmatpush2.msra.mxu0 0.0
    %1799 = vmatprep.subr.mxu0 0.0
    %1800 = vmatpush2.msra.mxu0 0.0
    %1801 = vmatprep.subr.mxu0 0.0
    %1802 = vmatpush2.msra.mxu0 0.0
    %1803 = vmatprep.subr.mxu0 0.0
    %1804 = vmatpush2.msra.mxu0 0.0
    %1805 = vmatprep.subr.mxu0 0.0
    %1806 = vmatpush2.msra.mxu0 0.0
    %1807 = vmatprep.subr.mxu0 0.0
    %1808 = vmatpush2.msra.mxu0 0.0
    %1809 = vmatprep.subr.mxu0 0.0
    %1810 = vmatpush2.msra.mxu0 0.0
    %1811 = vmatprep.subr.mxu0 0.0
    %1812 = vmatpush2.msra.mxu0 0.0
    %1813 = vmatprep.subr.mxu0 0.0
    %1814 = vmatpush2.msra.mxu0 0.0
    %1815 = vmatprep.subr.mxu0 0.0
    %1816 = vmatpush2.msra.mxu0 0.0
    %1817 = vmatprep.subr.mxu0 0.0
    %1818 = vmatpush2.msra.mxu0 0.0
    %1819 = vmatprep.subr.mxu0 0.0
    %1820 = vmatpush2.msra.mxu0 0.0
    %1821 = vmatprep.mubr.f32.mxu0 0.0
    %1822 = vmatmul.mubr.f32.gmra.mxu0 %v1755
    %v1823 = vpop.f32.mrf.mxu0
    %v1824 = vadd.f32 0.0, %v1823
    %v1825 = vpop.f32.mrf.mxu0
    %v1826 = vadd.f32 0.0, %v1825
    %1827 = vdwg.mxu0
    %v1828 = vadd.f32 %v1753, %v1824
    %v1829 = vxor.u32 %v1828, 2147483648
    %v1830 = vmul.f32 %v1829, 1.442695
    %v1831 = vpow.pop %v1830
    %v1832 = vadd.f32 %v1831, 1.0
    %v1833 = vrcp.pop %v1832
    %v1834 = vmul.f32 1.0, %v1833
    %v1835 = vadd.f32 %v1826, %v651
    %v1836 = vmul.f32 %v1834, %v1835
    %v1837 = vadd.f32 %v1754, %v1836
    %v1838 = vtanh.pop %v1837
    %v1839 = vsub.f32 1.0, %v1834
    %1841 = vrot.lane.b32.xlu0 %v1838, 64
    %v1842 = vpop.permute.xlu0 %1841
    %v1844 = vmul.f32 %v1839, %v1842
    %v1845 = vmul.f32 %v1834, %v1637
    %v1846 = vadd.f32 %v1844, %v1845
    %1848 = vrot.lane.b32.xlu0 %v1846, 64
    %v1849 = vpop.permute.xlu0 %1848
    %1851 = vst.msk [vmem:[%s1218] sm:$0xff] %vm475, %v1849
    %1852 = vst.msk [vmem:[%s1216] sm:$0xff] %vm871, %v1849
    %1853 = vst.msk [vmem:[%s1216] sm:$0xff] %vm873, %v1846
    %1854 = vst.msk [vmem:[%s1218] sm:$0xff] %vm875, %v1846
    %s1855 = smul.addr %s1750, 8
    %s1856 = scalar_lea.vmem [#allocation3], %s1855
    %v1857 = vld [vmem:[%s1856] sm:$0xff]
    %v1858 = vld [vmem:[%s1856 + $0x8] sm:$0xff]
    %v1859 = vsel %vm614, %v1744, 0
    %1861 = vmatprep.subr.mxu0 0.0
    %1862 = vmatpush1.msra.mxu0 0.0
    %1863 = vmatprep.subr.mxu0 0.0
    %1864 = vmatpush1.msra.mxu0 0.0
    %1865 = vmatprep.subr.mxu0 0.0
    %1866 = vmatpush1.msra.mxu0 0.0
    %1867 = vmatprep.subr.mxu0 0.0
    %1868 = vmatpush1.msra.mxu0 0.0
    %1869 = vmatprep.subr.mxu0 0.0
    %1870 = vmatpush1.msra.mxu0 0.0
    %1871 = vmatprep.subr.mxu0 0.0
    %1872 = vmatpush1.msra.mxu0 0.0
    %1873 = vmatprep.subr.mxu0 0.0
    %1874 = vmatpush1.msra.mxu0 0.0
    %1875 = vmatprep.subr.mxu0 0.0
    %1876 = vmatpush1.msra.mxu0 0.0
    %1877 = vmatprep.subr.mxu0 %v841
    %1878 = vmatpush1.msra.mxu0 %v840
    %1879 = vmatprep.subr.mxu0 %v839
    %1880 = vmatpush1.msra.mxu0 %v838
    %1881 = vmatprep.subr.mxu0 %v837
    %1882 = vmatpush1.msra.mxu0 %v836
    %1883 = vmatprep.subr.mxu0 %v835
    %1884 = vmatpush1.msra.mxu0 %v834
    %1885 = vmatprep.subr.mxu0 %v833
    %1886 = vmatpush1.msra.mxu0 %v832
    %1887 = vmatprep.subr.mxu0 %v831
    %1888 = vmatpush1.msra.mxu0 %v830
    %1889 = vmatprep.subr.mxu0 %v829
    %1890 = vmatpush1.msra.mxu0 %v828
    %1891 = vmatprep.subr.mxu0 %v827
    %1892 = vmatpush1.msra.mxu0 %v826
    %1893 = vmatprep.subr.mxu0 0.0
    %1894 = vmatpush2.msra.mxu0 0.0
    %1895 = vmatprep.subr.mxu0 0.0
    %1896 = vmatpush2.msra.mxu0 0.0
    %1897 = vmatprep.subr.mxu0 0.0
    %1898 = vmatpush2.msra.mxu0 0.0
    %1899 = vmatprep.subr.mxu0 0.0
    %1900 = vmatpush2.msra.mxu0 0.0
    %1901 = vmatprep.subr.mxu0 0.0
    %1902 = vmatpush2.msra.mxu0 0.0
    %1903 = vmatprep.subr.mxu0 0.0
    %1904 = vmatpush2.msra.mxu0 0.0
    %1905 = vmatprep.subr.mxu0 0.0
    %1906 = vmatpush2.msra.mxu0 0.0
    %1907 = vmatprep.subr.mxu0 0.0
    %1908 = vmatpush2.msra.mxu0 0.0
    %1909 = vmatprep.subr.mxu0 0.0
    %1910 = vmatpush2.msra.mxu0 0.0
    %1911 = vmatprep.subr.mxu0 0.0
    %1912 = vmatpush2.msra.mxu0 0.0
    %1913 = vmatprep.subr.mxu0 0.0
    %1914 = vmatpush2.msra.mxu0 0.0
    %1915 = vmatprep.subr.mxu0 0.0
    %1916 = vmatpush2.msra.mxu0 0.0
    %1917 = vmatprep.subr.mxu0 0.0
    %1918 = vmatpush2.msra.mxu0 0.0
    %1919 = vmatprep.subr.mxu0 0.0
    %1920 = vmatpush2.msra.mxu0 0.0
    %1921 = vmatprep.subr.mxu0 0.0
    %1922 = vmatpush2.msra.mxu0 0.0
    %1923 = vmatprep.subr.mxu0 0.0
    %1924 = vmatpush2.msra.mxu0 0.0
    %1925 = vmatprep.mubr.f32.mxu0 0.0
    %1926 = vmatmul.mubr.f32.gmra.mxu0 %v1859
    %v1927 = vpop.f32.mrf.mxu0
    %v1928 = vadd.f32 0.0, %v1927
    %v1929 = vpop.f32.mrf.mxu0
    %v1930 = vadd.f32 0.0, %v1929
    %1931 = vdwg.mxu0
    %v1932 = vadd.f32 %v1857, %v1928
    %v1933 = vxor.u32 %v1932, 2147483648
    %v1934 = vmul.f32 %v1933, 1.442695
    %v1935 = vpow.pop %v1934
    %v1936 = vadd.f32 %v1935, 1.0
    %v1937 = vrcp.pop %v1936
    %v1938 = vmul.f32 1.0, %v1937
    %v1939 = vadd.f32 %v1930, %v847
    %v1940 = vmul.f32 %v1938, %v1939
    %v1941 = vadd.f32 %v1858, %v1940
    %v1942 = vtanh.pop %v1941
    %v1943 = vsub.f32 1.0, %v1938
    %1945 = vrot.lane.b32.xlu0 %v1942, 64
    %v1946 = vpop.permute.xlu0 %1945
    %v1948 = vmul.f32 %v1943, %v1946
    %v1949 = vmul.f32 %v1938, %v1741
    %v1950 = vadd.f32 %v1948, %v1949
    %1952 = vrot.lane.b32.xlu0 %v1950, 64
    %v1953 = vpop.permute.xlu0 %1952
    %1955 = vst.msk [vmem:[%s1324] sm:$0xff] %vm475, %v1953
    %1956 = vst.msk [vmem:[%s1322] sm:$0xff] %vm871, %v1953
    %1957 = vst.msk [vmem:[%s1322] sm:$0xff] %vm873, %v1950
    %1958 = vst.msk [vmem:[%s1324] sm:$0xff] %vm875, %v1950
    %s1959 = smul.u32 6, 2
    %s1960 = smul.addr %s1959, 8
    %s1961 = scalar_lea.vmem [#allocation2], %s1960
    %v1962 = vld [vmem:[%s1961] sm:$0xff]
    %v1963 = vld [vmem:[%s1961 + $0x8] sm:$0xff]
    %v1964 = vsel %vm614, %v1849, 0
    %1966 = vmatprep.subr.mxu0 0.0
    %1967 = vmatpush1.msra.mxu0 0.0
    %1968 = vmatprep.subr.mxu0 0.0
    %1969 = vmatpush1.msra.mxu0 0.0
    %1970 = vmatprep.subr.mxu0 0.0
    %1971 = vmatpush1.msra.mxu0 0.0
    %1972 = vmatprep.subr.mxu0 0.0
    %1973 = vmatpush1.msra.mxu0 0.0
    %1974 = vmatprep.subr.mxu0 0.0
    %1975 = vmatpush1.msra.mxu0 0.0
    %1976 = vmatprep.subr.mxu0 0.0
    %1977 = vmatpush1.msra.mxu0 0.0
    %1978 = vmatprep.subr.mxu0 0.0
    %1979 = vmatpush1.msra.mxu0 0.0
    %1980 = vmatprep.subr.mxu0 0.0
    %1981 = vmatpush1.msra.mxu0 0.0
    %1982 = vmatprep.subr.mxu0 %v645
    %1983 = vmatpush1.msra.mxu0 %v644
    %1984 = vmatprep.subr.mxu0 %v643
    %1985 = vmatpush1.msra.mxu0 %v642
    %1986 = vmatprep.subr.mxu0 %v641
    %1987 = vmatpush1.msra.mxu0 %v640
    %1988 = vmatprep.subr.mxu0 %v639
    %1989 = vmatpush1.msra.mxu0 %v638
    %1990 = vmatprep.subr.mxu0 %v637
    %1991 = vmatpush1.msra.mxu0 %v636
    %1992 = vmatprep.subr.mxu0 %v635
    %1993 = vmatpush1.msra.mxu0 %v634
    %1994 = vmatprep.subr.mxu0 %v633
    %1995 = vmatpush1.msra.mxu0 %v632
    %1996 = vmatprep.subr.mxu0 %v631
    %1997 = vmatpush1.msra.mxu0 %v630
    %1998 = vmatprep.subr.mxu0 0.0
    %1999 = vmatpush2.msra.mxu0 0.0
    %2000 = vmatprep.subr.mxu0 0.0
    %2001 = vmatpush2.msra.mxu0 0.0
    %2002 = vmatprep.subr.mxu0 0.0
    %2003 = vmatpush2.msra.mxu0 0.0
    %2004 = vmatprep.subr.mxu0 0.0
    %2005 = vmatpush2.msra.mxu0 0.0
    %2006 = vmatprep.subr.mxu0 0.0
    %2007 = vmatpush2.msra.mxu0 0.0
    %2008 = vmatprep.subr.mxu0 0.0
    %2009 = vmatpush2.msra.mxu0 0.0
    %2010 = vmatprep.subr.mxu0 0.0
    %2011 = vmatpush2.msra.mxu0 0.0
    %2012 = vmatprep.subr.mxu0 0.0
    %2013 = vmatpush2.msra.mxu0 0.0
    %2014 = vmatprep.subr.mxu0 0.0
    %2015 = vmatpush2.msra.mxu0 0.0
    %2016 = vmatprep.subr.mxu0 0.0
    %2017 = vmatpush2.msra.mxu0 0.0
    %2018 = vmatprep.subr.mxu0 0.0
    %2019 = vmatpush2.msra.mxu0 0.0
    %2020 = vmatprep.subr.mxu0 0.0
    %2021 = vmatpush2.msra.mxu0 0.0
    %2022 = vmatprep.subr.mxu0 0.0
    %2023 = vmatpush2.msra.mxu0 0.0
    %2024 = vmatprep.subr.mxu0 0.0
    %2025 = vmatpush2.msra.mxu0 0.0
    %2026 = vmatprep.subr.mxu0 0.0
    %2027 = vmatpush2.msra.mxu0 0.0
    %2028 = vmatprep.subr.mxu0 0.0
    %2029 = vmatpush2.msra.mxu0 0.0
    %2030 = vmatprep.mubr.f32.mxu0 0.0
    %2031 = vmatmul.mubr.f32.gmra.mxu0 %v1964
    %v2032 = vpop.f32.mrf.mxu0
    %v2033 = vadd.f32 0.0, %v2032
    %v2034 = vpop.f32.mrf.mxu0
    %v2035 = vadd.f32 0.0, %v2034
    %2036 = vdwg.mxu0
    %v2037 = vadd.f32 %v1962, %v2033
    %v2038 = vxor.u32 %v2037, 2147483648
    %v2039 = vmul.f32 %v2038, 1.442695
    %v2040 = vpow.pop %v2039
    %v2041 = vadd.f32 %v2040, 1.0
    %v2042 = vrcp.pop %v2041
    %v2043 = vmul.f32 1.0, %v2042
    %v2044 = vadd.f32 %v2035, %v651
    %v2045 = vmul.f32 %v2043, %v2044
    %v2046 = vadd.f32 %v1963, %v2045
    %v2047 = vtanh.pop %v2046
    %v2048 = vsub.f32 1.0, %v2043
    %2050 = vrot.lane.b32.xlu0 %v2047, 64
    %v2051 = vpop.permute.xlu0 %2050
    %v2053 = vmul.f32 %v2048, %v2051
    %v2054 = vmul.f32 %v2043, %v1846
    %v2055 = vadd.f32 %v2053, %v2054
    %2057 = vrot.lane.b32.xlu0 %v2055, 64
    %v2058 = vpop.permute.xlu0 %2057
    %2060 = vst.msk [vmem:[%s1005] sm:$0xff] %vm475, %v2058
    %2061 = vst.msk [vmem:[%s1003] sm:$0xff] %vm871, %v2058
    %2062 = vst.msk [vmem:[%s1003] sm:$0xff] %vm873, %v2055
    %2063 = vst.msk [vmem:[%s1005] sm:$0xff] %vm875, %v2055
    %s2064 = smul.addr %s1959, 8
    %s2065 = scalar_lea.vmem [#allocation3], %s2064
    %v2066 = vld [vmem:[%s2065] sm:$0xff]
    %v2067 = vld [vmem:[%s2065 + $0x8] sm:$0xff]
    %v2068 = vsel %vm614, %v1953, 0
    %2070 = vmatprep.subr.mxu0 0.0
    %2071 = vmatpush1.msra.mxu0 0.0
    %2072 = vmatprep.subr.mxu0 0.0
    %2073 = vmatpush1.msra.mxu0 0.0
    %2074 = vmatprep.subr.mxu0 0.0
    %2075 = vmatpush1.msra.mxu0 0.0
    %2076 = vmatprep.subr.mxu0 0.0
    %2077 = vmatpush1.msra.mxu0 0.0
    %2078 = vmatprep.subr.mxu0 0.0
    %2079 = vmatpush1.msra.mxu0 0.0
    %2080 = vmatprep.subr.mxu0 0.0
    %2081 = vmatpush1.msra.mxu0 0.0
    %2082 = vmatprep.subr.mxu0 0.0
    %2083 = vmatpush1.msra.mxu0 0.0
    %2084 = vmatprep.subr.mxu0 0.0
    %2085 = vmatpush1.msra.mxu0 0.0
    %2086 = vmatprep.subr.mxu0 %v841
    %2087 = vmatpush1.msra.mxu0 %v840
    %2088 = vmatprep.subr.mxu0 %v839
    %2089 = vmatpush1.msra.mxu0 %v838
    %2090 = vmatprep.subr.mxu0 %v837
    %2091 = vmatpush1.msra.mxu0 %v836
    %2092 = vmatprep.subr.mxu0 %v835
    %2093 = vmatpush1.msra.mxu0 %v834
    %2094 = vmatprep.subr.mxu0 %v833
    %2095 = vmatpush1.msra.mxu0 %v832
    %2096 = vmatprep.subr.mxu0 %v831
    %2097 = vmatpush1.msra.mxu0 %v830
    %2098 = vmatprep.subr.mxu0 %v829
    %2099 = vmatpush1.msra.mxu0 %v828
    %2100 = vmatprep.subr.mxu0 %v827
    %2101 = vmatpush1.msra.mxu0 %v826
    %2102 = vmatprep.subr.mxu0 0.0
    %2103 = vmatpush2.msra.mxu0 0.0
    %2104 = vmatprep.subr.mxu0 0.0
    %2105 = vmatpush2.msra.mxu0 0.0
    %2106 = vmatprep.subr.mxu0 0.0
    %2107 = vmatpush2.msra.mxu0 0.0
    %2108 = vmatprep.subr.mxu0 0.0
    %2109 = vmatpush2.msra.mxu0 0.0
    %2110 = vmatprep.subr.mxu0 0.0
    %2111 = vmatpush2.msra.mxu0 0.0
    %2112 = vmatprep.subr.mxu0 0.0
    %2113 = vmatpush2.msra.mxu0 0.0
    %2114 = vmatprep.subr.mxu0 0.0
    %2115 = vmatpush2.msra.mxu0 0.0
    %2116 = vmatprep.subr.mxu0 0.0
    %2117 = vmatpush2.msra.mxu0 0.0
    %2118 = vmatprep.subr.mxu0 0.0
    %2119 = vmatpush2.msra.mxu0 0.0
    %2120 = vmatprep.subr.mxu0 0.0
    %2121 = vmatpush2.msra.mxu0 0.0
    %2122 = vmatprep.subr.mxu0 0.0
    %2123 = vmatpush2.msra.mxu0 0.0
    %2124 = vmatprep.subr.mxu0 0.0
    %2125 = vmatpush2.msra.mxu0 0.0
    %2126 = vmatprep.subr.mxu0 0.0
    %2127 = vmatpush2.msra.mxu0 0.0
    %2128 = vmatprep.subr.mxu0 0.0
    %2129 = vmatpush2.msra.mxu0 0.0
    %2130 = vmatprep.subr.mxu0 0.0
    %2131 = vmatpush2.msra.mxu0 0.0
    %2132 = vmatprep.subr.mxu0 0.0
    %2133 = vmatpush2.msra.mxu0 0.0
    %2134 = vmatprep.mubr.f32.mxu0 0.0
    %2135 = vmatmul.mubr.f32.gmra.mxu0 %v2068
    %v2136 = vpop.f32.mrf.mxu0
    %v2137 = vadd.f32 0.0, %v2136
    %v2138 = vpop.f32.mrf.mxu0
    %v2139 = vadd.f32 0.0, %v2138
    %2140 = vdwg.mxu0
    %v2141 = vadd.f32 %v2066, %v2137
    %v2142 = vxor.u32 %v2141, 2147483648
    %v2143 = vmul.f32 %v2142, 1.442695
    %v2144 = vpow.pop %v2143
    %v2145 = vadd.f32 %v2144, 1.0
    %v2146 = vrcp.pop %v2145
    %v2147 = vmul.f32 1.0, %v2146
    %v2148 = vadd.f32 %v2139, %v847
    %v2149 = vmul.f32 %v2147, %v2148
    %v2150 = vadd.f32 %v2067, %v2149
    %v2151 = vtanh.pop %v2150
    %v2152 = vsub.f32 1.0, %v2147
    %2154 = vrot.lane.b32.xlu0 %v2151, 64
    %v2155 = vpop.permute.xlu0 %2154
    %v2157 = vmul.f32 %v2152, %v2155
    %v2158 = vmul.f32 %v2147, %v1950
    %v2159 = vadd.f32 %v2157, %v2158
    %2161 = vrot.lane.b32.xlu0 %v2159, 64
    %v2162 = vpop.permute.xlu0 %2161
    %2164 = vst.msk [vmem:[%s1111] sm:$0xff] %vm475, %v2162
    %2165 = vst.msk [vmem:[%s1109] sm:$0xff] %vm871, %v2162
    %2166 = vst.msk [vmem:[%s1109] sm:$0xff] %vm873, %v2159
    %2167 = vst.msk [vmem:[%s1111] sm:$0xff] %vm875, %v2159
    %s2168 = smul.u32 7, 2
    %s2169 = smul.addr %s2168, 8
    %s2170 = scalar_lea.vmem [#allocation2], %s2169
    %v2171 = vld [vmem:[%s2170] sm:$0xff]
    %v2172 = vld [vmem:[%s2170 + $0x8] sm:$0xff]
    %v2173 = vsel %vm614, %v2058, 0
    %2175 = vmatprep.subr.mxu0 0.0
    %2176 = vmatpush1.msra.mxu0 0.0
    %2177 = vmatprep.subr.mxu0 0.0
    %2178 = vmatpush1.msra.mxu0 0.0
    %2179 = vmatprep.subr.mxu0 0.0
    %2180 = vmatpush1.msra.mxu0 0.0
    %2181 = vmatprep.subr.mxu0 0.0
    %2182 = vmatpush1.msra.mxu0 0.0
    %2183 = vmatprep.subr.mxu0 0.0
    %2184 = vmatpush1.msra.mxu0 0.0
    %2185 = vmatprep.subr.mxu0 0.0
    %2186 = vmatpush1.msra.mxu0 0.0
    %2187 = vmatprep.subr.mxu0 0.0
    %2188 = vmatpush1.msra.mxu0 0.0
    %2189 = vmatprep.subr.mxu0 0.0
    %2190 = vmatpush1.msra.mxu0 0.0
    %2191 = vmatprep.subr.mxu0 %v645
    %2192 = vmatpush1.msra.mxu0 %v644
    %2193 = vmatprep.subr.mxu0 %v643
    %2194 = vmatpush1.msra.mxu0 %v642
    %2195 = vmatprep.subr.mxu0 %v641
    %2196 = vmatpush1.msra.mxu0 %v640
    %2197 = vmatprep.subr.mxu0 %v639
    %2198 = vmatpush1.msra.mxu0 %v638
    %2199 = vmatprep.subr.mxu0 %v637
    %2200 = vmatpush1.msra.mxu0 %v636
    %2201 = vmatprep.subr.mxu0 %v635
    %2202 = vmatpush1.msra.mxu0 %v634
    %2203 = vmatprep.subr.mxu0 %v633
    %2204 = vmatpush1.msra.mxu0 %v632
    %2205 = vmatprep.subr.mxu0 %v631
    %2206 = vmatpush1.msra.mxu0 %v630
    %2207 = vmatprep.subr.mxu0 0.0
    %2208 = vmatpush2.msra.mxu0 0.0
    %2209 = vmatprep.subr.mxu0 0.0
    %2210 = vmatpush2.msra.mxu0 0.0
    %2211 = vmatprep.subr.mxu0 0.0
    %2212 = vmatpush2.msra.mxu0 0.0
    %2213 = vmatprep.subr.mxu0 0.0
    %2214 = vmatpush2.msra.mxu0 0.0
    %2215 = vmatprep.subr.mxu0 0.0
    %2216 = vmatpush2.msra.mxu0 0.0
    %2217 = vmatprep.subr.mxu0 0.0
    %2218 = vmatpush2.msra.mxu0 0.0
    %2219 = vmatprep.subr.mxu0 0.0
    %2220 = vmatpush2.msra.mxu0 0.0
    %2221 = vmatprep.subr.mxu0 0.0
    %2222 = vmatpush2.msra.mxu0 0.0
    %2223 = vmatprep.subr.mxu0 0.0
    %2224 = vmatpush2.msra.mxu0 0.0
    %2225 = vmatprep.subr.mxu0 0.0
    %2226 = vmatpush2.msra.mxu0 0.0
    %2227 = vmatprep.subr.mxu0 0.0
    %2228 = vmatpush2.msra.mxu0 0.0
    %2229 = vmatprep.subr.mxu0 0.0
    %2230 = vmatpush2.msra.mxu0 0.0
    %2231 = vmatprep.subr.mxu0 0.0
    %2232 = vmatpush2.msra.mxu0 0.0
    %2233 = vmatprep.subr.mxu0 0.0
    %2234 = vmatpush2.msra.mxu0 0.0
    %2235 = vmatprep.subr.mxu0 0.0
    %2236 = vmatpush2.msra.mxu0 0.0
    %2237 = vmatprep.subr.mxu0 0.0
    %2238 = vmatpush2.msra.mxu0 0.0
    %2239 = vmatprep.mubr.f32.mxu0 0.0
    %2240 = vmatmul.mubr.f32.gmra.mxu0 %v2173
    %v2241 = vpop.f32.mrf.mxu0
    %v2242 = vadd.f32 0.0, %v2241
    %v2243 = vpop.f32.mrf.mxu0
    %v2244 = vadd.f32 0.0, %v2243
    %2245 = vdwg.mxu0
    %v2246 = vadd.f32 %v2171, %v2242
    %v2247 = vxor.u32 %v2246, 2147483648
    %v2248 = vmul.f32 %v2247, 1.442695
    %v2249 = vpow.pop %v2248
    %v2250 = vadd.f32 %v2249, 1.0
    %v2251 = vrcp.pop %v2250
    %v2252 = vmul.f32 1.0, %v2251
    %v2253 = vadd.f32 %v2244, %v651
    %v2254 = vmul.f32 %v2252, %v2253
    %v2255 = vadd.f32 %v2172, %v2254
    %v2256 = vtanh.pop %v2255
    %v2257 = vsub.f32 1.0, %v2252
    %2259 = vrot.lane.b32.xlu0 %v2256, 64
    %v2260 = vpop.permute.xlu0 %2259
    %v2262 = vmul.f32 %v2257, %v2260
    %v2263 = vmul.f32 %v2252, %v2055
    %v2264 = vadd.f32 %v2262, %v2263
    %2266 = vrot.lane.b32.xlu0 %v2264, 64
    %v2267 = vpop.permute.xlu0 %2266
    %s2269 = scalar_lea.vmem [#allocation4], 56
    %2270 = vst.msk [vmem:[%s2269] sm:$0xff] %vm475, %v2267
    %2271 = vst.msk [vmem:[#allocation4] sm:$0xff] %vm871, %v2267
    %2272 = vst.msk [vmem:[#allocation4] sm:$0xff] %vm873, %v2264
    %2273 = vst.msk [vmem:[%s2269] sm:$0xff] %vm875, %v2264
    %s2274 = smul.addr %s2168, 8
    %s2275 = scalar_lea.vmem [#allocation3], %s2274
    %v2276 = vld [vmem:[%s2275] sm:$0xff]
    %v2277 = vld [vmem:[%s2275 + $0x8] sm:$0xff]
    %v2278 = vsel %vm614, %v2162, 0
    %2280 = vmatprep.subr.mxu0 0.0
    %2281 = vmatpush1.msra.mxu0 0.0
    %2282 = vmatprep.subr.mxu0 0.0
    %2283 = vmatpush1.msra.mxu0 0.0
    %2284 = vmatprep.subr.mxu0 0.0
    %2285 = vmatpush1.msra.mxu0 0.0
    %2286 = vmatprep.subr.mxu0 0.0
    %2287 = vmatpush1.msra.mxu0 0.0
    %2288 = vmatprep.subr.mxu0 0.0
    %2289 = vmatpush1.msra.mxu0 0.0
    %2290 = vmatprep.subr.mxu0 0.0
    %2291 = vmatpush1.msra.mxu0 0.0
    %2292 = vmatprep.subr.mxu0 0.0
    %2293 = vmatpush1.msra.mxu0 0.0
    %2294 = vmatprep.subr.mxu0 0.0
    %2295 = vmatpush1.msra.mxu0 0.0
    %2296 = vmatprep.subr.mxu0 %v841
    %2297 = vmatpush1.msra.mxu0 %v840
    %2298 = vmatprep.subr.mxu0 %v839
    %2299 = vmatpush1.msra.mxu0 %v838
    %2300 = vmatprep.subr.mxu0 %v837
    %2301 = vmatpush1.msra.mxu0 %v836
    %2302 = vmatprep.subr.mxu0 %v835
    %2303 = vmatpush1.msra.mxu0 %v834
    %2304 = vmatprep.subr.mxu0 %v833
    %2305 = vmatpush1.msra.mxu0 %v832
    %2306 = vmatprep.subr.mxu0 %v831
    %2307 = vmatpush1.msra.mxu0 %v830
    %2308 = vmatprep.subr.mxu0 %v829
    %2309 = vmatpush1.msra.mxu0 %v828
    %2310 = vmatprep.subr.mxu0 %v827
    %2311 = vmatpush1.msra.mxu0 %v826
    %2312 = vmatprep.subr.mxu0 0.0
    %2313 = vmatpush2.msra.mxu0 0.0
    %2314 = vmatprep.subr.mxu0 0.0
    %2315 = vmatpush2.msra.mxu0 0.0
    %2316 = vmatprep.subr.mxu0 0.0
    %2317 = vmatpush2.msra.mxu0 0.0
    %2318 = vmatprep.subr.mxu0 0.0
    %2319 = vmatpush2.msra.mxu0 0.0
    %2320 = vmatprep.subr.mxu0 0.0
    %2321 = vmatpush2.msra.mxu0 0.0
    %2322 = vmatprep.subr.mxu0 0.0
    %2323 = vmatpush2.msra.mxu0 0.0
    %2324 = vmatprep.subr.mxu0 0.0
    %2325 = vmatpush2.msra.mxu0 0.0
    %2326 = vmatprep.subr.mxu0 0.0
    %2327 = vmatpush2.msra.mxu0 0.0
    %2328 = vmatprep.subr.mxu0 0.0
    %2329 = vmatpush2.msra.mxu0 0.0
    %2330 = vmatprep.subr.mxu0 0.0
    %2331 = vmatpush2.msra.mxu0 0.0
    %2332 = vmatprep.subr.mxu0 0.0
    %2333 = vmatpush2.msra.mxu0 0.0
    %2334 = vmatprep.subr.mxu0 0.0
    %2335 = vmatpush2.msra.mxu0 0.0
    %2336 = vmatprep.subr.mxu0 0.0
    %2337 = vmatpush2.msra.mxu0 0.0
    %2338 = vmatprep.subr.mxu0 0.0
    %2339 = vmatpush2.msra.mxu0 0.0
    %2340 = vmatprep.subr.mxu0 0.0
    %2341 = vmatpush2.msra.mxu0 0.0
    %2342 = vmatprep.subr.mxu0 0.0
    %2343 = vmatpush2.msra.mxu0 0.0
    %2344 = vmatprep.mubr.f32.mxu0 0.0
    %2345 = vmatmul.mubr.f32.gmra.mxu0 %v2278
    %v2346 = vpop.f32.mrf.mxu0
    %v2347 = vadd.f32 0.0, %v2346
    %v2348 = vpop.f32.mrf.mxu0
    %v2349 = vadd.f32 0.0, %v2348
    %2350 = vdwg.mxu0
    %v2351 = vadd.f32 %v2276, %v2347
    %v2352 = vxor.u32 %v2351, 2147483648
    %v2353 = vmul.f32 %v2352, 1.442695
    %v2354 = vpow.pop %v2353
    %v2355 = vadd.f32 %v2354, 1.0
    %v2356 = vrcp.pop %v2355
    %v2357 = vmul.f32 1.0, %v2356
    %v2358 = vadd.f32 %v2349, %v847
    %v2359 = vmul.f32 %v2357, %v2358
    %v2360 = vadd.f32 %v2277, %v2359
    %v2361 = vtanh.pop %v2360
    %v2362 = vsub.f32 1.0, %v2357
    %2364 = vrot.lane.b32.xlu0 %v2361, 64
    %v2365 = vpop.permute.xlu0 %2364
    %v2367 = vmul.f32 %v2362, %v2365
    %v2368 = vmul.f32 %v2357, %v2159
    %v2369 = vadd.f32 %v2367, %v2368
    %2371 = vrot.lane.b32.xlu0 %v2369, 64
    %v2372 = vpop.permute.xlu0 %2371
    %s2374 = scalar_lea.vmem [#allocation5], 56
    %2375 = vst.msk [vmem:[%s2374] sm:$0xff] %vm475, %v2372
    %2376 = vst.msk [vmem:[#allocation5] sm:$0xff] %vm871, %v2372
    %2377 = vst.msk [vmem:[#allocation5] sm:$0xff] %vm873, %v2369
    %2378 = vst.msk [vmem:[%s2374] sm:$0xff] %vm875, %v2369
    %v2379 = vld [vmem:[#allocation4] sm:$0xff]
    %v2380 = vld [vmem:[#allocation4 + $0x8] sm:$0xff]
    %v2381 = vld [vmem:[#allocation4 + $0x10] sm:$0xff]
    %v2382 = vld [vmem:[#allocation4 + $0x18] sm:$0xff]
    %v2383 = vld [vmem:[#allocation4 + $0x20] sm:$0xff]
    %v2384 = vld [vmem:[#allocation4 + $0x28] sm:$0xff]
    %v2385 = vld [vmem:[#allocation4 + $0x30] sm:$0xff]
    %v2386 = vld [vmem:[#allocation4 + $0x38] sm:$0xff]
    %v2387 = vld [vmem:[%s15] sm:$0xff]
    %v2388 = vld [vmem:[%s15 + $0x8] sm:$0xff]
    %v2389 = vld [vmem:[%s15 + $0x10] sm:$0xff]
    %v2390 = vld [vmem:[%s15 + $0x18] sm:$0xff]
    %v2391 = vld [vmem:[%s15 + $0x20] sm:$0xff]
    %v2392 = vld [vmem:[%s15 + $0x28] sm:$0xff]
    %v2393 = vld [vmem:[%s15 + $0x30] sm:$0xff]
    %v2394 = vld [vmem:[%s15 + $0x38] sm:$0xff]
    %v2395 = vld [vmem:[%s15 + $0x40] sm:$0xff]
    %v2396 = vld [vmem:[%s15 + $0x48] sm:$0xff]
    %v2397 = vld [vmem:[%s15 + $0x50] sm:$0xff]
    %v2398 = vld [vmem:[%s15 + $0x58] sm:$0xff]
    %v2399 = vld [vmem:[%s15 + $0x60] sm:$0xff]
    %v2400 = vld [vmem:[%s15 + $0x68] sm:$0xff]
    %v2401 = vld [vmem:[%s15 + $0x70] sm:$0xff]
    %v2402 = vld [vmem:[%s15 + $0x78] sm:$0xff]
    %v2403 = vld [vmem:[%s15 + $0x80] sm:$0xff]
    %v2404 = vld [vmem:[%s15 + $0x88] sm:$0xff]
    %v2405 = vld [vmem:[%s15 + $0x90] sm:$0xff]
    %v2406 = vld [vmem:[%s15 + $0x98] sm:$0xff]
    %v2407 = vld [vmem:[%s15 + $0xa0] sm:$0xff]
    %v2408 = vld [vmem:[%s15 + $0xa8] sm:$0xff]
    %v2409 = vld [vmem:[%s15 + $0xb0] sm:$0xff]
    %v2410 = vld [vmem:[%s15 + $0xb8] sm:$0xff]
    %v2411 = vld [vmem:[%s15 + $0xc0] sm:$0xff]
    %v2412 = vld [vmem:[%s15 + $0xc8] sm:$0xff]
    %v2413 = vld [vmem:[%s15 + $0xd0] sm:$0xff]
    %v2414 = vld [vmem:[%s15 + $0xd8] sm:$0xff]
    %v2415 = vld [vmem:[%s15 + $0xe0] sm:$0xff]
    %v2416 = vld [vmem:[%s15 + $0xe8] sm:$0xff]
    %v2417 = vld [vmem:[%s15 + $0xf0] sm:$0xff]
    %v2418 = vld [vmem:[%s15 + $0xf8] sm:$0xff]
    %v2419 = vld [vmem:[#allocation10] sm:$0x3]
    %v2421 = vlaneseq
    %v2422 = vshrl.u32 %v2421, 7
    %v2423 = vsub.s32 0, %v2422
    %v2424 = vrot.slane %v2419, %v2423
    %v2425 = vlaneseq
    %v2426 = vshrl.u32 %v2425, 7
    %v2427 = vsub.s32 1, %v2426
    %v2428 = vrot.slane %v2419, %v2427
    %2431 = vmatprep.subr.mxu0 %v2418
    %2432 = vmatpush1.msra.mxu0 %v2417
    %2433 = vmatprep.subr.mxu0 %v2416
    %2434 = vmatpush1.msra.mxu0 %v2415
    %2435 = vmatprep.subr.mxu0 %v2414
    %2436 = vmatpush1.msra.mxu0 %v2413
    %2437 = vmatprep.subr.mxu0 %v2412
    %2438 = vmatpush1.msra.mxu0 %v2411
    %2439 = vmatprep.subr.mxu0 %v2410
    %2440 = vmatpush1.msra.mxu0 %v2409
    %2441 = vmatprep.subr.mxu0 %v2408
    %2442 = vmatpush1.msra.mxu0 %v2407
    %2443 = vmatprep.subr.mxu0 %v2406
    %2444 = vmatpush1.msra.mxu0 %v2405
    %2445 = vmatprep.subr.mxu0 %v2404
    %2446 = vmatpush1.msra.mxu0 %v2403
    %2447 = vmatprep.subr.mxu0 %v2402
    %2448 = vmatpush1.msra.mxu0 %v2401
    %2449 = vmatprep.subr.mxu0 %v2400
    %2450 = vmatpush1.msra.mxu0 %v2399
    %2451 = vmatprep.subr.mxu0 %v2398
    %2452 = vmatpush1.msra.mxu0 %v2397
    %2453 = vmatprep.subr.mxu0 %v2396
    %2454 = vmatpush1.msra.mxu0 %v2395
    %2455 = vmatprep.subr.mxu0 %v2394
    %2456 = vmatpush1.msra.mxu0 %v2393
    %2457 = vmatprep.subr.mxu0 %v2392
    %2458 = vmatpush1.msra.mxu0 %v2391
    %2459 = vmatprep.subr.mxu0 %v2390
    %2460 = vmatpush1.msra.mxu0 %v2389
    %2461 = vmatprep.subr.mxu0 %v2388
    %2462 = vmatpush1.msra.mxu0 %v2387
    %2463 = vmatprep.subr.mxu0 0.0
    %2464 = vmatpush2.msra.mxu0 0.0
    %2465 = vmatprep.subr.mxu0 0.0
    %2466 = vmatpush2.msra.mxu0 0.0
    %2467 = vmatprep.subr.mxu0 0.0
    %2468 = vmatpush2.msra.mxu0 0.0
    %2469 = vmatprep.subr.mxu0 0.0
    %2470 = vmatpush2.msra.mxu0 0.0
    %2471 = vmatprep.subr.mxu0 0.0
    %2472 = vmatpush2.msra.mxu0 0.0
    %2473 = vmatprep.subr.mxu0 0.0
    %2474 = vmatpush2.msra.mxu0 0.0
    %2475 = vmatprep.subr.mxu0 0.0
    %2476 = vmatpush2.msra.mxu0 0.0
    %2477 = vmatprep.subr.mxu0 0.0
    %2478 = vmatpush2.msra.mxu0 0.0
    %2479 = vmatprep.subr.mxu0 0.0
    %2480 = vmatpush2.msra.mxu0 0.0
    %2481 = vmatprep.subr.mxu0 0.0
    %2482 = vmatpush2.msra.mxu0 0.0
    %2483 = vmatprep.subr.mxu0 0.0
    %2484 = vmatpush2.msra.mxu0 0.0
    %2485 = vmatprep.subr.mxu0 0.0
    %2486 = vmatpush2.msra.mxu0 0.0
    %2487 = vmatprep.subr.mxu0 0.0
    %2488 = vmatpush2.msra.mxu0 0.0
    %2489 = vmatprep.subr.mxu0 0.0
    %2490 = vmatpush2.msra.mxu0 0.0
    %2491 = vmatprep.subr.mxu0 0.0
    %2492 = vmatpush2.msra.mxu0 0.0
    %2493 = vmatprep.subr.mxu0 0.0
    %2494 = vmatpush2.msra.mxu0 0.0
    %2495 = vmatprep.mubr.f32.mxu0 0.0
    %2496 = vmatmul.mubr.f32.gmra.mxu0 %v2379
    %v2497 = vpop.f32.mrf.mxu0
    %v2498 = vadd.f32 %v2424, %v2497
    %v2499 = vpop.f32.mrf.mxu0
    %v2500 = vadd.f32 %v2428, %v2499
    %2501 = vmatprep.mubr.f32.mxu0 0.0
    %2502 = vmatmul.mubr.f32.gmra.mxu0 %v2380
    %v2503 = vpop.f32.mrf.mxu0
    %v2504 = vadd.f32 %v2424, %v2503
    %v2505 = vpop.f32.mrf.mxu0
    %v2506 = vadd.f32 %v2428, %v2505
    %2507 = vmatprep.mubr.f32.mxu0 0.0
    %2508 = vmatmul.mubr.f32.gmra.mxu0 %v2381
    %v2509 = vpop.f32.mrf.mxu0
    %v2510 = vadd.f32 %v2424, %v2509
    %v2511 = vpop.f32.mrf.mxu0
    %v2512 = vadd.f32 %v2428, %v2511
    %2513 = vmatprep.mubr.f32.mxu0 0.0
    %2514 = vmatmul.mubr.f32.gmra.mxu0 %v2382
    %v2515 = vpop.f32.mrf.mxu0
    %v2516 = vadd.f32 %v2424, %v2515
    %v2517 = vpop.f32.mrf.mxu0
    %v2518 = vadd.f32 %v2428, %v2517
    %2519 = vmatprep.mubr.f32.mxu0 0.0
    %2520 = vmatmul.mubr.f32.gmra.mxu0 %v2383
    %v2521 = vpop.f32.mrf.mxu0
    %v2522 = vadd.f32 %v2424, %v2521
    %v2523 = vpop.f32.mrf.mxu0
    %v2524 = vadd.f32 %v2428, %v2523
    %2525 = vmatprep.mubr.f32.mxu0 0.0
    %2526 = vmatmul.mubr.f32.gmra.mxu0 %v2384
    %v2527 = vpop.f32.mrf.mxu0
    %v2528 = vadd.f32 %v2424, %v2527
    %v2529 = vpop.f32.mrf.mxu0
    %v2530 = vadd.f32 %v2428, %v2529
    %2531 = vmatprep.mubr.f32.mxu0 0.0
    %2532 = vmatmul.mubr.f32.gmra.mxu0 %v2385
    %v2533 = vpop.f32.mrf.mxu0
    %v2534 = vadd.f32 %v2424, %v2533
    %v2535 = vpop.f32.mrf.mxu0
    %v2536 = vadd.f32 %v2428, %v2535
    %2537 = vmatprep.mubr.f32.mxu0 0.0
    %2538 = vmatmul.mubr.f32.gmra.mxu0 %v2386
    %v2539 = vpop.f32.mrf.mxu0
    %v2540 = vadd.f32 %v2424, %v2539
    %v2541 = vpop.f32.mrf.mxu0
    %v2542 = vadd.f32 %v2428, %v2541
    %2543 = vdwg.mxu0
    %2544 = vst [vmem:[#allocation2] sm:$0xff] %v2498
    %2545 = vst.msk [vmem:[#allocation2 + $0x8] sm:$0xff] %vm614, %v2500
    %2546 = vst [vmem:[#allocation2 + $0x10] sm:$0xff] %v2504
    %2547 = vst.msk [vmem:[#allocation2 + $0x18] sm:$0xff] %vm614, %v2506
    %2548 = vst [vmem:[#allocation2 + $0x20] sm:$0xff] %v2510
    %2549 = vst.msk [vmem:[#allocation2 + $0x28] sm:$0xff] %vm614, %v2512
    %2550 = vst [vmem:[#allocation2 + $0x30] sm:$0xff] %v2516
    %2551 = vst.msk [vmem:[#allocation2 + $0x38] sm:$0xff] %vm614, %v2518
    %2552 = vst [vmem:[#allocation2 + $0x40] sm:$0xff] %v2522
    %2553 = vst.msk [vmem:[#allocation2 + $0x48] sm:$0xff] %vm614, %v2524
    %2554 = vst [vmem:[#allocation2 + $0x50] sm:$0xff] %v2528
    %2555 = vst.msk [vmem:[#allocation2 + $0x58] sm:$0xff] %vm614, %v2530
    %2556 = vst [vmem:[#allocation2 + $0x60] sm:$0xff] %v2534
    %2557 = vst.msk [vmem:[#allocation2 + $0x68] sm:$0xff] %vm614, %v2536
    %2558 = vst [vmem:[#allocation2 + $0x70] sm:$0xff] %v2540
    %2559 = vst.msk [vmem:[#allocation2 + $0x78] sm:$0xff] %vm614, %v2542
    %v2560 = vld [vmem:[%s17] sm:$0xff]
    %v2561 = vld [vmem:[%s17 + $0x8] sm:$0xff]
    %v2562 = vld [vmem:[%s17 + $0x10] sm:$0xff]
    %v2563 = vld [vmem:[%s17 + $0x18] sm:$0xff]
    %v2564 = vld [vmem:[%s17 + $0x20] sm:$0xff]
    %v2565 = vld [vmem:[%s17 + $0x28] sm:$0xff]
    %v2566 = vld [vmem:[%s17 + $0x30] sm:$0xff]
    %v2567 = vld [vmem:[%s17 + $0x38] sm:$0xff]
    %v2568 = vld [vmem:[%s17 + $0x40] sm:$0xff]
    %v2569 = vld [vmem:[%s17 + $0x48] sm:$0xff]
    %v2570 = vld [vmem:[%s17 + $0x50] sm:$0xff]
    %v2571 = vld [vmem:[%s17 + $0x58] sm:$0xff]
    %v2572 = vld [vmem:[%s17 + $0x60] sm:$0xff]
    %v2573 = vld [vmem:[%s17 + $0x68] sm:$0xff]
    %v2574 = vld [vmem:[%s17 + $0x70] sm:$0xff]
    %v2575 = vld [vmem:[%s17 + $0x78] sm:$0xff]
    %v2576 = vld [vmem:[#allocation11] sm:$0x1]
    %v2578 = vlaneseq
    %v2579 = vshrl.u32 %v2578, 7
    %v2580 = vsub.s32 0, %v2579
    %v2581 = vrot.slane %v2576, %v2580
    %v2583 = vld [vmem:[#allocation5] sm:$0xff]
    %v2584 = vld [vmem:[#allocation5 + $0x8] sm:$0xff]
    %v2585 = vld [vmem:[#allocation5 + $0x10] sm:$0xff]
    %v2586 = vld [vmem:[#allocation5 + $0x18] sm:$0xff]
    %v2587 = vld [vmem:[#allocation5 + $0x20] sm:$0xff]
    %v2588 = vld [vmem:[#allocation5 + $0x28] sm:$0xff]
    %v2589 = vld [vmem:[#allocation5 + $0x30] sm:$0xff]
    %v2590 = vld [vmem:[#allocation5 + $0x38] sm:$0xff]
    %v2591 = vld [vmem:[%s31] sm:$0xff]
    %v2592 = vld [vmem:[%s31 + $0x8] sm:$0xff]
    %v2593 = vld [vmem:[%s31 + $0x10] sm:$0xff]
    %v2594 = vld [vmem:[%s31 + $0x18] sm:$0xff]
    %v2595 = vld [vmem:[%s31 + $0x20] sm:$0xff]
    %v2596 = vld [vmem:[%s31 + $0x28] sm:$0xff]
    %v2597 = vld [vmem:[%s31 + $0x30] sm:$0xff]
    %v2598 = vld [vmem:[%s31 + $0x38] sm:$0xff]
    %v2599 = vld [vmem:[%s31 + $0x40] sm:$0xff]
    %v2600 = vld [vmem:[%s31 + $0x48] sm:$0xff]
    %v2601 = vld [vmem:[%s31 + $0x50] sm:$0xff]
    %v2602 = vld [vmem:[%s31 + $0x58] sm:$0xff]
    %v2603 = vld [vmem:[%s31 + $0x60] sm:$0xff]
    %v2604 = vld [vmem:[%s31 + $0x68] sm:$0xff]
    %v2605 = vld [vmem:[%s31 + $0x70] sm:$0xff]
    %v2606 = vld [vmem:[%s31 + $0x78] sm:$0xff]
    %v2607 = vld [vmem:[%s31 + $0x80] sm:$0xff]
    %v2608 = vld [vmem:[%s31 + $0x88] sm:$0xff]
    %v2609 = vld [vmem:[%s31 + $0x90] sm:$0xff]
    %v2610 = vld [vmem:[%s31 + $0x98] sm:$0xff]
    %v2611 = vld [vmem:[%s31 + $0xa0] sm:$0xff]
    %v2612 = vld [vmem:[%s31 + $0xa8] sm:$0xff]
    %v2613 = vld [vmem:[%s31 + $0xb0] sm:$0xff]
    %v2614 = vld [vmem:[%s31 + $0xb8] sm:$0xff]
    %v2615 = vld [vmem:[%s31 + $0xc0] sm:$0xff]
    %v2616 = vld [vmem:[%s31 + $0xc8] sm:$0xff]
    %v2617 = vld [vmem:[%s31 + $0xd0] sm:$0xff]
    %v2618 = vld [vmem:[%s31 + $0xd8] sm:$0xff]
    %v2619 = vld [vmem:[%s31 + $0xe0] sm:$0xff]
    %v2620 = vld [vmem:[%s31 + $0xe8] sm:$0xff]
    %v2621 = vld [vmem:[%s31 + $0xf0] sm:$0xff]
    %v2622 = vld [vmem:[%s31 + $0xf8] sm:$0xff]
    %v2623 = vld [vmem:[#allocation16] sm:$0x3]
    %v2625 = vlaneseq
    %v2626 = vshrl.u32 %v2625, 7
    %v2627 = vsub.s32 0, %v2626
    %v2628 = vrot.slane %v2623, %v2627
    %v2629 = vlaneseq
    %v2630 = vshrl.u32 %v2629, 7
    %v2631 = vsub.s32 1, %v2630
    %v2632 = vrot.slane %v2623, %v2631
    %2635 = vmatprep.subr.mxu0 %v2622
    %2636 = vmatpush1.msra.mxu0 %v2621
    %2637 = vmatprep.subr.mxu0 %v2620
    %2638 = vmatpush1.msra.mxu0 %v2619
    %2639 = vmatprep.subr.mxu0 %v2618
    %2640 = vmatpush1.msra.mxu0 %v2617
    %2641 = vmatprep.subr.mxu0 %v2616
    %2642 = vmatpush1.msra.mxu0 %v2615
    %2643 = vmatprep.subr.mxu0 %v2614
    %2644 = vmatpush1.msra.mxu0 %v2613
    %2645 = vmatprep.subr.mxu0 %v2612
    %2646 = vmatpush1.msra.mxu0 %v2611
    %2647 = vmatprep.subr.mxu0 %v2610
    %2648 = vmatpush1.msra.mxu0 %v2609
    %2649 = vmatprep.subr.mxu0 %v2608
    %2650 = vmatpush1.msra.mxu0 %v2607
    %2651 = vmatprep.subr.mxu0 %v2606
    %2652 = vmatpush1.msra.mxu0 %v2605
    %2653 = vmatprep.subr.mxu0 %v2604
    %2654 = vmatpush1.msra.mxu0 %v2603
    %2655 = vmatprep.subr.mxu0 %v2602
    %2656 = vmatpush1.msra.mxu0 %v2601
    %2657 = vmatprep.subr.mxu0 %v2600
    %2658 = vmatpush1.msra.mxu0 %v2599
    %2659 = vmatprep.subr.mxu0 %v2598
    %2660 = vmatpush1.msra.mxu0 %v2597
    %2661 = vmatprep.subr.mxu0 %v2596
    %2662 = vmatpush1.msra.mxu0 %v2595
    %2663 = vmatprep.subr.mxu0 %v2594
    %2664 = vmatpush1.msra.mxu0 %v2593
    %2665 = vmatprep.subr.mxu0 %v2592
    %2666 = vmatpush1.msra.mxu0 %v2591
    %2667 = vmatprep.subr.mxu0 0.0
    %2668 = vmatpush2.msra.mxu0 0.0
    %2669 = vmatprep.subr.mxu0 0.0
    %2670 = vmatpush2.msra.mxu0 0.0
    %2671 = vmatprep.subr.mxu0 0.0
    %2672 = vmatpush2.msra.mxu0 0.0
    %2673 = vmatprep.subr.mxu0 0.0
    %2674 = vmatpush2.msra.mxu0 0.0
    %2675 = vmatprep.subr.mxu0 0.0
    %2676 = vmatpush2.msra.mxu0 0.0
    %2677 = vmatprep.subr.mxu0 0.0
    %2678 = vmatpush2.msra.mxu0 0.0
    %2679 = vmatprep.subr.mxu0 0.0
    %2680 = vmatpush2.msra.mxu0 0.0
    %2681 = vmatprep.subr.mxu0 0.0
    %2682 = vmatpush2.msra.mxu0 0.0
    %2683 = vmatprep.subr.mxu0 0.0
    %2684 = vmatpush2.msra.mxu0 0.0
    %2685 = vmatprep.subr.mxu0 0.0
    %2686 = vmatpush2.msra.mxu0 0.0
    %2687 = vmatprep.subr.mxu0 0.0
    %2688 = vmatpush2.msra.mxu0 0.0
    %2689 = vmatprep.subr.mxu0 0.0
    %2690 = vmatpush2.msra.mxu0 0.0
    %2691 = vmatprep.subr.mxu0 0.0
    %2692 = vmatpush2.msra.mxu0 0.0
    %2693 = vmatprep.subr.mxu0 0.0
    %2694 = vmatpush2.msra.mxu0 0.0
    %2695 = vmatprep.subr.mxu0 0.0
    %2696 = vmatpush2.msra.mxu0 0.0
    %2697 = vmatprep.subr.mxu0 0.0
    %2698 = vmatpush2.msra.mxu0 0.0
    %2699 = vmatprep.mubr.f32.mxu0 0.0
    %2700 = vmatmul.mubr.f32.gmra.mxu0 %v2583
    %v2701 = vpop.f32.mrf.mxu0
    %v2702 = vadd.f32 %v2628, %v2701
    %v2703 = vpop.f32.mrf.mxu0
    %v2704 = vadd.f32 %v2632, %v2703
    %2705 = vmatprep.mubr.f32.mxu0 0.0
    %2706 = vmatmul.mubr.f32.gmra.mxu0 %v2584
    %v2707 = vpop.f32.mrf.mxu0
    %v2708 = vadd.f32 %v2628, %v2707
    %v2709 = vpop.f32.mrf.mxu0
    %v2710 = vadd.f32 %v2632, %v2709
    %2711 = vmatprep.mubr.f32.mxu0 0.0
    %2712 = vmatmul.mubr.f32.gmra.mxu0 %v2585
    %v2713 = vpop.f32.mrf.mxu0
    %v2714 = vadd.f32 %v2628, %v2713
    %v2715 = vpop.f32.mrf.mxu0
    %v2716 = vadd.f32 %v2632, %v2715
    %2717 = vmatprep.mubr.f32.mxu0 0.0
    %2718 = vmatmul.mubr.f32.gmra.mxu0 %v2586
    %v2719 = vpop.f32.mrf.mxu0
    %v2720 = vadd.f32 %v2628, %v2719
    %v2721 = vpop.f32.mrf.mxu0
    %v2722 = vadd.f32 %v2632, %v2721
    %2723 = vmatprep.mubr.f32.mxu0 0.0
    %2724 = vmatmul.mubr.f32.gmra.mxu0 %v2587
    %v2725 = vpop.f32.mrf.mxu0
    %v2726 = vadd.f32 %v2628, %v2725
    %v2727 = vpop.f32.mrf.mxu0
    %v2728 = vadd.f32 %v2632, %v2727
    %2729 = vmatprep.mubr.f32.mxu0 0.0
    %2730 = vmatmul.mubr.f32.gmra.mxu0 %v2588
    %v2731 = vpop.f32.mrf.mxu0
    %v2732 = vadd.f32 %v2628, %v2731
    %v2733 = vpop.f32.mrf.mxu0
    %v2734 = vadd.f32 %v2632, %v2733
    %2735 = vmatprep.mubr.f32.mxu0 0.0
    %2736 = vmatmul.mubr.f32.gmra.mxu0 %v2589
    %v2737 = vpop.f32.mrf.mxu0
    %v2738 = vadd.f32 %v2628, %v2737
    %v2739 = vpop.f32.mrf.mxu0
    %v2740 = vadd.f32 %v2632, %v2739
    %2741 = vmatprep.mubr.f32.mxu0 0.0
    %2742 = vmatmul.mubr.f32.gmra.mxu0 %v2590
    %v2743 = vpop.f32.mrf.mxu0
    %v2744 = vadd.f32 %v2628, %v2743
    %v2745 = vpop.f32.mrf.mxu0
    %v2746 = vadd.f32 %v2632, %v2745
    %2747 = vdwg.mxu0
    %2748 = vst [vmem:[#allocation3] sm:$0xff] %v2702
    %2749 = vst.msk [vmem:[#allocation3 + $0x8] sm:$0xff] %vm614, %v2704
    %2750 = vst [vmem:[#allocation3 + $0x10] sm:$0xff] %v2708
    %2751 = vst.msk [vmem:[#allocation3 + $0x18] sm:$0xff] %vm614, %v2710
    %2752 = vst [vmem:[#allocation3 + $0x20] sm:$0xff] %v2714
    %2753 = vst.msk [vmem:[#allocation3 + $0x28] sm:$0xff] %vm614, %v2716
    %2754 = vst [vmem:[#allocation3 + $0x30] sm:$0xff] %v2720
    %2755 = vst.msk [vmem:[#allocation3 + $0x38] sm:$0xff] %vm614, %v2722
    %2756 = vst [vmem:[#allocation3 + $0x40] sm:$0xff] %v2726
    %2757 = vst.msk [vmem:[#allocation3 + $0x48] sm:$0xff] %vm614, %v2728
    %2758 = vst [vmem:[#allocation3 + $0x50] sm:$0xff] %v2732
    %2759 = vst.msk [vmem:[#allocation3 + $0x58] sm:$0xff] %vm614, %v2734
    %2760 = vst [vmem:[#allocation3 + $0x60] sm:$0xff] %v2738
    %2761 = vst.msk [vmem:[#allocation3 + $0x68] sm:$0xff] %vm614, %v2740
    %2762 = vst [vmem:[#allocation3 + $0x70] sm:$0xff] %v2744
    %2763 = vst.msk [vmem:[#allocation3 + $0x78] sm:$0xff] %vm614, %v2746
    %v2764 = vld [vmem:[%s33] sm:$0xff]
    %v2765 = vld [vmem:[%s33 + $0x8] sm:$0xff]
    %v2766 = vld [vmem:[%s33 + $0x10] sm:$0xff]
    %v2767 = vld [vmem:[%s33 + $0x18] sm:$0xff]
    %v2768 = vld [vmem:[%s33 + $0x20] sm:$0xff]
    %v2769 = vld [vmem:[%s33 + $0x28] sm:$0xff]
    %v2770 = vld [vmem:[%s33 + $0x30] sm:$0xff]
    %v2771 = vld [vmem:[%s33 + $0x38] sm:$0xff]
    %v2772 = vld [vmem:[%s33 + $0x40] sm:$0xff]
    %v2773 = vld [vmem:[%s33 + $0x48] sm:$0xff]
    %v2774 = vld [vmem:[%s33 + $0x50] sm:$0xff]
    %v2775 = vld [vmem:[%s33 + $0x58] sm:$0xff]
    %v2776 = vld [vmem:[%s33 + $0x60] sm:$0xff]
    %v2777 = vld [vmem:[%s33 + $0x68] sm:$0xff]
    %v2778 = vld [vmem:[%s33 + $0x70] sm:$0xff]
    %v2779 = vld [vmem:[%s33 + $0x78] sm:$0xff]
    %v2780 = vld [vmem:[#allocation17] sm:$0x1]
    %v2782 = vlaneseq
    %v2783 = vshrl.u32 %v2782, 7
    %v2784 = vsub.s32 0, %v2783
    %v2785 = vrot.slane %v2780, %v2784
    %v2787 = vld [vmem:[#allocation2] sm:$0xff]
    %v2788 = vld [vmem:[#allocation2 + $0x8] sm:$0xff]
    %v2789 = vxor.u32 %v2787, 2147483648
    %v2790 = vmul.f32 %v2789, 1.442695
    %v2791 = vpow.pop %v2790
    %v2792 = vadd.f32 %v2791, 1.0
    %v2793 = vrcp.pop %v2792
    %v2794 = vmul.f32 1.0, %v2793
    %v2795 = vmul.f32 %v2794, %v2581
    %v2796 = vadd.f32 %v2788, %v2795
    %v2797 = vtanh.pop %v2796
    %v2798 = vsub.f32 1.0, %v2794
    %2800 = vrot.lane.b32.xlu0 %v2797, 64
    %v2801 = vpop.permute.xlu0 %2800
    %v2803 = vmul.f32 %v2798, %v2801
    %2805 = vrot.lane.b32.xlu0 %v2803, 64
    %v2806 = vpop.permute.xlu0 %2805
    %2808 = vst.msk [vmem:[#allocation4] sm:$0xff] %vm475, %v2806
    %2809 = vst.msk [vmem:[#allocation4 + $0x38] sm:$0xff] %vm871, %v2806
    %v2810 = vld [vmem:[#allocation3] sm:$0xff]
    %v2811 = vld [vmem:[#allocation3 + $0x8] sm:$0xff]
    %v2812 = vxor.u32 %v2810, 2147483648
    %v2813 = vmul.f32 %v2812, 1.442695
    %v2814 = vpow.pop %v2813
    %v2815 = vadd.f32 %v2814, 1.0
    %v2816 = vrcp.pop %v2815
    %v2817 = vmul.f32 1.0, %v2816
    %v2818 = vmul.f32 %v2817, %v2785
    %v2819 = vadd.f32 %v2811, %v2818
    %v2820 = vtanh.pop %v2819
    %v2821 = vsub.f32 1.0, %v2817
    %2823 = vrot.lane.b32.xlu0 %v2820, 64
    %v2824 = vpop.permute.xlu0 %2823
    %v2826 = vmul.f32 %v2821, %v2824
    %2828 = vrot.lane.b32.xlu0 %v2826, 64
    %v2829 = vpop.permute.xlu0 %2828
    %2831 = vst.msk [vmem:[#allocation5] sm:$0xff] %vm475, %v2829
    %2832 = vst.msk [vmem:[#allocation5 + $0x38] sm:$0xff] %vm871, %v2829
    %2833 = vst.msk [vmem:[#allocation5 + $0x38] sm:$0xff] %vm873, %v2826
    %2834 = vst.msk [vmem:[#allocation5] sm:$0xff] %vm875, %v2826
    %v2835 = vld [vmem:[%s904] sm:$0xff]
    %v2836 = vld [vmem:[%s904 + $0x8] sm:$0xff]
    %v2837 = vsel %vm614, %v2806, 0
    %2839 = vmatprep.subr.mxu0 0.0
    %2840 = vmatpush1.msra.mxu0 0.0
    %2841 = vmatprep.subr.mxu0 0.0
    %2842 = vmatpush1.msra.mxu0 0.0
    %2843 = vmatprep.subr.mxu0 0.0
    %2844 = vmatpush1.msra.mxu0 0.0
    %2845 = vmatprep.subr.mxu0 0.0
    %2846 = vmatpush1.msra.mxu0 0.0
    %2847 = vmatprep.subr.mxu0 0.0
    %2848 = vmatpush1.msra.mxu0 0.0
    %2849 = vmatprep.subr.mxu0 0.0
    %2850 = vmatpush1.msra.mxu0 0.0
    %2851 = vmatprep.subr.mxu0 0.0
    %2852 = vmatpush1.msra.mxu0 0.0
    %2853 = vmatprep.subr.mxu0 0.0
    %2854 = vmatpush1.msra.mxu0 0.0
    %2855 = vmatprep.subr.mxu0 %v2575
    %2856 = vmatpush1.msra.mxu0 %v2574
    %2857 = vmatprep.subr.mxu0 %v2573
    %2858 = vmatpush1.msra.mxu0 %v2572
    %2859 = vmatprep.subr.mxu0 %v2571
    %2860 = vmatpush1.msra.mxu0 %v2570
    %2861 = vmatprep.subr.mxu0 %v2569
    %2862 = vmatpush1.msra.mxu0 %v2568
    %2863 = vmatprep.subr.mxu0 %v2567
    %2864 = vmatpush1.msra.mxu0 %v2566
    %2865 = vmatprep.subr.mxu0 %v2565
    %2866 = vmatpush1.msra.mxu0 %v2564
    %2867 = vmatprep.subr.mxu0 %v2563
    %2868 = vmatpush1.msra.mxu0 %v2562
    %2869 = vmatprep.subr.mxu0 %v2561
    %2870 = vmatpush1.msra.mxu0 %v2560
    %2871 = vmatprep.subr.mxu0 0.0
    %2872 = vmatpush2.msra.mxu0 0.0
    %2873 = vmatprep.subr.mxu0 0.0
    %2874 = vmatpush2.msra.mxu0 0.0
    %2875 = vmatprep.subr.mxu0 0.0
    %2876 = vmatpush2.msra.mxu0 0.0
    %2877 = vmatprep.subr.mxu0 0.0
    %2878 = vmatpush2.msra.mxu0 0.0
    %2879 = vmatprep.subr.mxu0 0.0
    %2880 = vmatpush2.msra.mxu0 0.0
    %2881 = vmatprep.subr.mxu0 0.0
    %2882 = vmatpush2.msra.mxu0 0.0
    %2883 = vmatprep.subr.mxu0 0.0
    %2884 = vmatpush2.msra.mxu0 0.0
    %2885 = vmatprep.subr.mxu0 0.0
    %2886 = vmatpush2.msra.mxu0 0.0
    %2887 = vmatprep.subr.mxu0 0.0
    %2888 = vmatpush2.msra.mxu0 0.0
    %2889 = vmatprep.subr.mxu0 0.0
    %2890 = vmatpush2.msra.mxu0 0.0
    %2891 = vmatprep.subr.mxu0 0.0
    %2892 = vmatpush2.msra.mxu0 0.0
    %2893 = vmatprep.subr.mxu0 0.0
    %2894 = vmatpush2.msra.mxu0 0.0
    %2895 = vmatprep.subr.mxu0 0.0
    %2896 = vmatpush2.msra.mxu0 0.0
    %2897 = vmatprep.subr.mxu0 0.0
    %2898 = vmatpush2.msra.mxu0 0.0
    %2899 = vmatprep.subr.mxu0 0.0
    %2900 = vmatpush2.msra.mxu0 0.0
    %2901 = vmatprep.subr.mxu0 0.0
    %2902 = vmatpush2.msra.mxu0 0.0
    %2903 = vmatprep.mubr.f32.mxu0 0.0
    %2904 = vmatmul.mubr.f32.gmra.mxu0 %v2837
    %v2905 = vpop.f32.mrf.mxu0
    %v2906 = vadd.f32 0.0, %v2905
    %v2907 = vpop.f32.mrf.mxu0
    %v2908 = vadd.f32 0.0, %v2907
    %2909 = vdwg.mxu0
    %v2910 = vadd.f32 %v2835, %v2906
    %v2911 = vxor.u32 %v2910, 2147483648
    %v2912 = vmul.f32 %v2911, 1.442695
    %v2913 = vpow.pop %v2912
    %v2914 = vadd.f32 %v2913, 1.0
    %v2915 = vrcp.pop %v2914
    %v2916 = vmul.f32 1.0, %v2915
    %v2917 = vadd.f32 %v2908, %v2581
    %v2918 = vmul.f32 %v2916, %v2917
    %v2919 = vadd.f32 %v2836, %v2918
    %v2920 = vtanh.pop %v2919
    %v2921 = vsub.f32 1.0, %v2916
    %2923 = vrot.lane.b32.xlu0 %v2920, 64
    %v2924 = vpop.permute.xlu0 %2923
    %v2926 = vmul.f32 %v2921, %v2924
    %v2927 = vmul.f32 %v2916, %v2803
    %v2928 = vadd.f32 %v2926, %v2927
    %2930 = vrot.lane.b32.xlu0 %v2928, 64
    %v2931 = vpop.permute.xlu0 %2930
    %2933 = vst.msk [vmem:[%s1003] sm:$0xff] %vm475, %v2931
    %2934 = vst.msk [vmem:[%s1005] sm:$0xff] %vm871, %v2931
    %v2935 = vld [vmem:[%s1010] sm:$0xff]
    %v2936 = vld [vmem:[%s1010 + $0x8] sm:$0xff]
    %v2937 = vsel %vm614, %v2829, 0
    %2939 = vmatprep.subr.mxu0 0.0
    %2940 = vmatpush1.msra.mxu0 0.0
    %2941 = vmatprep.subr.mxu0 0.0
    %2942 = vmatpush1.msra.mxu0 0.0
    %2943 = vmatprep.subr.mxu0 0.0
    %2944 = vmatpush1.msra.mxu0 0.0
    %2945 = vmatprep.subr.mxu0 0.0
    %2946 = vmatpush1.msra.mxu0 0.0
    %2947 = vmatprep.subr.mxu0 0.0
    %2948 = vmatpush1.msra.mxu0 0.0
    %2949 = vmatprep.subr.mxu0 0.0
    %2950 = vmatpush1.msra.mxu0 0.0
    %2951 = vmatprep.subr.mxu0 0.0
    %2952 = vmatpush1.msra.mxu0 0.0
    %2953 = vmatprep.subr.mxu0 0.0
    %2954 = vmatpush1.msra.mxu0 0.0
    %2955 = vmatprep.subr.mxu0 %v2779
    %2956 = vmatpush1.msra.mxu0 %v2778
    %2957 = vmatprep.subr.mxu0 %v2777
    %2958 = vmatpush1.msra.mxu0 %v2776
    %2959 = vmatprep.subr.mxu0 %v2775
    %2960 = vmatpush1.msra.mxu0 %v2774
    %2961 = vmatprep.subr.mxu0 %v2773
    %2962 = vmatpush1.msra.mxu0 %v2772
    %2963 = vmatprep.subr.mxu0 %v2771
    %2964 = vmatpush1.msra.mxu0 %v2770
    %2965 = vmatprep.subr.mxu0 %v2769
    %2966 = vmatpush1.msra.mxu0 %v2768
    %2967 = vmatprep.subr.mxu0 %v2767
    %2968 = vmatpush1.msra.mxu0 %v2766
    %2969 = vmatprep.subr.mxu0 %v2765
    %2970 = vmatpush1.msra.mxu0 %v2764
    %2971 = vmatprep.subr.mxu0 0.0
    %2972 = vmatpush2.msra.mxu0 0.0
    %2973 = vmatprep.subr.mxu0 0.0
    %2974 = vmatpush2.msra.mxu0 0.0
    %2975 = vmatprep.subr.mxu0 0.0
    %2976 = vmatpush2.msra.mxu0 0.0
    %2977 = vmatprep.subr.mxu0 0.0
    %2978 = vmatpush2.msra.mxu0 0.0
    %2979 = vmatprep.subr.mxu0 0.0
    %2980 = vmatpush2.msra.mxu0 0.0
    %2981 = vmatprep.subr.mxu0 0.0
    %2982 = vmatpush2.msra.mxu0 0.0
    %2983 = vmatprep.subr.mxu0 0.0
    %2984 = vmatpush2.msra.mxu0 0.0
    %2985 = vmatprep.subr.mxu0 0.0
    %2986 = vmatpush2.msra.mxu0 0.0
    %2987 = vmatprep.subr.mxu0 0.0
    %2988 = vmatpush2.msra.mxu0 0.0
    %2989 = vmatprep.subr.mxu0 0.0
    %2990 = vmatpush2.msra.mxu0 0.0
    %2991 = vmatprep.subr.mxu0 0.0
    %2992 = vmatpush2.msra.mxu0 0.0
    %2993 = vmatprep.subr.mxu0 0.0
    %2994 = vmatpush2.msra.mxu0 0.0
    %2995 = vmatprep.subr.mxu0 0.0
    %2996 = vmatpush2.msra.mxu0 0.0
    %2997 = vmatprep.subr.mxu0 0.0
    %2998 = vmatpush2.msra.mxu0 0.0
    %2999 = vmatprep.subr.mxu0 0.0
    %3000 = vmatpush2.msra.mxu0 0.0
    %3001 = vmatprep.subr.mxu0 0.0
    %3002 = vmatpush2.msra.mxu0 0.0
    %3003 = vmatprep.mubr.f32.mxu0 0.0
    %3004 = vmatmul.mubr.f32.gmra.mxu0 %v2937
    %v3005 = vpop.f32.mrf.mxu0
    %v3006 = vadd.f32 0.0, %v3005
    %v3007 = vpop.f32.mrf.mxu0
    %v3008 = vadd.f32 0.0, %v3007
    %3009 = vdwg.mxu0
    %v3010 = vadd.f32 %v2935, %v3006
    %v3011 = vxor.u32 %v3010, 2147483648
    %v3012 = vmul.f32 %v3011, 1.442695
    %v3013 = vpow.pop %v3012
    %v3014 = vadd.f32 %v3013, 1.0
    %v3015 = vrcp.pop %v3014
    %v3016 = vmul.f32 1.0, %v3015
    %v3017 = vadd.f32 %v3008, %v2785
    %v3018 = vmul.f32 %v3016, %v3017
    %v3019 = vadd.f32 %v2936, %v3018
    %v3020 = vtanh.pop %v3019
    %v3021 = vsub.f32 1.0, %v3016
    %3023 = vrot.lane.b32.xlu0 %v3020, 64
    %v3024 = vpop.permute.xlu0 %3023
    %v3026 = vmul.f32 %v3021, %v3024
    %v3027 = vmul.f32 %v3016, %v2826
    %v3028 = vadd.f32 %v3026, %v3027
    %3030 = vrot.lane.b32.xlu0 %v3028, 64
    %v3031 = vpop.permute.xlu0 %3030
    %3033 = vst.msk [vmem:[%s1109] sm:$0xff] %vm475, %v3031
    %3034 = vst.msk [vmem:[%s1111] sm:$0xff] %vm871, %v3031
    %3035 = vst.msk [vmem:[%s1111] sm:$0xff] %vm873, %v3028
    %3036 = vst.msk [vmem:[%s1109] sm:$0xff] %vm875, %v3028
    %v3037 = vld [vmem:[%s1117] sm:$0xff]
    %v3038 = vld [vmem:[%s1117 + $0x8] sm:$0xff]
    %v3039 = vsel %vm614, %v2931, 0
    %3041 = vmatprep.subr.mxu0 0.0
    %3042 = vmatpush1.msra.mxu0 0.0
    %3043 = vmatprep.subr.mxu0 0.0
    %3044 = vmatpush1.msra.mxu0 0.0
    %3045 = vmatprep.subr.mxu0 0.0
    %3046 = vmatpush1.msra.mxu0 0.0
    %3047 = vmatprep.subr.mxu0 0.0
    %3048 = vmatpush1.msra.mxu0 0.0
    %3049 = vmatprep.subr.mxu0 0.0
    %3050 = vmatpush1.msra.mxu0 0.0
    %3051 = vmatprep.subr.mxu0 0.0
    %3052 = vmatpush1.msra.mxu0 0.0
    %3053 = vmatprep.subr.mxu0 0.0
    %3054 = vmatpush1.msra.mxu0 0.0
    %3055 = vmatprep.subr.mxu0 0.0
    %3056 = vmatpush1.msra.mxu0 0.0
    %3057 = vmatprep.subr.mxu0 %v2575
    %3058 = vmatpush1.msra.mxu0 %v2574
    %3059 = vmatprep.subr.mxu0 %v2573
    %3060 = vmatpush1.msra.mxu0 %v2572
    %3061 = vmatprep.subr.mxu0 %v2571
    %3062 = vmatpush1.msra.mxu0 %v2570
    %3063 = vmatprep.subr.mxu0 %v2569
    %3064 = vmatpush1.msra.mxu0 %v2568
    %3065 = vmatprep.subr.mxu0 %v2567
    %3066 = vmatpush1.msra.mxu0 %v2566
    %3067 = vmatprep.subr.mxu0 %v2565
    %3068 = vmatpush1.msra.mxu0 %v2564
    %3069 = vmatprep.subr.mxu0 %v2563
    %3070 = vmatpush1.msra.mxu0 %v2562
    %3071 = vmatprep.subr.mxu0 %v2561
    %3072 = vmatpush1.msra.mxu0 %v2560
    %3073 = vmatprep.subr.mxu0 0.0
    %3074 = vmatpush2.msra.mxu0 0.0
    %3075 = vmatprep.subr.mxu0 0.0
    %3076 = vmatpush2.msra.mxu0 0.0
    %3077 = vmatprep.subr.mxu0 0.0
    %3078 = vmatpush2.msra.mxu0 0.0
    %3079 = vmatprep.subr.mxu0 0.0
    %3080 = vmatpush2.msra.mxu0 0.0
    %3081 = vmatprep.subr.mxu0 0.0
    %3082 = vmatpush2.msra.mxu0 0.0
    %3083 = vmatprep.subr.mxu0 0.0
    %3084 = vmatpush2.msra.mxu0 0.0
    %3085 = vmatprep.subr.mxu0 0.0
    %3086 = vmatpush2.msra.mxu0 0.0
    %3087 = vmatprep.subr.mxu0 0.0
    %3088 = vmatpush2.msra.mxu0 0.0
    %3089 = vmatprep.subr.mxu0 0.0
    %3090 = vmatpush2.msra.mxu0 0.0
    %3091 = vmatprep.subr.mxu0 0.0
    %3092 = vmatpush2.msra.mxu0 0.0
    %3093 = vmatprep.subr.mxu0 0.0
    %3094 = vmatpush2.msra.mxu0 0.0
    %3095 = vmatprep.subr.mxu0 0.0
    %3096 = vmatpush2.msra.mxu0 0.0
    %3097 = vmatprep.subr.mxu0 0.0
    %3098 = vmatpush2.msra.mxu0 0.0
    %3099 = vmatprep.subr.mxu0 0.0
    %3100 = vmatpush2.msra.mxu0 0.0
    %3101 = vmatprep.subr.mxu0 0.0
    %3102 = vmatpush2.msra.mxu0 0.0
    %3103 = vmatprep.subr.mxu0 0.0
    %3104 = vmatpush2.msra.mxu0 0.0
    %3105 = vmatprep.mubr.f32.mxu0 0.0
    %3106 = vmatmul.mubr.f32.gmra.mxu0 %v3039
    %v3107 = vpop.f32.mrf.mxu0
    %v3108 = vadd.f32 0.0, %v3107
    %v3109 = vpop.f32.mrf.mxu0
    %v3110 = vadd.f32 0.0, %v3109
    %3111 = vdwg.mxu0
    %v3112 = vadd.f32 %v3037, %v3108
    %v3113 = vxor.u32 %v3112, 2147483648
    %v3114 = vmul.f32 %v3113, 1.442695
    %v3115 = vpow.pop %v3114
    %v3116 = vadd.f32 %v3115, 1.0
    %v3117 = vrcp.pop %v3116
    %v3118 = vmul.f32 1.0, %v3117
    %v3119 = vadd.f32 %v3110, %v2581
    %v3120 = vmul.f32 %v3118, %v3119
    %v3121 = vadd.f32 %v3038, %v3120
    %v3122 = vtanh.pop %v3121
    %v3123 = vsub.f32 1.0, %v3118
    %3125 = vrot.lane.b32.xlu0 %v3122, 64
    %v3126 = vpop.permute.xlu0 %3125
    %v3128 = vmul.f32 %v3123, %v3126
    %v3129 = vmul.f32 %v3118, %v2928
    %v3130 = vadd.f32 %v3128, %v3129
    %3132 = vrot.lane.b32.xlu0 %v3130, 64
    %v3133 = vpop.permute.xlu0 %3132
    %3135 = vst.msk [vmem:[%s1216] sm:$0xff] %vm475, %v3133
    %3136 = vst.msk [vmem:[%s1218] sm:$0xff] %vm871, %v3133
    %v3137 = vld [vmem:[%s1223] sm:$0xff]
    %v3138 = vld [vmem:[%s1223 + $0x8] sm:$0xff]
    %v3139 = vsel %vm614, %v3031, 0
    %3141 = vmatprep.subr.mxu0 0.0
    %3142 = vmatpush1.msra.mxu0 0.0
    %3143 = vmatprep.subr.mxu0 0.0
    %3144 = vmatpush1.msra.mxu0 0.0
    %3145 = vmatprep.subr.mxu0 0.0
    %3146 = vmatpush1.msra.mxu0 0.0
    %3147 = vmatprep.subr.mxu0 0.0
    %3148 = vmatpush1.msra.mxu0 0.0
    %3149 = vmatprep.subr.mxu0 0.0
    %3150 = vmatpush1.msra.mxu0 0.0
    %3151 = vmatprep.subr.mxu0 0.0
    %3152 = vmatpush1.msra.mxu0 0.0
    %3153 = vmatprep.subr.mxu0 0.0
    %3154 = vmatpush1.msra.mxu0 0.0
    %3155 = vmatprep.subr.mxu0 0.0
    %3156 = vmatpush1.msra.mxu0 0.0
    %3157 = vmatprep.subr.mxu0 %v2779
    %3158 = vmatpush1.msra.mxu0 %v2778
    %3159 = vmatprep.subr.mxu0 %v2777
    %3160 = vmatpush1.msra.mxu0 %v2776
    %3161 = vmatprep.subr.mxu0 %v2775
    %3162 = vmatpush1.msra.mxu0 %v2774
    %3163 = vmatprep.subr.mxu0 %v2773
    %3164 = vmatpush1.msra.mxu0 %v2772
    %3165 = vmatprep.subr.mxu0 %v2771
    %3166 = vmatpush1.msra.mxu0 %v2770
    %3167 = vmatprep.subr.mxu0 %v2769
    %3168 = vmatpush1.msra.mxu0 %v2768
    %3169 = vmatprep.subr.mxu0 %v2767
    %3170 = vmatpush1.msra.mxu0 %v2766
    %3171 = vmatprep.subr.mxu0 %v2765
    %3172 = vmatpush1.msra.mxu0 %v2764
    %3173 = vmatprep.subr.mxu0 0.0
    %3174 = vmatpush2.msra.mxu0 0.0
    %3175 = vmatprep.subr.mxu0 0.0
    %3176 = vmatpush2.msra.mxu0 0.0
    %3177 = vmatprep.subr.mxu0 0.0
    %3178 = vmatpush2.msra.mxu0 0.0
    %3179 = vmatprep.subr.mxu0 0.0
    %3180 = vmatpush2.msra.mxu0 0.0
    %3181 = vmatprep.subr.mxu0 0.0
    %3182 = vmatpush2.msra.mxu0 0.0
    %3183 = vmatprep.subr.mxu0 0.0
    %3184 = vmatpush2.msra.mxu0 0.0
    %3185 = vmatprep.subr.mxu0 0.0
    %3186 = vmatpush2.msra.mxu0 0.0
    %3187 = vmatprep.subr.mxu0 0.0
    %3188 = vmatpush2.msra.mxu0 0.0
    %3189 = vmatprep.subr.mxu0 0.0
    %3190 = vmatpush2.msra.mxu0 0.0
    %3191 = vmatprep.subr.mxu0 0.0
    %3192 = vmatpush2.msra.mxu0 0.0
    %3193 = vmatprep.subr.mxu0 0.0
    %3194 = vmatpush2.msra.mxu0 0.0
    %3195 = vmatprep.subr.mxu0 0.0
    %3196 = vmatpush2.msra.mxu0 0.0
    %3197 = vmatprep.subr.mxu0 0.0
    %3198 = vmatpush2.msra.mxu0 0.0
    %3199 = vmatprep.subr.mxu0 0.0
    %3200 = vmatpush2.msra.mxu0 0.0
    %3201 = vmatprep.subr.mxu0 0.0
    %3202 = vmatpush2.msra.mxu0 0.0
    %3203 = vmatprep.subr.mxu0 0.0
    %3204 = vmatpush2.msra.mxu0 0.0
    %3205 = vmatprep.mubr.f32.mxu0 0.0
    %3206 = vmatmul.mubr.f32.gmra.mxu0 %v3139
    %v3207 = vpop.f32.mrf.mxu0
    %v3208 = vadd.f32 0.0, %v3207
    %v3209 = vpop.f32.mrf.mxu0
    %v3210 = vadd.f32 0.0, %v3209
    %3211 = vdwg.mxu0
    %v3212 = vadd.f32 %v3137, %v3208
    %v3213 = vxor.u32 %v3212, 2147483648
    %v3214 = vmul.f32 %v3213, 1.442695
    %v3215 = vpow.pop %v3214
    %v3216 = vadd.f32 %v3215, 1.0
    %v3217 = vrcp.pop %v3216
    %v3218 = vmul.f32 1.0, %v3217
    %v3219 = vadd.f32 %v3210, %v2785
    %v3220 = vmul.f32 %v3218, %v3219
    %v3221 = vadd.f32 %v3138, %v3220
    %v3222 = vtanh.pop %v3221
    %v3223 = vsub.f32 1.0, %v3218
    %3225 = vrot.lane.b32.xlu0 %v3222, 64
    %v3226 = vpop.permute.xlu0 %3225
    %v3228 = vmul.f32 %v3223, %v3226
    %v3229 = vmul.f32 %v3218, %v3028
    %v3230 = vadd.f32 %v3228, %v3229
    %3232 = vrot.lane.b32.xlu0 %v3230, 64
    %v3233 = vpop.permute.xlu0 %3232
    %3235 = vst.msk [vmem:[%s1322] sm:$0xff] %vm475, %v3233
    %3236 = vst.msk [vmem:[%s1324] sm:$0xff] %vm871, %v3233
    %3237 = vst.msk [vmem:[%s1324] sm:$0xff] %vm873, %v3230
    %3238 = vst.msk [vmem:[%s1322] sm:$0xff] %vm875, %v3230
    %v3239 = vld [vmem:[%s1330] sm:$0xff]
    %v3240 = vld [vmem:[%s1330 + $0x8] sm:$0xff]
    %v3241 = vsel %vm614, %v3133, 0
    %3243 = vmatprep.subr.mxu0 0.0
    %3244 = vmatpush1.msra.mxu0 0.0
    %3245 = vmatprep.subr.mxu0 0.0
    %3246 = vmatpush1.msra.mxu0 0.0
    %3247 = vmatprep.subr.mxu0 0.0
    %3248 = vmatpush1.msra.mxu0 0.0
    %3249 = vmatprep.subr.mxu0 0.0
    %3250 = vmatpush1.msra.mxu0 0.0
    %3251 = vmatprep.subr.mxu0 0.0
    %3252 = vmatpush1.msra.mxu0 0.0
    %3253 = vmatprep.subr.mxu0 0.0
    %3254 = vmatpush1.msra.mxu0 0.0
    %3255 = vmatprep.subr.mxu0 0.0
    %3256 = vmatpush1.msra.mxu0 0.0
    %3257 = vmatprep.subr.mxu0 0.0
    %3258 = vmatpush1.msra.mxu0 0.0
    %3259 = vmatprep.subr.mxu0 %v2575
    %3260 = vmatpush1.msra.mxu0 %v2574
    %3261 = vmatprep.subr.mxu0 %v2573
    %3262 = vmatpush1.msra.mxu0 %v2572
    %3263 = vmatprep.subr.mxu0 %v2571
    %3264 = vmatpush1.msra.mxu0 %v2570
    %3265 = vmatprep.subr.mxu0 %v2569
    %3266 = vmatpush1.msra.mxu0 %v2568
    %3267 = vmatprep.subr.mxu0 %v2567
    %3268 = vmatpush1.msra.mxu0 %v2566
    %3269 = vmatprep.subr.mxu0 %v2565
    %3270 = vmatpush1.msra.mxu0 %v2564
    %3271 = vmatprep.subr.mxu0 %v2563
    %3272 = vmatpush1.msra.mxu0 %v2562
    %3273 = vmatprep.subr.mxu0 %v2561
    %3274 = vmatpush1.msra.mxu0 %v2560
    %3275 = vmatprep.subr.mxu0 0.0
    %3276 = vmatpush2.msra.mxu0 0.0
    %3277 = vmatprep.subr.mxu0 0.0
    %3278 = vmatpush2.msra.mxu0 0.0
    %3279 = vmatprep.subr.mxu0 0.0
    %3280 = vmatpush2.msra.mxu0 0.0
    %3281 = vmatprep.subr.mxu0 0.0
    %3282 = vmatpush2.msra.mxu0 0.0
    %3283 = vmatprep.subr.mxu0 0.0
    %3284 = vmatpush2.msra.mxu0 0.0
    %3285 = vmatprep.subr.mxu0 0.0
    %3286 = vmatpush2.msra.mxu0 0.0
    %3287 = vmatprep.subr.mxu0 0.0
    %3288 = vmatpush2.msra.mxu0 0.0
    %3289 = vmatprep.subr.mxu0 0.0
    %3290 = vmatpush2.msra.mxu0 0.0
    %3291 = vmatprep.subr.mxu0 0.0
    %3292 = vmatpush2.msra.mxu0 0.0
    %3293 = vmatprep.subr.mxu0 0.0
    %3294 = vmatpush2.msra.mxu0 0.0
    %3295 = vmatprep.subr.mxu0 0.0
    %3296 = vmatpush2.msra.mxu0 0.0
    %3297 = vmatprep.subr.mxu0 0.0
    %3298 = vmatpush2.msra.mxu0 0.0
    %3299 = vmatprep.subr.mxu0 0.0
    %3300 = vmatpush2.msra.mxu0 0.0
    %3301 = vmatprep.subr.mxu0 0.0
    %3302 = vmatpush2.msra.mxu0 0.0
    %3303 = vmatprep.subr.mxu0 0.0
    %3304 = vmatpush2.msra.mxu0 0.0
    %3305 = vmatprep.subr.mxu0 0.0
    %3306 = vmatpush2.msra.mxu0 0.0
    %3307 = vmatprep.mubr.f32.mxu0 0.0
    %3308 = vmatmul.mubr.f32.gmra.mxu0 %v3241
    %v3309 = vpop.f32.mrf.mxu0
    %v3310 = vadd.f32 0.0, %v3309
    %v3311 = vpop.f32.mrf.mxu0
    %v3312 = vadd.f32 0.0, %v3311
    %3313 = vdwg.mxu0
    %v3314 = vadd.f32 %v3239, %v3310
    %v3315 = vxor.u32 %v3314, 2147483648
    %v3316 = vmul.f32 %v3315, 1.442695
    %v3317 = vpow.pop %v3316
    %v3318 = vadd.f32 %v3317, 1.0
    %v3319 = vrcp.pop %v3318
    %v3320 = vmul.f32 1.0, %v3319
    %v3321 = vadd.f32 %v3312, %v2581
    %v3322 = vmul.f32 %v3320, %v3321
    %v3323 = vadd.f32 %v3240, %v3322
    %v3324 = vtanh.pop %v3323
    %v3325 = vsub.f32 1.0, %v3320
    %3327 = vrot.lane.b32.xlu0 %v3324, 64
    %v3328 = vpop.permute.xlu0 %3327
    %v3330 = vmul.f32 %v3325, %v3328
    %v3331 = vmul.f32 %v3320, %v3130
    %v3332 = vadd.f32 %v3330, %v3331
    %3334 = vrot.lane.b32.xlu0 %v3332, 64
    %v3335 = vpop.permute.xlu0 %3334
    %3337 = vst.msk [vmem:[%s1429] sm:$0xff] %vm475, %v3335
    %3338 = vst.msk [vmem:[%s1431] sm:$0xff] %vm871, %v3335
    %v3339 = vld [vmem:[%s1436] sm:$0xff]
    %v3340 = vld [vmem:[%s1436 + $0x8] sm:$0xff]
    %v3341 = vsel %vm614, %v3233, 0
    %3343 = vmatprep.subr.mxu0 0.0
    %3344 = vmatpush1.msra.mxu0 0.0
    %3345 = vmatprep.subr.mxu0 0.0
    %3346 = vmatpush1.msra.mxu0 0.0
    %3347 = vmatprep.subr.mxu0 0.0
    %3348 = vmatpush1.msra.mxu0 0.0
    %3349 = vmatprep.subr.mxu0 0.0
    %3350 = vmatpush1.msra.mxu0 0.0
    %3351 = vmatprep.subr.mxu0 0.0
    %3352 = vmatpush1.msra.mxu0 0.0
    %3353 = vmatprep.subr.mxu0 0.0
    %3354 = vmatpush1.msra.mxu0 0.0
    %3355 = vmatprep.subr.mxu0 0.0
    %3356 = vmatpush1.msra.mxu0 0.0
    %3357 = vmatprep.subr.mxu0 0.0
    %3358 = vmatpush1.msra.mxu0 0.0
    %3359 = vmatprep.subr.mxu0 %v2779
    %3360 = vmatpush1.msra.mxu0 %v2778
    %3361 = vmatprep.subr.mxu0 %v2777
    %3362 = vmatpush1.msra.mxu0 %v2776
    %3363 = vmatprep.subr.mxu0 %v2775
    %3364 = vmatpush1.msra.mxu0 %v2774
    %3365 = vmatprep.subr.mxu0 %v2773
    %3366 = vmatpush1.msra.mxu0 %v2772
    %3367 = vmatprep.subr.mxu0 %v2771
    %3368 = vmatpush1.msra.mxu0 %v2770
    %3369 = vmatprep.subr.mxu0 %v2769
    %3370 = vmatpush1.msra.mxu0 %v2768
    %3371 = vmatprep.subr.mxu0 %v2767
    %3372 = vmatpush1.msra.mxu0 %v2766
    %3373 = vmatprep.subr.mxu0 %v2765
    %3374 = vmatpush1.msra.mxu0 %v2764
    %3375 = vmatprep.subr.mxu0 0.0
    %3376 = vmatpush2.msra.mxu0 0.0
    %3377 = vmatprep.subr.mxu0 0.0
    %3378 = vmatpush2.msra.mxu0 0.0
    %3379 = vmatprep.subr.mxu0 0.0
    %3380 = vmatpush2.msra.mxu0 0.0
    %3381 = vmatprep.subr.mxu0 0.0
    %3382 = vmatpush2.msra.mxu0 0.0
    %3383 = vmatprep.subr.mxu0 0.0
    %3384 = vmatpush2.msra.mxu0 0.0
    %3385 = vmatprep.subr.mxu0 0.0
    %3386 = vmatpush2.msra.mxu0 0.0
    %3387 = vmatprep.subr.mxu0 0.0
    %3388 = vmatpush2.msra.mxu0 0.0
    %3389 = vmatprep.subr.mxu0 0.0
    %3390 = vmatpush2.msra.mxu0 0.0
    %3391 = vmatprep.subr.mxu0 0.0
    %3392 = vmatpush2.msra.mxu0 0.0
    %3393 = vmatprep.subr.mxu0 0.0
    %3394 = vmatpush2.msra.mxu0 0.0
    %3395 = vmatprep.subr.mxu0 0.0
    %3396 = vmatpush2.msra.mxu0 0.0
    %3397 = vmatprep.subr.mxu0 0.0
    %3398 = vmatpush2.msra.mxu0 0.0
    %3399 = vmatprep.subr.mxu0 0.0
    %3400 = vmatpush2.msra.mxu0 0.0
    %3401 = vmatprep.subr.mxu0 0.0
    %3402 = vmatpush2.msra.mxu0 0.0
    %3403 = vmatprep.subr.mxu0 0.0
    %3404 = vmatpush2.msra.mxu0 0.0
    %3405 = vmatprep.subr.mxu0 0.0
    %3406 = vmatpush2.msra.mxu0 0.0
    %3407 = vmatprep.mubr.f32.mxu0 0.0
    %3408 = vmatmul.mubr.f32.gmra.mxu0 %v3341
    %v3409 = vpop.f32.mrf.mxu0
    %v3410 = vadd.f32 0.0, %v3409
    %v3411 = vpop.f32.mrf.mxu0
    %v3412 = vadd.f32 0.0, %v3411
    %3413 = vdwg.mxu0
    %v3414 = vadd.f32 %v3339, %v3410
    %v3415 = vxor.u32 %v3414, 2147483648
    %v3416 = vmul.f32 %v3415, 1.442695
    %v3417 = vpow.pop %v3416
    %v3418 = vadd.f32 %v3417, 1.0
    %v3419 = vrcp.pop %v3418
    %v3420 = vmul.f32 1.0, %v3419
    %v3421 = vadd.f32 %v3412, %v2785
    %v3422 = vmul.f32 %v3420, %v3421
    %v3423 = vadd.f32 %v3340, %v3422
    %v3424 = vtanh.pop %v3423
    %v3425 = vsub.f32 1.0, %v3420
    %3427 = vrot.lane.b32.xlu0 %v3424, 64
    %v3428 = vpop.permute.xlu0 %3427
    %v3430 = vmul.f32 %v3425, %v3428
    %v3431 = vmul.f32 %v3420, %v3230
    %v3432 = vadd.f32 %v3430, %v3431
    %3434 = vrot.lane.b32.xlu0 %v3432, 64
    %v3435 = vpop.permute.xlu0 %3434
    %3437 = vst.msk [vmem:[%s1535] sm:$0xff] %vm475, %v3435
    %3438 = vst.msk [vmem:[%s1537] sm:$0xff] %vm871, %v3435
    %3439 = vst.msk [vmem:[%s1537] sm:$0xff] %vm873, %v3432
    %3440 = vst.msk [vmem:[%s1535] sm:$0xff] %vm875, %v3432
    %v3441 = vld [vmem:[%s1543] sm:$0xff]
    %v3442 = vld [vmem:[%s1543 + $0x8] sm:$0xff]
    %v3443 = vsel %vm614, %v3335, 0
    %3445 = vmatprep.subr.mxu0 0.0
    %3446 = vmatpush1.msra.mxu0 0.0
    %3447 = vmatprep.subr.mxu0 0.0
    %3448 = vmatpush1.msra.mxu0 0.0
    %3449 = vmatprep.subr.mxu0 0.0
    %3450 = vmatpush1.msra.mxu0 0.0
    %3451 = vmatprep.subr.mxu0 0.0
    %3452 = vmatpush1.msra.mxu0 0.0
    %3453 = vmatprep.subr.mxu0 0.0
    %3454 = vmatpush1.msra.mxu0 0.0
    %3455 = vmatprep.subr.mxu0 0.0
    %3456 = vmatpush1.msra.mxu0 0.0
    %3457 = vmatprep.subr.mxu0 0.0
    %3458 = vmatpush1.msra.mxu0 0.0
    %3459 = vmatprep.subr.mxu0 0.0
    %3460 = vmatpush1.msra.mxu0 0.0
    %3461 = vmatprep.subr.mxu0 %v2575
    %3462 = vmatpush1.msra.mxu0 %v2574
    %3463 = vmatprep.subr.mxu0 %v2573
    %3464 = vmatpush1.msra.mxu0 %v2572
    %3465 = vmatprep.subr.mxu0 %v2571
    %3466 = vmatpush1.msra.mxu0 %v2570
    %3467 = vmatprep.subr.mxu0 %v2569
    %3468 = vmatpush1.msra.mxu0 %v2568
    %3469 = vmatprep.subr.mxu0 %v2567
    %3470 = vmatpush1.msra.mxu0 %v2566
    %3471 = vmatprep.subr.mxu0 %v2565
    %3472 = vmatpush1.msra.mxu0 %v2564
    %3473 = vmatprep.subr.mxu0 %v2563
    %3474 = vmatpush1.msra.mxu0 %v2562
    %3475 = vmatprep.subr.mxu0 %v2561
    %3476 = vmatpush1.msra.mxu0 %v2560
    %3477 = vmatprep.subr.mxu0 0.0
    %3478 = vmatpush2.msra.mxu0 0.0
    %3479 = vmatprep.subr.mxu0 0.0
    %3480 = vmatpush2.msra.mxu0 0.0
    %3481 = vmatprep.subr.mxu0 0.0
    %3482 = vmatpush2.msra.mxu0 0.0
    %3483 = vmatprep.subr.mxu0 0.0
    %3484 = vmatpush2.msra.mxu0 0.0
    %3485 = vmatprep.subr.mxu0 0.0
    %3486 = vmatpush2.msra.mxu0 0.0
    %3487 = vmatprep.subr.mxu0 0.0
    %3488 = vmatpush2.msra.mxu0 0.0
    %3489 = vmatprep.subr.mxu0 0.0
    %3490 = vmatpush2.msra.mxu0 0.0
    %3491 = vmatprep.subr.mxu0 0.0
    %3492 = vmatpush2.msra.mxu0 0.0
    %3493 = vmatprep.subr.mxu0 0.0
    %3494 = vmatpush2.msra.mxu0 0.0
    %3495 = vmatprep.subr.mxu0 0.0
    %3496 = vmatpush2.msra.mxu0 0.0
    %3497 = vmatprep.subr.mxu0 0.0
    %3498 = vmatpush2.msra.mxu0 0.0
    %3499 = vmatprep.subr.mxu0 0.0
    %3500 = vmatpush2.msra.mxu0 0.0
    %3501 = vmatprep.subr.mxu0 0.0
    %3502 = vmatpush2.msra.mxu0 0.0
    %3503 = vmatprep.subr.mxu0 0.0
    %3504 = vmatpush2.msra.mxu0 0.0
    %3505 = vmatprep.subr.mxu0 0.0
    %3506 = vmatpush2.msra.mxu0 0.0
    %3507 = vmatprep.subr.mxu0 0.0
    %3508 = vmatpush2.msra.mxu0 0.0
    %3509 = vmatprep.mubr.f32.mxu0 0.0
    %3510 = vmatmul.mubr.f32.gmra.mxu0 %v3443
    %v3511 = vpop.f32.mrf.mxu0
    %v3512 = vadd.f32 0.0, %v3511
    %v3513 = vpop.f32.mrf.mxu0
    %v3514 = vadd.f32 0.0, %v3513
    %3515 = vdwg.mxu0
    %v3516 = vadd.f32 %v3441, %v3512
    %v3517 = vxor.u32 %v3516, 2147483648
    %v3518 = vmul.f32 %v3517, 1.442695
    %v3519 = vpow.pop %v3518
    %v3520 = vadd.f32 %v3519, 1.0
    %v3521 = vrcp.pop %v3520
    %v3522 = vmul.f32 1.0, %v3521
    %v3523 = vadd.f32 %v3514, %v2581
    %v3524 = vmul.f32 %v3522, %v3523
    %v3525 = vadd.f32 %v3442, %v3524
    %v3526 = vtanh.pop %v3525
    %v3527 = vsub.f32 1.0, %v3522
    %3529 = vrot.lane.b32.xlu0 %v3526, 64
    %v3530 = vpop.permute.xlu0 %3529
    %v3532 = vmul.f32 %v3527, %v3530
    %v3533 = vmul.f32 %v3522, %v3332
    %v3534 = vadd.f32 %v3532, %v3533
    %3536 = vrot.lane.b32.xlu0 %v3534, 64
    %v3537 = vpop.permute.xlu0 %3536
    %3539 = vst.msk [vmem:[%s1431] sm:$0xff] %vm475, %v3537
    %3540 = vst.msk [vmem:[%s1429] sm:$0xff] %vm871, %v3537
    %v3541 = vld [vmem:[%s1647] sm:$0xff]
    %v3542 = vld [vmem:[%s1647 + $0x8] sm:$0xff]
    %v3543 = vsel %vm614, %v3435, 0
    %3545 = vmatprep.subr.mxu0 0.0
    %3546 = vmatpush1.msra.mxu0 0.0
    %3547 = vmatprep.subr.mxu0 0.0
    %3548 = vmatpush1.msra.mxu0 0.0
    %3549 = vmatprep.subr.mxu0 0.0
    %3550 = vmatpush1.msra.mxu0 0.0
    %3551 = vmatprep.subr.mxu0 0.0
    %3552 = vmatpush1.msra.mxu0 0.0
    %3553 = vmatprep.subr.mxu0 0.0
    %3554 = vmatpush1.msra.mxu0 0.0
    %3555 = vmatprep.subr.mxu0 0.0
    %3556 = vmatpush1.msra.mxu0 0.0
    %3557 = vmatprep.subr.mxu0 0.0
    %3558 = vmatpush1.msra.mxu0 0.0
    %3559 = vmatprep.subr.mxu0 0.0
    %3560 = vmatpush1.msra.mxu0 0.0
    %3561 = vmatprep.subr.mxu0 %v2779
    %3562 = vmatpush1.msra.mxu0 %v2778
    %3563 = vmatprep.subr.mxu0 %v2777
    %3564 = vmatpush1.msra.mxu0 %v2776
    %3565 = vmatprep.subr.mxu0 %v2775
    %3566 = vmatpush1.msra.mxu0 %v2774
    %3567 = vmatprep.subr.mxu0 %v2773
    %3568 = vmatpush1.msra.mxu0 %v2772
    %3569 = vmatprep.subr.mxu0 %v2771
    %3570 = vmatpush1.msra.mxu0 %v2770
    %3571 = vmatprep.subr.mxu0 %v2769
    %3572 = vmatpush1.msra.mxu0 %v2768
    %3573 = vmatprep.subr.mxu0 %v2767
    %3574 = vmatpush1.msra.mxu0 %v2766
    %3575 = vmatprep.subr.mxu0 %v2765
    %3576 = vmatpush1.msra.mxu0 %v2764
    %3577 = vmatprep.subr.mxu0 0.0
    %3578 = vmatpush2.msra.mxu0 0.0
    %3579 = vmatprep.subr.mxu0 0.0
    %3580 = vmatpush2.msra.mxu0 0.0
    %3581 = vmatprep.subr.mxu0 0.0
    %3582 = vmatpush2.msra.mxu0 0.0
    %3583 = vmatprep.subr.mxu0 0.0
    %3584 = vmatpush2.msra.mxu0 0.0
    %3585 = vmatprep.subr.mxu0 0.0
    %3586 = vmatpush2.msra.mxu0 0.0
    %3587 = vmatprep.subr.mxu0 0.0
    %3588 = vmatpush2.msra.mxu0 0.0
    %3589 = vmatprep.subr.mxu0 0.0
    %3590 = vmatpush2.msra.mxu0 0.0
    %3591 = vmatprep.subr.mxu0 0.0
    %3592 = vmatpush2.msra.mxu0 0.0
    %3593 = vmatprep.subr.mxu0 0.0
    %3594 = vmatpush2.msra.mxu0 0.0
    %3595 = vmatprep.subr.mxu0 0.0
    %3596 = vmatpush2.msra.mxu0 0.0
    %3597 = vmatprep.subr.mxu0 0.0
    %3598 = vmatpush2.msra.mxu0 0.0
    %3599 = vmatprep.subr.mxu0 0.0
    %3600 = vmatpush2.msra.mxu0 0.0
    %3601 = vmatprep.subr.mxu0 0.0
    %3602 = vmatpush2.msra.mxu0 0.0
    %3603 = vmatprep.subr.mxu0 0.0
    %3604 = vmatpush2.msra.mxu0 0.0
    %3605 = vmatprep.subr.mxu0 0.0
    %3606 = vmatpush2.msra.mxu0 0.0
    %3607 = vmatprep.subr.mxu0 0.0
    %3608 = vmatpush2.msra.mxu0 0.0
    %3609 = vmatprep.mubr.f32.mxu0 0.0
    %3610 = vmatmul.mubr.f32.gmra.mxu0 %v3543
    %v3611 = vpop.f32.mrf.mxu0
    %v3612 = vadd.f32 0.0, %v3611
    %v3613 = vpop.f32.mrf.mxu0
    %v3614 = vadd.f32 0.0, %v3613
    %3615 = vdwg.mxu0
    %v3616 = vadd.f32 %v3541, %v3612
    %v3617 = vxor.u32 %v3616, 2147483648
    %v3618 = vmul.f32 %v3617, 1.442695
    %v3619 = vpow.pop %v3618
    %v3620 = vadd.f32 %v3619, 1.0
    %v3621 = vrcp.pop %v3620
    %v3622 = vmul.f32 1.0, %v3621
    %v3623 = vadd.f32 %v3614, %v2785
    %v3624 = vmul.f32 %v3622, %v3623
    %v3625 = vadd.f32 %v3542, %v3624
    %v3626 = vtanh.pop %v3625
    %v3627 = vsub.f32 1.0, %v3622
    %3629 = vrot.lane.b32.xlu0 %v3626, 64
    %v3630 = vpop.permute.xlu0 %3629
    %v3632 = vmul.f32 %v3627, %v3630
    %v3633 = vmul.f32 %v3622, %v3432
    %v3634 = vadd.f32 %v3632, %v3633
    %3636 = vrot.lane.b32.xlu0 %v3634, 64
    %v3637 = vpop.permute.xlu0 %3636
    %3639 = vst.msk [vmem:[%s1537] sm:$0xff] %vm475, %v3637
    %3640 = vst.msk [vmem:[%s1535] sm:$0xff] %vm871, %v3637
    %3641 = vst.msk [vmem:[%s1535] sm:$0xff] %vm873, %v3634
    %3642 = vst.msk [vmem:[%s1537] sm:$0xff] %vm875, %v3634
    %v3643 = vld [vmem:[%s1752] sm:$0xff]
    %v3644 = vld [vmem:[%s1752 + $0x8] sm:$0xff]
    %v3645 = vsel %vm614, %v3537, 0
    %3647 = vmatprep.subr.mxu0 0.0
    %3648 = vmatpush1.msra.mxu0 0.0
    %3649 = vmatprep.subr.mxu0 0.0
    %3650 = vmatpush1.msra.mxu0 0.0
    %3651 = vmatprep.subr.mxu0 0.0
    %3652 = vmatpush1.msra.mxu0 0.0
    %3653 = vmatprep.subr.mxu0 0.0
    %3654 = vmatpush1.msra.mxu0 0.0
    %3655 = vmatprep.subr.mxu0 0.0
    %3656 = vmatpush1.msra.mxu0 0.0
    %3657 = vmatprep.subr.mxu0 0.0
    %3658 = vmatpush1.msra.mxu0 0.0
    %3659 = vmatprep.subr.mxu0 0.0
    %3660 = vmatpush1.msra.mxu0 0.0
    %3661 = vmatprep.subr.mxu0 0.0
    %3662 = vmatpush1.msra.mxu0 0.0
    %3663 = vmatprep.subr.mxu0 %v2575
    %3664 = vmatpush1.msra.mxu0 %v2574
    %3665 = vmatprep.subr.mxu0 %v2573
    %3666 = vmatpush1.msra.mxu0 %v2572
    %3667 = vmatprep.subr.mxu0 %v2571
    %3668 = vmatpush1.msra.mxu0 %v2570
    %3669 = vmatprep.subr.mxu0 %v2569
    %3670 = vmatpush1.msra.mxu0 %v2568
    %3671 = vmatprep.subr.mxu0 %v2567
    %3672 = vmatpush1.msra.mxu0 %v2566
    %3673 = vmatprep.subr.mxu0 %v2565
    %3674 = vmatpush1.msra.mxu0 %v2564
    %3675 = vmatprep.subr.mxu0 %v2563
    %3676 = vmatpush1.msra.mxu0 %v2562
    %3677 = vmatprep.subr.mxu0 %v2561
    %3678 = vmatpush1.msra.mxu0 %v2560
    %3679 = vmatprep.subr.mxu0 0.0
    %3680 = vmatpush2.msra.mxu0 0.0
    %3681 = vmatprep.subr.mxu0 0.0
    %3682 = vmatpush2.msra.mxu0 0.0
    %3683 = vmatprep.subr.mxu0 0.0
    %3684 = vmatpush2.msra.mxu0 0.0
    %3685 = vmatprep.subr.mxu0 0.0
    %3686 = vmatpush2.msra.mxu0 0.0
    %3687 = vmatprep.subr.mxu0 0.0
    %3688 = vmatpush2.msra.mxu0 0.0
    %3689 = vmatprep.subr.mxu0 0.0
    %3690 = vmatpush2.msra.mxu0 0.0
    %3691 = vmatprep.subr.mxu0 0.0
    %3692 = vmatpush2.msra.mxu0 0.0
    %3693 = vmatprep.subr.mxu0 0.0
    %3694 = vmatpush2.msra.mxu0 0.0
    %3695 = vmatprep.subr.mxu0 0.0
    %3696 = vmatpush2.msra.mxu0 0.0
    %3697 = vmatprep.subr.mxu0 0.0
    %3698 = vmatpush2.msra.mxu0 0.0
    %3699 = vmatprep.subr.mxu0 0.0
    %3700 = vmatpush2.msra.mxu0 0.0
    %3701 = vmatprep.subr.mxu0 0.0
    %3702 = vmatpush2.msra.mxu0 0.0
    %3703 = vmatprep.subr.mxu0 0.0
    %3704 = vmatpush2.msra.mxu0 0.0
    %3705 = vmatprep.subr.mxu0 0.0
    %3706 = vmatpush2.msra.mxu0 0.0
    %3707 = vmatprep.subr.mxu0 0.0
    %3708 = vmatpush2.msra.mxu0 0.0
    %3709 = vmatprep.subr.mxu0 0.0
    %3710 = vmatpush2.msra.mxu0 0.0
    %3711 = vmatprep.mubr.f32.mxu0 0.0
    %3712 = vmatmul.mubr.f32.gmra.mxu0 %v3645
    %v3713 = vpop.f32.mrf.mxu0
    %v3714 = vadd.f32 0.0, %v3713
    %v3715 = vpop.f32.mrf.mxu0
    %v3716 = vadd.f32 0.0, %v3715
    %3717 = vdwg.mxu0
    %v3718 = vadd.f32 %v3643, %v3714
    %v3719 = vxor.u32 %v3718, 2147483648
    %v3720 = vmul.f32 %v3719, 1.442695
    %v3721 = vpow.pop %v3720
    %v3722 = vadd.f32 %v3721, 1.0
    %v3723 = vrcp.pop %v3722
    %v3724 = vmul.f32 1.0, %v3723
    %v3725 = vadd.f32 %v3716, %v2581
    %v3726 = vmul.f32 %v3724, %v3725
    %v3727 = vadd.f32 %v3644, %v3726
    %v3728 = vtanh.pop %v3727
    %v3729 = vsub.f32 1.0, %v3724
    %3731 = vrot.lane.b32.xlu0 %v3728, 64
    %v3732 = vpop.permute.xlu0 %3731
    %v3734 = vmul.f32 %v3729, %v3732
    %v3735 = vmul.f32 %v3724, %v3534
    %v3736 = vadd.f32 %v3734, %v3735
    %3738 = vrot.lane.b32.xlu0 %v3736, 64
    %v3739 = vpop.permute.xlu0 %3738
    %3741 = vst.msk [vmem:[%s1218] sm:$0xff] %vm475, %v3739
    %3742 = vst.msk [vmem:[%s1216] sm:$0xff] %vm871, %v3739
    %v3743 = vld [vmem:[%s1856] sm:$0xff]
    %v3744 = vld [vmem:[%s1856 + $0x8] sm:$0xff]
    %v3745 = vsel %vm614, %v3637, 0
    %3747 = vmatprep.subr.mxu0 0.0
    %3748 = vmatpush1.msra.mxu0 0.0
    %3749 = vmatprep.subr.mxu0 0.0
    %3750 = vmatpush1.msra.mxu0 0.0
    %3751 = vmatprep.subr.mxu0 0.0
    %3752 = vmatpush1.msra.mxu0 0.0
    %3753 = vmatprep.subr.mxu0 0.0
    %3754 = vmatpush1.msra.mxu0 0.0
    %3755 = vmatprep.subr.mxu0 0.0
    %3756 = vmatpush1.msra.mxu0 0.0
    %3757 = vmatprep.subr.mxu0 0.0
    %3758 = vmatpush1.msra.mxu0 0.0
    %3759 = vmatprep.subr.mxu0 0.0
    %3760 = vmatpush1.msra.mxu0 0.0
    %3761 = vmatprep.subr.mxu0 0.0
    %3762 = vmatpush1.msra.mxu0 0.0
    %3763 = vmatprep.subr.mxu0 %v2779
    %3764 = vmatpush1.msra.mxu0 %v2778
    %3765 = vmatprep.subr.mxu0 %v2777
    %3766 = vmatpush1.msra.mxu0 %v2776
    %3767 = vmatprep.subr.mxu0 %v2775
    %3768 = vmatpush1.msra.mxu0 %v2774
    %3769 = vmatprep.subr.mxu0 %v2773
    %3770 = vmatpush1.msra.mxu0 %v2772
    %3771 = vmatprep.subr.mxu0 %v2771
    %3772 = vmatpush1.msra.mxu0 %v2770
    %3773 = vmatprep.subr.mxu0 %v2769
    %3774 = vmatpush1.msra.mxu0 %v2768
    %3775 = vmatprep.subr.mxu0 %v2767
    %3776 = vmatpush1.msra.mxu0 %v2766
    %3777 = vmatprep.subr.mxu0 %v2765
    %3778 = vmatpush1.msra.mxu0 %v2764
    %3779 = vmatprep.subr.mxu0 0.0
    %3780 = vmatpush2.msra.mxu0 0.0
    %3781 = vmatprep.subr.mxu0 0.0
    %3782 = vmatpush2.msra.mxu0 0.0
    %3783 = vmatprep.subr.mxu0 0.0
    %3784 = vmatpush2.msra.mxu0 0.0
    %3785 = vmatprep.subr.mxu0 0.0
    %3786 = vmatpush2.msra.mxu0 0.0
    %3787 = vmatprep.subr.mxu0 0.0
    %3788 = vmatpush2.msra.mxu0 0.0
    %3789 = vmatprep.subr.mxu0 0.0
    %3790 = vmatpush2.msra.mxu0 0.0
    %3791 = vmatprep.subr.mxu0 0.0
    %3792 = vmatpush2.msra.mxu0 0.0
    %3793 = vmatprep.subr.mxu0 0.0
    %3794 = vmatpush2.msra.mxu0 0.0
    %3795 = vmatprep.subr.mxu0 0.0
    %3796 = vmatpush2.msra.mxu0 0.0
    %3797 = vmatprep.subr.mxu0 0.0
    %3798 = vmatpush2.msra.mxu0 0.0
    %3799 = vmatprep.subr.mxu0 0.0
    %3800 = vmatpush2.msra.mxu0 0.0
    %3801 = vmatprep.subr.mxu0 0.0
    %3802 = vmatpush2.msra.mxu0 0.0
    %3803 = vmatprep.subr.mxu0 0.0
    %3804 = vmatpush2.msra.mxu0 0.0
    %3805 = vmatprep.subr.mxu0 0.0
    %3806 = vmatpush2.msra.mxu0 0.0
    %3807 = vmatprep.subr.mxu0 0.0
    %3808 = vmatpush2.msra.mxu0 0.0
    %3809 = vmatprep.subr.mxu0 0.0
    %3810 = vmatpush2.msra.mxu0 0.0
    %3811 = vmatprep.mubr.f32.mxu0 0.0
    %3812 = vmatmul.mubr.f32.gmra.mxu0 %v3745
    %v3813 = vpop.f32.mrf.mxu0
    %v3814 = vadd.f32 0.0, %v3813
    %v3815 = vpop.f32.mrf.mxu0
    %v3816 = vadd.f32 0.0, %v3815
    %3817 = vdwg.mxu0
    %v3818 = vadd.f32 %v3743, %v3814
    %v3819 = vxor.u32 %v3818, 2147483648
    %v3820 = vmul.f32 %v3819, 1.442695
    %v3821 = vpow.pop %v3820
    %v3822 = vadd.f32 %v3821, 1.0
    %v3823 = vrcp.pop %v3822
    %v3824 = vmul.f32 1.0, %v3823
    %v3825 = vadd.f32 %v3816, %v2785
    %v3826 = vmul.f32 %v3824, %v3825
    %v3827 = vadd.f32 %v3744, %v3826
    %v3828 = vtanh.pop %v3827
    %v3829 = vsub.f32 1.0, %v3824
    %3831 = vrot.lane.b32.xlu0 %v3828, 64
    %v3832 = vpop.permute.xlu0 %3831
    %v3834 = vmul.f32 %v3829, %v3832
    %v3835 = vmul.f32 %v3824, %v3634
    %v3836 = vadd.f32 %v3834, %v3835
    %3838 = vrot.lane.b32.xlu0 %v3836, 64
    %v3839 = vpop.permute.xlu0 %3838
    %3841 = vst.msk [vmem:[%s1324] sm:$0xff] %vm475, %v3839
    %3842 = vst.msk [vmem:[%s1322] sm:$0xff] %vm871, %v3839
    %3843 = vst.msk [vmem:[%s1322] sm:$0xff] %vm873, %v3836
    %3844 = vst.msk [vmem:[%s1324] sm:$0xff] %vm875, %v3836
    %v3845 = vld [vmem:[%s1961] sm:$0xff]
    %v3846 = vld [vmem:[%s1961 + $0x8] sm:$0xff]
    %v3847 = vsel %vm614, %v3739, 0
    %3849 = vmatprep.subr.mxu0 0.0
    %3850 = vmatpush1.msra.mxu0 0.0
    %3851 = vmatprep.subr.mxu0 0.0
    %3852 = vmatpush1.msra.mxu0 0.0
    %3853 = vmatprep.subr.mxu0 0.0
    %3854 = vmatpush1.msra.mxu0 0.0
    %3855 = vmatprep.subr.mxu0 0.0
    %3856 = vmatpush1.msra.mxu0 0.0
    %3857 = vmatprep.subr.mxu0 0.0
    %3858 = vmatpush1.msra.mxu0 0.0
    %3859 = vmatprep.subr.mxu0 0.0
    %3860 = vmatpush1.msra.mxu0 0.0
    %3861 = vmatprep.subr.mxu0 0.0
    %3862 = vmatpush1.msra.mxu0 0.0
    %3863 = vmatprep.subr.mxu0 0.0
    %3864 = vmatpush1.msra.mxu0 0.0
    %3865 = vmatprep.subr.mxu0 %v2575
    %3866 = vmatpush1.msra.mxu0 %v2574
    %3867 = vmatprep.subr.mxu0 %v2573
    %3868 = vmatpush1.msra.mxu0 %v2572
    %3869 = vmatprep.subr.mxu0 %v2571
    %3870 = vmatpush1.msra.mxu0 %v2570
    %3871 = vmatprep.subr.mxu0 %v2569
    %3872 = vmatpush1.msra.mxu0 %v2568
    %3873 = vmatprep.subr.mxu0 %v2567
    %3874 = vmatpush1.msra.mxu0 %v2566
    %3875 = vmatprep.subr.mxu0 %v2565
    %3876 = vmatpush1.msra.mxu0 %v2564
    %3877 = vmatprep.subr.mxu0 %v2563
    %3878 = vmatpush1.msra.mxu0 %v2562
    %3879 = vmatprep.subr.mxu0 %v2561
    %3880 = vmatpush1.msra.mxu0 %v2560
    %3881 = vmatprep.subr.mxu0 0.0
    %3882 = vmatpush2.msra.mxu0 0.0
    %3883 = vmatprep.subr.mxu0 0.0
    %3884 = vmatpush2.msra.mxu0 0.0
    %3885 = vmatprep.subr.mxu0 0.0
    %3886 = vmatpush2.msra.mxu0 0.0
    %3887 = vmatprep.subr.mxu0 0.0
    %3888 = vmatpush2.msra.mxu0 0.0
    %3889 = vmatprep.subr.mxu0 0.0
    %3890 = vmatpush2.msra.mxu0 0.0
    %3891 = vmatprep.subr.mxu0 0.0
    %3892 = vmatpush2.msra.mxu0 0.0
    %3893 = vmatprep.subr.mxu0 0.0
    %3894 = vmatpush2.msra.mxu0 0.0
    %3895 = vmatprep.subr.mxu0 0.0
    %3896 = vmatpush2.msra.mxu0 0.0
    %3897 = vmatprep.subr.mxu0 0.0
    %3898 = vmatpush2.msra.mxu0 0.0
    %3899 = vmatprep.subr.mxu0 0.0
    %3900 = vmatpush2.msra.mxu0 0.0
    %3901 = vmatprep.subr.mxu0 0.0
    %3902 = vmatpush2.msra.mxu0 0.0
    %3903 = vmatprep.subr.mxu0 0.0
    %3904 = vmatpush2.msra.mxu0 0.0
    %3905 = vmatprep.subr.mxu0 0.0
    %3906 = vmatpush2.msra.mxu0 0.0
    %3907 = vmatprep.subr.mxu0 0.0
    %3908 = vmatpush2.msra.mxu0 0.0
    %3909 = vmatprep.subr.mxu0 0.0
    %3910 = vmatpush2.msra.mxu0 0.0
    %3911 = vmatprep.subr.mxu0 0.0
    %3912 = vmatpush2.msra.mxu0 0.0
    %3913 = vmatprep.mubr.f32.mxu0 0.0
    %3914 = vmatmul.mubr.f32.gmra.mxu0 %v3847
    %v3915 = vpop.f32.mrf.mxu0
    %v3916 = vadd.f32 0.0, %v3915
    %v3917 = vpop.f32.mrf.mxu0
    %v3918 = vadd.f32 0.0, %v3917
    %3919 = vdwg.mxu0
    %v3920 = vadd.f32 %v3845, %v3916
    %v3921 = vxor.u32 %v3920, 2147483648
    %v3922 = vmul.f32 %v3921, 1.442695
    %v3923 = vpow.pop %v3922
    %v3924 = vadd.f32 %v3923, 1.0
    %v3925 = vrcp.pop %v3924
    %v3926 = vmul.f32 1.0, %v3925
    %v3927 = vadd.f32 %v3918, %v2581
    %v3928 = vmul.f32 %v3926, %v3927
    %v3929 = vadd.f32 %v3846, %v3928
    %v3930 = vtanh.pop %v3929
    %v3931 = vsub.f32 1.0, %v3926
    %3933 = vrot.lane.b32.xlu0 %v3930, 64
    %v3934 = vpop.permute.xlu0 %3933
    %v3936 = vmul.f32 %v3931, %v3934
    %v3937 = vmul.f32 %v3926, %v3736
    %v3938 = vadd.f32 %v3936, %v3937
    %3940 = vrot.lane.b32.xlu0 %v3938, 64
    %v3941 = vpop.permute.xlu0 %3940
    %3943 = vst.msk [vmem:[%s1005] sm:$0xff] %vm475, %v3941
    %3944 = vst.msk [vmem:[%s1003] sm:$0xff] %vm871, %v3941
    %v3945 = vld [vmem:[%s2065] sm:$0xff]
    %v3946 = vld [vmem:[%s2065 + $0x8] sm:$0xff]
    %v3947 = vsel %vm614, %v3839, 0
    %3949 = vmatprep.subr.mxu0 0.0
    %3950 = vmatpush1.msra.mxu0 0.0
    %3951 = vmatprep.subr.mxu0 0.0
    %3952 = vmatpush1.msra.mxu0 0.0
    %3953 = vmatprep.subr.mxu0 0.0
    %3954 = vmatpush1.msra.mxu0 0.0
    %3955 = vmatprep.subr.mxu0 0.0
    %3956 = vmatpush1.msra.mxu0 0.0
    %3957 = vmatprep.subr.mxu0 0.0
    %3958 = vmatpush1.msra.mxu0 0.0
    %3959 = vmatprep.subr.mxu0 0.0
    %3960 = vmatpush1.msra.mxu0 0.0
    %3961 = vmatprep.subr.mxu0 0.0
    %3962 = vmatpush1.msra.mxu0 0.0
    %3963 = vmatprep.subr.mxu0 0.0
    %3964 = vmatpush1.msra.mxu0 0.0
    %3965 = vmatprep.subr.mxu0 %v2779
    %3966 = vmatpush1.msra.mxu0 %v2778
    %3967 = vmatprep.subr.mxu0 %v2777
    %3968 = vmatpush1.msra.mxu0 %v2776
    %3969 = vmatprep.subr.mxu0 %v2775
    %3970 = vmatpush1.msra.mxu0 %v2774
    %3971 = vmatprep.subr.mxu0 %v2773
    %3972 = vmatpush1.msra.mxu0 %v2772
    %3973 = vmatprep.subr.mxu0 %v2771
    %3974 = vmatpush1.msra.mxu0 %v2770
    %3975 = vmatprep.subr.mxu0 %v2769
    %3976 = vmatpush1.msra.mxu0 %v2768
    %3977 = vmatprep.subr.mxu0 %v2767
    %3978 = vmatpush1.msra.mxu0 %v2766
    %3979 = vmatprep.subr.mxu0 %v2765
    %3980 = vmatpush1.msra.mxu0 %v2764
    %3981 = vmatprep.subr.mxu0 0.0
    %3982 = vmatpush2.msra.mxu0 0.0
    %3983 = vmatprep.subr.mxu0 0.0
    %3984 = vmatpush2.msra.mxu0 0.0
    %3985 = vmatprep.subr.mxu0 0.0
    %3986 = vmatpush2.msra.mxu0 0.0
    %3987 = vmatprep.subr.mxu0 0.0
    %3988 = vmatpush2.msra.mxu0 0.0
    %3989 = vmatprep.subr.mxu0 0.0
    %3990 = vmatpush2.msra.mxu0 0.0
    %3991 = vmatprep.subr.mxu0 0.0
    %3992 = vmatpush2.msra.mxu0 0.0
    %3993 = vmatprep.subr.mxu0 0.0
    %3994 = vmatpush2.msra.mxu0 0.0
    %3995 = vmatprep.subr.mxu0 0.0
    %3996 = vmatpush2.msra.mxu0 0.0
    %3997 = vmatprep.subr.mxu0 0.0
    %3998 = vmatpush2.msra.mxu0 0.0
    %3999 = vmatprep.subr.mxu0 0.0
    %4000 = vmatpush2.msra.mxu0 0.0
    %4001 = vmatprep.subr.mxu0 0.0
    %4002 = vmatpush2.msra.mxu0 0.0
    %4003 = vmatprep.subr.mxu0 0.0
    %4004 = vmatpush2.msra.mxu0 0.0
    %4005 = vmatprep.subr.mxu0 0.0
    %4006 = vmatpush2.msra.mxu0 0.0
    %4007 = vmatprep.subr.mxu0 0.0
    %4008 = vmatpush2.msra.mxu0 0.0
    %4009 = vmatprep.subr.mxu0 0.0
    %4010 = vmatpush2.msra.mxu0 0.0
    %4011 = vmatprep.subr.mxu0 0.0
    %4012 = vmatpush2.msra.mxu0 0.0
    %4013 = vmatprep.mubr.f32.mxu0 0.0
    %4014 = vmatmul.mubr.f32.gmra.mxu0 %v3947
    %v4015 = vpop.f32.mrf.mxu0
    %v4016 = vadd.f32 0.0, %v4015
    %v4017 = vpop.f32.mrf.mxu0
    %v4018 = vadd.f32 0.0, %v4017
    %4019 = vdwg.mxu0
    %v4020 = vadd.f32 %v3945, %v4016
    %v4021 = vxor.u32 %v4020, 2147483648
    %v4022 = vmul.f32 %v4021, 1.442695
    %v4023 = vpow.pop %v4022
    %v4024 = vadd.f32 %v4023, 1.0
    %v4025 = vrcp.pop %v4024
    %v4026 = vmul.f32 1.0, %v4025
    %v4027 = vadd.f32 %v4018, %v2785
    %v4028 = vmul.f32 %v4026, %v4027
    %v4029 = vadd.f32 %v3946, %v4028
    %v4030 = vtanh.pop %v4029
    %v4031 = vsub.f32 1.0, %v4026
    %4033 = vrot.lane.b32.xlu0 %v4030, 64
    %v4034 = vpop.permute.xlu0 %4033
    %v4036 = vmul.f32 %v4031, %v4034
    %v4037 = vmul.f32 %v4026, %v3836
    %v4038 = vadd.f32 %v4036, %v4037
    %4040 = vrot.lane.b32.xlu0 %v4038, 64
    %v4041 = vpop.permute.xlu0 %4040
    %4043 = vst.msk [vmem:[%s1111] sm:$0xff] %vm475, %v4041
    %4044 = vst.msk [vmem:[%s1109] sm:$0xff] %vm871, %v4041
    %4045 = vst.msk [vmem:[%s1109] sm:$0xff] %vm873, %v4038
    %4046 = vst.msk [vmem:[%s1111] sm:$0xff] %vm875, %v4038
    %v4047 = vld [vmem:[%s2170] sm:$0xff]
    %v4048 = vld [vmem:[%s2170 + $0x8] sm:$0xff]
    %v4049 = vsel %vm614, %v3941, 0
    %4051 = vmatprep.subr.mxu0 0.0
    %4052 = vmatpush1.msra.mxu0 0.0
    %4053 = vmatprep.subr.mxu0 0.0
    %4054 = vmatpush1.msra.mxu0 0.0
    %4055 = vmatprep.subr.mxu0 0.0
    %4056 = vmatpush1.msra.mxu0 0.0
    %4057 = vmatprep.subr.mxu0 0.0
    %4058 = vmatpush1.msra.mxu0 0.0
    %4059 = vmatprep.subr.mxu0 0.0
    %4060 = vmatpush1.msra.mxu0 0.0
    %4061 = vmatprep.subr.mxu0 0.0
    %4062 = vmatpush1.msra.mxu0 0.0
    %4063 = vmatprep.subr.mxu0 0.0
    %4064 = vmatpush1.msra.mxu0 0.0
    %4065 = vmatprep.subr.mxu0 0.0
    %4066 = vmatpush1.msra.mxu0 0.0
    %4067 = vmatprep.subr.mxu0 %v2575
    %4068 = vmatpush1.msra.mxu0 %v2574
    %4069 = vmatprep.subr.mxu0 %v2573
    %4070 = vmatpush1.msra.mxu0 %v2572
    %4071 = vmatprep.subr.mxu0 %v2571
    %4072 = vmatpush1.msra.mxu0 %v2570
    %4073 = vmatprep.subr.mxu0 %v2569
    %4074 = vmatpush1.msra.mxu0 %v2568
    %4075 = vmatprep.subr.mxu0 %v2567
    %4076 = vmatpush1.msra.mxu0 %v2566
    %4077 = vmatprep.subr.mxu0 %v2565
    %4078 = vmatpush1.msra.mxu0 %v2564
    %4079 = vmatprep.subr.mxu0 %v2563
    %4080 = vmatpush1.msra.mxu0 %v2562
    %4081 = vmatprep.subr.mxu0 %v2561
    %4082 = vmatpush1.msra.mxu0 %v2560
    %4083 = vmatprep.subr.mxu0 0.0
    %4084 = vmatpush2.msra.mxu0 0.0
    %4085 = vmatprep.subr.mxu0 0.0
    %4086 = vmatpush2.msra.mxu0 0.0
    %4087 = vmatprep.subr.mxu0 0.0
    %4088 = vmatpush2.msra.mxu0 0.0
    %4089 = vmatprep.subr.mxu0 0.0
    %4090 = vmatpush2.msra.mxu0 0.0
    %4091 = vmatprep.subr.mxu0 0.0
    %4092 = vmatpush2.msra.mxu0 0.0
    %4093 = vmatprep.subr.mxu0 0.0
    %4094 = vmatpush2.msra.mxu0 0.0
    %4095 = vmatprep.subr.mxu0 0.0
    %4096 = vmatpush2.msra.mxu0 0.0
    %4097 = vmatprep.subr.mxu0 0.0
    %4098 = vmatpush2.msra.mxu0 0.0
    %4099 = vmatprep.subr.mxu0 0.0
    %4100 = vmatpush2.msra.mxu0 0.0
    %4101 = vmatprep.subr.mxu0 0.0
    %4102 = vmatpush2.msra.mxu0 0.0
    %4103 = vmatprep.subr.mxu0 0.0
    %4104 = vmatpush2.msra.mxu0 0.0
    %4105 = vmatprep.subr.mxu0 0.0
    %4106 = vmatpush2.msra.mxu0 0.0
    %4107 = vmatprep.subr.mxu0 0.0
    %4108 = vmatpush2.msra.mxu0 0.0
    %4109 = vmatprep.subr.mxu0 0.0
    %4110 = vmatpush2.msra.mxu0 0.0
    %4111 = vmatprep.subr.mxu0 0.0
    %4112 = vmatpush2.msra.mxu0 0.0
    %4113 = vmatprep.subr.mxu0 0.0
    %4114 = vmatpush2.msra.mxu0 0.0
    %4115 = vmatprep.mubr.f32.mxu0 0.0
    %4116 = vmatmul.mubr.f32.gmra.mxu0 %v4049
    %v4117 = vpop.f32.mrf.mxu0
    %v4118 = vadd.f32 0.0, %v4117
    %v4119 = vpop.f32.mrf.mxu0
    %v4120 = vadd.f32 0.0, %v4119
    %4121 = vdwg.mxu0
    %v4122 = vadd.f32 %v4047, %v4118
    %v4123 = vxor.u32 %v4122, 2147483648
    %v4124 = vmul.f32 %v4123, 1.442695
    %v4125 = vpow.pop %v4124
    %v4126 = vadd.f32 %v4125, 1.0
    %v4127 = vrcp.pop %v4126
    %v4128 = vmul.f32 1.0, %v4127
    %v4129 = vadd.f32 %v4120, %v2581
    %v4130 = vmul.f32 %v4128, %v4129
    %v4131 = vadd.f32 %v4048, %v4130
    %v4132 = vtanh.pop %v4131
    %v4133 = vsub.f32 1.0, %v4128
    %4135 = vrot.lane.b32.xlu0 %v4132, 64
    %v4136 = vpop.permute.xlu0 %4135
    %v4138 = vmul.f32 %v4133, %v4136
    %v4139 = vmul.f32 %v4128, %v3938
    %v4140 = vadd.f32 %v4138, %v4139
    %4142 = vrot.lane.b32.xlu0 %v4140, 64
    %v4143 = vpop.permute.xlu0 %4142
    %4145 = vst.msk [vmem:[%s2269] sm:$0xff] %vm475, %v4143
    %4146 = vst.msk [vmem:[#allocation4] sm:$0xff] %vm871, %v4143
    %v4147 = vld [vmem:[%s2275] sm:$0xff]
    %v4148 = vld [vmem:[%s2275 + $0x8] sm:$0xff]
    %v4149 = vsel %vm614, %v4041, 0
    %4151 = vmatprep.subr.mxu0 0.0
    %4152 = vmatpush1.msra.mxu0 0.0
    %4153 = vmatprep.subr.mxu0 0.0
    %4154 = vmatpush1.msra.mxu0 0.0
    %4155 = vmatprep.subr.mxu0 0.0
    %4156 = vmatpush1.msra.mxu0 0.0
    %4157 = vmatprep.subr.mxu0 0.0
    %4158 = vmatpush1.msra.mxu0 0.0
    %4159 = vmatprep.subr.mxu0 0.0
    %4160 = vmatpush1.msra.mxu0 0.0
    %4161 = vmatprep.subr.mxu0 0.0
    %4162 = vmatpush1.msra.mxu0 0.0
    %4163 = vmatprep.subr.mxu0 0.0
    %4164 = vmatpush1.msra.mxu0 0.0
    %4165 = vmatprep.subr.mxu0 0.0
    %4166 = vmatpush1.msra.mxu0 0.0
    %4167 = vmatprep.subr.mxu0 %v2779
    %4168 = vmatpush1.msra.mxu0 %v2778
    %4169 = vmatprep.subr.mxu0 %v2777
    %4170 = vmatpush1.msra.mxu0 %v2776
    %4171 = vmatprep.subr.mxu0 %v2775
    %4172 = vmatpush1.msra.mxu0 %v2774
    %4173 = vmatprep.subr.mxu0 %v2773
    %4174 = vmatpush1.msra.mxu0 %v2772
    %4175 = vmatprep.subr.mxu0 %v2771
    %4176 = vmatpush1.msra.mxu0 %v2770
    %4177 = vmatprep.subr.mxu0 %v2769
    %4178 = vmatpush1.msra.mxu0 %v2768
    %4179 = vmatprep.subr.mxu0 %v2767
    %4180 = vmatpush1.msra.mxu0 %v2766
    %4181 = vmatprep.subr.mxu0 %v2765
    %4182 = vmatpush1.msra.mxu0 %v2764
    %4183 = vmatprep.subr.mxu0 0.0
    %4184 = vmatpush2.msra.mxu0 0.0
    %4185 = vmatprep.subr.mxu0 0.0
    %4186 = vmatpush2.msra.mxu0 0.0
    %4187 = vmatprep.subr.mxu0 0.0
    %4188 = vmatpush2.msra.mxu0 0.0
    %4189 = vmatprep.subr.mxu0 0.0
    %4190 = vmatpush2.msra.mxu0 0.0
    %4191 = vmatprep.subr.mxu0 0.0
    %4192 = vmatpush2.msra.mxu0 0.0
    %4193 = vmatprep.subr.mxu0 0.0
    %4194 = vmatpush2.msra.mxu0 0.0
    %4195 = vmatprep.subr.mxu0 0.0
    %4196 = vmatpush2.msra.mxu0 0.0
    %4197 = vmatprep.subr.mxu0 0.0
    %4198 = vmatpush2.msra.mxu0 0.0
    %4199 = vmatprep.subr.mxu0 0.0
    %4200 = vmatpush2.msra.mxu0 0.0
    %4201 = vmatprep.subr.mxu0 0.0
    %4202 = vmatpush2.msra.mxu0 0.0
    %4203 = vmatprep.subr.mxu0 0.0
    %4204 = vmatpush2.msra.mxu0 0.0
    %4205 = vmatprep.subr.mxu0 0.0
    %4206 = vmatpush2.msra.mxu0 0.0
    %4207 = vmatprep.subr.mxu0 0.0
    %4208 = vmatpush2.msra.mxu0 0.0
    %4209 = vmatprep.subr.mxu0 0.0
    %4210 = vmatpush2.msra.mxu0 0.0
    %4211 = vmatprep.subr.mxu0 0.0
    %4212 = vmatpush2.msra.mxu0 0.0
    %4213 = vmatprep.subr.mxu0 0.0
    %4214 = vmatpush2.msra.mxu0 0.0
    %4215 = vmatprep.mubr.f32.mxu0 0.0
    %4216 = vmatmul.mubr.f32.gmra.mxu0 %v4149
    %v4217 = vpop.f32.mrf.mxu0
    %v4218 = vadd.f32 0.0, %v4217
    %v4219 = vpop.f32.mrf.mxu0
    %v4220 = vadd.f32 0.0, %v4219
    %4221 = vdwg.mxu0
    %v4222 = vadd.f32 %v4147, %v4218
    %v4223 = vxor.u32 %v4222, 2147483648
    %v4224 = vmul.f32 %v4223, 1.442695
    %v4225 = vpow.pop %v4224
    %v4226 = vadd.f32 %v4225, 1.0
    %v4227 = vrcp.pop %v4226
    %v4228 = vmul.f32 1.0, %v4227
    %v4229 = vadd.f32 %v4220, %v2785
    %v4230 = vmul.f32 %v4228, %v4229
    %v4231 = vadd.f32 %v4148, %v4230
    %v4232 = vtanh.pop %v4231
    %v4233 = vsub.f32 1.0, %v4228
    %4235 = vrot.lane.b32.xlu0 %v4232, 64
    %v4236 = vpop.permute.xlu0 %4235
    %v4238 = vmul.f32 %v4233, %v4236
    %v4239 = vmul.f32 %v4228, %v4038
    %v4240 = vadd.f32 %v4238, %v4239
    %4242 = vrot.lane.b32.xlu0 %v4240, 64
    %v4243 = vpop.permute.xlu0 %4242
    %4245 = vst.msk [vmem:[%s2374] sm:$0xff] %vm475, %v4243
    %4246 = vst.msk [vmem:[#allocation5] sm:$0xff] %vm871, %v4243
    %4247 = vst.msk [vmem:[#allocation5] sm:$0xff] %vm873, %v4240
    %4248 = vst.msk [vmem:[%s2374] sm:$0xff] %vm875, %v4240
    %v4249 = vld [vmem:[#allocation5] sm:$0xff]
    %v4250 = vld [vmem:[#allocation5 + $0x8] sm:$0xff]
    %v4251 = vld [vmem:[#allocation5 + $0x10] sm:$0xff]
    %v4252 = vld [vmem:[#allocation5 + $0x18] sm:$0xff]
    %v4253 = vld [vmem:[#allocation5 + $0x20] sm:$0xff]
    %v4254 = vld [vmem:[#allocation5 + $0x28] sm:$0xff]
    %v4255 = vld [vmem:[#allocation5 + $0x30] sm:$0xff]
    %v4256 = vld [vmem:[#allocation5 + $0x38] sm:$0xff]
    %v4257 = vld [vmem:[%s39] sm:$0xff]
    %v4258 = vld [vmem:[%s39 + $0x8] sm:$0xff]
    %v4259 = vld [vmem:[%s39 + $0x10] sm:$0xff]
    %v4260 = vld [vmem:[%s39 + $0x18] sm:$0xff]
    %v4261 = vld [vmem:[%s39 + $0x20] sm:$0xff]
    %v4262 = vld [vmem:[%s39 + $0x28] sm:$0xff]
    %v4263 = vld [vmem:[%s39 + $0x30] sm:$0xff]
    %v4264 = vld [vmem:[%s39 + $0x38] sm:$0xff]
    %v4265 = vld [vmem:[%s39 + $0x40] sm:$0xff]
    %v4266 = vld [vmem:[%s39 + $0x48] sm:$0xff]
    %v4267 = vld [vmem:[%s39 + $0x50] sm:$0xff]
    %v4268 = vld [vmem:[%s39 + $0x58] sm:$0xff]
    %v4269 = vld [vmem:[%s39 + $0x60] sm:$0xff]
    %v4270 = vld [vmem:[%s39 + $0x68] sm:$0xff]
    %v4271 = vld [vmem:[%s39 + $0x70] sm:$0xff]
    %v4272 = vld [vmem:[%s39 + $0x78] sm:$0xff]
    %v4273 = vld [vmem:[%s39 + $0x80] sm:$0xff]
    %v4274 = vld [vmem:[%s39 + $0x88] sm:$0xff]
    %v4275 = vld [vmem:[%s39 + $0x90] sm:$0xff]
    %v4276 = vld [vmem:[%s39 + $0x98] sm:$0xff]
    %v4277 = vld [vmem:[%s39 + $0xa0] sm:$0xff]
    %v4278 = vld [vmem:[%s39 + $0xa8] sm:$0xff]
    %v4279 = vld [vmem:[%s39 + $0xb0] sm:$0xff]
    %v4280 = vld [vmem:[%s39 + $0xb8] sm:$0xff]
    %v4281 = vld [vmem:[%s39 + $0xc0] sm:$0xff]
    %v4282 = vld [vmem:[%s39 + $0xc8] sm:$0xff]
    %v4283 = vld [vmem:[%s39 + $0xd0] sm:$0xff]
    %v4284 = vld [vmem:[%s39 + $0xd8] sm:$0xff]
    %v4285 = vld [vmem:[%s39 + $0xe0] sm:$0xff]
    %v4286 = vld [vmem:[%s39 + $0xe8] sm:$0xff]
    %v4287 = vld [vmem:[%s39 + $0xf0] sm:$0xff]
    %v4288 = vld [vmem:[%s39 + $0xf8] sm:$0xff]
    %v4289 = vld [vmem:[#allocation19] sm:$0x3]
    %v4291 = vlaneseq
    %v4292 = vshrl.u32 %v4291, 7
    %v4293 = vsub.s32 0, %v4292
    %v4294 = vrot.slane %v4289, %v4293
    %v4295 = vlaneseq
    %v4296 = vshrl.u32 %v4295, 7
    %v4297 = vsub.s32 1, %v4296
    %v4298 = vrot.slane %v4289, %v4297
    %4301 = vmatprep.subr.mxu0 %v4288
    %4302 = vmatpush1.msra.mxu0 %v4287
    %4303 = vmatprep.subr.mxu0 %v4286
    %4304 = vmatpush1.msra.mxu0 %v4285
    %4305 = vmatprep.subr.mxu0 %v4284
    %4306 = vmatpush1.msra.mxu0 %v4283
    %4307 = vmatprep.subr.mxu0 %v4282
    %4308 = vmatpush1.msra.mxu0 %v4281
    %4309 = vmatprep.subr.mxu0 %v4280
    %4310 = vmatpush1.msra.mxu0 %v4279
    %4311 = vmatprep.subr.mxu0 %v4278
    %4312 = vmatpush1.msra.mxu0 %v4277
    %4313 = vmatprep.subr.mxu0 %v4276
    %4314 = vmatpush1.msra.mxu0 %v4275
    %4315 = vmatprep.subr.mxu0 %v4274
    %4316 = vmatpush1.msra.mxu0 %v4273
    %4317 = vmatprep.subr.mxu0 %v4272
    %4318 = vmatpush1.msra.mxu0 %v4271
    %4319 = vmatprep.subr.mxu0 %v4270
    %4320 = vmatpush1.msra.mxu0 %v4269
    %4321 = vmatprep.subr.mxu0 %v4268
    %4322 = vmatpush1.msra.mxu0 %v4267
    %4323 = vmatprep.subr.mxu0 %v4266
    %4324 = vmatpush1.msra.mxu0 %v4265
    %4325 = vmatprep.subr.mxu0 %v4264
    %4326 = vmatpush1.msra.mxu0 %v4263
    %4327 = vmatprep.subr.mxu0 %v4262
    %4328 = vmatpush1.msra.mxu0 %v4261
    %4329 = vmatprep.subr.mxu0 %v4260
    %4330 = vmatpush1.msra.mxu0 %v4259
    %4331 = vmatprep.subr.mxu0 %v4258
    %4332 = vmatpush1.msra.mxu0 %v4257
    %4333 = vmatprep.subr.mxu0 0.0
    %4334 = vmatpush2.msra.mxu0 0.0
    %4335 = vmatprep.subr.mxu0 0.0
    %4336 = vmatpush2.msra.mxu0 0.0
    %4337 = vmatprep.subr.mxu0 0.0
    %4338 = vmatpush2.msra.mxu0 0.0
    %4339 = vmatprep.subr.mxu0 0.0
    %4340 = vmatpush2.msra.mxu0 0.0
    %4341 = vmatprep.subr.mxu0 0.0
    %4342 = vmatpush2.msra.mxu0 0.0
    %4343 = vmatprep.subr.mxu0 0.0
    %4344 = vmatpush2.msra.mxu0 0.0
    %4345 = vmatprep.subr.mxu0 0.0
    %4346 = vmatpush2.msra.mxu0 0.0
    %4347 = vmatprep.subr.mxu0 0.0
    %4348 = vmatpush2.msra.mxu0 0.0
    %4349 = vmatprep.subr.mxu0 0.0
    %4350 = vmatpush2.msra.mxu0 0.0
    %4351 = vmatprep.subr.mxu0 0.0
    %4352 = vmatpush2.msra.mxu0 0.0
    %4353 = vmatprep.subr.mxu0 0.0
    %4354 = vmatpush2.msra.mxu0 0.0
    %4355 = vmatprep.subr.mxu0 0.0
    %4356 = vmatpush2.msra.mxu0 0.0
    %4357 = vmatprep.subr.mxu0 0.0
    %4358 = vmatpush2.msra.mxu0 0.0
    %4359 = vmatprep.subr.mxu0 0.0
    %4360 = vmatpush2.msra.mxu0 0.0
    %4361 = vmatprep.subr.mxu0 0.0
    %4362 = vmatpush2.msra.mxu0 0.0
    %4363 = vmatprep.subr.mxu0 0.0
    %4364 = vmatpush2.msra.mxu0 0.0
    %4365 = vmatprep.mubr.f32.mxu0 0.0
    %4366 = vmatmul.mubr.f32.gmra.mxu0 %v4249
    %v4367 = vpop.f32.mrf.mxu0
    %v4368 = vadd.f32 %v4294, %v4367
    %v4369 = vpop.f32.mrf.mxu0
    %v4370 = vadd.f32 %v4298, %v4369
    %4371 = vmatprep.mubr.f32.mxu0 0.0
    %4372 = vmatmul.mubr.f32.gmra.mxu0 %v4250
    %v4373 = vpop.f32.mrf.mxu0
    %v4374 = vadd.f32 %v4294, %v4373
    %v4375 = vpop.f32.mrf.mxu0
    %v4376 = vadd.f32 %v4298, %v4375
    %4377 = vmatprep.mubr.f32.mxu0 0.0
    %4378 = vmatmul.mubr.f32.gmra.mxu0 %v4251
    %v4379 = vpop.f32.mrf.mxu0
    %v4380 = vadd.f32 %v4294, %v4379
    %v4381 = vpop.f32.mrf.mxu0
    %v4382 = vadd.f32 %v4298, %v4381
    %4383 = vmatprep.mubr.f32.mxu0 0.0
    %4384 = vmatmul.mubr.f32.gmra.mxu0 %v4252
    %v4385 = vpop.f32.mrf.mxu0
    %v4386 = vadd.f32 %v4294, %v4385
    %v4387 = vpop.f32.mrf.mxu0
    %v4388 = vadd.f32 %v4298, %v4387
    %4389 = vmatprep.mubr.f32.mxu0 0.0
    %4390 = vmatmul.mubr.f32.gmra.mxu0 %v4253
    %v4391 = vpop.f32.mrf.mxu0
    %v4392 = vadd.f32 %v4294, %v4391
    %v4393 = vpop.f32.mrf.mxu0
    %v4394 = vadd.f32 %v4298, %v4393
    %4395 = vmatprep.mubr.f32.mxu0 0.0
    %4396 = vmatmul.mubr.f32.gmra.mxu0 %v4254
    %v4397 = vpop.f32.mrf.mxu0
    %v4398 = vadd.f32 %v4294, %v4397
    %v4399 = vpop.f32.mrf.mxu0
    %v4400 = vadd.f32 %v4298, %v4399
    %4401 = vmatprep.mubr.f32.mxu0 0.0
    %4402 = vmatmul.mubr.f32.gmra.mxu0 %v4255
    %v4403 = vpop.f32.mrf.mxu0
    %v4404 = vadd.f32 %v4294, %v4403
    %v4405 = vpop.f32.mrf.mxu0
    %v4406 = vadd.f32 %v4298, %v4405
    %4407 = vmatprep.mubr.f32.mxu0 0.0
    %4408 = vmatmul.mubr.f32.gmra.mxu0 %v4256
    %v4409 = vpop.f32.mrf.mxu0
    %v4410 = vadd.f32 %v4294, %v4409
    %v4411 = vpop.f32.mrf.mxu0
    %v4412 = vadd.f32 %v4298, %v4411
    %4413 = vdwg.mxu0
    %4414 = vst [vmem:[#allocation3] sm:$0xff] %v4368
    %4415 = vst.msk [vmem:[#allocation3 + $0x8] sm:$0xff] %vm614, %v4370
    %4416 = vst [vmem:[#allocation3 + $0x10] sm:$0xff] %v4374
    %4417 = vst.msk [vmem:[#allocation3 + $0x18] sm:$0xff] %vm614, %v4376
    %4418 = vst [vmem:[#allocation3 + $0x20] sm:$0xff] %v4380
    %4419 = vst.msk [vmem:[#allocation3 + $0x28] sm:$0xff] %vm614, %v4382
    %4420 = vst [vmem:[#allocation3 + $0x30] sm:$0xff] %v4386
    %4421 = vst.msk [vmem:[#allocation3 + $0x38] sm:$0xff] %vm614, %v4388
    %4422 = vst [vmem:[#allocation3 + $0x40] sm:$0xff] %v4392
    %4423 = vst.msk [vmem:[#allocation3 + $0x48] sm:$0xff] %vm614, %v4394
    %4424 = vst [vmem:[#allocation3 + $0x50] sm:$0xff] %v4398
    %4425 = vst.msk [vmem:[#allocation3 + $0x58] sm:$0xff] %vm614, %v4400
    %4426 = vst [vmem:[#allocation3 + $0x60] sm:$0xff] %v4404
    %4427 = vst.msk [vmem:[#allocation3 + $0x68] sm:$0xff] %vm614, %v4406
    %4428 = vst [vmem:[#allocation3 + $0x70] sm:$0xff] %v4410
    %4429 = vst.msk [vmem:[#allocation3 + $0x78] sm:$0xff] %vm614, %v4412
    %v4430 = vld [vmem:[%s41] sm:$0xff]
    %v4431 = vld [vmem:[%s41 + $0x8] sm:$0xff]
    %v4432 = vld [vmem:[%s41 + $0x10] sm:$0xff]
    %v4433 = vld [vmem:[%s41 + $0x18] sm:$0xff]
    %v4434 = vld [vmem:[%s41 + $0x20] sm:$0xff]
    %v4435 = vld [vmem:[%s41 + $0x28] sm:$0xff]
    %v4436 = vld [vmem:[%s41 + $0x30] sm:$0xff]
    %v4437 = vld [vmem:[%s41 + $0x38] sm:$0xff]
    %v4438 = vld [vmem:[%s41 + $0x40] sm:$0xff]
    %v4439 = vld [vmem:[%s41 + $0x48] sm:$0xff]
    %v4440 = vld [vmem:[%s41 + $0x50] sm:$0xff]
    %v4441 = vld [vmem:[%s41 + $0x58] sm:$0xff]
    %v4442 = vld [vmem:[%s41 + $0x60] sm:$0xff]
    %v4443 = vld [vmem:[%s41 + $0x68] sm:$0xff]
    %v4444 = vld [vmem:[%s41 + $0x70] sm:$0xff]
    %v4445 = vld [vmem:[%s41 + $0x78] sm:$0xff]
    %v4446 = vld [vmem:[#allocation20] sm:$0x1]
    %v4448 = vlaneseq
    %v4449 = vshrl.u32 %v4448, 7
    %v4450 = vsub.s32 0, %v4449
    %v4451 = vrot.slane %v4446, %v4450
    %v4453 = vld [vmem:[#allocation3] sm:$0xff]
    %v4454 = vld [vmem:[#allocation3 + $0x8] sm:$0xff]
    %v4455 = vxor.u32 %v4453, 2147483648
    %v4456 = vmul.f32 %v4455, 1.442695
    %v4457 = vpow.pop %v4456
    %v4458 = vadd.f32 %v4457, 1.0
    %v4459 = vrcp.pop %v4458
    %v4460 = vmul.f32 1.0, %v4459
    %v4461 = vmul.f32 %v4460, %v4451
    %v4462 = vadd.f32 %v4454, %v4461
    %v4463 = vtanh.pop %v4462
    %v4464 = vsub.f32 1.0, %v4460
    %4466 = vrot.lane.b32.xlu0 %v4463, 64
    %v4467 = vpop.permute.xlu0 %4466
    %v4469 = vmul.f32 %v4464, %v4467
    %4471 = vrot.lane.b32.xlu0 %v4469, 64
    %v4472 = vpop.permute.xlu0 %4471
    %4474 = vst.msk [vmem:[#allocation5] sm:$0xff] %vm475, %v4472
    %4475 = vst.msk [vmem:[#allocation5 + $0x38] sm:$0xff] %vm871, %v4472
    %v4476 = vld [vmem:[%s1010] sm:$0xff]
    %v4477 = vld [vmem:[%s1010 + $0x8] sm:$0xff]
    %v4478 = vsel %vm614, %v4472, 0
    %4480 = vmatprep.subr.mxu0 0.0
    %4481 = vmatpush1.msra.mxu0 0.0
    %4482 = vmatprep.subr.mxu0 0.0
    %4483 = vmatpush1.msra.mxu0 0.0
    %4484 = vmatprep.subr.mxu0 0.0
    %4485 = vmatpush1.msra.mxu0 0.0
    %4486 = vmatprep.subr.mxu0 0.0
    %4487 = vmatpush1.msra.mxu0 0.0
    %4488 = vmatprep.subr.mxu0 0.0
    %4489 = vmatpush1.msra.mxu0 0.0
    %4490 = vmatprep.subr.mxu0 0.0
    %4491 = vmatpush1.msra.mxu0 0.0
    %4492 = vmatprep.subr.mxu0 0.0
    %4493 = vmatpush1.msra.mxu0 0.0
    %4494 = vmatprep.subr.mxu0 0.0
    %4495 = vmatpush1.msra.mxu0 0.0
    %4496 = vmatprep.subr.mxu0 %v4445
    %4497 = vmatpush1.msra.mxu0 %v4444
    %4498 = vmatprep.subr.mxu0 %v4443
    %4499 = vmatpush1.msra.mxu0 %v4442
    %4500 = vmatprep.subr.mxu0 %v4441
    %4501 = vmatpush1.msra.mxu0 %v4440
    %4502 = vmatprep.subr.mxu0 %v4439
    %4503 = vmatpush1.msra.mxu0 %v4438
    %4504 = vmatprep.subr.mxu0 %v4437
    %4505 = vmatpush1.msra.mxu0 %v4436
    %4506 = vmatprep.subr.mxu0 %v4435
    %4507 = vmatpush1.msra.mxu0 %v4434
    %4508 = vmatprep.subr.mxu0 %v4433
    %4509 = vmatpush1.msra.mxu0 %v4432
    %4510 = vmatprep.subr.mxu0 %v4431
    %4511 = vmatpush1.msra.mxu0 %v4430
    %4512 = vmatprep.subr.mxu0 0.0
    %4513 = vmatpush2.msra.mxu0 0.0
    %4514 = vmatprep.subr.mxu0 0.0
    %4515 = vmatpush2.msra.mxu0 0.0
    %4516 = vmatprep.subr.mxu0 0.0
    %4517 = vmatpush2.msra.mxu0 0.0
    %4518 = vmatprep.subr.mxu0 0.0
    %4519 = vmatpush2.msra.mxu0 0.0
    %4520 = vmatprep.subr.mxu0 0.0
    %4521 = vmatpush2.msra.mxu0 0.0
    %4522 = vmatprep.subr.mxu0 0.0
    %4523 = vmatpush2.msra.mxu0 0.0
    %4524 = vmatprep.subr.mxu0 0.0
    %4525 = vmatpush2.msra.mxu0 0.0
    %4526 = vmatprep.subr.mxu0 0.0
    %4527 = vmatpush2.msra.mxu0 0.0
    %4528 = vmatprep.subr.mxu0 0.0
    %4529 = vmatpush2.msra.mxu0 0.0
    %4530 = vmatprep.subr.mxu0 0.0
    %4531 = vmatpush2.msra.mxu0 0.0
    %4532 = vmatprep.subr.mxu0 0.0
    %4533 = vmatpush2.msra.mxu0 0.0
    %4534 = vmatprep.subr.mxu0 0.0
    %4535 = vmatpush2.msra.mxu0 0.0
    %4536 = vmatprep.subr.mxu0 0.0
    %4537 = vmatpush2.msra.mxu0 0.0
    %4538 = vmatprep.subr.mxu0 0.0
    %4539 = vmatpush2.msra.mxu0 0.0
    %4540 = vmatprep.subr.mxu0 0.0
    %4541 = vmatpush2.msra.mxu0 0.0
    %4542 = vmatprep.subr.mxu0 0.0
    %4543 = vmatpush2.msra.mxu0 0.0
    %4544 = vmatprep.mubr.f32.mxu0 0.0
    %4545 = vmatmul.mubr.f32.gmra.mxu0 %v4478
    %v4546 = vpop.f32.mrf.mxu0
    %v4547 = vadd.f32 0.0, %v4546
    %v4548 = vpop.f32.mrf.mxu0
    %v4549 = vadd.f32 0.0, %v4548
    %4550 = vdwg.mxu0
    %v4551 = vadd.f32 %v4476, %v4547
    %v4552 = vxor.u32 %v4551, 2147483648
    %v4553 = vmul.f32 %v4552, 1.442695
    %v4554 = vpow.pop %v4553
    %v4555 = vadd.f32 %v4554, 1.0
    %v4556 = vrcp.pop %v4555
    %v4557 = vmul.f32 1.0, %v4556
    %v4558 = vadd.f32 %v4549, %v4451
    %v4559 = vmul.f32 %v4557, %v4558
    %v4560 = vadd.f32 %v4477, %v4559
    %v4561 = vtanh.pop %v4560
    %v4562 = vsub.f32 1.0, %v4557
    %4564 = vrot.lane.b32.xlu0 %v4561, 64
    %v4565 = vpop.permute.xlu0 %4564
    %v4567 = vmul.f32 %v4562, %v4565
    %v4568 = vmul.f32 %v4557, %v4469
    %v4569 = vadd.f32 %v4567, %v4568
    %4571 = vrot.lane.b32.xlu0 %v4569, 64
    %v4572 = vpop.permute.xlu0 %4571
    %4574 = vst.msk [vmem:[%s1109] sm:$0xff] %vm475, %v4572
    %4575 = vst.msk [vmem:[%s1111] sm:$0xff] %vm871, %v4572
    %v4576 = vld [vmem:[%s1223] sm:$0xff]
    %v4577 = vld [vmem:[%s1223 + $0x8] sm:$0xff]
    %v4578 = vsel %vm614, %v4572, 0
    %4580 = vmatprep.subr.mxu0 0.0
    %4581 = vmatpush1.msra.mxu0 0.0
    %4582 = vmatprep.subr.mxu0 0.0
    %4583 = vmatpush1.msra.mxu0 0.0
    %4584 = vmatprep.subr.mxu0 0.0
    %4585 = vmatpush1.msra.mxu0 0.0
    %4586 = vmatprep.subr.mxu0 0.0
    %4587 = vmatpush1.msra.mxu0 0.0
    %4588 = vmatprep.subr.mxu0 0.0
    %4589 = vmatpush1.msra.mxu0 0.0
    %4590 = vmatprep.subr.mxu0 0.0
    %4591 = vmatpush1.msra.mxu0 0.0
    %4592 = vmatprep.subr.mxu0 0.0
    %4593 = vmatpush1.msra.mxu0 0.0
    %4594 = vmatprep.subr.mxu0 0.0
    %4595 = vmatpush1.msra.mxu0 0.0
    %4596 = vmatprep.subr.mxu0 %v4445
    %4597 = vmatpush1.msra.mxu0 %v4444
    %4598 = vmatprep.subr.mxu0 %v4443
    %4599 = vmatpush1.msra.mxu0 %v4442
    %4600 = vmatprep.subr.mxu0 %v4441
    %4601 = vmatpush1.msra.mxu0 %v4440
    %4602 = vmatprep.subr.mxu0 %v4439
    %4603 = vmatpush1.msra.mxu0 %v4438
    %4604 = vmatprep.subr.mxu0 %v4437
    %4605 = vmatpush1.msra.mxu0 %v4436
    %4606 = vmatprep.subr.mxu0 %v4435
    %4607 = vmatpush1.msra.mxu0 %v4434
    %4608 = vmatprep.subr.mxu0 %v4433
    %4609 = vmatpush1.msra.mxu0 %v4432
    %4610 = vmatprep.subr.mxu0 %v4431
    %4611 = vmatpush1.msra.mxu0 %v4430
    %4612 = vmatprep.subr.mxu0 0.0
    %4613 = vmatpush2.msra.mxu0 0.0
    %4614 = vmatprep.subr.mxu0 0.0
    %4615 = vmatpush2.msra.mxu0 0.0
    %4616 = vmatprep.subr.mxu0 0.0
    %4617 = vmatpush2.msra.mxu0 0.0
    %4618 = vmatprep.subr.mxu0 0.0
    %4619 = vmatpush2.msra.mxu0 0.0
    %4620 = vmatprep.subr.mxu0 0.0
    %4621 = vmatpush2.msra.mxu0 0.0
    %4622 = vmatprep.subr.mxu0 0.0
    %4623 = vmatpush2.msra.mxu0 0.0
    %4624 = vmatprep.subr.mxu0 0.0
    %4625 = vmatpush2.msra.mxu0 0.0
    %4626 = vmatprep.subr.mxu0 0.0
    %4627 = vmatpush2.msra.mxu0 0.0
    %4628 = vmatprep.subr.mxu0 0.0
    %4629 = vmatpush2.msra.mxu0 0.0
    %4630 = vmatprep.subr.mxu0 0.0
    %4631 = vmatpush2.msra.mxu0 0.0
    %4632 = vmatprep.subr.mxu0 0.0
    %4633 = vmatpush2.msra.mxu0 0.0
    %4634 = vmatprep.subr.mxu0 0.0
    %4635 = vmatpush2.msra.mxu0 0.0
    %4636 = vmatprep.subr.mxu0 0.0
    %4637 = vmatpush2.msra.mxu0 0.0
    %4638 = vmatprep.subr.mxu0 0.0
    %4639 = vmatpush2.msra.mxu0 0.0
    %4640 = vmatprep.subr.mxu0 0.0
    %4641 = vmatpush2.msra.mxu0 0.0
    %4642 = vmatprep.subr.mxu0 0.0
    %4643 = vmatpush2.msra.mxu0 0.0
    %4644 = vmatprep.mubr.f32.mxu0 0.0
    %4645 = vmatmul.mubr.f32.gmra.mxu0 %v4578
    %v4646 = vpop.f32.mrf.mxu0
    %v4647 = vadd.f32 0.0, %v4646
    %v4648 = vpop.f32.mrf.mxu0
    %v4649 = vadd.f32 0.0, %v4648
    %4650 = vdwg.mxu0
    %v4651 = vadd.f32 %v4576, %v4647
    %v4652 = vxor.u32 %v4651, 2147483648
    %v4653 = vmul.f32 %v4652, 1.442695
    %v4654 = vpow.pop %v4653
    %v4655 = vadd.f32 %v4654, 1.0
    %v4656 = vrcp.pop %v4655
    %v4657 = vmul.f32 1.0, %v4656
    %v4658 = vadd.f32 %v4649, %v4451
    %v4659 = vmul.f32 %v4657, %v4658
    %v4660 = vadd.f32 %v4577, %v4659
    %v4661 = vtanh.pop %v4660
    %v4662 = vsub.f32 1.0, %v4657
    %4664 = vrot.lane.b32.xlu0 %v4661, 64
    %v4665 = vpop.permute.xlu0 %4664
    %v4667 = vmul.f32 %v4662, %v4665
    %v4668 = vmul.f32 %v4657, %v4569
    %v4669 = vadd.f32 %v4667, %v4668
    %4671 = vrot.lane.b32.xlu0 %v4669, 64
    %v4672 = vpop.permute.xlu0 %4671
    %4674 = vst.msk [vmem:[%s1322] sm:$0xff] %vm475, %v4672
    %4675 = vst.msk [vmem:[%s1324] sm:$0xff] %vm871, %v4672
    %v4676 = vld [vmem:[%s1436] sm:$0xff]
    %v4677 = vld [vmem:[%s1436 + $0x8] sm:$0xff]
    %v4678 = vsel %vm614, %v4672, 0
    %4680 = vmatprep.subr.mxu0 0.0
    %4681 = vmatpush1.msra.mxu0 0.0
    %4682 = vmatprep.subr.mxu0 0.0
    %4683 = vmatpush1.msra.mxu0 0.0
    %4684 = vmatprep.subr.mxu0 0.0
    %4685 = vmatpush1.msra.mxu0 0.0
    %4686 = vmatprep.subr.mxu0 0.0
    %4687 = vmatpush1.msra.mxu0 0.0
    %4688 = vmatprep.subr.mxu0 0.0
    %4689 = vmatpush1.msra.mxu0 0.0
    %4690 = vmatprep.subr.mxu0 0.0
    %4691 = vmatpush1.msra.mxu0 0.0
    %4692 = vmatprep.subr.mxu0 0.0
    %4693 = vmatpush1.msra.mxu0 0.0
    %4694 = vmatprep.subr.mxu0 0.0
    %4695 = vmatpush1.msra.mxu0 0.0
    %4696 = vmatprep.subr.mxu0 %v4445
    %4697 = vmatpush1.msra.mxu0 %v4444
    %4698 = vmatprep.subr.mxu0 %v4443
    %4699 = vmatpush1.msra.mxu0 %v4442
    %4700 = vmatprep.subr.mxu0 %v4441
    %4701 = vmatpush1.msra.mxu0 %v4440
    %4702 = vmatprep.subr.mxu0 %v4439
    %4703 = vmatpush1.msra.mxu0 %v4438
    %4704 = vmatprep.subr.mxu0 %v4437
    %4705 = vmatpush1.msra.mxu0 %v4436
    %4706 = vmatprep.subr.mxu0 %v4435
    %4707 = vmatpush1.msra.mxu0 %v4434
    %4708 = vmatprep.subr.mxu0 %v4433
    %4709 = vmatpush1.msra.mxu0 %v4432
    %4710 = vmatprep.subr.mxu0 %v4431
    %4711 = vmatpush1.msra.mxu0 %v4430
    %4712 = vmatprep.subr.mxu0 0.0
    %4713 = vmatpush2.msra.mxu0 0.0
    %4714 = vmatprep.subr.mxu0 0.0
    %4715 = vmatpush2.msra.mxu0 0.0
    %4716 = vmatprep.subr.mxu0 0.0
    %4717 = vmatpush2.msra.mxu0 0.0
    %4718 = vmatprep.subr.mxu0 0.0
    %4719 = vmatpush2.msra.mxu0 0.0
    %4720 = vmatprep.subr.mxu0 0.0
    %4721 = vmatpush2.msra.mxu0 0.0
    %4722 = vmatprep.subr.mxu0 0.0
    %4723 = vmatpush2.msra.mxu0 0.0
    %4724 = vmatprep.subr.mxu0 0.0
    %4725 = vmatpush2.msra.mxu0 0.0
    %4726 = vmatprep.subr.mxu0 0.0
    %4727 = vmatpush2.msra.mxu0 0.0
    %4728 = vmatprep.subr.mxu0 0.0
    %4729 = vmatpush2.msra.mxu0 0.0
    %4730 = vmatprep.subr.mxu0 0.0
    %4731 = vmatpush2.msra.mxu0 0.0
    %4732 = vmatprep.subr.mxu0 0.0
    %4733 = vmatpush2.msra.mxu0 0.0
    %4734 = vmatprep.subr.mxu0 0.0
    %4735 = vmatpush2.msra.mxu0 0.0
    %4736 = vmatprep.subr.mxu0 0.0
    %4737 = vmatpush2.msra.mxu0 0.0
    %4738 = vmatprep.subr.mxu0 0.0
    %4739 = vmatpush2.msra.mxu0 0.0
    %4740 = vmatprep.subr.mxu0 0.0
    %4741 = vmatpush2.msra.mxu0 0.0
    %4742 = vmatprep.subr.mxu0 0.0
    %4743 = vmatpush2.msra.mxu0 0.0
    %4744 = vmatprep.mubr.f32.mxu0 0.0
    %4745 = vmatmul.mubr.f32.gmra.mxu0 %v4678
    %v4746 = vpop.f32.mrf.mxu0
    %v4747 = vadd.f32 0.0, %v4746
    %v4748 = vpop.f32.mrf.mxu0
    %v4749 = vadd.f32 0.0, %v4748
    %4750 = vdwg.mxu0
    %v4751 = vadd.f32 %v4676, %v4747
    %v4752 = vxor.u32 %v4751, 2147483648
    %v4753 = vmul.f32 %v4752, 1.442695
    %v4754 = vpow.pop %v4753
    %v4755 = vadd.f32 %v4754, 1.0
    %v4756 = vrcp.pop %v4755
    %v4757 = vmul.f32 1.0, %v4756
    %v4758 = vadd.f32 %v4749, %v4451
    %v4759 = vmul.f32 %v4757, %v4758
    %v4760 = vadd.f32 %v4677, %v4759
    %v4761 = vtanh.pop %v4760
    %v4762 = vsub.f32 1.0, %v4757
    %4764 = vrot.lane.b32.xlu0 %v4761, 64
    %v4765 = vpop.permute.xlu0 %4764
    %v4767 = vmul.f32 %v4762, %v4765
    %v4768 = vmul.f32 %v4757, %v4669
    %v4769 = vadd.f32 %v4767, %v4768
    %4771 = vrot.lane.b32.xlu0 %v4769, 64
    %v4772 = vpop.permute.xlu0 %4771
    %4774 = vst.msk [vmem:[%s1535] sm:$0xff] %vm475, %v4772
    %4775 = vst.msk [vmem:[%s1537] sm:$0xff] %vm871, %v4772
    %v4776 = vld [vmem:[%s1647] sm:$0xff]
    %v4777 = vld [vmem:[%s1647 + $0x8] sm:$0xff]
    %v4778 = vsel %vm614, %v4772, 0
    %4780 = vmatprep.subr.mxu0 0.0
    %4781 = vmatpush1.msra.mxu0 0.0
    %4782 = vmatprep.subr.mxu0 0.0
    %4783 = vmatpush1.msra.mxu0 0.0
    %4784 = vmatprep.subr.mxu0 0.0
    %4785 = vmatpush1.msra.mxu0 0.0
    %4786 = vmatprep.subr.mxu0 0.0
    %4787 = vmatpush1.msra.mxu0 0.0
    %4788 = vmatprep.subr.mxu0 0.0
    %4789 = vmatpush1.msra.mxu0 0.0
    %4790 = vmatprep.subr.mxu0 0.0
    %4791 = vmatpush1.msra.mxu0 0.0
    %4792 = vmatprep.subr.mxu0 0.0
    %4793 = vmatpush1.msra.mxu0 0.0
    %4794 = vmatprep.subr.mxu0 0.0
    %4795 = vmatpush1.msra.mxu0 0.0
    %4796 = vmatprep.subr.mxu0 %v4445
    %4797 = vmatpush1.msra.mxu0 %v4444
    %4798 = vmatprep.subr.mxu0 %v4443
    %4799 = vmatpush1.msra.mxu0 %v4442
    %4800 = vmatprep.subr.mxu0 %v4441
    %4801 = vmatpush1.msra.mxu0 %v4440
    %4802 = vmatprep.subr.mxu0 %v4439
    %4803 = vmatpush1.msra.mxu0 %v4438
    %4804 = vmatprep.subr.mxu0 %v4437
    %4805 = vmatpush1.msra.mxu0 %v4436
    %4806 = vmatprep.subr.mxu0 %v4435
    %4807 = vmatpush1.msra.mxu0 %v4434
    %4808 = vmatprep.subr.mxu0 %v4433
    %4809 = vmatpush1.msra.mxu0 %v4432
    %4810 = vmatprep.subr.mxu0 %v4431
    %4811 = vmatpush1.msra.mxu0 %v4430
    %4812 = vmatprep.subr.mxu0 0.0
    %4813 = vmatpush2.msra.mxu0 0.0
    %4814 = vmatprep.subr.mxu0 0.0
    %4815 = vmatpush2.msra.mxu0 0.0
    %4816 = vmatprep.subr.mxu0 0.0
    %4817 = vmatpush2.msra.mxu0 0.0
    %4818 = vmatprep.subr.mxu0 0.0
    %4819 = vmatpush2.msra.mxu0 0.0
    %4820 = vmatprep.subr.mxu0 0.0
    %4821 = vmatpush2.msra.mxu0 0.0
    %4822 = vmatprep.subr.mxu0 0.0
    %4823 = vmatpush2.msra.mxu0 0.0
    %4824 = vmatprep.subr.mxu0 0.0
    %4825 = vmatpush2.msra.mxu0 0.0
    %4826 = vmatprep.subr.mxu0 0.0
    %4827 = vmatpush2.msra.mxu0 0.0
    %4828 = vmatprep.subr.mxu0 0.0
    %4829 = vmatpush2.msra.mxu0 0.0
    %4830 = vmatprep.subr.mxu0 0.0
    %4831 = vmatpush2.msra.mxu0 0.0
    %4832 = vmatprep.subr.mxu0 0.0
    %4833 = vmatpush2.msra.mxu0 0.0
    %4834 = vmatprep.subr.mxu0 0.0
    %4835 = vmatpush2.msra.mxu0 0.0
    %4836 = vmatprep.subr.mxu0 0.0
    %4837 = vmatpush2.msra.mxu0 0.0
    %4838 = vmatprep.subr.mxu0 0.0
    %4839 = vmatpush2.msra.mxu0 0.0
    %4840 = vmatprep.subr.mxu0 0.0
    %4841 = vmatpush2.msra.mxu0 0.0
    %4842 = vmatprep.subr.mxu0 0.0
    %4843 = vmatpush2.msra.mxu0 0.0
    %4844 = vmatprep.mubr.f32.mxu0 0.0
    %4845 = vmatmul.mubr.f32.gmra.mxu0 %v4778
    %v4846 = vpop.f32.mrf.mxu0
    %v4847 = vadd.f32 0.0, %v4846
    %v4848 = vpop.f32.mrf.mxu0
    %v4849 = vadd.f32 0.0, %v4848
    %4850 = vdwg.mxu0
    %v4851 = vadd.f32 %v4776, %v4847
    %v4852 = vxor.u32 %v4851, 2147483648
    %v4853 = vmul.f32 %v4852, 1.442695
    %v4854 = vpow.pop %v4853
    %v4855 = vadd.f32 %v4854, 1.0
    %v4856 = vrcp.pop %v4855
    %v4857 = vmul.f32 1.0, %v4856
    %v4858 = vadd.f32 %v4849, %v4451
    %v4859 = vmul.f32 %v4857, %v4858
    %v4860 = vadd.f32 %v4777, %v4859
    %v4861 = vtanh.pop %v4860
    %v4862 = vsub.f32 1.0, %v4857
    %4864 = vrot.lane.b32.xlu0 %v4861, 64
    %v4865 = vpop.permute.xlu0 %4864
    %v4867 = vmul.f32 %v4862, %v4865
    %v4868 = vmul.f32 %v4857, %v4769
    %v4869 = vadd.f32 %v4867, %v4868
    %4871 = vrot.lane.b32.xlu0 %v4869, 64
    %v4872 = vpop.permute.xlu0 %4871
    %4874 = vst.msk [vmem:[%s1537] sm:$0xff] %vm475, %v4872
    %4875 = vst.msk [vmem:[%s1535] sm:$0xff] %vm871, %v4872
    %v4876 = vld [vmem:[%s1856] sm:$0xff]
    %v4877 = vld [vmem:[%s1856 + $0x8] sm:$0xff]
    %v4878 = vsel %vm614, %v4872, 0
    %4880 = vmatprep.subr.mxu0 0.0
    %4881 = vmatpush1.msra.mxu0 0.0
    %4882 = vmatprep.subr.mxu0 0.0
    %4883 = vmatpush1.msra.mxu0 0.0
    %4884 = vmatprep.subr.mxu0 0.0
    %4885 = vmatpush1.msra.mxu0 0.0
    %4886 = vmatprep.subr.mxu0 0.0
    %4887 = vmatpush1.msra.mxu0 0.0
    %4888 = vmatprep.subr.mxu0 0.0
    %4889 = vmatpush1.msra.mxu0 0.0
    %4890 = vmatprep.subr.mxu0 0.0
    %4891 = vmatpush1.msra.mxu0 0.0
    %4892 = vmatprep.subr.mxu0 0.0
    %4893 = vmatpush1.msra.mxu0 0.0
    %4894 = vmatprep.subr.mxu0 0.0
    %4895 = vmatpush1.msra.mxu0 0.0
    %4896 = vmatprep.subr.mxu0 %v4445
    %4897 = vmatpush1.msra.mxu0 %v4444
    %4898 = vmatprep.subr.mxu0 %v4443
    %4899 = vmatpush1.msra.mxu0 %v4442
    %4900 = vmatprep.subr.mxu0 %v4441
    %4901 = vmatpush1.msra.mxu0 %v4440
    %4902 = vmatprep.subr.mxu0 %v4439
    %4903 = vmatpush1.msra.mxu0 %v4438
    %4904 = vmatprep.subr.mxu0 %v4437
    %4905 = vmatpush1.msra.mxu0 %v4436
    %4906 = vmatprep.subr.mxu0 %v4435
    %4907 = vmatpush1.msra.mxu0 %v4434
    %4908 = vmatprep.subr.mxu0 %v4433
    %4909 = vmatpush1.msra.mxu0 %v4432
    %4910 = vmatprep.subr.mxu0 %v4431
    %4911 = vmatpush1.msra.mxu0 %v4430
    %4912 = vmatprep.subr.mxu0 0.0
    %4913 = vmatpush2.msra.mxu0 0.0
    %4914 = vmatprep.subr.mxu0 0.0
    %4915 = vmatpush2.msra.mxu0 0.0
    %4916 = vmatprep.subr.mxu0 0.0
    %4917 = vmatpush2.msra.mxu0 0.0
    %4918 = vmatprep.subr.mxu0 0.0
    %4919 = vmatpush2.msra.mxu0 0.0
    %4920 = vmatprep.subr.mxu0 0.0
    %4921 = vmatpush2.msra.mxu0 0.0
    %4922 = vmatprep.subr.mxu0 0.0
    %4923 = vmatpush2.msra.mxu0 0.0
    %4924 = vmatprep.subr.mxu0 0.0
    %4925 = vmatpush2.msra.mxu0 0.0
    %4926 = vmatprep.subr.mxu0 0.0
    %4927 = vmatpush2.msra.mxu0 0.0
    %4928 = vmatprep.subr.mxu0 0.0
    %4929 = vmatpush2.msra.mxu0 0.0
    %4930 = vmatprep.subr.mxu0 0.0
    %4931 = vmatpush2.msra.mxu0 0.0
    %4932 = vmatprep.subr.mxu0 0.0
    %4933 = vmatpush2.msra.mxu0 0.0
    %4934 = vmatprep.subr.mxu0 0.0
    %4935 = vmatpush2.msra.mxu0 0.0
    %4936 = vmatprep.subr.mxu0 0.0
    %4937 = vmatpush2.msra.mxu0 0.0
    %4938 = vmatprep.subr.mxu0 0.0
    %4939 = vmatpush2.msra.mxu0 0.0
    %4940 = vmatprep.subr.mxu0 0.0
    %4941 = vmatpush2.msra.mxu0 0.0
    %4942 = vmatprep.subr.mxu0 0.0
    %4943 = vmatpush2.msra.mxu0 0.0
    %4944 = vmatprep.mubr.f32.mxu0 0.0
    %4945 = vmatmul.mubr.f32.gmra.mxu0 %v4878
    %v4946 = vpop.f32.mrf.mxu0
    %v4947 = vadd.f32 0.0, %v4946
    %v4948 = vpop.f32.mrf.mxu0
    %v4949 = vadd.f32 0.0, %v4948
    %4950 = vdwg.mxu0
    %v4951 = vadd.f32 %v4876, %v4947
    %v4952 = vxor.u32 %v4951, 2147483648
    %v4953 = vmul.f32 %v4952, 1.442695
    %v4954 = vpow.pop %v4953
    %v4955 = vadd.f32 %v4954, 1.0
    %v4956 = vrcp.pop %v4955
    %v4957 = vmul.f32 1.0, %v4956
    %v4958 = vadd.f32 %v4949, %v4451
    %v4959 = vmul.f32 %v4957, %v4958
    %v4960 = vadd.f32 %v4877, %v4959
    %v4961 = vtanh.pop %v4960
    %v4962 = vsub.f32 1.0, %v4957
    %4964 = vrot.lane.b32.xlu0 %v4961, 64
    %v4965 = vpop.permute.xlu0 %4964
    %v4967 = vmul.f32 %v4962, %v4965
    %v4968 = vmul.f32 %v4957, %v4869
    %v4969 = vadd.f32 %v4967, %v4968
    %4971 = vrot.lane.b32.xlu0 %v4969, 64
    %v4972 = vpop.permute.xlu0 %4971
    %4974 = vst.msk [vmem:[%s1324] sm:$0xff] %vm475, %v4972
    %4975 = vst.msk [vmem:[%s1322] sm:$0xff] %vm871, %v4972
    %v4976 = vld [vmem:[%s2065] sm:$0xff]
    %v4977 = vld [vmem:[%s2065 + $0x8] sm:$0xff]
    %v4978 = vsel %vm614, %v4972, 0
    %4980 = vmatprep.subr.mxu0 0.0
    %4981 = vmatpush1.msra.mxu0 0.0
    %4982 = vmatprep.subr.mxu0 0.0
    %4983 = vmatpush1.msra.mxu0 0.0
    %4984 = vmatprep.subr.mxu0 0.0
    %4985 = vmatpush1.msra.mxu0 0.0
    %4986 = vmatprep.subr.mxu0 0.0
    %4987 = vmatpush1.msra.mxu0 0.0
    %4988 = vmatprep.subr.mxu0 0.0
    %4989 = vmatpush1.msra.mxu0 0.0
    %4990 = vmatprep.subr.mxu0 0.0
    %4991 = vmatpush1.msra.mxu0 0.0
    %4992 = vmatprep.subr.mxu0 0.0
    %4993 = vmatpush1.msra.mxu0 0.0
    %4994 = vmatprep.subr.mxu0 0.0
    %4995 = vmatpush1.msra.mxu0 0.0
    %4996 = vmatprep.subr.mxu0 %v4445
    %4997 = vmatpush1.msra.mxu0 %v4444
    %4998 = vmatprep.subr.mxu0 %v4443
    %4999 = vmatpush1.msra.mxu0 %v4442
    %5000 = vmatprep.subr.mxu0 %v4441
    %5001 = vmatpush1.msra.mxu0 %v4440
    %5002 = vmatprep.subr.mxu0 %v4439
    %5003 = vmatpush1.msra.mxu0 %v4438
    %5004 = vmatprep.subr.mxu0 %v4437
    %5005 = vmatpush1.msra.mxu0 %v4436
    %5006 = vmatprep.subr.mxu0 %v4435
    %5007 = vmatpush1.msra.mxu0 %v4434
    %5008 = vmatprep.subr.mxu0 %v4433
    %5009 = vmatpush1.msra.mxu0 %v4432
    %5010 = vmatprep.subr.mxu0 %v4431
    %5011 = vmatpush1.msra.mxu0 %v4430
    %5012 = vmatprep.subr.mxu0 0.0
    %5013 = vmatpush2.msra.mxu0 0.0
    %5014 = vmatprep.subr.mxu0 0.0
    %5015 = vmatpush2.msra.mxu0 0.0
    %5016 = vmatprep.subr.mxu0 0.0
    %5017 = vmatpush2.msra.mxu0 0.0
    %5018 = vmatprep.subr.mxu0 0.0
    %5019 = vmatpush2.msra.mxu0 0.0
    %5020 = vmatprep.subr.mxu0 0.0
    %5021 = vmatpush2.msra.mxu0 0.0
    %5022 = vmatprep.subr.mxu0 0.0
    %5023 = vmatpush2.msra.mxu0 0.0
    %5024 = vmatprep.subr.mxu0 0.0
    %5025 = vmatpush2.msra.mxu0 0.0
    %5026 = vmatprep.subr.mxu0 0.0
    %5027 = vmatpush2.msra.mxu0 0.0
    %5028 = vmatprep.subr.mxu0 0.0
    %5029 = vmatpush2.msra.mxu0 0.0
    %5030 = vmatprep.subr.mxu0 0.0
    %5031 = vmatpush2.msra.mxu0 0.0
    %5032 = vmatprep.subr.mxu0 0.0
    %5033 = vmatpush2.msra.mxu0 0.0
    %5034 = vmatprep.subr.mxu0 0.0
    %5035 = vmatpush2.msra.mxu0 0.0
    %5036 = vmatprep.subr.mxu0 0.0
    %5037 = vmatpush2.msra.mxu0 0.0
    %5038 = vmatprep.subr.mxu0 0.0
    %5039 = vmatpush2.msra.mxu0 0.0
    %5040 = vmatprep.subr.mxu0 0.0
    %5041 = vmatpush2.msra.mxu0 0.0
    %5042 = vmatprep.subr.mxu0 0.0
    %5043 = vmatpush2.msra.mxu0 0.0
    %5044 = vmatprep.mubr.f32.mxu0 0.0
    %5045 = vmatmul.mubr.f32.gmra.mxu0 %v4978
    %v5046 = vpop.f32.mrf.mxu0
    %v5047 = vadd.f32 0.0, %v5046
    %v5048 = vpop.f32.mrf.mxu0
    %v5049 = vadd.f32 0.0, %v5048
    %5050 = vdwg.mxu0
    %v5051 = vadd.f32 %v4976, %v5047
    %v5052 = vxor.u32 %v5051, 2147483648
    %v5053 = vmul.f32 %v5052, 1.442695
    %v5054 = vpow.pop %v5053
    %v5055 = vadd.f32 %v5054, 1.0
    %v5056 = vrcp.pop %v5055
    %v5057 = vmul.f32 1.0, %v5056
    %v5058 = vadd.f32 %v5049, %v4451
    %v5059 = vmul.f32 %v5057, %v5058
    %v5060 = vadd.f32 %v4977, %v5059
    %v5061 = vtanh.pop %v5060
    %v5062 = vsub.f32 1.0, %v5057
    %5064 = vrot.lane.b32.xlu0 %v5061, 64
    %v5065 = vpop.permute.xlu0 %5064
    %v5067 = vmul.f32 %v5062, %v5065
    %v5068 = vmul.f32 %v5057, %v4969
    %v5069 = vadd.f32 %v5067, %v5068
    %5071 = vrot.lane.b32.xlu0 %v5069, 64
    %v5072 = vpop.permute.xlu0 %5071
    %5074 = vst.msk [vmem:[%s1111] sm:$0xff] %vm475, %v5072
    %5075 = vst.msk [vmem:[%s1109] sm:$0xff] %vm871, %v5072
    %v5076 = vld [vmem:[%s2275] sm:$0xff]
    %v5077 = vld [vmem:[%s2275 + $0x8] sm:$0xff]
    %v5078 = vsel %vm614, %v5072, 0
    %5080 = vmatprep.subr.mxu0 0.0
    %5081 = vmatpush1.msra.mxu0 0.0
    %5082 = vmatprep.subr.mxu0 0.0
    %5083 = vmatpush1.msra.mxu0 0.0
    %5084 = vmatprep.subr.mxu0 0.0
    %5085 = vmatpush1.msra.mxu0 0.0
    %5086 = vmatprep.subr.mxu0 0.0
    %5087 = vmatpush1.msra.mxu0 0.0
    %5088 = vmatprep.subr.mxu0 0.0
    %5089 = vmatpush1.msra.mxu0 0.0
    %5090 = vmatprep.subr.mxu0 0.0
    %5091 = vmatpush1.msra.mxu0 0.0
    %5092 = vmatprep.subr.mxu0 0.0
    %5093 = vmatpush1.msra.mxu0 0.0
    %5094 = vmatprep.subr.mxu0 0.0
    %5095 = vmatpush1.msra.mxu0 0.0
    %5096 = vmatprep.subr.mxu0 %v4445
    %5097 = vmatpush1.msra.mxu0 %v4444
    %5098 = vmatprep.subr.mxu0 %v4443
    %5099 = vmatpush1.msra.mxu0 %v4442
    %5100 = vmatprep.subr.mxu0 %v4441
    %5101 = vmatpush1.msra.mxu0 %v4440
    %5102 = vmatprep.subr.mxu0 %v4439
    %5103 = vmatpush1.msra.mxu0 %v4438
    %5104 = vmatprep.subr.mxu0 %v4437
    %5105 = vmatpush1.msra.mxu0 %v4436
    %5106 = vmatprep.subr.mxu0 %v4435
    %5107 = vmatpush1.msra.mxu0 %v4434
    %5108 = vmatprep.subr.mxu0 %v4433
    %5109 = vmatpush1.msra.mxu0 %v4432
    %5110 = vmatprep.subr.mxu0 %v4431
    %5111 = vmatpush1.msra.mxu0 %v4430
    %5112 = vmatprep.subr.mxu0 0.0
    %5113 = vmatpush2.msra.mxu0 0.0
    %5114 = vmatprep.subr.mxu0 0.0
    %5115 = vmatpush2.msra.mxu0 0.0
    %5116 = vmatprep.subr.mxu0 0.0
    %5117 = vmatpush2.msra.mxu0 0.0
    %5118 = vmatprep.subr.mxu0 0.0
    %5119 = vmatpush2.msra.mxu0 0.0
    %5120 = vmatprep.subr.mxu0 0.0
    %5121 = vmatpush2.msra.mxu0 0.0
    %5122 = vmatprep.subr.mxu0 0.0
    %5123 = vmatpush2.msra.mxu0 0.0
    %5124 = vmatprep.subr.mxu0 0.0
    %5125 = vmatpush2.msra.mxu0 0.0
    %5126 = vmatprep.subr.mxu0 0.0
    %5127 = vmatpush2.msra.mxu0 0.0
    %5128 = vmatprep.subr.mxu0 0.0
    %5129 = vmatpush2.msra.mxu0 0.0
    %5130 = vmatprep.subr.mxu0 0.0
    %5131 = vmatpush2.msra.mxu0 0.0
    %5132 = vmatprep.subr.mxu0 0.0
    %5133 = vmatpush2.msra.mxu0 0.0
    %5134 = vmatprep.subr.mxu0 0.0
    %5135 = vmatpush2.msra.mxu0 0.0
    %5136 = vmatprep.subr.mxu0 0.0
    %5137 = vmatpush2.msra.mxu0 0.0
    %5138 = vmatprep.subr.mxu0 0.0
    %5139 = vmatpush2.msra.mxu0 0.0
    %5140 = vmatprep.subr.mxu0 0.0
    %5141 = vmatpush2.msra.mxu0 0.0
    %5142 = vmatprep.subr.mxu0 0.0
    %5143 = vmatpush2.msra.mxu0 0.0
    %5144 = vmatprep.mubr.f32.mxu0 0.0
    %5145 = vmatmul.mubr.f32.gmra.mxu0 %v5078
    %v5146 = vpop.f32.mrf.mxu0
    %v5147 = vadd.f32 0.0, %v5146
    %v5148 = vpop.f32.mrf.mxu0
    %v5149 = vadd.f32 0.0, %v5148
    %5150 = vdwg.mxu0
    %v5151 = vadd.f32 %v5076, %v5147
    %v5152 = vxor.u32 %v5151, 2147483648
    %v5153 = vmul.f32 %v5152, 1.442695
    %v5154 = vpow.pop %v5153
    %v5155 = vadd.f32 %v5154, 1.0
    %v5156 = vrcp.pop %v5155
    %v5157 = vmul.f32 1.0, %v5156
    %v5158 = vadd.f32 %v5149, %v4451
    %v5159 = vmul.f32 %v5157, %v5158
    %v5160 = vadd.f32 %v5077, %v5159
    %v5161 = vtanh.pop %v5160
    %v5162 = vsub.f32 1.0, %v5157
    %5164 = vrot.lane.b32.xlu0 %v5161, 64
    %v5165 = vpop.permute.xlu0 %5164
    %v5167 = vmul.f32 %v5162, %v5165
    %v5168 = vmul.f32 %v5157, %v5069
    %v5169 = vadd.f32 %v5167, %v5168
    %5171 = vrot.lane.b32.xlu0 %v5169, 64
    %v5172 = vpop.permute.xlu0 %5171
    %5174 = vst.msk [vmem:[%s2374] sm:$0xff] %vm475, %v5172
    %5175 = vst.msk [vmem:[#allocation5] sm:$0xff] %vm871, %v5172
    %v5176 = vld [vmem:[#allocation4] sm:$0xff]
    %v5177 = vld [vmem:[#allocation4 + $0x8] sm:$0xff]
    %v5178 = vld [vmem:[#allocation4 + $0x10] sm:$0xff]
    %v5179 = vld [vmem:[#allocation4 + $0x18] sm:$0xff]
    %v5180 = vld [vmem:[#allocation4 + $0x20] sm:$0xff]
    %v5181 = vld [vmem:[#allocation4 + $0x28] sm:$0xff]
    %v5182 = vld [vmem:[#allocation4 + $0x30] sm:$0xff]
    %v5183 = vld [vmem:[#allocation4 + $0x38] sm:$0xff]
    %v5184 = vld [vmem:[#allocation5] sm:$0xff]
    %v5185 = vld [vmem:[#allocation5 + $0x8] sm:$0xff]
    %v5186 = vld [vmem:[#allocation5 + $0x10] sm:$0xff]
    %v5187 = vld [vmem:[#allocation5 + $0x18] sm:$0xff]
    %v5188 = vld [vmem:[#allocation5 + $0x20] sm:$0xff]
    %v5189 = vld [vmem:[#allocation5 + $0x28] sm:$0xff]
    %v5190 = vld [vmem:[#allocation5 + $0x30] sm:$0xff]
    %v5191 = vld [vmem:[#allocation5 + $0x38] sm:$0xff]
    %v5192 = vld [vmem:[%s53] sm:$0xff]
    %v5193 = vld [vmem:[%s53 + $0x8] sm:$0xff]
    %v5194 = vld [vmem:[%s53 + $0x10] sm:$0xff]
    %v5195 = vld [vmem:[%s53 + $0x18] sm:$0xff]
    %v5196 = vld [vmem:[%s53 + $0x20] sm:$0xff]
    %v5197 = vld [vmem:[%s53 + $0x28] sm:$0xff]
    %v5198 = vld [vmem:[%s53 + $0x30] sm:$0xff]
    %v5199 = vld [vmem:[%s53 + $0x38] sm:$0xff]
    %v5200 = vld [vmem:[#allocation25] sm:$0x1]
    %v5202 = vlaneseq
    %v5203 = vshrl.u32 %v5202, 7
    %v5204 = vsub.s32 0, %v5203
    %v5205 = vrot.slane %v5200, %v5204
    %v5208 = vsel %vm614, %v5176, 0
    %v5211 = vsel %vm614, %v5177, 0
    %v5214 = vsel %vm614, %v5178, 0
    %v5217 = vsel %vm614, %v5179, 0
    %v5220 = vsel %vm614, %v5180, 0
    %v5223 = vsel %vm614, %v5181, 0
    %v5226 = vsel %vm614, %v5182, 0
    %v5229 = vsel %vm614, %v5183, 0
    %5231 = vmatprep.subr.mxu0 0.0
    %5232 = vmatpush1.msra.mxu0 0.0
    %5233 = vmatprep.subr.mxu0 0.0
    %5234 = vmatpush1.msra.mxu0 0.0
    %5235 = vmatprep.subr.mxu0 0.0
    %5236 = vmatpush1.msra.mxu0 0.0
    %5237 = vmatprep.subr.mxu0 0.0
    %5238 = vmatpush1.msra.mxu0 0.0
    %5239 = vmatprep.subr.mxu0 0.0
    %5240 = vmatpush1.msra.mxu0 0.0
    %5241 = vmatprep.subr.mxu0 0.0
    %5242 = vmatpush1.msra.mxu0 0.0
    %5243 = vmatprep.subr.mxu0 0.0
    %5244 = vmatpush1.msra.mxu0 0.0
    %5245 = vmatprep.subr.mxu0 0.0
    %5246 = vmatpush1.msra.mxu0 0.0
    %5247 = vmatprep.subr.mxu0 0.0
    %5248 = vmatpush1.msra.mxu0 %v5199
    %5249 = vmatprep.subr.mxu0 0.0
    %5250 = vmatpush1.msra.mxu0 %v5198
    %5251 = vmatprep.subr.mxu0 0.0
    %5252 = vmatpush1.msra.mxu0 %v5197
    %5253 = vmatprep.subr.mxu0 0.0
    %5254 = vmatpush1.msra.mxu0 %v5196
    %5255 = vmatprep.subr.mxu0 0.0
    %5256 = vmatpush1.msra.mxu0 %v5195
    %5257 = vmatprep.subr.mxu0 0.0
    %5258 = vmatpush1.msra.mxu0 %v5194
    %5259 = vmatprep.subr.mxu0 0.0
    %5260 = vmatpush1.msra.mxu0 %v5193
    %5261 = vmatprep.subr.mxu0 0.0
    %5262 = vmatpush1.msra.mxu0 %v5192
    %5263 = vmatprep.subr.mxu0 0.0
    %5264 = vmatpush2.msra.mxu0 0.0
    %5265 = vmatprep.subr.mxu0 0.0
    %5266 = vmatpush2.msra.mxu0 0.0
    %5267 = vmatprep.subr.mxu0 0.0
    %5268 = vmatpush2.msra.mxu0 0.0
    %5269 = vmatprep.subr.mxu0 0.0
    %5270 = vmatpush2.msra.mxu0 0.0
    %5271 = vmatprep.subr.mxu0 0.0
    %5272 = vmatpush2.msra.mxu0 0.0
    %5273 = vmatprep.subr.mxu0 0.0
    %5274 = vmatpush2.msra.mxu0 0.0
    %5275 = vmatprep.subr.mxu0 0.0
    %5276 = vmatpush2.msra.mxu0 0.0
    %5277 = vmatprep.subr.mxu0 0.0
    %5278 = vmatpush2.msra.mxu0 0.0
    %5279 = vmatprep.subr.mxu0 0.0
    %5280 = vmatpush2.msra.mxu0 0.0
    %5281 = vmatprep.subr.mxu0 0.0
    %5282 = vmatpush2.msra.mxu0 0.0
    %5283 = vmatprep.subr.mxu0 0.0
    %5284 = vmatpush2.msra.mxu0 0.0
    %5285 = vmatprep.subr.mxu0 0.0
    %5286 = vmatpush2.msra.mxu0 0.0
    %5287 = vmatprep.subr.mxu0 0.0
    %5288 = vmatpush2.msra.mxu0 0.0
    %5289 = vmatprep.subr.mxu0 0.0
    %5290 = vmatpush2.msra.mxu0 0.0
    %5291 = vmatprep.subr.mxu0 0.0
    %5292 = vmatpush2.msra.mxu0 0.0
    %5293 = vmatprep.subr.mxu0 0.0
    %5294 = vmatpush2.msra.mxu0 0.0
    %5295 = vmatprep.mubr.f32.mxu0 0.0
    %5296 = vmatmul.mubr.f32.gmra.mxu0 %v5208
    %v5297 = vpop.f32.mrf.mxu0
    %v5298 = vadd.f32 %v5205, %v5297
    %v5299 = vpop.f32.mrf.mxu0
    %5300 = vmatprep.mubr.f32.mxu0 0.0
    %5301 = vmatmul.mubr.f32.gmra.mxu0 %v5211
    %v5302 = vpop.f32.mrf.mxu0
    %v5303 = vadd.f32 %v5205, %v5302
    %v5304 = vpop.f32.mrf.mxu0
    %5305 = vmatprep.mubr.f32.mxu0 0.0
    %5306 = vmatmul.mubr.f32.gmra.mxu0 %v5214
    %v5307 = vpop.f32.mrf.mxu0
    %v5308 = vadd.f32 %v5205, %v5307
    %v5309 = vpop.f32.mrf.mxu0
    %5310 = vmatprep.mubr.f32.mxu0 0.0
    %5311 = vmatmul.mubr.f32.gmra.mxu0 %v5217
    %v5312 = vpop.f32.mrf.mxu0
    %v5313 = vadd.f32 %v5205, %v5312
    %v5314 = vpop.f32.mrf.mxu0
    %5315 = vmatprep.mubr.f32.mxu0 0.0
    %5316 = vmatmul.mubr.f32.gmra.mxu0 %v5220
    %v5317 = vpop.f32.mrf.mxu0
    %v5318 = vadd.f32 %v5205, %v5317
    %v5319 = vpop.f32.mrf.mxu0
    %5320 = vmatprep.mubr.f32.mxu0 0.0
    %5321 = vmatmul.mubr.f32.gmra.mxu0 %v5223
    %v5322 = vpop.f32.mrf.mxu0
    %v5323 = vadd.f32 %v5205, %v5322
    %v5324 = vpop.f32.mrf.mxu0
    %5325 = vmatprep.mubr.f32.mxu0 0.0
    %5326 = vmatmul.mubr.f32.gmra.mxu0 %v5226
    %v5327 = vpop.f32.mrf.mxu0
    %v5328 = vadd.f32 %v5205, %v5327
    %v5329 = vpop.f32.mrf.mxu0
    %5330 = vmatprep.mubr.f32.mxu0 0.0
    %5331 = vmatmul.mubr.f32.gmra.mxu0 %v5229
    %v5332 = vpop.f32.mrf.mxu0
    %v5333 = vadd.f32 %v5205, %v5332
    %v5334 = vpop.f32.mrf.mxu0
    %5335 = vdwg.mxu0
    %v5336 = vld [vmem:[%s57] sm:$0xff]
    %v5337 = vld [vmem:[%s57 + $0x8] sm:$0xff]
    %v5338 = vld [vmem:[%s57 + $0x10] sm:$0xff]
    %v5339 = vld [vmem:[%s57 + $0x18] sm:$0xff]
    %v5340 = vld [vmem:[%s57 + $0x20] sm:$0xff]
    %v5341 = vld [vmem:[%s57 + $0x28] sm:$0xff]
    %v5342 = vld [vmem:[%s57 + $0x30] sm:$0xff]
    %v5343 = vld [vmem:[%s57 + $0x38] sm:$0xff]
    %v5344 = vld [vmem:[#allocation26] sm:$0x1]
    %v5346 = vlaneseq
    %v5347 = vshrl.u32 %v5346, 7
    %v5348 = vsub.s32 0, %v5347
    %v5349 = vrot.slane %v5344, %v5348
    %v5352 = vsel %vm614, %v5184, 0
    %v5355 = vsel %vm614, %v5185, 0
    %v5358 = vsel %vm614, %v5186, 0
    %v5361 = vsel %vm614, %v5187, 0
    %v5364 = vsel %vm614, %v5188, 0
    %v5367 = vsel %vm614, %v5189, 0
    %v5370 = vsel %vm614, %v5190, 0
    %v5373 = vsel %vm614, %v5191, 0
    %5375 = vmatprep.subr.mxu0 0.0
    %5376 = vmatpush1.msra.mxu0 0.0
    %5377 = vmatprep.subr.mxu0 0.0
    %5378 = vmatpush1.msra.mxu0 0.0
    %5379 = vmatprep.subr.mxu0 0.0
    %5380 = vmatpush1.msra.mxu0 0.0
    %5381 = vmatprep.subr.mxu0 0.0
    %5382 = vmatpush1.msra.mxu0 0.0
    %5383 = vmatprep.subr.mxu0 0.0
    %5384 = vmatpush1.msra.mxu0 0.0
    %5385 = vmatprep.subr.mxu0 0.0
    %5386 = vmatpush1.msra.mxu0 0.0
    %5387 = vmatprep.subr.mxu0 0.0
    %5388 = vmatpush1.msra.mxu0 0.0
    %5389 = vmatprep.subr.mxu0 0.0
    %5390 = vmatpush1.msra.mxu0 0.0
    %5391 = vmatprep.subr.mxu0 0.0
    %5392 = vmatpush1.msra.mxu0 %v5343
    %5393 = vmatprep.subr.mxu0 0.0
    %5394 = vmatpush1.msra.mxu0 %v5342
    %5395 = vmatprep.subr.mxu0 0.0
    %5396 = vmatpush1.msra.mxu0 %v5341
    %5397 = vmatprep.subr.mxu0 0.0
    %5398 = vmatpush1.msra.mxu0 %v5340
    %5399 = vmatprep.subr.mxu0 0.0
    %5400 = vmatpush1.msra.mxu0 %v5339
    %5401 = vmatprep.subr.mxu0 0.0
    %5402 = vmatpush1.msra.mxu0 %v5338
    %5403 = vmatprep.subr.mxu0 0.0
    %5404 = vmatpush1.msra.mxu0 %v5337
    %5405 = vmatprep.subr.mxu0 0.0
    %5406 = vmatpush1.msra.mxu0 %v5336
    %5407 = vmatprep.subr.mxu0 0.0
    %5408 = vmatpush2.msra.mxu0 0.0
    %5409 = vmatprep.subr.mxu0 0.0
    %5410 = vmatpush2.msra.mxu0 0.0
    %5411 = vmatprep.subr.mxu0 0.0
    %5412 = vmatpush2.msra.mxu0 0.0
    %5413 = vmatprep.subr.mxu0 0.0
    %5414 = vmatpush2.msra.mxu0 0.0
    %5415 = vmatprep.subr.mxu0 0.0
    %5416 = vmatpush2.msra.mxu0 0.0
    %5417 = vmatprep.subr.mxu0 0.0
    %5418 = vmatpush2.msra.mxu0 0.0
    %5419 = vmatprep.subr.mxu0 0.0
    %5420 = vmatpush2.msra.mxu0 0.0
    %5421 = vmatprep.subr.mxu0 0.0
    %5422 = vmatpush2.msra.mxu0 0.0
    %5423 = vmatprep.subr.mxu0 0.0
    %5424 = vmatpush2.msra.mxu0 0.0
    %5425 = vmatprep.subr.mxu0 0.0
    %5426 = vmatpush2.msra.mxu0 0.0
    %5427 = vmatprep.subr.mxu0 0.0
    %5428 = vmatpush2.msra.mxu0 0.0
    %5429 = vmatprep.subr.mxu0 0.0
    %5430 = vmatpush2.msra.mxu0 0.0
    %5431 = vmatprep.subr.mxu0 0.0
    %5432 = vmatpush2.msra.mxu0 0.0
    %5433 = vmatprep.subr.mxu0 0.0
    %5434 = vmatpush2.msra.mxu0 0.0
    %5435 = vmatprep.subr.mxu0 0.0
    %5436 = vmatpush2.msra.mxu0 0.0
    %5437 = vmatprep.subr.mxu0 0.0
    %5438 = vmatpush2.msra.mxu0 0.0
    %5439 = vmatprep.mubr.f32.mxu0 0.0
    %5440 = vmatmul.mubr.f32.gmra.mxu0 %v5352
    %v5441 = vpop.f32.mrf.mxu0
    %v5442 = vadd.f32 %v5349, %v5441
    %v5443 = vpop.f32.mrf.mxu0
    %5444 = vmatprep.mubr.f32.mxu0 0.0
    %5445 = vmatmul.mubr.f32.gmra.mxu0 %v5355
    %v5446 = vpop.f32.mrf.mxu0
    %v5447 = vadd.f32 %v5349, %v5446
    %v5448 = vpop.f32.mrf.mxu0
    %5449 = vmatprep.mubr.f32.mxu0 0.0
    %5450 = vmatmul.mubr.f32.gmra.mxu0 %v5358
    %v5451 = vpop.f32.mrf.mxu0
    %v5452 = vadd.f32 %v5349, %v5451
    %v5453 = vpop.f32.mrf.mxu0
    %5454 = vmatprep.mubr.f32.mxu0 0.0
    %5455 = vmatmul.mubr.f32.gmra.mxu0 %v5361
    %v5456 = vpop.f32.mrf.mxu0
    %v5457 = vadd.f32 %v5349, %v5456
    %v5458 = vpop.f32.mrf.mxu0
    %5459 = vmatprep.mubr.f32.mxu0 0.0
    %5460 = vmatmul.mubr.f32.gmra.mxu0 %v5364
    %v5461 = vpop.f32.mrf.mxu0
    %v5462 = vadd.f32 %v5349, %v5461
    %v5463 = vpop.f32.mrf.mxu0
    %5464 = vmatprep.mubr.f32.mxu0 0.0
    %5465 = vmatmul.mubr.f32.gmra.mxu0 %v5367
    %v5466 = vpop.f32.mrf.mxu0
    %v5467 = vadd.f32 %v5349, %v5466
    %v5468 = vpop.f32.mrf.mxu0
    %5469 = vmatprep.mubr.f32.mxu0 0.0
    %5470 = vmatmul.mubr.f32.gmra.mxu0 %v5370
    %v5471 = vpop.f32.mrf.mxu0
    %v5472 = vadd.f32 %v5349, %v5471
    %v5473 = vpop.f32.mrf.mxu0
    %5474 = vmatprep.mubr.f32.mxu0 0.0
    %5475 = vmatmul.mubr.f32.gmra.mxu0 %v5373
    %v5476 = vpop.f32.mrf.mxu0
    %v5477 = vadd.f32 %v5349, %v5476
    %v5478 = vpop.f32.mrf.mxu0
    %5479 = vdwg.mxu0
    %v5480 = vld [vmem:[%s5] sm:$0xff]
    %v5481 = vld [vmem:[%s47] sm:$0xff]
    %v5482 = vld [vmem:[%s47 + $0x8] sm:$0xff]
    %v5483 = vld [vmem:[%s47 + $0x10] sm:$0xff]
    %v5484 = vld [vmem:[%s47 + $0x18] sm:$0xff]
    %v5485 = vld [vmem:[%s47 + $0x20] sm:$0xff]
    %v5486 = vld [vmem:[%s47 + $0x28] sm:$0xff]
    %v5487 = vld [vmem:[%s47 + $0x30] sm:$0xff]
    %v5488 = vld [vmem:[%s47 + $0x38] sm:$0xff]
    %v5489 = vld [vmem:[%s47 + $0x40] sm:$0xff]
    %v5490 = vld [vmem:[%s47 + $0x48] sm:$0xff]
    %v5491 = vld [vmem:[%s47 + $0x50] sm:$0xff]
    %v5492 = vld [vmem:[%s47 + $0x58] sm:$0xff]
    %v5493 = vld [vmem:[%s47 + $0x60] sm:$0xff]
    %v5494 = vld [vmem:[%s47 + $0x68] sm:$0xff]
    %v5495 = vld [vmem:[%s47 + $0x70] sm:$0xff]
    %v5496 = vld [vmem:[%s47 + $0x78] sm:$0xff]
    %v5497 = vld [vmem:[%s47 + $0x80] sm:$0xff]
    %v5498 = vld [vmem:[%s47 + $0x88] sm:$0xff]
    %v5499 = vld [vmem:[%s47 + $0x90] sm:$0xff]
    %v5500 = vld [vmem:[%s47 + $0x98] sm:$0xff]
    %v5501 = vld [vmem:[%s47 + $0xa0] sm:$0xff]
    %v5502 = vld [vmem:[%s47 + $0xa8] sm:$0xff]
    %v5503 = vld [vmem:[%s47 + $0xb0] sm:$0xff]
    %v5504 = vld [vmem:[%s47 + $0xb8] sm:$0xff]
    %v5505 = vld [vmem:[%s47 + $0xc0] sm:$0xff]
    %v5506 = vld [vmem:[%s47 + $0xc8] sm:$0xff]
    %v5507 = vld [vmem:[%s47 + $0xd0] sm:$0xff]
    %v5508 = vld [vmem:[%s47 + $0xd8] sm:$0xff]
    %v5509 = vld [vmem:[%s47 + $0xe0] sm:$0xff]
    %v5510 = vld [vmem:[%s47 + $0xe8] sm:$0xff]
    %v5511 = vld [vmem:[%s47 + $0xf0] sm:$0xff]
    %v5512 = vld [vmem:[%s47 + $0xf8] sm:$0xff]
    %v5513 = vld [vmem:[%s47 + $0x100] sm:$0xff]
    %v5514 = vld [vmem:[%s47 + $0x108] sm:$0xff]
    %v5515 = vld [vmem:[%s47 + $0x110] sm:$0xff]
    %v5516 = vld [vmem:[%s47 + $0x118] sm:$0xff]
    %v5517 = vld [vmem:[%s47 + $0x120] sm:$0xff]
    %v5518 = vld [vmem:[%s47 + $0x128] sm:$0xff]
    %v5519 = vld [vmem:[%s47 + $0x130] sm:$0xff]
    %v5520 = vld [vmem:[%s47 + $0x138] sm:$0xff]
    %v5521 = vld [vmem:[%s47 + $0x140] sm:$0xff]
    %v5522 = vld [vmem:[%s47 + $0x148] sm:$0xff]
    %v5523 = vld [vmem:[%s47 + $0x150] sm:$0xff]
    %v5524 = vld [vmem:[%s47 + $0x158] sm:$0xff]
    %v5525 = vld [vmem:[%s47 + $0x160] sm:$0xff]
    %v5526 = vld [vmem:[%s47 + $0x168] sm:$0xff]
    %v5527 = vld [vmem:[%s47 + $0x170] sm:$0xff]
    %v5528 = vld [vmem:[%s47 + $0x178] sm:$0xff]
    %v5529 = vld [vmem:[%s47 + $0x180] sm:$0xff]
    %v5530 = vld [vmem:[%s47 + $0x188] sm:$0xff]
    %v5531 = vld [vmem:[%s47 + $0x190] sm:$0xff]
    %v5532 = vld [vmem:[%s47 + $0x198] sm:$0xff]
    %v5533 = vld [vmem:[%s47 + $0x1a0] sm:$0xff]
    %v5534 = vld [vmem:[%s47 + $0x1a8] sm:$0xff]
    %v5535 = vld [vmem:[%s47 + $0x1b0] sm:$0xff]
    %v5536 = vld [vmem:[%s47 + $0x1b8] sm:$0xff]
    %v5537 = vld [vmem:[%s47 + $0x1c0] sm:$0xff]
    %v5538 = vld [vmem:[%s47 + $0x1c8] sm:$0xff]
    %v5539 = vld [vmem:[%s47 + $0x1d0] sm:$0xff]
    %v5540 = vld [vmem:[%s47 + $0x1d8] sm:$0xff]
    %v5541 = vld [vmem:[%s47 + $0x1e0] sm:$0xff]
    %v5542 = vld [vmem:[%s47 + $0x1e8] sm:$0xff]
    %v5543 = vld [vmem:[%s47 + $0x1f0] sm:$0xff]
    %v5544 = vld [vmem:[%s47 + $0x1f8] sm:$0xff]
    %v5545 = vld [vmem:[%s47 + $0x200] sm:$0xff]
    %v5546 = vld [vmem:[%s47 + $0x208] sm:$0xff]
    %v5547 = vld [vmem:[%s47 + $0x210] sm:$0xff]
    %v5548 = vld [vmem:[%s47 + $0x218] sm:$0xff]
    %v5549 = vld [vmem:[%s47 + $0x220] sm:$0xff]
    %v5550 = vld [vmem:[%s47 + $0x228] sm:$0xff]
    %v5551 = vld [vmem:[%s47 + $0x230] sm:$0xff]
    %v5552 = vld [vmem:[%s47 + $0x238] sm:$0xff]
    %v5553 = vld [vmem:[%s47 + $0x240] sm:$0xff]
    %v5554 = vld [vmem:[%s47 + $0x248] sm:$0xff]
    %v5555 = vld [vmem:[%s47 + $0x250] sm:$0xff]
    %v5556 = vld [vmem:[%s47 + $0x258] sm:$0xff]
    %v5557 = vld [vmem:[%s47 + $0x260] sm:$0xff]
    %v5558 = vld [vmem:[%s47 + $0x268] sm:$0xff]
    %v5559 = vld [vmem:[%s47 + $0x270] sm:$0xff]
    %v5560 = vld [vmem:[%s47 + $0x278] sm:$0xff]
    %v5561 = vld [vmem:[%s47 + $0x280] sm:$0xff]
    %v5562 = vld [vmem:[%s47 + $0x288] sm:$0xff]
    %v5563 = vld [vmem:[%s47 + $0x290] sm:$0xff]
    %v5564 = vld [vmem:[%s47 + $0x298] sm:$0xff]
    %v5565 = vld [vmem:[#allocation22] sm:$0x3f]
    %v5567 = vlaneseq
    %v5568 = vshrl.u32 %v5567, 7
    %v5569 = vsub.s32 0, %v5568
    %v5570 = vrot.slane %v5565, %v5569
    %v5571 = vlaneseq
    %v5572 = vshrl.u32 %v5571, 7
    %v5573 = vsub.s32 1, %v5572
    %v5574 = vrot.slane %v5565, %v5573
    %v5575 = vlaneseq
    %v5576 = vshrl.u32 %v5575, 7
    %v5577 = vsub.s32 2, %v5576
    %v5578 = vrot.slane %v5565, %v5577
    %v5579 = vlaneseq
    %v5580 = vshrl.u32 %v5579, 7
    %v5581 = vsub.s32 3, %v5580
    %v5582 = vrot.slane %v5565, %v5581
    %v5583 = vlaneseq
    %v5584 = vshrl.u32 %v5583, 7
    %v5585 = vsub.s32 4, %v5584
    %v5586 = vrot.slane %v5565, %v5585
    %v5587 = vlaneseq
    %v5588 = vshrl.u32 %v5587, 7
    %v5589 = vsub.s32 5, %v5588
    %v5590 = vrot.slane %v5565, %v5589
    %vm5597 = vcmask 916480
    %v5599 = vsel %vm5597, %v5480, 0
    %5601 = vmatprep.subr.mxu0 0.0
    %5602 = vmatpush1.msra.mxu0 0.0
    %5603 = vmatprep.subr.mxu0 0.0
    %5604 = vmatpush1.msra.mxu0 0.0
    %5605 = vmatprep.subr.mxu0 %v5560
    %5606 = vmatpush1.msra.mxu0 %v5559
    %5607 = vmatprep.subr.mxu0 %v5554
    %5608 = vmatpush1.msra.mxu0 %v5553
    %5609 = vmatprep.subr.mxu0 %v5548
    %5610 = vmatpush1.msra.mxu0 %v5547
    %5611 = vmatprep.subr.mxu0 %v5542
    %5612 = vmatpush1.msra.mxu0 %v5541
    %5613 = vmatprep.subr.mxu0 %v5536
    %5614 = vmatpush1.msra.mxu0 %v5535
    %5615 = vmatprep.subr.mxu0 %v5530
    %5616 = vmatpush1.msra.mxu0 %v5529
    %5617 = vmatprep.subr.mxu0 %v5524
    %5618 = vmatpush1.msra.mxu0 %v5523
    %5619 = vmatprep.subr.mxu0 %v5518
    %5620 = vmatpush1.msra.mxu0 %v5517
    %5621 = vmatprep.subr.mxu0 %v5512
    %5622 = vmatpush1.msra.mxu0 %v5511
    %5623 = vmatprep.subr.mxu0 %v5506
    %5624 = vmatpush1.msra.mxu0 %v5505
    %5625 = vmatprep.subr.mxu0 %v5500
    %5626 = vmatpush1.msra.mxu0 %v5499
    %5627 = vmatprep.subr.mxu0 %v5494
    %5628 = vmatpush1.msra.mxu0 %v5493
    %5629 = vmatprep.subr.mxu0 %v5488
    %5630 = vmatpush1.msra.mxu0 %v5487
    %5631 = vmatprep.subr.mxu0 %v5482
    %5632 = vmatpush1.msra.mxu0 %v5481
    %5633 = vmatprep.subr.mxu0 0.0
    %5634 = vmatpush2.msra.mxu0 0.0
    %5635 = vmatprep.subr.mxu0 0.0
    %5636 = vmatpush2.msra.mxu0 0.0
    %5637 = vmatprep.subr.mxu0 0.0
    %5638 = vmatpush2.msra.mxu0 0.0
    %5639 = vmatprep.subr.mxu0 0.0
    %5640 = vmatpush2.msra.mxu0 0.0
    %5641 = vmatprep.subr.mxu0 0.0
    %5642 = vmatpush2.msra.mxu0 0.0
    %5643 = vmatprep.subr.mxu0 0.0
    %5644 = vmatpush2.msra.mxu0 0.0
    %5645 = vmatprep.subr.mxu0 0.0
    %5646 = vmatpush2.msra.mxu0 0.0
    %5647 = vmatprep.subr.mxu0 0.0
    %5648 = vmatpush2.msra.mxu0 0.0
    %5649 = vmatprep.subr.mxu0 0.0
    %5650 = vmatpush2.msra.mxu0 0.0
    %5651 = vmatprep.subr.mxu0 0.0
    %5652 = vmatpush2.msra.mxu0 0.0
    %5653 = vmatprep.subr.mxu0 0.0
    %5654 = vmatpush2.msra.mxu0 0.0
    %5655 = vmatprep.subr.mxu0 0.0
    %5656 = vmatpush2.msra.mxu0 0.0
    %5657 = vmatprep.subr.mxu0 0.0
    %5658 = vmatpush2.msra.mxu0 0.0
    %5659 = vmatprep.subr.mxu0 0.0
    %5660 = vmatpush2.msra.mxu0 0.0
    %5661 = vmatprep.subr.mxu0 0.0
    %5662 = vmatpush2.msra.mxu0 0.0
    %5663 = vmatprep.subr.mxu0 0.0
    %5664 = vmatpush2.msra.mxu0 0.0
    %5665 = vmatprep.mubr.f32.mxu0 0.0
    %5666 = vmatmul.mubr.f32.gmra.mxu0 %v5599
    %v5667 = vpop.f32.mrf.mxu0
    %v5668 = vadd.f32 %v5570, %v5667
    %v5669 = vpop.f32.mrf.mxu0
    %v5670 = vadd.f32 %v5574, %v5669
    %5671 = vdwg.mxu0
    %5672 = vmatprep.subr.mxu0 0.0
    %5673 = vmatpush1.msra.mxu0 0.0
    %5674 = vmatprep.subr.mxu0 0.0
    %5675 = vmatpush1.msra.mxu0 0.0
    %5676 = vmatprep.subr.mxu0 %v5562
    %5677 = vmatpush1.msra.mxu0 %v5561
    %5678 = vmatprep.subr.mxu0 %v5556
    %5679 = vmatpush1.msra.mxu0 %v5555
    %5680 = vmatprep.subr.mxu0 %v5550
    %5681 = vmatpush1.msra.mxu0 %v5549
    %5682 = vmatprep.subr.mxu0 %v5544
    %5683 = vmatpush1.msra.mxu0 %v5543
    %5684 = vmatprep.subr.mxu0 %v5538
    %5685 = vmatpush1.msra.mxu0 %v5537
    %5686 = vmatprep.subr.mxu0 %v5532
    %5687 = vmatpush1.msra.mxu0 %v5531
    %5688 = vmatprep.subr.mxu0 %v5526
    %5689 = vmatpush1.msra.mxu0 %v5525
    %5690 = vmatprep.subr.mxu0 %v5520
    %5691 = vmatpush1.msra.mxu0 %v5519
    %5692 = vmatprep.subr.mxu0 %v5514
    %5693 = vmatpush1.msra.mxu0 %v5513
    %5694 = vmatprep.subr.mxu0 %v5508
    %5695 = vmatpush1.msra.mxu0 %v5507
    %5696 = vmatprep.subr.mxu0 %v5502
    %5697 = vmatpush1.msra.mxu0 %v5501
    %5698 = vmatprep.subr.mxu0 %v5496
    %5699 = vmatpush1.msra.mxu0 %v5495
    %5700 = vmatprep.subr.mxu0 %v5490
    %5701 = vmatpush1.msra.mxu0 %v5489
    %5702 = vmatprep.subr.mxu0 %v5484
    %5703 = vmatpush1.msra.mxu0 %v5483
    %5704 = vmatprep.subr.mxu0 0.0
    %5705 = vmatpush2.msra.mxu0 0.0
    %5706 = vmatprep.subr.mxu0 0.0
    %5707 = vmatpush2.msra.mxu0 0.0
    %5708 = vmatprep.subr.mxu0 0.0
    %5709 = vmatpush2.msra.mxu0 0.0
    %5710 = vmatprep.subr.mxu0 0.0
    %5711 = vmatpush2.msra.mxu0 0.0
    %5712 = vmatprep.subr.mxu0 0.0
    %5713 = vmatpush2.msra.mxu0 0.0
    %5714 = vmatprep.subr.mxu0 0.0
    %5715 = vmatpush2.msra.mxu0 0.0
    %5716 = vmatprep.subr.mxu0 0.0
    %5717 = vmatpush2.msra.mxu0 0.0
    %5718 = vmatprep.subr.mxu0 0.0
    %5719 = vmatpush2.msra.mxu0 0.0
    %5720 = vmatprep.subr.mxu0 0.0
    %5721 = vmatpush2.msra.mxu0 0.0
    %5722 = vmatprep.subr.mxu0 0.0
    %5723 = vmatpush2.msra.mxu0 0.0
    %5724 = vmatprep.subr.mxu0 0.0
    %5725 = vmatpush2.msra.mxu0 0.0
    %5726 = vmatprep.subr.mxu0 0.0
    %5727 = vmatpush2.msra.mxu0 0.0
    %5728 = vmatprep.subr.mxu0 0.0
    %5729 = vmatpush2.msra.mxu0 0.0
    %5730 = vmatprep.subr.mxu0 0.0
    %5731 = vmatpush2.msra.mxu0 0.0
    %5732 = vmatprep.subr.mxu0 0.0
    %5733 = vmatpush2.msra.mxu0 0.0
    %5734 = vmatprep.subr.mxu0 0.0
    %5735 = vmatpush2.msra.mxu0 0.0
    %5736 = vmatprep.mubr.f32.mxu0 0.0
    %5737 = vmatmul.mubr.f32.gmra.mxu0 %v5599
    %v5738 = vpop.f32.mrf.mxu0
    %v5739 = vadd.f32 %v5578, %v5738
    %v5740 = vpop.f32.mrf.mxu0
    %v5741 = vadd.f32 %v5582, %v5740
    %5742 = vdwg.mxu0
    %5743 = vmatprep.subr.mxu0 0.0
    %5744 = vmatpush1.msra.mxu0 0.0
    %5745 = vmatprep.subr.mxu0 0.0
    %5746 = vmatpush1.msra.mxu0 0.0
    %5747 = vmatprep.subr.mxu0 %v5564
    %5748 = vmatpush1.msra.mxu0 %v5563
    %5749 = vmatprep.subr.mxu0 %v5558
    %5750 = vmatpush1.msra.mxu0 %v5557
    %5751 = vmatprep.subr.mxu0 %v5552
    %5752 = vmatpush1.msra.mxu0 %v5551
    %5753 = vmatprep.subr.mxu0 %v5546
    %5754 = vmatpush1.msra.mxu0 %v5545
    %5755 = vmatprep.subr.mxu0 %v5540
    %5756 = vmatpush1.msra.mxu0 %v5539
    %5757 = vmatprep.subr.mxu0 %v5534
    %5758 = vmatpush1.msra.mxu0 %v5533
    %5759 = vmatprep.subr.mxu0 %v5528
    %5760 = vmatpush1.msra.mxu0 %v5527
    %5761 = vmatprep.subr.mxu0 %v5522
    %5762 = vmatpush1.msra.mxu0 %v5521
    %5763 = vmatprep.subr.mxu0 %v5516
    %5764 = vmatpush1.msra.mxu0 %v5515
    %5765 = vmatprep.subr.mxu0 %v5510
    %5766 = vmatpush1.msra.mxu0 %v5509
    %5767 = vmatprep.subr.mxu0 %v5504
    %5768 = vmatpush1.msra.mxu0 %v5503
    %5769 = vmatprep.subr.mxu0 %v5498
    %5770 = vmatpush1.msra.mxu0 %v5497
    %5771 = vmatprep.subr.mxu0 %v5492
    %5772 = vmatpush1.msra.mxu0 %v5491
    %5773 = vmatprep.subr.mxu0 %v5486
    %5774 = vmatpush1.msra.mxu0 %v5485
    %5775 = vmatprep.subr.mxu0 0.0
    %5776 = vmatpush2.msra.mxu0 0.0
    %5777 = vmatprep.subr.mxu0 0.0
    %5778 = vmatpush2.msra.mxu0 0.0
    %5779 = vmatprep.subr.mxu0 0.0
    %5780 = vmatpush2.msra.mxu0 0.0
    %5781 = vmatprep.subr.mxu0 0.0
    %5782 = vmatpush2.msra.mxu0 0.0
    %5783 = vmatprep.subr.mxu0 0.0
    %5784 = vmatpush2.msra.mxu0 0.0
    %5785 = vmatprep.subr.mxu0 0.0
    %5786 = vmatpush2.msra.mxu0 0.0
    %5787 = vmatprep.subr.mxu0 0.0
    %5788 = vmatpush2.msra.mxu0 0.0
    %5789 = vmatprep.subr.mxu0 0.0
    %5790 = vmatpush2.msra.mxu0 0.0
    %5791 = vmatprep.subr.mxu0 0.0
    %5792 = vmatpush2.msra.mxu0 0.0
    %5793 = vmatprep.subr.mxu0 0.0
    %5794 = vmatpush2.msra.mxu0 0.0
    %5795 = vmatprep.subr.mxu0 0.0
    %5796 = vmatpush2.msra.mxu0 0.0
    %5797 = vmatprep.subr.mxu0 0.0
    %5798 = vmatpush2.msra.mxu0 0.0
    %5799 = vmatprep.subr.mxu0 0.0
    %5800 = vmatpush2.msra.mxu0 0.0
    %5801 = vmatprep.subr.mxu0 0.0
    %5802 = vmatpush2.msra.mxu0 0.0
    %5803 = vmatprep.subr.mxu0 0.0
    %5804 = vmatpush2.msra.mxu0 0.0
    %5805 = vmatprep.subr.mxu0 0.0
    %5806 = vmatpush2.msra.mxu0 0.0
    %5807 = vmatprep.mubr.f32.mxu0 0.0
    %5808 = vmatmul.mubr.f32.gmra.mxu0 %v5599
    %v5809 = vpop.f32.mrf.mxu0
    %v5810 = vadd.f32 %v5586, %v5809
    %v5811 = vpop.f32.mrf.mxu0
    %v5812 = vadd.f32 %v5590, %v5811
    %5813 = vdwg.mxu0
    %v5814 = vxor.u32 %v5668, 2147483648
    %v5815 = vxor.u32 %v5670, 2147483648
    %v5816 = vxor.u32 %v5739, 2147483648
    %v5817 = vxor.u32 %v5741, 2147483648
    %v5818 = vmul.f32 %v5814, 1.442695
    %v5819 = vpow.pop %v5818
    %v5820 = vmul.f32 %v5815, 1.442695
    %v5821 = vpow.pop %v5820
    %v5822 = vmul.f32 %v5816, 1.442695
    %v5823 = vpow.pop %v5822
    %v5824 = vmul.f32 %v5817, 1.442695
    %v5825 = vpow.pop %v5824
    %v5826 = vadd.f32 %v5819, 1.0
    %v5827 = vadd.f32 %v5821, 1.0
    %v5828 = vadd.f32 %v5823, 1.0
    %v5829 = vadd.f32 %v5825, 1.0
    %v5830 = vrcp.pop %v5826
    %v5831 = vmul.f32 1.0, %v5830
    %v5832 = vrcp.pop %v5827
    %v5833 = vmul.f32 1.0, %v5832
    %v5834 = vrcp.pop %v5828
    %v5835 = vmul.f32 1.0, %v5834
    %v5836 = vrcp.pop %v5829
    %v5837 = vmul.f32 1.0, %v5836
    %v5838 = vld [vmem:[#allocation23] sm:$0x3]
    %v5840 = vlaneseq
    %v5841 = vshrl.u32 %v5840, 7
    %v5842 = vsub.s32 0, %v5841
    %v5843 = vrot.slane %v5838, %v5842
    %v5844 = vlaneseq
    %v5845 = vshrl.u32 %v5844, 7
    %v5846 = vsub.s32 1, %v5845
    %v5847 = vrot.slane %v5838, %v5846
    %v5850 = vmul.f32 %v5831, %v5843
    %v5851 = vmul.f32 %v5833, %v5847
    %5854 = vrot.lane.b32.xlu0 %v5850, 64
    %v5855 = vpop.permute.xlu0 %5854
    %5856 = vrot.lane.b32.xlu0 %v5851, 64
    %v5857 = vpop.permute.xlu0 %5856
    %v5858 = vsel %vm614, %v5855, %v5857
    %v5862 = vadd.f32 %v5741, %v5855
    %v5863 = vadd.f32 %v5810, %v5858
    %v5864 = vadd.f32 %v5812, %v5857
    %v5865 = vtanh.pop %v5862
    %v5866 = vtanh.pop %v5863
    %v5867 = vtanh.pop %v5864
    %v5868 = vsub.f32 1.0, %v5833
    %v5869 = vsub.f32 1.0, %v5835
    %v5870 = vsub.f32 1.0, %v5837
    %5874 = vrot.lane.b32.xlu0 %v5865, 32
    %v5875 = vpop.permute.xlu0 %5874
    %5876 = vrot.lane.b32.xlu0 %v5866, 32
    %v5877 = vpop.permute.xlu0 %5876
    %5878 = vrot.lane.b32.xlu0 %v5867, 32
    %v5879 = vpop.permute.xlu0 %5878
    %v5880 = vsel %vm475, %v5875, %v5877
    %v5881 = vsel %vm475, %v5877, %v5879
    %v5885 = vmul.f32 %v5868, %v5875
    %v5886 = vmul.f32 %v5869, %v5880
    %v5887 = vmul.f32 %v5870, %v5881
    %v5888 = vld [vmem:[%s61] sm:$0xff]
    %v5889 = vld [vmem:[%s61 + $0x8] sm:$0xff]
    %v5890 = vld [vmem:[%s61 + $0x10] sm:$0xff]
    %v5891 = vld [vmem:[%s61 + $0x18] sm:$0xff]
    %v5892 = vld [vmem:[%s61 + $0x20] sm:$0xff]
    %v5893 = vld [vmem:[%s61 + $0x28] sm:$0xff]
    %v5894 = vld [vmem:[%s61 + $0x30] sm:$0xff]
    %v5895 = vld [vmem:[%s61 + $0x38] sm:$0xff]
    %v5896 = vld [vmem:[%s61 + $0x40] sm:$0xff]
    %v5897 = vld [vmem:[%s61 + $0x48] sm:$0xff]
    %v5898 = vld [vmem:[%s61 + $0x50] sm:$0xff]
    %v5899 = vld [vmem:[%s61 + $0x58] sm:$0xff]
    %v5900 = vld [vmem:[%s61 + $0x60] sm:$0xff]
    %v5901 = vld [vmem:[%s61 + $0x68] sm:$0xff]
    %v5902 = vld [vmem:[%s61 + $0x70] sm:$0xff]
    %v5903 = vld [vmem:[%s61 + $0x78] sm:$0xff]
    %v5904 = vld [vmem:[%s61 + $0x80] sm:$0xff]
    %v5905 = vld [vmem:[%s61 + $0x88] sm:$0xff]
    %v5906 = vld [vmem:[%s61 + $0x90] sm:$0xff]
    %v5907 = vld [vmem:[%s61 + $0x98] sm:$0xff]
    %v5908 = vld [vmem:[%s61 + $0xa0] sm:$0xff]
    %v5909 = vld [vmem:[%s61 + $0xa8] sm:$0xff]
    %v5910 = vld [vmem:[%s61 + $0xb0] sm:$0xff]
    %v5911 = vld [vmem:[%s61 + $0xb8] sm:$0xff]
    %v5912 = vld [vmem:[%s61 + $0xc0] sm:$0xff]
    %v5913 = vld [vmem:[%s61 + $0xc8] sm:$0xff]
    %v5914 = vld [vmem:[%s61 + $0xd0] sm:$0xff]
    %v5915 = vld [vmem:[%s61 + $0xd8] sm:$0xff]
    %v5916 = vld [vmem:[#allocation28] sm:$0x1]
    %v5918 = vlaneseq
    %v5919 = vshrl.u32 %v5918, 7
    %v5920 = vsub.s32 0, %v5919
    %v5921 = vrot.slane %v5916, %v5920
    %5926 = vrot.lane.b32.xlu0 %v5885, 32
    %v5927 = vpop.permute.xlu0 %5926
    %5928 = vrot.lane.b32.xlu0 %v5886, 32
    %v5929 = vpop.permute.xlu0 %5928
    %5930 = vrot.lane.b32.xlu0 %v5887, 32
    %v5931 = vpop.permute.xlu0 %5930
    %v5932 = vsel %vm475, %v5927, %v5929
    %v5933 = vsel %vm475, %v5929, %v5931
    %vm5935 = vcmask 785408
    %v5936 = vsel %vm5935, %v5933, 0
    %5938 = vmatprep.subr.mxu0 0.0
    %5939 = vmatpush1.msra.mxu0 %v5903
    %5940 = vmatprep.subr.mxu0 0.0
    %5941 = vmatpush1.msra.mxu0 %v5902
    %5942 = vmatprep.subr.mxu0 0.0
    %5943 = vmatpush1.msra.mxu0 %v5901
    %5944 = vmatprep.subr.mxu0 0.0
    %5945 = vmatpush1.msra.mxu0 %v5900
    %5946 = vmatprep.subr.mxu0 0.0
    %5947 = vmatpush1.msra.mxu0 %v5899
    %5948 = vmatprep.subr.mxu0 0.0
    %5949 = vmatpush1.msra.mxu0 %v5898
    %5950 = vmatprep.subr.mxu0 0.0
    %5951 = vmatpush1.msra.mxu0 %v5897
    %5952 = vmatprep.subr.mxu0 0.0
    %5953 = vmatpush1.msra.mxu0 %v5896
    %5954 = vmatprep.subr.mxu0 0.0
    %5955 = vmatpush1.msra.mxu0 %v5895
    %5956 = vmatprep.subr.mxu0 0.0
    %5957 = vmatpush1.msra.mxu0 %v5894
    %5958 = vmatprep.subr.mxu0 0.0
    %5959 = vmatpush1.msra.mxu0 %v5893
    %5960 = vmatprep.subr.mxu0 0.0
    %5961 = vmatpush1.msra.mxu0 %v5892
    %5962 = vmatprep.subr.mxu0 0.0
    %5963 = vmatpush1.msra.mxu0 %v5891
    %5964 = vmatprep.subr.mxu0 0.0
    %5965 = vmatpush1.msra.mxu0 %v5890
    %5966 = vmatprep.subr.mxu0 0.0
    %5967 = vmatpush1.msra.mxu0 %v5889
    %5968 = vmatprep.subr.mxu0 0.0
    %5969 = vmatpush1.msra.mxu0 %v5888
    %5970 = vmatprep.subr.mxu0 0.0
    %5971 = vmatpush2.msra.mxu0 0.0
    %5972 = vmatprep.subr.mxu0 0.0
    %5973 = vmatpush2.msra.mxu0 0.0
    %5974 = vmatprep.subr.mxu0 0.0
    %5975 = vmatpush2.msra.mxu0 0.0
    %5976 = vmatprep.subr.mxu0 0.0
    %5977 = vmatpush2.msra.mxu0 0.0
    %5978 = vmatprep.subr.mxu0 0.0
    %5979 = vmatpush2.msra.mxu0 %v5915
    %5980 = vmatprep.subr.mxu0 0.0
    %5981 = vmatpush2.msra.mxu0 %v5914
    %5982 = vmatprep.subr.mxu0 0.0
    %5983 = vmatpush2.msra.mxu0 %v5913
    %5984 = vmatprep.subr.mxu0 0.0
    %5985 = vmatpush2.msra.mxu0 %v5912
    %5986 = vmatprep.subr.mxu0 0.0
    %5987 = vmatpush2.msra.mxu0 %v5911
    %5988 = vmatprep.subr.mxu0 0.0
    %5989 = vmatpush2.msra.mxu0 %v5910
    %5990 = vmatprep.subr.mxu0 0.0
    %5991 = vmatpush2.msra.mxu0 %v5909
    %5992 = vmatprep.subr.mxu0 0.0
    %5993 = vmatpush2.msra.mxu0 %v5908
    %5994 = vmatprep.subr.mxu0 0.0
    %5995 = vmatpush2.msra.mxu0 %v5907
    %5996 = vmatprep.subr.mxu0 0.0
    %5997 = vmatpush2.msra.mxu0 %v5906
    %5998 = vmatprep.subr.mxu0 0.0
    %5999 = vmatpush2.msra.mxu0 %v5905
    %6000 = vmatprep.subr.mxu0 0.0
    %6001 = vmatpush2.msra.mxu0 %v5904
    %6002 = vmatprep.mubr.f32.mxu0 %v5936
    %6003 = vmatmul.mubr.f32.gmra.mxu0 %v5932
    %v6004 = vpop.f32.mrf.mxu0
    %v6005 = vadd.f32 %v5921, %v6004
    %v6006 = vpop.f32.mrf.mxu0
    %6007 = vdwg.mxu0
    %v6008 = vld [vmem:[#allocation31] sm:$0xff]
    %v6009 = vld [vmem:[#allocation31 + $0x8] sm:$0xff]
    %v6010 = vld [vmem:[#allocation32] sm:$0x1]
    %v6012 = vlaneseq
    %v6013 = vshrl.u32 %v6012, 7
    %v6014 = vsub.s32 0, %v6013
    %v6015 = vrot.slane %v6010, %v6014
    %v6018 = vsel %vm406, %v6005, 0
    %6020 = vmatprep.subr.mxu0 0.0
    %6021 = vmatpush1.msra.mxu0 0.0
    %6022 = vmatprep.subr.mxu0 0.0
    %6023 = vmatpush1.msra.mxu0 0.0
    %6024 = vmatprep.subr.mxu0 0.0
    %6025 = vmatpush1.msra.mxu0 0.0
    %6026 = vmatprep.subr.mxu0 0.0
    %6027 = vmatpush1.msra.mxu0 0.0
    %6028 = vmatprep.subr.mxu0 0.0
    %6029 = vmatpush1.msra.mxu0 0.0
    %6030 = vmatprep.subr.mxu0 0.0
    %6031 = vmatpush1.msra.mxu0 0.0
    %6032 = vmatprep.subr.mxu0 0.0
    %6033 = vmatpush1.msra.mxu0 0.0
    %6034 = vmatprep.subr.mxu0 0.0
    %6035 = vmatpush1.msra.mxu0 0.0
    %6036 = vmatprep.subr.mxu0 0.0
    %6037 = vmatpush1.msra.mxu0 0.0
    %6038 = vmatprep.subr.mxu0 0.0
    %6039 = vmatpush1.msra.mxu0 0.0
    %6040 = vmatprep.subr.mxu0 0.0
    %6041 = vmatpush1.msra.mxu0 0.0
    %6042 = vmatprep.subr.mxu0 0.0
    %6043 = vmatpush1.msra.mxu0 0.0
    %6044 = vmatprep.subr.mxu0 0.0
    %6045 = vmatpush1.msra.mxu0 0.0
    %6046 = vmatprep.subr.mxu0 0.0
    %6047 = vmatpush1.msra.mxu0 0.0
    %6048 = vmatprep.subr.mxu0 0.0
    %6049 = vmatpush1.msra.mxu0 %v6009
    %6050 = vmatprep.subr.mxu0 0.0
    %6051 = vmatpush1.msra.mxu0 %v6008
    %6052 = vmatprep.subr.mxu0 0.0
    %6053 = vmatpush2.msra.mxu0 0.0
    %6054 = vmatprep.subr.mxu0 0.0
    %6055 = vmatpush2.msra.mxu0 0.0
    %6056 = vmatprep.subr.mxu0 0.0
    %6057 = vmatpush2.msra.mxu0 0.0
    %6058 = vmatprep.subr.mxu0 0.0
    %6059 = vmatpush2.msra.mxu0 0.0
    %6060 = vmatprep.subr.mxu0 0.0
    %6061 = vmatpush2.msra.mxu0 0.0
    %6062 = vmatprep.subr.mxu0 0.0
    %6063 = vmatpush2.msra.mxu0 0.0
    %6064 = vmatprep.subr.mxu0 0.0
    %6065 = vmatpush2.msra.mxu0 0.0
    %6066 = vmatprep.subr.mxu0 0.0
    %6067 = vmatpush2.msra.mxu0 0.0
    %6068 = vmatprep.subr.mxu0 0.0
    %6069 = vmatpush2.msra.mxu0 0.0
    %6070 = vmatprep.subr.mxu0 0.0
    %6071 = vmatpush2.msra.mxu0 0.0
    %6072 = vmatprep.subr.mxu0 0.0
    %6073 = vmatpush2.msra.mxu0 0.0
    %6074 = vmatprep.subr.mxu0 0.0
    %6075 = vmatpush2.msra.mxu0 0.0
    %6076 = vmatprep.subr.mxu0 0.0
    %6077 = vmatpush2.msra.mxu0 0.0
    %6078 = vmatprep.subr.mxu0 0.0
    %6079 = vmatpush2.msra.mxu0 0.0
    %6080 = vmatprep.subr.mxu0 0.0
    %6081 = vmatpush2.msra.mxu0 0.0
    %6082 = vmatprep.subr.mxu0 0.0
    %6083 = vmatpush2.msra.mxu0 0.0
    %6084 = vmatprep.mubr.f32.mxu0 0.0
    %6085 = vmatmul.mubr.f32.gmra.mxu0 %v6018
    %v6086 = vpop.f32.mrf.mxu0
    %v6087 = vadd.f32 %v6015, %v6086
    %v6088 = vpop.f32.mrf.mxu0
    %6089 = vdwg.mxu0
    %v6090 = vld [vmem:[#allocation29] sm:$0xff]
    %v6091 = vld [vmem:[#allocation29 + $0x8] sm:$0xff]
    %v6093 = vsel %vm406, %v5442, 0
    %v6096 = vsel %vm406, %v5447, 0
    %v6099 = vsel %vm406, %v5452, 0
    %v6102 = vsel %vm406, %v5457, 0
    %v6105 = vsel %vm406, %v5462, 0
    %v6108 = vsel %vm406, %v5467, 0
    %v6111 = vsel %vm406, %v5472, 0
    %v6114 = vsel %vm406, %v5477, 0
    %6116 = vmatprep.subr.mxu0 0.0
    %6117 = vmatpush1.msra.mxu0 0.0
    %6118 = vmatprep.subr.mxu0 0.0
    %6119 = vmatpush1.msra.mxu0 0.0
    %6120 = vmatprep.subr.mxu0 0.0
    %6121 = vmatpush1.msra.mxu0 0.0
    %6122 = vmatprep.subr.mxu0 0.0
    %6123 = vmatpush1.msra.mxu0 0.0
    %6124 = vmatprep.subr.mxu0 0.0
    %6125 = vmatpush1.msra.mxu0 0.0
    %6126 = vmatprep.subr.mxu0 0.0
    %6127 = vmatpush1.msra.mxu0 0.0
    %6128 = vmatprep.subr.mxu0 0.0
    %6129 = vmatpush1.msra.mxu0 0.0
    %6130 = vmatprep.subr.mxu0 0.0
    %6131 = vmatpush1.msra.mxu0 0.0
    %6132 = vmatprep.subr.mxu0 0.0
    %6133 = vmatpush1.msra.mxu0 0.0
    %6134 = vmatprep.subr.mxu0 0.0
    %6135 = vmatpush1.msra.mxu0 0.0
    %6136 = vmatprep.subr.mxu0 0.0
    %6137 = vmatpush1.msra.mxu0 0.0
    %6138 = vmatprep.subr.mxu0 0.0
    %6139 = vmatpush1.msra.mxu0 0.0
    %6140 = vmatprep.subr.mxu0 0.0
    %6141 = vmatpush1.msra.mxu0 0.0
    %6142 = vmatprep.subr.mxu0 0.0
    %6143 = vmatpush1.msra.mxu0 0.0
    %6144 = vmatprep.subr.mxu0 0.0
    %6145 = vmatpush1.msra.mxu0 %v6009
    %6146 = vmatprep.subr.mxu0 0.0
    %6147 = vmatpush1.msra.mxu0 %v6008
    %6148 = vmatprep.subr.mxu0 0.0
    %6149 = vmatpush2.msra.mxu0 0.0
    %6150 = vmatprep.subr.mxu0 0.0
    %6151 = vmatpush2.msra.mxu0 0.0
    %6152 = vmatprep.subr.mxu0 0.0
    %6153 = vmatpush2.msra.mxu0 0.0
    %6154 = vmatprep.subr.mxu0 0.0
    %6155 = vmatpush2.msra.mxu0 0.0
    %6156 = vmatprep.subr.mxu0 0.0
    %6157 = vmatpush2.msra.mxu0 0.0
    %6158 = vmatprep.subr.mxu0 0.0
    %6159 = vmatpush2.msra.mxu0 0.0
    %6160 = vmatprep.subr.mxu0 0.0
    %6161 = vmatpush2.msra.mxu0 0.0
    %6162 = vmatprep.subr.mxu0 0.0
    %6163 = vmatpush2.msra.mxu0 0.0
    %6164 = vmatprep.subr.mxu0 0.0
    %6165 = vmatpush2.msra.mxu0 0.0
    %6166 = vmatprep.subr.mxu0 0.0
    %6167 = vmatpush2.msra.mxu0 0.0
    %6168 = vmatprep.subr.mxu0 0.0
    %6169 = vmatpush2.msra.mxu0 0.0
    %6170 = vmatprep.subr.mxu0 0.0
    %6171 = vmatpush2.msra.mxu0 0.0
    %6172 = vmatprep.subr.mxu0 0.0
    %6173 = vmatpush2.msra.mxu0 0.0
    %6174 = vmatprep.subr.mxu0 0.0
    %6175 = vmatpush2.msra.mxu0 0.0
    %6176 = vmatprep.subr.mxu0 0.0
    %6177 = vmatpush2.msra.mxu0 0.0
    %6178 = vmatprep.subr.mxu0 0.0
    %6179 = vmatpush2.msra.mxu0 0.0
    %6180 = vmatprep.mubr.f32.mxu0 0.0
    %6181 = vmatmul.mubr.f32.gmra.mxu0 %v6093
    %v6182 = vpop.f32.mrf.mxu0
    %v6183 = vadd.f32 0.0, %v6182
    %v6184 = vpop.f32.mrf.mxu0
    %6185 = vmatprep.mubr.f32.mxu0 0.0
    %6186 = vmatmul.mubr.f32.gmra.mxu0 %v6096
    %v6187 = vpop.f32.mrf.mxu0
    %v6188 = vadd.f32 0.0, %v6187
    %v6189 = vpop.f32.mrf.mxu0
    %6190 = vmatprep.mubr.f32.mxu0 0.0
    %6191 = vmatmul.mubr.f32.gmra.mxu0 %v6099
    %v6192 = vpop.f32.mrf.mxu0
    %v6193 = vadd.f32 0.0, %v6192
    %v6194 = vpop.f32.mrf.mxu0
    %6195 = vmatprep.mubr.f32.mxu0 0.0
    %6196 = vmatmul.mubr.f32.gmra.mxu0 %v6102
    %v6197 = vpop.f32.mrf.mxu0
    %v6198 = vadd.f32 0.0, %v6197
    %v6199 = vpop.f32.mrf.mxu0
    %6200 = vmatprep.mubr.f32.mxu0 0.0
    %6201 = vmatmul.mubr.f32.gmra.mxu0 %v6105
    %v6202 = vpop.f32.mrf.mxu0
    %v6203 = vadd.f32 0.0, %v6202
    %v6204 = vpop.f32.mrf.mxu0
    %6205 = vmatprep.mubr.f32.mxu0 0.0
    %6206 = vmatmul.mubr.f32.gmra.mxu0 %v6108
    %v6207 = vpop.f32.mrf.mxu0
    %v6208 = vadd.f32 0.0, %v6207
    %v6209 = vpop.f32.mrf.mxu0
    %6210 = vmatprep.mubr.f32.mxu0 0.0
    %6211 = vmatmul.mubr.f32.gmra.mxu0 %v6111
    %v6212 = vpop.f32.mrf.mxu0
    %v6213 = vadd.f32 0.0, %v6212
    %v6214 = vpop.f32.mrf.mxu0
    %6215 = vmatprep.mubr.f32.mxu0 0.0
    %6216 = vmatmul.mubr.f32.gmra.mxu0 %v6114
    %v6217 = vpop.f32.mrf.mxu0
    %v6218 = vadd.f32 0.0, %v6217
    %v6219 = vpop.f32.mrf.mxu0
    %6220 = vdwg.mxu0
    %v6222 = vsel %vm406, %v5298, 0
    %v6225 = vsel %vm406, %v5303, 0
    %v6228 = vsel %vm406, %v5308, 0
    %v6231 = vsel %vm406, %v5313, 0
    %v6234 = vsel %vm406, %v5318, 0
    %v6237 = vsel %vm406, %v5323, 0
    %v6240 = vsel %vm406, %v5328, 0
    %v6243 = vsel %vm406, %v5333, 0
    %6245 = vmatprep.subr.mxu0 0.0
    %6246 = vmatpush1.msra.mxu0 0.0
    %6247 = vmatprep.subr.mxu0 0.0
    %6248 = vmatpush1.msra.mxu0 0.0
    %6249 = vmatprep.subr.mxu0 0.0
    %6250 = vmatpush1.msra.mxu0 0.0
    %6251 = vmatprep.subr.mxu0 0.0
    %6252 = vmatpush1.msra.mxu0 0.0
    %6253 = vmatprep.subr.mxu0 0.0
    %6254 = vmatpush1.msra.mxu0 0.0
    %6255 = vmatprep.subr.mxu0 0.0
    %6256 = vmatpush1.msra.mxu0 0.0
    %6257 = vmatprep.subr.mxu0 0.0
    %6258 = vmatpush1.msra.mxu0 0.0
    %6259 = vmatprep.subr.mxu0 0.0
    %6260 = vmatpush1.msra.mxu0 0.0
    %6261 = vmatprep.subr.mxu0 0.0
    %6262 = vmatpush1.msra.mxu0 0.0
    %6263 = vmatprep.subr.mxu0 0.0
    %6264 = vmatpush1.msra.mxu0 0.0
    %6265 = vmatprep.subr.mxu0 0.0
    %6266 = vmatpush1.msra.mxu0 0.0
    %6267 = vmatprep.subr.mxu0 0.0
    %6268 = vmatpush1.msra.mxu0 0.0
    %6269 = vmatprep.subr.mxu0 0.0
    %6270 = vmatpush1.msra.mxu0 0.0
    %6271 = vmatprep.subr.mxu0 0.0
    %6272 = vmatpush1.msra.mxu0 0.0
    %6273 = vmatprep.subr.mxu0 0.0
    %6274 = vmatpush1.msra.mxu0 %v6091
    %6275 = vmatprep.subr.mxu0 0.0
    %6276 = vmatpush1.msra.mxu0 %v6090
    %6277 = vmatprep.subr.mxu0 0.0
    %6278 = vmatpush2.msra.mxu0 0.0
    %6279 = vmatprep.subr.mxu0 0.0
    %6280 = vmatpush2.msra.mxu0 0.0
    %6281 = vmatprep.subr.mxu0 0.0
    %6282 = vmatpush2.msra.mxu0 0.0
    %6283 = vmatprep.subr.mxu0 0.0
    %6284 = vmatpush2.msra.mxu0 0.0
    %6285 = vmatprep.subr.mxu0 0.0
    %6286 = vmatpush2.msra.mxu0 0.0
    %6287 = vmatprep.subr.mxu0 0.0
    %6288 = vmatpush2.msra.mxu0 0.0
    %6289 = vmatprep.subr.mxu0 0.0
    %6290 = vmatpush2.msra.mxu0 0.0
    %6291 = vmatprep.subr.mxu0 0.0
    %6292 = vmatpush2.msra.mxu0 0.0
    %6293 = vmatprep.subr.mxu0 0.0
    %6294 = vmatpush2.msra.mxu0 0.0
    %6295 = vmatprep.subr.mxu0 0.0
    %6296 = vmatpush2.msra.mxu0 0.0
    %6297 = vmatprep.subr.mxu0 0.0
    %6298 = vmatpush2.msra.mxu0 0.0
    %6299 = vmatprep.subr.mxu0 0.0
    %6300 = vmatpush2.msra.mxu0 0.0
    %6301 = vmatprep.subr.mxu0 0.0
    %6302 = vmatpush2.msra.mxu0 0.0
    %6303 = vmatprep.subr.mxu0 0.0
    %6304 = vmatpush2.msra.mxu0 0.0
    %6305 = vmatprep.subr.mxu0 0.0
    %6306 = vmatpush2.msra.mxu0 0.0
    %6307 = vmatprep.subr.mxu0 0.0
    %6308 = vmatpush2.msra.mxu0 0.0
    %6309 = vmatprep.mubr.f32.mxu0 0.0
    %6310 = vmatmul.mubr.f32.gmra.mxu0 %v6222
    %v6311 = vpop.f32.mrf.mxu0
    %v6312 = vadd.f32 %v6183, %v6311
    %v6313 = vpop.f32.mrf.mxu0
    %6314 = vmatprep.mubr.f32.mxu0 0.0
    %6315 = vmatmul.mubr.f32.gmra.mxu0 %v6225
    %v6316 = vpop.f32.mrf.mxu0
    %v6317 = vadd.f32 %v6188, %v6316
    %v6318 = vpop.f32.mrf.mxu0
    %6319 = vmatprep.mubr.f32.mxu0 0.0
    %6320 = vmatmul.mubr.f32.gmra.mxu0 %v6228
    %v6321 = vpop.f32.mrf.mxu0
    %v6322 = vadd.f32 %v6193, %v6321
    %v6323 = vpop.f32.mrf.mxu0
    %6324 = vmatprep.mubr.f32.mxu0 0.0
    %6325 = vmatmul.mubr.f32.gmra.mxu0 %v6231
    %v6326 = vpop.f32.mrf.mxu0
    %v6327 = vadd.f32 %v6198, %v6326
    %v6328 = vpop.f32.mrf.mxu0
    %6329 = vmatprep.mubr.f32.mxu0 0.0
    %6330 = vmatmul.mubr.f32.gmra.mxu0 %v6234
    %v6331 = vpop.f32.mrf.mxu0
    %v6332 = vadd.f32 %v6203, %v6331
    %v6333 = vpop.f32.mrf.mxu0
    %6334 = vmatprep.mubr.f32.mxu0 0.0
    %6335 = vmatmul.mubr.f32.gmra.mxu0 %v6237
    %v6336 = vpop.f32.mrf.mxu0
    %v6337 = vadd.f32 %v6208, %v6336
    %v6338 = vpop.f32.mrf.mxu0
    %6339 = vmatprep.mubr.f32.mxu0 0.0
    %6340 = vmatmul.mubr.f32.gmra.mxu0 %v6240
    %v6341 = vpop.f32.mrf.mxu0
    %v6342 = vadd.f32 %v6213, %v6341
    %v6343 = vpop.f32.mrf.mxu0
    %6344 = vmatprep.mubr.f32.mxu0 0.0
    %6345 = vmatmul.mubr.f32.gmra.mxu0 %v6243
    %v6346 = vpop.f32.mrf.mxu0
    %v6347 = vadd.f32 %v6218, %v6346
    %v6348 = vpop.f32.mrf.mxu0
    %6349 = vdwg.mxu0
    %v6350 = vadd.f32 %v6312, %v6087
    %v6351 = vadd.f32 %v6317, %v6087
    %v6352 = vadd.f32 %v6322, %v6087
    %v6353 = vadd.f32 %v6327, %v6087
    %v6354 = vadd.f32 %v6332, %v6087
    %v6355 = vadd.f32 %v6337, %v6087
    %v6356 = vadd.f32 %v6342, %v6087
    %v6357 = vadd.f32 %v6347, %v6087
    %6358 = vst.msk [vmem:[%s71] sm:$0xff] %vm406, %v6350
    %6359 = vst.msk [vmem:[%s71 + $0x8] sm:$0xff] %vm406, %v6351
    %6360 = vst.msk [vmem:[%s71 + $0x10] sm:$0xff] %vm406, %v6352
    %6361 = vst.msk [vmem:[%s71 + $0x18] sm:$0xff] %vm406, %v6353
    %6362 = vst.msk [vmem:[%s71 + $0x20] sm:$0xff] %vm406, %v6354
    %6363 = vst.msk [vmem:[%s71 + $0x28] sm:$0xff] %vm406, %v6355
    %6364 = vst.msk [vmem:[%s71 + $0x30] sm:$0xff] %vm406, %v6356
    %6365 = vst.msk [vmem:[%s71 + $0x38] sm:$0xff] %vm406, %v6357
    // Predicated region
    $region214: #{fed_enhance_lstm_forward.1} parent=1 // pred_check
      _
    $region215: #{fed_enhance_lstm_forward.1} parent=1 // pred_check_branch
      %6367 = sbr.rel (0) target = $region217
    $region216: #{fed_enhance_lstm_forward.1} parent=1 // pred_region
      _
    $region217: #{fed_enhance_lstm_forward.1} parent=1 // pred_fallthru
      _
    // Predicated region
    $region218: #{fed_enhance_lstm_forward.1} parent=1 // pred_check
      _
    $region219: #{fed_enhance_lstm_forward.1} parent=1 // pred_check_branch
      %6369 = sbr.rel (0) target = $region221
    $region220: #{fed_enhance_lstm_forward.1} parent=1 // pred_region
      _
    $region221: #{fed_enhance_lstm_forward.1} parent=1 // pred_fallthru
      _
    %6370 = vsyncpa [#allocation7], 1
    %6371 = vsyncpa [#allocation9], 1
    %6372 = vsyncpa [#allocation12], 1
    %6373 = vsyncpa [#allocation15], 1
    %6374 = vsyncpa [#allocation18], 1
    %6375 = vsyncpa [#allocation21], 1
    %6376 = vsyncpa [#allocation24], 1
    %6377 = vsyncpa [#allocation27], 1
    %6378 = vsyncpa [#allocation30], 1
    %6379 = vsyncpa [#allocation33], 1

</llo_original>
